<compile_context>
chip_gen: v7x
topology: tpu7x:2x2x1
jax: 0.10.0
libtpu: 0.0.40
codegen_flags: <defaults>
</compile_context>

<pallas_src>
import functools
import math

import jax
import jax.numpy as jnp
from jax.experimental import pallas as pl
from jax.experimental.pallas import tpu as pltpu


# ----------------------------- hardware queries ------------------------------
def _num_tensorcores():
    """Best-effort TensorCore count (v5e/v6e: 1, v7x: 2). Defaults to 1."""
    try:
        info = pltpu.get_tpu_info()
        for name in ("num_cores", "core_count", "num_tensorcores",
                     "tensorcore_count", "num_cores_per_chip", "cores_per_chip"):
            val = getattr(info, name, None)
            if val:
                return int(val)
    except Exception:
        pass
    try:
        return max(1, int(getattr(jax.devices()[0], "num_cores", 1)))
    except Exception:
        return 1


def _vmem_capacity_bytes():
    """Best-effort per-core VMEM capacity; conservative (v7x) default."""
    try:
        return int(pltpu.get_tpu_info().vmem_capacity_bytes)
    except Exception:
        return 64 * 2 ** 20


# ----------------------------- kernel helpers ---------------------------------
def _split_heads(t, *, num_heads, dh, seq_len, tb, head_layout):
    """(tb*N, dim) -> (H*tb, N, dh), head-major over the batch axis.

    Matches torch.cat(t.chunk(num_heads, -1), 0) in the reference module.
    """
    if head_layout == "einshape":
        t = t.reshape(tb * seq_len, num_heads, dh)
        t = pltpu.einshape("mhd->hmd", t)          # one structured relayout
        return t.reshape(num_heads * tb, seq_len, dh)
    # "slice" layout: per-head lane slices + axis-0 concat (proven lowering).
    return jnp.concatenate(
        [t[:, j * dh:(j + 1) * dh].reshape(tb, seq_len, dh)
         for j in range(num_heads)],
        axis=0)


def _merge_heads(av, *, num_heads, dh, dim, seq_len, tb, head_layout):
    """(H*tb, N, dh) -> (tb*N, dim): concat heads back along the feature axis."""
    if head_layout == "einshape":
        av = av.reshape(num_heads, tb * seq_len, dh)
        av = pltpu.einshape("hmd->mhd", av)        # one structured relayout
        return av.reshape(tb * seq_len, dim)
    return jnp.concatenate(
        [av[j * tb:(j + 1) * tb] for j in range(num_heads)],
        axis=-1).reshape(tb * seq_len, dim)


def _sab_block(h, wqkv, bqkv, wo, bo, *, num_heads, dim, seq_len, tb,
               mm_dtype, head_layout):
    """One SAB / MAB(X, X) block on a (tb*N, Din) VMEM-resident activation."""
    dh = dim // num_heads
    # NOTE: the reference MultiCompat scales by 1/sqrt(dim) (the FULL dim), not
    # 1/sqrt(dim/num_heads).  This is intentional -- do not "fix" it.
    scale = 1.0 / math.sqrt(dim)

    # Fused Q|K|V projection: one wide MXU pass, f32 accumulation.
    qkv = jnp.dot(h.astype(mm_dtype), wqkv.astype(mm_dtype),
                  preferred_element_type=jnp.float32) + bqkv
    q = qkv[:, 0 * dim:1 * dim]                    # (tb*N, dim)
    k = qkv[:, 1 * dim:2 * dim]
    v = qkv[:, 2 * dim:3 * dim]

    qh = _split_heads(q, num_heads=num_heads, dh=dh, seq_len=seq_len, tb=tb,
                      head_layout=head_layout)
    kh = _split_heads(k, num_heads=num_heads, dh=dh, seq_len=seq_len, tb=tb,
                      head_layout=head_layout)
    vh = _split_heads(v, num_heads=num_heads, dh=dh, seq_len=seq_len, tb=tb,
                      head_layout=head_layout)

    # Head-batched attention: single-batch-dim einsums, one softmax for all heads.
    logits = jnp.einsum("bnd,bmd->bnm", qh.astype(mm_dtype), kh.astype(mm_dtype),
                        preferred_element_type=jnp.float32) * scale
    logits = logits - jnp.max(logits, axis=-1, keepdims=True)
    e = jnp.exp(logits)
    # Exact division (NOT pl.reciprocal(approx=True)): the denominator is a tiny
    # fraction of the work and exact keeps parity with the PyTorch reference
    # across deep stacks.
    p = e / jnp.sum(e, axis=-1, keepdims=True)
    av = jnp.einsum("bnm,bmd->bnd", p.astype(mm_dtype), vh.astype(mm_dtype),
                    preferred_element_type=jnp.float32)        # (H*tb, N, dh)

    attn = _merge_heads(av, num_heads=num_heads, dh=dh, dim=dim,
                        seq_len=seq_len, tb=tb, head_layout=head_layout)

    o = q + attn                                   # ln1 = Identity, dropout = Identity
    ff = jnp.dot(o.astype(mm_dtype), wo.astype(mm_dtype),
                 preferred_element_type=jnp.float32) + bo
    return o + jnp.maximum(ff, 0.0)                # ln2 = Identity


def _stacked_sab_kernel(x_ref, *refs, num_blocks, num_heads, dim, seq_len, tb,
                        mm_dtype, head_layout, unroll_blocks):
    """Full StackedSAB forward for one batch chunk of `tb` elements.

    refs = [wqkv0, bqkv0, wo0, bo0,
            (wqkv_rest, bqkv_rest, wo_rest, bo_rest if num_blocks > 1),
            o_ref]
    """
    o_ref = refs[-1]
    blk = functools.partial(_sab_block, num_heads=num_heads, dim=dim,
                            seq_len=seq_len, tb=tb, mm_dtype=mm_dtype,
                            head_layout=head_layout)

    # Block 0 (its Din may differ from dim).  The activation stays resident in
    # vregs/VMEM for the whole stack -- no HBM round trip between blocks.
    h = x_ref[...].astype(jnp.float32).reshape(tb * seq_len, -1)
    h = blk(h, refs[0][...], refs[1][...], refs[2][...], refs[3][...])

    if num_blocks > 1:
        wqkv_r, bqkv_r, wo_r, bo_r = refs[4], refs[5], refs[6], refs[7]
        if unroll_blocks:
            # Small stacks: static unroll (simple, no dynamic weight indexing).
            for i in range(num_blocks - 1):
                h = blk(h, wqkv_r[i], bqkv_r[i], wo_r[i], bo_r[i])
        else:
            # Deep stacks: fori_loop bounds vreg live ranges / code size.
            def body(i, hh):
                return blk(hh, wqkv_r[i], bqkv_r[i], wo_r[i], bo_r[i])
            h = jax.lax.fori_loop(0, num_blocks - 1, body, h)

    # Direct (tb, N, dim) store.  The old per-row lane-packing concat loop was
    # dropped: for dim >= 128 the block is already lane-dense, and below that the
    # in-kernel relayout costs more than the masked sub-128-lane stores it saves.
    o_ref[...] = h.reshape(tb, seq_len, dim).astype(o_ref.dtype)


# ----------------------------- host-side wrapper -----------------------------
def _pack_block(p):
    wqkv = jnp.concatenate([p["wq"], p["wk"], p["wv"]], axis=1)    # (Din, 3*dim)
    bqkv = jnp.concatenate([p["bq"], p["bk"], p["bv"]])[None, :]   # (1, 3*dim)
    return wqkv, bqkv, p["wo"], p["bo"][None, :]


def _const_index_map(ndim):
    zeros = (0,) * ndim

    def index_map(b):
        return zeros

    return index_map


def _const_spec(arr, buffered):
    if buffered is None:
        return pl.BlockSpec(arr.shape, _const_index_map(arr.ndim))
    return pl.BlockSpec(arr.shape, _const_index_map(arr.ndim),
                        pipeline_mode=buffered)


def _stacked_sab_pallas(x, blocks, *, num_heads, head_layout, matmul_dtype):
    B, N, dim_in = x.shape
    dim = blocks[0]["wq"].shape[1]
    nb = len(blocks)
    assert dim % num_heads == 0

    if matmul_dtype is None:
        # bf16 MXU operands only pay off at larger dim (v6e/v7x bf16-native MXU);
        # keep f32 at small dim for exact parity with the reference.
        matmul_dtype = jnp.bfloat16 if dim >= 256 else jnp.float32

    # --- grid / batch-chunk selection ---------------------------------------
    # Split the batch over the grid ONLY when (a) the chip has 2 TensorCores
    # (v7x megacore) and (b) each chunk still feeds the MXU with >= 256 rows.
    # v5e/v6e have a single TC, so a >1 grid there would just be a serial loop
    # paying ~0.35 us/step and halving the matmul M dimension.
    num_tc = _num_tensorcores()
    if num_tc >= 2 and B % 2 == 0 and (B // 2) * N >= 256:
        tb = B // 2
    else:
        tb = B
    grid = (B // tb,)

    # --- host-side weight packing (tiny, one-off) ----------------------------
    # Block 0 separate (different Din); blocks 1..L-1 stacked into 4 arrays.
    weights = list(_pack_block(blocks[0]))
    if nb > 1:
        rest = [_pack_block(p) for p in blocks[1:]]
        weights += [jnp.stack([r[j] for r in rest]) for j in range(4)]

    weight_bytes = sum(int(a.size) * a.dtype.itemsize for a in weights)
    # Constant-index weights are never re-fetched across the grid; single-buffer
    # them when they are big enough to matter for VMEM (v7x: 64 MiB physical).
    buffered = pl.Buffered(1) if weight_bytes > (2 << 20) else None
    weight_specs = [_const_spec(a, buffered) for a in weights]

    unroll_blocks = (nb - 1) <= 4

    kernel = functools.partial(
        _stacked_sab_kernel,
        num_blocks=nb, num_heads=num_heads, dim=dim, seq_len=N, tb=tb,
        mm_dtype=matmul_dtype, head_layout=head_layout,
        unroll_blocks=unroll_blocks)

    # --- VMEM budget (explicit, derived from the working set) ----------------
    act_bytes = 4 * (tb * N * (max(dim_in, dim) + 9 * dim)
                     + 3 * num_heads * tb * N * N)               # qkv/o/ff + logits
    io_bytes = 4 * 2 * (tb * N * dim_in + tb * N * dim)          # dbl-buffered x/out
    wbuf_bytes = weight_bytes * (1 if buffered is not None else 2)
    working_set = io_bytes + wbuf_bytes + act_bytes
    vmem_limit = int(min(max(2 * working_set, 32 * 2 ** 20),
                         int(0.85 * _vmem_capacity_bytes())))

    # --- advisory cost estimate for the XLA scheduler ------------------------
    flops = 0
    for p in blocks:
        din = p["wq"].shape[0]
        flops += B * (2 * N * din * 3 * dim       # fused QKV projection
                      + 4 * N * N * dim           # logits + A @ V
                      + 2 * N * dim * dim)        # output projection
    cost = pl.CostEstimate(
        flops=int(flops),
        transcendentals=int(B * nb * num_heads * N * N),
        bytes_accessed=int(4 * (x.size + B * N * dim) + weight_bytes))

    out = pl.pallas_call(
        kernel,
        out_shape=jax.ShapeDtypeStruct((B, N, dim), x.dtype),
        grid_spec=pltpu.PrefetchScalarGridSpec(
            num_scalar_prefetch=0,
            grid=grid,
            in_specs=[pl.BlockSpec((tb, N, dim_in), lambda b: (b, 0, 0))]
                     + weight_specs,
            out_specs=pl.BlockSpec((tb, N, dim), lambda b: (b, 0, 0)),
        ),
        compiler_params=pltpu.CompilerParams(
            dimension_semantics=("parallel",) if grid[0] > 1 else ("arbitrary",),
            vmem_limit_bytes=vmem_limit),
        cost_estimate=cost,
    )(x, *weights)
    return out


def stacked_sab_forward(x, blocks, *, num_heads, head_layout="auto",
                        matmul_dtype=None):
    """StackedSAB forward. x: (B, N, dim_X) -> (B, N, dim)."""
    if head_layout != "auto":
        return _stacked_sab_pallas(x, blocks, num_heads=num_heads,
                                   head_layout=head_layout,
                                   matmul_dtype=matmul_dtype)
    try:
        # Preferred layout: reshape + pltpu.einshape head split/merge (2 relayouts
        # per tensor per block instead of 12 lane slices + 4 concats).
        out = _stacked_sab_pallas(x, blocks, num_heads=num_heads,
                                  head_layout="einshape",
                                  matmul_dtype=matmul_dtype)
        return jax.block_until_ready(out)
    except Exception:
        # Robust fallback: per-head slice/concat layout (proven lowering) in case
        # this jax/Mosaic version rejects the einshape/reshape relayout path.
        out = _stacked_sab_pallas(x, blocks, num_heads=num_heads,
                                  head_layout="slice",
                                  matmul_dtype=matmul_dtype)
        return jax.block_until_ready(out)


# ----------------------------- init & reference ------------------------------
def init_linear(key, din, dout):
    """Deterministic PyTorch-like uniform init; weight returned as (din, dout)."""
    kw, kb = jax.random.split(key)
    bound = 1.0 / math.sqrt(din)
    w = jax.random.uniform(kw, (din, dout), jnp.float32, -bound, bound)
    b = jax.random.uniform(kb, (dout,), jnp.float32, -bound, bound)
    return w, b


def init_stacked_sab(key, dim_X, dim, num_blocks):
    blocks = []
    for i in range(num_blocks):
        din = dim_X if i == 0 else dim
        key, k1, k2, k3, k4 = jax.random.split(key, 5)
        wq, bq = init_linear(k1, din, dim)
        wk, bk = init_linear(k2, din, dim)
        wv, bv = init_linear(k3, din, dim)
        wo, bo = init_linear(k4, dim, dim)
        blocks.append(dict(wq=wq, bq=bq, wk=wk, bk=bk, wv=wv, bv=bv,
                           wo=wo, bo=bo))
    return blocks


# --- pure-JAX reference (mirrors the PyTorch forward exactly) -----------------
def mab_ref(x, p, num_heads):
    q = x @ p["wq"] + p["bq"]
    k = x @ p["wk"] + p["bk"]
    v = x @ p["wv"] + p["bv"]
    dim = q.shape[-1]
    dh = dim // num_heads
    # torch.cat(chunk(heads, -1), 0): stack heads along the batch dim
    q_ = jnp.concatenate([q[..., h * dh:(h + 1) * dh] for h in range(num_heads)], 0)
    k_ = jnp.concatenate([k[..., h * dh:(h + 1) * dh] for h in range(num_heads)], 0)
    v_ = jnp.concatenate([v[..., h * dh:(h + 1) * dh] for h in range(num_heads)], 0)
    logits = jnp.einsum("bnd,bmd->bnm", q_, k_) / math.sqrt(dim)
    a = jax.nn.softmax(logits, axis=-1)
    av = jnp.einsum("bnm,bmd->bnd", a, v_)
    B = x.shape[0]
    attn = jnp.concatenate([av[h * B:(h + 1) * B] for h in range(num_heads)], -1)
    o = q + attn
    o = o + jax.nn.relu(o @ p["wo"] + p["bo"])
    return o


def stacked_sab_ref(x, blocks, num_heads):
    for p in blocks:
        x = mab_ref(x, p, num_heads)
    return x
# ------------------------------------------------------------------------------


if __name__ == "__main__":
    # Small, deterministic example: StackedSAB(dim_X=16, dim=32, num_blocks=2)
    B, N = 2, 8
    dim_X, dim, num_blocks, num_heads = 16, 32, 2, 4

    key = jax.random.PRNGKey(0)
    key, kx = jax.random.split(key)
    x = jax.random.normal(kx, (B, N, dim_X), dtype=jnp.float32)

    blocks = init_stacked_sab(key, dim_X, dim, num_blocks)

    out = stacked_sab_forward(x, blocks, num_heads=num_heads)
    out = jax.block_until_ready(out)

    ref = stacked_sab_ref(x, blocks, num_heads)
    assert out.shape == (B, N, dim)
    # Softmax now uses exact division; remaining tolerance covers the MXU's
    # f32-via-bf16-pass matmul precision vs. the plain-XLA reference ops.
    assert jnp.allclose(out, ref, atol=5e-3, rtol=5e-3), "mismatch vs reference"

    print("KERNEL_OK")
</pallas_src>

<mosaic_0001>
module attributes {stable_mosaic.version = 11 : i64} {
  func.func @_stacked_sab_kernel(%arg0: i32, %arg1: memref<2x8x16xf32, #tpu.memory_space<vmem>>, %arg2: memref<16x96xf32, #tpu.memory_space<vmem>>, %arg3: memref<1x96xf32, #tpu.memory_space<vmem>>, %arg4: memref<32x32xf32, #tpu.memory_space<vmem>>, %arg5: memref<1x32xf32, #tpu.memory_space<vmem>>, %arg6: memref<1x32x96xf32, #tpu.memory_space<vmem>>, %arg7: memref<1x1x96xf32, #tpu.memory_space<vmem>>, %arg8: memref<1x32x32xf32, #tpu.memory_space<vmem>>, %arg9: memref<1x1x32xf32, #tpu.memory_space<vmem>>, %arg10: memref<2x8x32xf32, #tpu.memory_space<vmem>>) attributes {dimension_semantics = [#tpu.dimension_semantics<arbitrary>], iteration_bounds = array<i64: 1>, scalar_prefetch = 0 : i64, scratch_operands = 0 : i64, tpu.core_type = #tpu.core_type<tc>, window_params = [{transform_indices = @transform_0, window_bounds = array<i64: 2, 8, 16>}, {pipeline_mode = #tpu.pipeline_mode<synchronous>, transform_indices = @transform_1, window_bounds = array<i64: 16, 96>}, {pipeline_mode = #tpu.pipeline_mode<synchronous>, transform_indices = @transform_2, window_bounds = array<i64: 1, 96>}, {pipeline_mode = #tpu.pipeline_mode<synchronous>, transform_indices = @transform_3, window_bounds = array<i64: 32, 32>}, {pipeline_mode = #tpu.pipeline_mode<synchronous>, transform_indices = @transform_4, window_bounds = array<i64: 1, 32>}, {pipeline_mode = #tpu.pipeline_mode<synchronous>, transform_indices = @transform_5, window_bounds = array<i64: 1, 32, 96>}, {pipeline_mode = #tpu.pipeline_mode<synchronous>, transform_indices = @transform_6, window_bounds = array<i64: 1, 1, 96>}, {pipeline_mode = #tpu.pipeline_mode<synchronous>, transform_indices = @transform_7, window_bounds = array<i64: 1, 32, 32>}, {pipeline_mode = #tpu.pipeline_mode<synchronous>, transform_indices = @transform_8, window_bounds = array<i64: 1, 1, 32>}, {transform_indices = @transform_9, window_bounds = array<i64: 2, 8, 32>}]} {
    %c0 = arith.constant 0 : index
    %c0_0 = arith.constant 0 : index
    %c0_1 = arith.constant 0 : index
    %0 = vector.load %arg1[%c0, %c0_0, %c0_1] : memref<2x8x16xf32, #tpu.memory_space<vmem>>, vector<2x8x16xf32>
    %1 = vector.shape_cast %0 : vector<2x8x16xf32> to vector<16x16xf32>
    %c0_2 = arith.constant 0 : index
    %c0_3 = arith.constant 0 : index
    %2 = vector.load %arg2[%c0_2, %c0_3] : memref<16x96xf32, #tpu.memory_space<vmem>>, vector<16x96xf32>
    %c0_4 = arith.constant 0 : index
    %c0_5 = arith.constant 0 : index
    %3 = vector.load %arg3[%c0_4, %c0_5] : memref<1x96xf32, #tpu.memory_space<vmem>>, vector<1x96xf32>
    %c0_6 = arith.constant 0 : index
    %c0_7 = arith.constant 0 : index
    %4 = vector.load %arg4[%c0_6, %c0_7] : memref<32x32xf32, #tpu.memory_space<vmem>>, vector<32x32xf32>
    %c0_8 = arith.constant 0 : index
    %c0_9 = arith.constant 0 : index
    %5 = vector.load %arg5[%c0_8, %c0_9] : memref<1x32xf32, #tpu.memory_space<vmem>>, vector<1x32xf32>
    %cst = arith.constant dense<0.000000e+00> : vector<16x96xf32>
    %6 = tpu.matmul %1, %2, %cst {dimension_numbers = #tpu.dot_dimension_numbers<[1], [0], [0], [1], [0, 0, 1, 1], [], []>} : vector<16x16xf32>, vector<16x96xf32>, vector<16x96xf32> -> vector<16x96xf32>
    %7 = vector.broadcast %3 : vector<1x96xf32> to vector<16x96xf32>
    %8 = arith.addf %6, %7 : vector<16x96xf32>
    %9 = vector.extract_strided_slice %8 {offsets = [0, 0], sizes = [16, 32], strides = [1, 1]} : vector<16x96xf32> to vector<16x32xf32>
    %10 = vector.extract_strided_slice %8 {offsets = [0, 32], sizes = [16, 32], strides = [1, 1]} : vector<16x96xf32> to vector<16x32xf32>
    %11 = vector.extract_strided_slice %8 {offsets = [0, 64], sizes = [16, 32], strides = [1, 1]} : vector<16x96xf32> to vector<16x32xf32>
    %12 = vector.shape_cast %9 : vector<16x32xf32> to vector<16x4x8xf32>
    %13 = tpu.transpose %12, [1, 0, 2] : vector<16x4x8xf32> -> vector<4x16x8xf32>
    %14 = vector.shape_cast %13 : vector<4x16x8xf32> to vector<8x8x8xf32>
    %15 = vector.shape_cast %10 : vector<16x32xf32> to vector<16x4x8xf32>
    %16 = tpu.transpose %15, [1, 0, 2] : vector<16x4x8xf32> -> vector<4x16x8xf32>
    %17 = vector.shape_cast %16 : vector<4x16x8xf32> to vector<8x8x8xf32>
    %18 = vector.shape_cast %11 : vector<16x32xf32> to vector<16x4x8xf32>
    %19 = tpu.transpose %18, [1, 0, 2] : vector<16x4x8xf32> -> vector<4x16x8xf32>
    %20 = vector.shape_cast %19 : vector<4x16x8xf32> to vector<8x8x8xf32>
    "tpu.trace_start"() <{level = 10 : i32, message = "bnd,bmd->bnm"}> : () -> ()
    %cst_10 = arith.constant dense<0.000000e+00> : vector<8x8x8xf32>
    %21 = tpu.matmul %14, %17, %cst_10 {dimension_numbers = #tpu.dot_dimension_numbers<[2], [2], [1], [1], [0, 0, 0, 1, 1, 1], [0], [0]>} : vector<8x8x8xf32>, vector<8x8x8xf32>, vector<8x8x8xf32> -> vector<8x8x8xf32>
    "tpu.trace_stop"() : () -> ()
    %cst_11 = arith.constant 0.176776692 : f32
    %22 = vector.broadcast %cst_11 : f32 to vector<8x8x8xf32>
    %23 = arith.mulf %21, %22 : vector<8x8x8xf32>
    %cst_12 = arith.constant dense<0xFF800000> : vector<8x8xf32>
    %24 = vector.multi_reduction <maximumf>, %23, %cst_12 [2] : vector<8x8x8xf32> to vector<8x8xf32>
    %25 = vector.shape_cast %24 : vector<8x8xf32> to vector<8x8x1xf32>
    %26 = vector.broadcast %25 : vector<8x8x1xf32> to vector<8x8x8xf32>
    %27 = arith.subf %23, %26 : vector<8x8x8xf32>
    %28 = math.exp %27 : vector<8x8x8xf32>
    %cst_13 = arith.constant dense<0.000000e+00> : vector<8x8xf32>
    %29 = vector.multi_reduction <add>, %28, %cst_13 [2] : vector<8x8x8xf32> to vector<8x8xf32>
    %30 = vector.shape_cast %29 : vector<8x8xf32> to vector<8x8x1xf32>
    %31 = vector.broadcast %30 : vector<8x8x1xf32> to vector<8x8x8xf32>
    %32 = arith.divf %28, %31 : vector<8x8x8xf32>
    "tpu.trace_start"() <{level = 10 : i32, message = "bnm,bmd->bnd"}> : () -> ()
    %cst_14 = arith.constant dense<0.000000e+00> : vector<8x8x8xf32>
    %33 = tpu.matmul %32, %20, %cst_14 {dimension_numbers = #tpu.dot_dimension_numbers<[2], [1], [1], [2], [0, 0, 0, 1, 1, 2], [0], [0]>} : vector<8x8x8xf32>, vector<8x8x8xf32>, vector<8x8x8xf32> -> vector<8x8x8xf32>
    "tpu.trace_stop"() : () -> ()
    %34 = vector.shape_cast %33 : vector<8x8x8xf32> to vector<4x16x8xf32>
    %35 = tpu.transpose %34, [1, 0, 2] : vector<4x16x8xf32> -> vector<16x4x8xf32>
    %36 = vector.shape_cast %35 : vector<16x4x8xf32> to vector<16x32xf32>
    %37 = arith.addf %9, %36 : vector<16x32xf32>
    %cst_15 = arith.constant dense<0.000000e+00> : vector<16x32xf32>
    %38 = tpu.matmul %37, %4, %cst_15 {dimension_numbers = #tpu.dot_dimension_numbers<[1], [0], [0], [1], [0, 0, 1, 1], [], []>} : vector<16x32xf32>, vector<32x32xf32>, vector<16x32xf32> -> vector<16x32xf32>
    %39 = vector.broadcast %5 : vector<1x32xf32> to vector<16x32xf32>
    %40 = arith.addf %38, %39 : vector<16x32xf32>
    %cst_16 = arith.constant 0.000000e+00 : f32
    %41 = vector.broadcast %cst_16 : f32 to vector<16x32xf32>
    %42 = arith.maximumf %40, %41 : vector<16x32xf32>
    %43 = arith.addf %37, %42 : vector<16x32xf32>
    %c0_17 = arith.constant 0 : index
    %c0_18 = arith.constant 0 : index
    %c0_19 = arith.constant 0 : index
    %44 = vector.load %arg6[%c0_17, %c0_18, %c0_19] : memref<1x32x96xf32, #tpu.memory_space<vmem>>, vector<1x32x96xf32>
    %45 = vector.shape_cast %44 : vector<1x32x96xf32> to vector<32x96xf32>
    %c0_20 = arith.constant 0 : index
    %c0_21 = arith.constant 0 : index
    %c0_22 = arith.constant 0 : index
    %46 = vector.load %arg7[%c0_20, %c0_21, %c0_22] : memref<1x1x96xf32, #tpu.memory_space<vmem>>, vector<1x1x96xf32>
    %47 = vector.shape_cast %46 : vector<1x1x96xf32> to vector<1x96xf32>
    %c0_23 = arith.constant 0 : index
    %c0_24 = arith.constant 0 : index
    %c0_25 = arith.constant 0 : index
    %48 = vector.load %arg8[%c0_23, %c0_24, %c0_25] : memref<1x32x32xf32, #tpu.memory_space<vmem>>, vector<1x32x32xf32>
    %49 = vector.shape_cast %48 : vector<1x32x32xf32> to vector<32x32xf32>
    %c0_26 = arith.constant 0 : index
    %c0_27 = arith.constant 0 : index
    %c0_28 = arith.constant 0 : index
    %50 = vector.load %arg9[%c0_26, %c0_27, %c0_28] : memref<1x1x32xf32, #tpu.memory_space<vmem>>, vector<1x1x32xf32>
    %51 = vector.shape_cast %50 : vector<1x1x32xf32> to vector<1x32xf32>
    %cst_29 = arith.constant dense<0.000000e+00> : vector<16x96xf32>
    %52 = tpu.matmul %43, %45, %cst_29 {dimension_numbers = #tpu.dot_dimension_numbers<[1], [0], [0], [1], [0, 0, 1, 1], [], []>} : vector<16x32xf32>, vector<32x96xf32>, vector<16x96xf32> -> vector<16x96xf32>
    %53 = vector.broadcast %47 : vector<1x96xf32> to vector<16x96xf32>
    %54 = arith.addf %52, %53 : vector<16x96xf32>
    %55 = vector.extract_strided_slice %54 {offsets = [0, 0], sizes = [16, 32], strides = [1, 1]} : vector<16x96xf32> to vector<16x32xf32>
    %56 = vector.extract_strided_slice %54 {offsets = [0, 32], sizes = [16, 32], strides = [1, 1]} : vector<16x96xf32> to vector<16x32xf32>
    %57 = vector.extract_strided_slice %54 {offsets = [0, 64], sizes = [16, 32], strides = [1, 1]} : vector<16x96xf32> to vector<16x32xf32>
    %58 = vector.shape_cast %55 : vector<16x32xf32> to vector<16x4x8xf32>
    %59 = tpu.transpose %58, [1, 0, 2] : vector<16x4x8xf32> -> vector<4x16x8xf32>
    %60 = vector.shape_cast %59 : vector<4x16x8xf32> to vector<8x8x8xf32>
    %61 = vector.shape_cast %56 : vector<16x32xf32> to vector<16x4x8xf32>
    %62 = tpu.transpose %61, [1, 0, 2] : vector<16x4x8xf32> -> vector<4x16x8xf32>
    %63 = vector.shape_cast %62 : vector<4x16x8xf32> to vector<8x8x8xf32>
    %64 = vector.shape_cast %57 : vector<16x32xf32> to vector<16x4x8xf32>
    %65 = tpu.transpose %64, [1, 0, 2] : vector<16x4x8xf32> -> vector<4x16x8xf32>
    %66 = vector.shape_cast %65 : vector<4x16x8xf32> to vector<8x8x8xf32>
    "tpu.trace_start"() <{level = 10 : i32, message = "bnd,bmd->bnm"}> : () -> ()
    %cst_30 = arith.constant dense<0.000000e+00> : vector<8x8x8xf32>
    %67 = tpu.matmul %60, %63, %cst_30 {dimension_numbers = #tpu.dot_dimension_numbers<[2], [2], [1], [1], [0, 0, 0, 1, 1, 1], [0], [0]>} : vector<8x8x8xf32>, vector<8x8x8xf32>, vector<8x8x8xf32> -> vector<8x8x8xf32>
    "tpu.trace_stop"() : () -> ()
    %cst_31 = arith.constant 0.176776692 : f32
    %68 = vector.broadcast %cst_31 : f32 to vector<8x8x8xf32>
    %69 = arith.mulf %67, %68 : vector<8x8x8xf32>
    %cst_32 = arith.constant dense<0xFF800000> : vector<8x8xf32>
    %70 = vector.multi_reduction <maximumf>, %69, %cst_32 [2] : vector<8x8x8xf32> to vector<8x8xf32>
    %71 = vector.shape_cast %70 : vector<8x8xf32> to vector<8x8x1xf32>
    %72 = vector.broadcast %71 : vector<8x8x1xf32> to vector<8x8x8xf32>
    %73 = arith.subf %69, %72 : vector<8x8x8xf32>
    %74 = math.exp %73 : vector<8x8x8xf32>
    %cst_33 = arith.constant dense<0.000000e+00> : vector<8x8xf32>
    %75 = vector.multi_reduction <add>, %74, %cst_33 [2] : vector<8x8x8xf32> to vector<8x8xf32>
    %76 = vector.shape_cast %75 : vector<8x8xf32> to vector<8x8x1xf32>
    %77 = vector.broadcast %76 : vector<8x8x1xf32> to vector<8x8x8xf32>
    %78 = arith.divf %74, %77 : vector<8x8x8xf32>
    "tpu.trace_start"() <{level = 10 : i32, message = "bnm,bmd->bnd"}> : () -> ()
    %cst_34 = arith.constant dense<0.000000e+00> : vector<8x8x8xf32>
    %79 = tpu.matmul %78, %66, %cst_34 {dimension_numbers = #tpu.dot_dimension_numbers<[2], [1], [1], [2], [0, 0, 0, 1, 1, 2], [0], [0]>} : vector<8x8x8xf32>, vector<8x8x8xf32>, vector<8x8x8xf32> -> vector<8x8x8xf32>
    "tpu.trace_stop"() : () -> ()
    %80 = vector.shape_cast %79 : vector<8x8x8xf32> to vector<4x16x8xf32>
    %81 = tpu.transpose %80, [1, 0, 2] : vector<4x16x8xf32> -> vector<16x4x8xf32>
    %82 = vector.shape_cast %81 : vector<16x4x8xf32> to vector<16x32xf32>
    %83 = arith.addf %55, %82 : vector<16x32xf32>
    %cst_35 = arith.constant dense<0.000000e+00> : vector<16x32xf32>
    %84 = tpu.matmul %83, %49, %cst_35 {dimension_numbers = #tpu.dot_dimension_numbers<[1], [0], [0], [1], [0, 0, 1, 1], [], []>} : vector<16x32xf32>, vector<32x32xf32>, vector<16x32xf32> -> vector<16x32xf32>
    %85 = vector.broadcast %51 : vector<1x32xf32> to vector<16x32xf32>
    %86 = arith.addf %84, %85 : vector<16x32xf32>
    %cst_36 = arith.constant 0.000000e+00 : f32
    %87 = vector.broadcast %cst_36 : f32 to vector<16x32xf32>
    %88 = arith.maximumf %86, %87 : vector<16x32xf32>
    %89 = arith.addf %83, %88 : vector<16x32xf32>
    %90 = vector.shape_cast %89 : vector<16x32xf32> to vector<2x8x32xf32>
    %c0_37 = arith.constant 0 : index
    %c0_38 = arith.constant 0 : index
    %c0_39 = arith.constant 0 : index
    %91 = vector.load %arg10[%c0_37, %c0_38, %c0_39] : memref<2x8x32xf32, #tpu.memory_space<vmem>>, vector<2x8x32xf32>
    tpu.vector_store %arg10[%c0_37, %c0_38, %c0_39], %90 {strides = array<i32>} : memref<2x8x32xf32, #tpu.memory_space<vmem>>, vector<2x8x32xf32>,
    return
  }
  func.func @transform_0(%arg0: i32) -> (i32, i32, i32) {
    %c0_i32 = arith.constant 0 : i32
    %c0_i32_0 = arith.constant 0 : i32
    %c0_i32_1 = arith.constant 0 : i32
    return %arg0, %c0_i32, %c0_i32_0 : i32, i32, i32
  }
  func.func @transform_1(%arg0: i32) -> (i32, i32) {
    %c0_i32 = arith.constant 0 : i32
    %c0_i32_0 = arith.constant 0 : i32
    %c0_i32_1 = arith.constant 0 : i32
    return %c0_i32, %c0_i32_0 : i32, i32
  }
  func.func @transform_2(%arg0: i32) -> (i32, i32) {
    %c0_i32 = arith.constant 0 : i32
    %c0_i32_0 = arith.constant 0 : i32
    %c0_i32_1 = arith.constant 0 : i32
    return %c0_i32, %c0_i32_0 : i32, i32
  }
  func.func @transform_3(%arg0: i32) -> (i32, i32) {
    %c0_i32 = arith.constant 0 : i32
    %c0_i32_0 = arith.constant 0 : i32
    %c0_i32_1 = arith.constant 0 : i32
    return %c0_i32, %c0_i32_0 : i32, i32
  }
  func.func @transform_4(%arg0: i32) -> (i32, i32) {
    %c0_i32 = arith.constant 0 : i32
    %c0_i32_0 = arith.constant 0 : i32
    %c0_i32_1 = arith.constant 0 : i32
    return %c0_i32, %c0_i32_0 : i32, i32
  }
  func.func @transform_5(%arg0: i32) -> (i32, i32, i32) {
    %c0_i32 = arith.constant 0 : i32
    %c0_i32_0 = arith.constant 0 : i32
    %c0_i32_1 = arith.constant 0 : i32
    %c0_i32_2 = arith.constant 0 : i32
    return %c0_i32, %c0_i32_0, %c0_i32_1 : i32, i32, i32
  }
  func.func @transform_6(%arg0: i32) -> (i32, i32, i32) {
    %c0_i32 = arith.constant 0 : i32
    %c0_i32_0 = arith.constant 0 : i32
    %c0_i32_1 = arith.constant 0 : i32
    %c0_i32_2 = arith.constant 0 : i32
    return %c0_i32, %c0_i32_0, %c0_i32_1 : i32, i32, i32
  }
  func.func @transform_7(%arg0: i32) -> (i32, i32, i32) {
    %c0_i32 = arith.constant 0 : i32
    %c0_i32_0 = arith.constant 0 : i32
    %c0_i32_1 = arith.constant 0 : i32
    %c0_i32_2 = arith.constant 0 : i32
    return %c0_i32, %c0_i32_0, %c0_i32_1 : i32, i32, i32
  }
  func.func @transform_8(%arg0: i32) -> (i32, i32, i32) {
    %c0_i32 = arith.constant 0 : i32
    %c0_i32_0 = arith.constant 0 : i32
    %c0_i32_1 = arith.constant 0 : i32
    %c0_i32_2 = arith.constant 0 : i32
    return %c0_i32, %c0_i32_0, %c0_i32_1 : i32, i32, i32
  }
  func.func @transform_9(%arg0: i32) -> (i32, i32, i32) {
    %c0_i32 = arith.constant 0 : i32
    %c0_i32_0 = arith.constant 0 : i32
    %c0_i32_1 = arith.constant 0 : i32
    return %arg0, %c0_i32, %c0_i32_0 : i32, i32, i32
  }
}

module attributes {stable_mosaic.version = 11 : i64} {
  func.func @_stacked_sab_kernel(%arg0: i32, %arg1: memref<2x8x16xf32, #tpu.memory_space<vmem>>, %arg2: memref<16x96xf32, #tpu.memory_space<vmem>>, %arg3: memref<1x96xf32, #tpu.memory_space<vmem>>, %arg4: memref<32x32xf32, #tpu.memory_space<vmem>>, %arg5: memref<1x32xf32, #tpu.memory_space<vmem>>, %arg6: memref<1x32x96xf32, #tpu.memory_space<vmem>>, %arg7: memref<1x1x96xf32, #tpu.memory_space<vmem>>, %arg8: memref<1x32x32xf32, #tpu.memory_space<vmem>>, %arg9: memref<1x1x32xf32, #tpu.memory_space<vmem>>, %arg10: memref<2x8x32xf32, #tpu.memory_space<vmem>>) attributes {dimension_semantics = [#tpu.dimension_semantics<arbitrary>], iteration_bounds = array<i64: 1>, scalar_prefetch = 0 : i64, scratch_operands = 0 : i64, tpu.core_type = #tpu.core_type<tc>, window_params = [{transform_indices = @transform_0, window_bounds = array<i64: 2, 8, 16>}, {pipeline_mode = #tpu.pipeline_mode<synchronous>, transform_indices = @transform_1, window_bounds = array<i64: 16, 96>}, {pipeline_mode = #tpu.pipeline_mode<synchronous>, transform_indices = @transform_2, window_bounds = array<i64: 1, 96>}, {pipeline_mode = #tpu.pipeline_mode<synchronous>, transform_indices = @transform_3, window_bounds = array<i64: 32, 32>}, {pipeline_mode = #tpu.pipeline_mode<synchronous>, transform_indices = @transform_4, window_bounds = array<i64: 1, 32>}, {pipeline_mode = #tpu.pipeline_mode<synchronous>, transform_indices = @transform_5, window_bounds = array<i64: 1, 32, 96>}, {pipeline_mode = #tpu.pipeline_mode<synchronous>, transform_indices = @transform_6, window_bounds = array<i64: 1, 1, 96>}, {pipeline_mode = #tpu.pipeline_mode<synchronous>, transform_indices = @transform_7, window_bounds = array<i64: 1, 32, 32>}, {pipeline_mode = #tpu.pipeline_mode<synchronous>, transform_indices = @transform_8, window_bounds = array<i64: 1, 1, 32>}, {transform_indices = @transform_9, window_bounds = array<i64: 2, 8, 32>}]} {
    %c0 = arith.constant 0 : index
    %c0_0 = arith.constant 0 : index
    %c0_1 = arith.constant 0 : index
    %0 = vector.load %arg1[%c0, %c0_0, %c0_1] : memref<2x8x16xf32, #tpu.memory_space<vmem>>, vector<2x8x16xf32>
    %1 = vector.shape_cast %0 : vector<2x8x16xf32> to vector<16x16xf32>
    %c0_2 = arith.constant 0 : index
    %c0_3 = arith.constant 0 : index
    %2 = vector.load %arg2[%c0_2, %c0_3] : memref<16x96xf32, #tpu.memory_space<vmem>>, vector<16x96xf32>
    %c0_4 = arith.constant 0 : index
    %c0_5 = arith.constant 0 : index
    %3 = vector.load %arg3[%c0_4, %c0_5] : memref<1x96xf32, #tpu.memory_space<vmem>>, vector<1x96xf32>
    %c0_6 = arith.constant 0 : index
    %c0_7 = arith.constant 0 : index
    %4 = vector.load %arg4[%c0_6, %c0_7] : memref<32x32xf32, #tpu.memory_space<vmem>>, vector<32x32xf32>
    %c0_8 = arith.constant 0 : index
    %c0_9 = arith.constant 0 : index
    %5 = vector.load %arg5[%c0_8, %c0_9] : memref<1x32xf32, #tpu.memory_space<vmem>>, vector<1x32xf32>
    %cst = arith.constant dense<0.000000e+00> : vector<16x96xf32>
    %6 = tpu.matmul %1, %2, %cst {dimension_numbers = #tpu.dot_dimension_numbers<[1], [0], [0], [1], [0, 0, 1, 1], [], []>} : vector<16x16xf32>, vector<16x96xf32>, vector<16x96xf32> -> vector<16x96xf32>
    %7 = vector.broadcast %3 : vector<1x96xf32> to vector<16x96xf32>
    %8 = arith.addf %6, %7 : vector<16x96xf32>
    %9 = vector.extract_strided_slice %8 {offsets = [0, 0], sizes = [16, 32], strides = [1, 1]} : vector<16x96xf32> to vector<16x32xf32>
    %10 = vector.extract_strided_slice %8 {offsets = [0, 32], sizes = [16, 32], strides = [1, 1]} : vector<16x96xf32> to vector<16x32xf32>
    %11 = vector.extract_strided_slice %8 {offsets = [0, 64], sizes = [16, 32], strides = [1, 1]} : vector<16x96xf32> to vector<16x32xf32>
    %12 = vector.extract_strided_slice %9 {offsets = [0, 0], sizes = [16, 8], strides = [1, 1]} : vector<16x32xf32> to vector<16x8xf32>
    %13 = vector.shape_cast %12 : vector<16x8xf32> to vector<2x8x8xf32>
    %14 = vector.extract_strided_slice %9 {offsets = [0, 8], sizes = [16, 8], strides = [1, 1]} : vector<16x32xf32> to vector<16x8xf32>
    %15 = vector.shape_cast %14 : vector<16x8xf32> to vector<2x8x8xf32>
    %16 = vector.extract_strided_slice %9 {offsets = [0, 16], sizes = [16, 8], strides = [1, 1]} : vector<16x32xf32> to vector<16x8xf32>
    %17 = vector.shape_cast %16 : vector<16x8xf32> to vector<2x8x8xf32>
    %18 = vector.extract_strided_slice %9 {offsets = [0, 24], sizes = [16, 8], strides = [1, 1]} : vector<16x32xf32> to vector<16x8xf32>
    %19 = vector.shape_cast %18 : vector<16x8xf32> to vector<2x8x8xf32>
    %20 = tpu.concatenate %13, %15, %17, %19 in 0 : vector<2x8x8xf32>, vector<2x8x8xf32>, vector<2x8x8xf32>, vector<2x8x8xf32> -> vector<8x8x8xf32>
    %21 = vector.extract_strided_slice %10 {offsets = [0, 0], sizes = [16, 8], strides = [1, 1]} : vector<16x32xf32> to vector<16x8xf32>
    %22 = vector.shape_cast %21 : vector<16x8xf32> to vector<2x8x8xf32>
    %23 = vector.extract_strided_slice %10 {offsets = [0, 8], sizes = [16, 8], strides = [1, 1]} : vector<16x32xf32> to vector<16x8xf32>
    %24 = vector.shape_cast %23 : vector<16x8xf32> to vector<2x8x8xf32>
    %25 = vector.extract_strided_slice %10 {offsets = [0, 16], sizes = [16, 8], strides = [1, 1]} : vector<16x32xf32> to vector<16x8xf32>
    %26 = vector.shape_cast %25 : vector<16x8xf32> to vector<2x8x8xf32>
    %27 = vector.extract_strided_slice %10 {offsets = [0, 24], sizes = [16, 8], strides = [1, 1]} : vector<16x32xf32> to vector<16x8xf32>
    %28 = vector.shape_cast %27 : vector<16x8xf32> to vector<2x8x8xf32>
    %29 = tpu.concatenate %22, %24, %26, %28 in 0 : vector<2x8x8xf32>, vector<2x8x8xf32>, vector<2x8x8xf32>, vector<2x8x8xf32> -> vector<8x8x8xf32>
    %30 = vector.extract_strided_slice %11 {offsets = [0, 0], sizes = [16, 8], strides = [1, 1]} : vector<16x32xf32> to vector<16x8xf32>
    %31 = vector.shape_cast %30 : vector<16x8xf32> to vector<2x8x8xf32>
    %32 = vector.extract_strided_slice %11 {offsets = [0, 8], sizes = [16, 8], strides = [1, 1]} : vector<16x32xf32> to vector<16x8xf32>
    %33 = vector.shape_cast %32 : vector<16x8xf32> to vector<2x8x8xf32>
    %34 = vector.extract_strided_slice %11 {offsets = [0, 16], sizes = [16, 8], strides = [1, 1]} : vector<16x32xf32> to vector<16x8xf32>
    %35 = vector.shape_cast %34 : vector<16x8xf32> to vector<2x8x8xf32>
    %36 = vector.extract_strided_slice %11 {offsets = [0, 24], sizes = [16, 8], strides = [1, 1]} : vector<16x32xf32> to vector<16x8xf32>
    %37 = vector.shape_cast %36 : vector<16x8xf32> to vector<2x8x8xf32>
    %38 = tpu.concatenate %31, %33, %35, %37 in 0 : vector<2x8x8xf32>, vector<2x8x8xf32>, vector<2x8x8xf32>, vector<2x8x8xf32> -> vector<8x8x8xf32>
    "tpu.trace_start"() <{level = 10 : i32, message = "bnd,bmd->bnm"}> : () -> ()
    %cst_10 = arith.constant dense<0.000000e+00> : vector<8x8x8xf32>
    %39 = tpu.matmul %20, %29, %cst_10 {dimension_numbers = #tpu.dot_dimension_numbers<[2], [2], [1], [1], [0, 0, 0, 1, 1, 1], [0], [0]>} : vector<8x8x8xf32>, vector<8x8x8xf32>, vector<8x8x8xf32> -> vector<8x8x8xf32>
    "tpu.trace_stop"() : () -> ()
    %cst_11 = arith.constant 0.176776692 : f32
    %40 = vector.broadcast %cst_11 : f32 to vector<8x8x8xf32>
    %41 = arith.mulf %39, %40 : vector<8x8x8xf32>
    %cst_12 = arith.constant dense<0xFF800000> : vector<8x8xf32>
    %42 = vector.multi_reduction <maximumf>, %41, %cst_12 [2] : vector<8x8x8xf32> to vector<8x8xf32>
    %43 = vector.shape_cast %42 : vector<8x8xf32> to vector<8x8x1xf32>
    %44 = vector.broadcast %43 : vector<8x8x1xf32> to vector<8x8x8xf32>
    %45 = arith.subf %41, %44 : vector<8x8x8xf32>
    %46 = math.exp %45 : vector<8x8x8xf32>
    %cst_13 = arith.constant dense<0.000000e+00> : vector<8x8xf32>
    %47 = vector.multi_reduction <add>, %46, %cst_13 [2] : vector<8x8x8xf32> to vector<8x8xf32>
    %48 = vector.shape_cast %47 : vector<8x8xf32> to vector<8x8x1xf32>
    %49 = vector.broadcast %48 : vector<8x8x1xf32> to vector<8x8x8xf32>
    %50 = arith.divf %46, %49 : vector<8x8x8xf32>
    "tpu.trace_start"() <{level = 10 : i32, message = "bnm,bmd->bnd"}> : () -> ()
    %cst_14 = arith.constant dense<0.000000e+00> : vector<8x8x8xf32>
    %51 = tpu.matmul %50, %38, %cst_14 {dimension_numbers = #tpu.dot_dimension_numbers<[2], [1], [1], [2], [0, 0, 0, 1, 1, 2], [0], [0]>} : vector<8x8x8xf32>, vector<8x8x8xf32>, vector<8x8x8xf32> -> vector<8x8x8xf32>
    "tpu.trace_stop"() : () -> ()
    %52 = vector.extract_strided_slice %51 {offsets = [0, 0, 0], sizes = [2, 8, 8], strides = [1, 1, 1]} : vector<8x8x8xf32> to vector<2x8x8xf32>
    %53 = vector.extract_strided_slice %51 {offsets = [2, 0, 0], sizes = [2, 8, 8], strides = [1, 1, 1]} : vector<8x8x8xf32> to vector<2x8x8xf32>
    %54 = vector.extract_strided_slice %51 {offsets = [4, 0, 0], sizes = [2, 8, 8], strides = [1, 1, 1]} : vector<8x8x8xf32> to vector<2x8x8xf32>
    %55 = vector.extract_strided_slice %51 {offsets = [6, 0, 0], sizes = [2, 8, 8], strides = [1, 1, 1]} : vector<8x8x8xf32> to vector<2x8x8xf32>
    %56 = tpu.concatenate %52, %53, %54, %55 in 2 : vector<2x8x8xf32>, vector<2x8x8xf32>, vector<2x8x8xf32>, vector<2x8x8xf32> -> vector<2x8x32xf32>
    %57 = vector.shape_cast %56 : vector<2x8x32xf32> to vector<16x32xf32>
    %58 = arith.addf %9, %57 : vector<16x32xf32>
    %cst_15 = arith.constant dense<0.000000e+00> : vector<16x32xf32>
    %59 = tpu.matmul %58, %4, %cst_15 {dimension_numbers = #tpu.dot_dimension_numbers<[1], [0], [0], [1], [0, 0, 1, 1], [], []>} : vector<16x32xf32>, vector<32x32xf32>, vector<16x32xf32> -> vector<16x32xf32>
    %60 = vector.broadcast %5 : vector<1x32xf32> to vector<16x32xf32>
    %61 = arith.addf %59, %60 : vector<16x32xf32>
    %cst_16 = arith.constant 0.000000e+00 : f32
    %62 = vector.broadcast %cst_16 : f32 to vector<16x32xf32>
    %63 = arith.maximumf %61, %62 : vector<16x32xf32>
    %64 = arith.addf %58, %63 : vector<16x32xf32>
    %c0_17 = arith.constant 0 : index
    %c0_18 = arith.constant 0 : index
    %c0_19 = arith.constant 0 : index
    %65 = vector.load %arg6[%c0_17, %c0_18, %c0_19] : memref<1x32x96xf32, #tpu.memory_space<vmem>>, vector<1x32x96xf32>
    %66 = vector.shape_cast %65 : vector<1x32x96xf32> to vector<32x96xf32>
    %c0_20 = arith.constant 0 : index
    %c0_21 = arith.constant 0 : index
    %c0_22 = arith.constant 0 : index
    %67 = vector.load %arg7[%c0_20, %c0_21, %c0_22] : memref<1x1x96xf32, #tpu.memory_space<vmem>>, vector<1x1x96xf32>
    %68 = vector.shape_cast %67 : vector<1x1x96xf32> to vector<1x96xf32>
    %c0_23 = arith.constant 0 : index
    %c0_24 = arith.constant 0 : index
    %c0_25 = arith.constant 0 : index
    %69 = vector.load %arg8[%c0_23, %c0_24, %c0_25] : memref<1x32x32xf32, #tpu.memory_space<vmem>>, vector<1x32x32xf32>
    %70 = vector.shape_cast %69 : vector<1x32x32xf32> to vector<32x32xf32>
    %c0_26 = arith.constant 0 : index
    %c0_27 = arith.constant 0 : index
    %c0_28 = arith.constant 0 : index
    %71 = vector.load %arg9[%c0_26, %c0_27, %c0_28] : memref<1x1x32xf32, #tpu.memory_space<vmem>>, vector<1x1x32xf32>
    %72 = vector.shape_cast %71 : vector<1x1x32xf32> to vector<1x32xf32>
    %cst_29 = arith.constant dense<0.000000e+00> : vector<16x96xf32>
    %73 = tpu.matmul %64, %66, %cst_29 {dimension_numbers = #tpu.dot_dimension_numbers<[1], [0], [0], [1], [0, 0, 1, 1], [], []>} : vector<16x32xf32>, vector<32x96xf32>, vector<16x96xf32> -> vector<16x96xf32>
    %74 = vector.broadcast %68 : vector<1x96xf32> to vector<16x96xf32>
    %75 = arith.addf %73, %74 : vector<16x96xf32>
    %76 = vector.extract_strided_slice %75 {offsets = [0, 0], sizes = [16, 32], strides = [1, 1]} : vector<16x96xf32> to vector<16x32xf32>
    %77 = vector.extract_strided_slice %75 {offsets = [0, 32], sizes = [16, 32], strides = [1, 1]} : vector<16x96xf32> to vector<16x32xf32>
    %78 = vector.extract_strided_slice %75 {offsets = [0, 64], sizes = [16, 32], strides = [1, 1]} : vector<16x96xf32> to vector<16x32xf32>
    %79 = vector.extract_strided_slice %76 {offsets = [0, 0], sizes = [16, 8], strides = [1, 1]} : vector<16x32xf32> to vector<16x8xf32>
    %80 = vector.shape_cast %79 : vector<16x8xf32> to vector<2x8x8xf32>
    %81 = vector.extract_strided_slice %76 {offsets = [0, 8], sizes = [16, 8], strides = [1, 1]} : vector<16x32xf32> to vector<16x8xf32>
    %82 = vector.shape_cast %81 : vector<16x8xf32> to vector<2x8x8xf32>
    %83 = vector.extract_strided_slice %76 {offsets = [0, 16], sizes = [16, 8], strides = [1, 1]} : vector<16x32xf32> to vector<16x8xf32>
    %84 = vector.shape_cast %83 : vector<16x8xf32> to vector<2x8x8xf32>
    %85 = vector.extract_strided_slice %76 {offsets = [0, 24], sizes = [16, 8], strides = [1, 1]} : vector<16x32xf32> to vector<16x8xf32>
    %86 = vector.shape_cast %85 : vector<16x8xf32> to vector<2x8x8xf32>
    %87 = tpu.concatenate %80, %82, %84, %86 in 0 : vector<2x8x8xf32>, vector<2x8x8xf32>, vector<2x8x8xf32>, vector<2x8x8xf32> -> vector<8x8x8xf32>
    %88 = vector.extract_strided_slice %77 {offsets = [0, 0], sizes = [16, 8], strides = [1, 1]} : vector<16x32xf32> to vector<16x8xf32>
    %89 = vector.shape_cast %88 : vector<16x8xf32> to vector<2x8x8xf32>
    %90 = vector.extract_strided_slice %77 {offsets = [0, 8], sizes = [16, 8], strides = [1, 1]} : vector<16x32xf32> to vector<16x8xf32>
    %91 = vector.shape_cast %90 : vector<16x8xf32> to vector<2x8x8xf32>
    %92 = vector.extract_strided_slice %77 {offsets = [0, 16], sizes = [16, 8], strides = [1, 1]} : vector<16x32xf32> to vector<16x8xf32>
    %93 = vector.shape_cast %92 : vector<16x8xf32> to vector<2x8x8xf32>
    %94 = vector.extract_strided_slice %77 {offsets = [0, 24], sizes = [16, 8], strides = [1, 1]} : vector<16x32xf32> to vector<16x8xf32>
    %95 = vector.shape_cast %94 : vector<16x8xf32> to vector<2x8x8xf32>
    %96 = tpu.concatenate %89, %91, %93, %95 in 0 : vector<2x8x8xf32>, vector<2x8x8xf32>, vector<2x8x8xf32>, vector<2x8x8xf32> -> vector<8x8x8xf32>
    %97 = vector.extract_strided_slice %78 {offsets = [0, 0], sizes = [16, 8], strides = [1, 1]} : vector<16x32xf32> to vector<16x8xf32>
    %98 = vector.shape_cast %97 : vector<16x8xf32> to vector<2x8x8xf32>
    %99 = vector.extract_strided_slice %78 {offsets = [0, 8], sizes = [16, 8], strides = [1, 1]} : vector<16x32xf32> to vector<16x8xf32>
    %100 = vector.shape_cast %99 : vector<16x8xf32> to vector<2x8x8xf32>
    %101 = vector.extract_strided_slice %78 {offsets = [0, 16], sizes = [16, 8], strides = [1, 1]} : vector<16x32xf32> to vector<16x8xf32>
    %102 = vector.shape_cast %101 : vector<16x8xf32> to vector<2x8x8xf32>
    %103 = vector.extract_strided_slice %78 {offsets = [0, 24], sizes = [16, 8], strides = [1, 1]} : vector<16x32xf32> to vector<16x8xf32>
    %104 = vector.shape_cast %103 : vector<16x8xf32> to vector<2x8x8xf32>
    %105 = tpu.concatenate %98, %100, %102, %104 in 0 : vector<2x8x8xf32>, vector<2x8x8xf32>, vector<2x8x8xf32>, vector<2x8x8xf32> -> vector<8x8x8xf32>
    "tpu.trace_start"() <{level = 10 : i32, message = "bnd,bmd->bnm"}> : () -> ()
    %cst_30 = arith.constant dense<0.000000e+00> : vector<8x8x8xf32>
    %106 = tpu.matmul %87, %96, %cst_30 {dimension_numbers = #tpu.dot_dimension_numbers<[2], [2], [1], [1], [0, 0, 0, 1, 1, 1], [0], [0]>} : vector<8x8x8xf32>, vector<8x8x8xf32>, vector<8x8x8xf32> -> vector<8x8x8xf32>
    "tpu.trace_stop"() : () -> ()
    %cst_31 = arith.constant 0.176776692 : f32
    %107 = vector.broadcast %cst_31 : f32 to vector<8x8x8xf32>
    %108 = arith.mulf %106, %107 : vector<8x8x8xf32>
    %cst_32 = arith.constant dense<0xFF800000> : vector<8x8xf32>
    %109 = vector.multi_reduction <maximumf>, %108, %cst_32 [2] : vector<8x8x8xf32> to vector<8x8xf32>
    %110 = vector.shape_cast %109 : vector<8x8xf32> to vector<8x8x1xf32>
    %111 = vector.broadcast %110 : vector<8x8x1xf32> to vector<8x8x8xf32>
    %112 = arith.subf %108, %111 : vector<8x8x8xf32>
    %113 = math.exp %112 : vector<8x8x8xf32>
    %cst_33 = arith.constant dense<0.000000e+00> : vector<8x8xf32>
    %114 = vector.multi_reduction <add>, %113, %cst_33 [2] : vector<8x8x8xf32> to vector<8x8xf32>
    %115 = vector.shape_cast %114 : vector<8x8xf32> to vector<8x8x1xf32>
    %116 = vector.broadcast %115 : vector<8x8x1xf32> to vector<8x8x8xf32>
    %117 = arith.divf %113, %116 : vector<8x8x8xf32>
    "tpu.trace_start"() <{level = 10 : i32, message = "bnm,bmd->bnd"}> : () -> ()
    %cst_34 = arith.constant dense<0.000000e+00> : vector<8x8x8xf32>
    %118 = tpu.matmul %117, %105, %cst_34 {dimension_numbers = #tpu.dot_dimension_numbers<[2], [1], [1], [2], [0, 0, 0, 1, 1, 2], [0], [0]>} : vector<8x8x8xf32>, vector<8x8x8xf32>, vector<8x8x8xf32> -> vector<8x8x8xf32>
    "tpu.trace_stop"() : () -> ()
    %119 = vector.extract_strided_slice %118 {offsets = [0, 0, 0], sizes = [2, 8, 8], strides = [1, 1, 1]} : vector<8x8x8xf32> to vector<2x8x8xf32>
    %120 = vector.extract_strided_slice %118 {offsets = [2, 0, 0], sizes = [2, 8, 8], strides = [1, 1, 1]} : vector<8x8x8xf32> to vector<2x8x8xf32>
    %121 = vector.extract_strided_slice %118 {offsets = [4, 0, 0], sizes = [2, 8, 8], strides = [1, 1, 1]} : vector<8x8x8xf32> to vector<2x8x8xf32>
    %122 = vector.extract_strided_slice %118 {offsets = [6, 0, 0], sizes = [2, 8, 8], strides = [1, 1, 1]} : vector<8x8x8xf32> to vector<2x8x8xf32>
    %123 = tpu.concatenate %119, %120, %121, %122 in 2 : vector<2x8x8xf32>, vector<2x8x8xf32>, vector<2x8x8xf32>, vector<2x8x8xf32> -> vector<2x8x32xf32>
    %124 = vector.shape_cast %123 : vector<2x8x32xf32> to vector<16x32xf32>
    %125 = arith.addf %76, %124 : vector<16x32xf32>
    %cst_35 = arith.constant dense<0.000000e+00> : vector<16x32xf32>
    %126 = tpu.matmul %125, %70, %cst_35 {dimension_numbers = #tpu.dot_dimension_numbers<[1], [0], [0], [1], [0, 0, 1, 1], [], []>} : vector<16x32xf32>, vector<32x32xf32>, vector<16x32xf32> -> vector<16x32xf32>
    %127 = vector.broadcast %72 : vector<1x32xf32> to vector<16x32xf32>
    %128 = arith.addf %126, %127 : vector<16x32xf32>
    %cst_36 = arith.constant 0.000000e+00 : f32
    %129 = vector.broadcast %cst_36 : f32 to vector<16x32xf32>
    %130 = arith.maximumf %128, %129 : vector<16x32xf32>
    %131 = arith.addf %125, %130 : vector<16x32xf32>
    %132 = vector.shape_cast %131 : vector<16x32xf32> to vector<2x8x32xf32>
    %c0_37 = arith.constant 0 : index
    %c0_38 = arith.constant 0 : index
    %c0_39 = arith.constant 0 : index
    %133 = vector.load %arg10[%c0_37, %c0_38, %c0_39] : memref<2x8x32xf32, #tpu.memory_space<vmem>>, vector<2x8x32xf32>
    tpu.vector_store %arg10[%c0_37, %c0_38, %c0_39], %132 {strides = array<i32>} : memref<2x8x32xf32, #tpu.memory_space<vmem>>, vector<2x8x32xf32>,
    return
  }
  func.func @transform_0(%arg0: i32) -> (i32, i32, i32) {
    %c0_i32 = arith.constant 0 : i32
    %c0_i32_0 = arith.constant 0 : i32
    %c0_i32_1 = arith.constant 0 : i32
    return %arg0, %c0_i32, %c0_i32_0 : i32, i32, i32
  }
  func.func @transform_1(%arg0: i32) -> (i32, i32) {
    %c0_i32 = arith.constant 0 : i32
    %c0_i32_0 = arith.constant 0 : i32
    %c0_i32_1 = arith.constant 0 : i32
    return %c0_i32, %c0_i32_0 : i32, i32
  }
  func.func @transform_2(%arg0: i32) -> (i32, i32) {
    %c0_i32 = arith.constant 0 : i32
    %c0_i32_0 = arith.constant 0 : i32
    %c0_i32_1 = arith.constant 0 : i32
    return %c0_i32, %c0_i32_0 : i32, i32
  }
  func.func @transform_3(%arg0: i32) -> (i32, i32) {
    %c0_i32 = arith.constant 0 : i32
    %c0_i32_0 = arith.constant 0 : i32
    %c0_i32_1 = arith.constant 0 : i32
    return %c0_i32, %c0_i32_0 : i32, i32
  }
  func.func @transform_4(%arg0: i32) -> (i32, i32) {
    %c0_i32 = arith.constant 0 : i32
    %c0_i32_0 = arith.constant 0 : i32
    %c0_i32_1 = arith.constant 0 : i32
    return %c0_i32, %c0_i32_0 : i32, i32
  }
  func.func @transform_5(%arg0: i32) -> (i32, i32, i32) {
    %c0_i32 = arith.constant 0 : i32
    %c0_i32_0 = arith.constant 0 : i32
    %c0_i32_1 = arith.constant 0 : i32
    %c0_i32_2 = arith.constant 0 : i32
    return %c0_i32, %c0_i32_0, %c0_i32_1 : i32, i32, i32
  }
  func.func @transform_6(%arg0: i32) -> (i32, i32, i32) {
    %c0_i32 = arith.constant 0 : i32
    %c0_i32_0 = arith.constant 0 : i32
    %c0_i32_1 = arith.constant 0 : i32
    %c0_i32_2 = arith.constant 0 : i32
    return %c0_i32, %c0_i32_0, %c0_i32_1 : i32, i32, i32
  }
  func.func @transform_7(%arg0: i32) -> (i32, i32, i32) {
    %c0_i32 = arith.constant 0 : i32
    %c0_i32_0 = arith.constant 0 : i32
    %c0_i32_1 = arith.constant 0 : i32
    %c0_i32_2 = arith.constant 0 : i32
    return %c0_i32, %c0_i32_0, %c0_i32_1 : i32, i32, i32
  }
  func.func @transform_8(%arg0: i32) -> (i32, i32, i32) {
    %c0_i32 = arith.constant 0 : i32
    %c0_i32_0 = arith.constant 0 : i32
    %c0_i32_1 = arith.constant 0 : i32
    %c0_i32_2 = arith.constant 0 : i32
    return %c0_i32, %c0_i32_0, %c0_i32_1 : i32, i32, i32
  }
  func.func @transform_9(%arg0: i32) -> (i32, i32, i32) {
    %c0_i32 = arith.constant 0 : i32
    %c0_i32_0 = arith.constant 0 : i32
    %c0_i32_1 = arith.constant 0 : i32
    return %arg0, %c0_i32, %c0_i32_0 : i32, i32, i32
  }
}

</mosaic_0001>

<llo_original>
// kernel: tpu_custom_call.1
$region0: #{tpu_custom_call.1}
  #allocation0 [shape = 'u32[]', space=smem, size = 0x4, offset = 0x4, fixed_abs, tag = 'smem constant byte address 0x4 - core index']
  #allocation1 [shape = 'u32[144,128]{1,0:T(1,128)}', space=vmem, size = 0x12000, scoped, tag = 'internal scratch']
  %s0 = inlined_call_operand.hbm [shape: f32[2,8,16], index: 0, kind: input, shape index: {}]
  %s1 = inlined_call_operand.hbm [shape: f32[16,96], index: 1, kind: input, shape index: {}]
  %s2 = inlined_call_operand.vmem [shape: f32[1,96], index: 2, kind: input, shape index: {}]
  %s3 = inlined_call_operand.hbm [shape: f32[32,32], index: 3, kind: input, shape index: {}]
  %s4 = inlined_call_operand.vmem [shape: f32[1,32], index: 4, kind: input, shape index: {}]
  %s5 = inlined_call_operand.hbm [shape: f32[1,32,96], index: 5, kind: input, shape index: {}]
  %s6 = inlined_call_operand.vmem [shape: f32[1,1,96], index: 6, kind: input, shape index: {}]
  %s7 = inlined_call_operand.hbm [shape: f32[1,32,32], index: 7, kind: input, shape index: {}]
  %s8 = inlined_call_operand.vmem [shape: f32[1,1,32], index: 8, kind: input, shape index: {}]
  %s9 = inlined_call_operand.hbm [shape: f32[2,8,32], index: 9, kind: output, shape index: {}]
  %s10 = sld [smem:[#allocation0]]
  $region66: #{tpu_custom_call.1} parent=0
    _
  %s12 = ssub.s32 1, %s10
  %s13 = scalar_select 0, %s12, %s10
  $region1: #{tpu_custom_call.1} parent=0
    #allocation2 [shape = 'u8[8192]{0}', space=vmem, size = 0x2000, scoped, tag = 'input window, operand 0, single buffered']
    #allocation3 [shape = 's32[1]{0}', space=sflag, size = 0x4, scoped, tag = 'scoped memory for tpu_custom_call.1']
    #allocation4 [shape = 's32[1]{0}', space=sflag, size = 0x4, scoped, tag = 'scoped memory for tpu_custom_call.1']
    #allocation5 [shape = 'u8[8192]{0}', space=vmem, size = 0x2000, scoped, tag = 'input window, operand 1, single buffered']
    #allocation6 [shape = 's32[1]{0}', space=sflag, size = 0x4, scoped, tag = 'scoped memory for tpu_custom_call.1']
    #allocation7 [shape = 'u8[16384]{0}', space=vmem, size = 0x4000, scoped, tag = 'input window, operand 3, single buffered']
    #allocation8 [shape = 'u8[16384]{0}', space=vmem, size = 0x4000, scoped, tag = 'input window, operand 5, single buffered']
    #allocation9 [shape = 's32[1]{0}', space=sflag, size = 0x4, scoped, tag = 'scoped memory for tpu_custom_call.1']
    #allocation10 [shape = 'u8[16384]{0}', space=vmem, size = 0x4000, scoped, tag = 'input window, operand 7, single buffered']
    #allocation11 [shape = 'u8[8192]{0}', space=vmem, size = 0x2000, scoped, tag = 'output window, operand 0, single buffered']
    %14 = vsyncpa [#allocation3], 0
    %15 = vsyncpa [#allocation6], 0
    %16 = vsyncpa [#allocation9], 0
    %17 = vsyncpa [#allocation4], 0
    // Predicated region
    $region2: #{tpu_custom_call.1} parent=1 // pred_check
      _
    $region3: #{tpu_custom_call.1} parent=1 // pred_check_branch
      %19 = sbr.rel (0) target = $region5
    $region4: #{tpu_custom_call.1} parent=1 // pred_region
      %s21 = ssub.s32 256, 256
      %22 = vsyncadd [#allocation3], %s21
      %s23 = sshll.u32 [#allocation2], 4
      %s24 = int_to_ptr.vmem [resolvable:$true] %s23
      %29 = dma.hbm_to_vmem [thread:$0]  %s0, 256, %s24, [#allocation3], 128, 128, 8
    $region5: #{tpu_custom_call.1} parent=1 // pred_fallthru
      _
    // Predicated region
    $region6: #{tpu_custom_call.1} parent=1 // pred_check
      _
    $region7: #{tpu_custom_call.1} parent=1 // pred_check_branch
      %31 = sbr.rel (0) target = $region9
    $region8: #{tpu_custom_call.1} parent=1 // pred_region
      %s33 = ssub.s32 256, 256
      %34 = vsyncadd [#allocation6], %s33
      %s35 = sshll.u32 [#allocation5], 4
      %s36 = int_to_ptr.vmem [resolvable:$true] %s35
      %41 = dma.hbm_to_vmem [thread:$0]  %s1, 256, %s36, [#allocation6], 128, 128, 8
    $region9: #{tpu_custom_call.1} parent=1 // pred_fallthru
      _
    // Predicated region
    $region10: #{tpu_custom_call.1} parent=1 // pred_check
      _
    $region11: #{tpu_custom_call.1} parent=1 // pred_check_branch
      %43 = sbr.rel (0) target = $region13
    $region12: #{tpu_custom_call.1} parent=1 // pred_region
      _
    $region13: #{tpu_custom_call.1} parent=1 // pred_fallthru
      _
    // Predicated region
    $region14: #{tpu_custom_call.1} parent=1 // pred_check
      _
    $region15: #{tpu_custom_call.1} parent=1 // pred_check_branch
      %45 = sbr.rel (0) target = $region17
    $region16: #{tpu_custom_call.1} parent=1 // pred_region
      %s47 = ssub.s32 512, 512
      %48 = vsyncadd [#allocation6], %s47
      %s49 = sshll.u32 [#allocation7], 4
      %s50 = int_to_ptr.vmem [resolvable:$true] %s49
      %55 = dma.hbm_to_vmem [thread:$0]  %s3, 512, %s50, [#allocation6], 128, 128, 8
    $region17: #{tpu_custom_call.1} parent=1 // pred_fallthru
      _
    // Predicated region
    $region18: #{tpu_custom_call.1} parent=1 // pred_check
      _
    $region19: #{tpu_custom_call.1} parent=1 // pred_check_branch
      %57 = sbr.rel (0) target = $region21
    $region20: #{tpu_custom_call.1} parent=1 // pred_region
      _
    $region21: #{tpu_custom_call.1} parent=1 // pred_fallthru
      _
    // Predicated region
    $region22: #{tpu_custom_call.1} parent=1 // pred_check
      _
    $region23: #{tpu_custom_call.1} parent=1 // pred_check_branch
      %59 = sbr.rel (0) target = $region25
    $region24: #{tpu_custom_call.1} parent=1 // pred_region
      %s61 = ssub.s32 512, 512
      %62 = vsyncadd [#allocation9], %s61
      %s63 = sshll.u32 [#allocation8], 4
      %s64 = int_to_ptr.vmem [resolvable:$true] %s63
      %69 = dma.hbm_to_vmem [thread:$0]  %s5, 512, %s64, [#allocation9], 128, 128, 8
    $region25: #{tpu_custom_call.1} parent=1 // pred_fallthru
      _
    // Predicated region
    $region26: #{tpu_custom_call.1} parent=1 // pred_check
      _
    $region27: #{tpu_custom_call.1} parent=1 // pred_check_branch
      %71 = sbr.rel (0) target = $region29
    $region28: #{tpu_custom_call.1} parent=1 // pred_region
      _
    $region29: #{tpu_custom_call.1} parent=1 // pred_fallthru
      _
    // Predicated region
    $region30: #{tpu_custom_call.1} parent=1 // pred_check
      _
    $region31: #{tpu_custom_call.1} parent=1 // pred_check_branch
      %73 = sbr.rel (0) target = $region33
    $region32: #{tpu_custom_call.1} parent=1 // pred_region
      %s75 = ssub.s32 512, 512
      %76 = vsyncadd [#allocation9], %s75
      %s77 = sshll.u32 [#allocation10], 4
      %s78 = int_to_ptr.vmem [resolvable:$true] %s77
      %83 = dma.hbm_to_vmem [thread:$0]  %s7, 512, %s78, [#allocation9], 128, 128, 8
    $region33: #{tpu_custom_call.1} parent=1 // pred_fallthru
      _
    // Predicated region
    $region34: #{tpu_custom_call.1} parent=1 // pred_check
      _
    $region35: #{tpu_custom_call.1} parent=1 // pred_check_branch
      %85 = sbr.rel (0) target = $region37
    $region36: #{tpu_custom_call.1} parent=1 // pred_region
      _
    $region37: #{tpu_custom_call.1} parent=1 // pred_fallthru
      _
    // Predicated region
    $region38: #{tpu_custom_call.1} parent=1 // pred_check
      _
    $region39: #{tpu_custom_call.1} parent=1 // pred_check_branch
      %87 = sbr.rel (0) target = $region41
    $region40: #{tpu_custom_call.1} parent=1 // pred_region
      %88 = dma.done [#allocation3], 256
    $region41: #{tpu_custom_call.1} parent=1 // pred_fallthru
      _
    // Predicated region
    $region42: #{tpu_custom_call.1} parent=1 // pred_check
      _
    $region43: #{tpu_custom_call.1} parent=1 // pred_check_branch
      %90 = sbr.rel (0) target = $region45
    $region44: #{tpu_custom_call.1} parent=1 // pred_region
      %91 = dma.done [#allocation6], 256
    $region45: #{tpu_custom_call.1} parent=1 // pred_fallthru
      _
    // Predicated region
    $region46: #{tpu_custom_call.1} parent=1 // pred_check
      _
    $region47: #{tpu_custom_call.1} parent=1 // pred_check_branch
      %93 = sbr.rel (0) target = $region49
    $region48: #{tpu_custom_call.1} parent=1 // pred_region
      %94 = dma.done [#allocation6], 512
    $region49: #{tpu_custom_call.1} parent=1 // pred_fallthru
      _
    // Predicated region
    $region50: #{tpu_custom_call.1} parent=1 // pred_check
      _
    $region51: #{tpu_custom_call.1} parent=1 // pred_check_branch
      %96 = sbr.rel (0) target = $region53
    $region52: #{tpu_custom_call.1} parent=1 // pred_region
      %97 = dma.done [#allocation9], 512
    $region53: #{tpu_custom_call.1} parent=1 // pred_fallthru
      _
    // Predicated region
    $region54: #{tpu_custom_call.1} parent=1 // pred_check
      _
    $region55: #{tpu_custom_call.1} parent=1 // pred_check_branch
      %99 = sbr.rel (0) target = $region57
    $region56: #{tpu_custom_call.1} parent=1 // pred_region
      %100 = dma.done [#allocation9], 512
    $region57: #{tpu_custom_call.1} parent=1 // pred_fallthru
      _
    %v101 = vld [vmem:[#allocation2] sm:$0xff]
    %v102 = vld [vmem:[#allocation2 + $0x8] sm:$0xff]
    %v103 = vld [vmem:[#allocation5] sm:$0xff]
    %v104 = vld [vmem:[#allocation5 + $0x8] sm:$0xff]
    %v105 = vld [vmem:[%s2] sm:$0x1]
    %v106 = vld [vmem:[#allocation7] sm:$0xff]
    %v107 = vld [vmem:[#allocation7 + $0x8] sm:$0xff]
    %v108 = vld [vmem:[#allocation7 + $0x10] sm:$0xff]
    %v109 = vld [vmem:[#allocation7 + $0x18] sm:$0xff]
    %v110 = vld [vmem:[%s4] sm:$0x1]
    %v112 = vlaneseq
    %v113 = vshrl.u32 %v112, 7
    %v114 = vsub.s32 0, %v113
    %v115 = vrot.slane %v105, %v114
    %vm117 = vcmask 130048
    %v119 = vsel %vm117, %v101, 0
    %v122 = vsel %vm117, %v102, 0
    %124 = vmatprep.subr.mxu0 0.0
    %125 = vmatpush1.msra.mxu0 %v103
    %126 = vmatprep.subr.mxu0 0.0
    %127 = vmatpush1.msra.mxu0 %v104
    %128 = vmatprep.subr.mxu0 0.0
    %129 = vmatpush1.msra.mxu0 0.0
    %130 = vmatprep.subr.mxu0 0.0
    %131 = vmatpush1.msra.mxu0 0.0
    %132 = vmatprep.subr.mxu0 0.0
    %133 = vmatpush1.msra.mxu0 0.0
    %134 = vmatprep.subr.mxu0 0.0
    %135 = vmatpush1.msra.mxu0 0.0
    %136 = vmatprep.subr.mxu0 0.0
    %137 = vmatpush1.msra.mxu0 0.0
    %138 = vmatprep.subr.mxu0 0.0
    %139 = vmatpush1.msra.mxu0 0.0
    %140 = vmatprep.subr.mxu0 0.0
    %141 = vmatpush1.msra.mxu0 0.0
    %142 = vmatprep.subr.mxu0 0.0
    %143 = vmatpush1.msra.mxu0 0.0
    %144 = vmatprep.subr.mxu0 0.0
    %145 = vmatpush1.msra.mxu0 0.0
    %146 = vmatprep.subr.mxu0 0.0
    %147 = vmatpush1.msra.mxu0 0.0
    %148 = vmatprep.subr.mxu0 0.0
    %149 = vmatpush1.msra.mxu0 0.0
    %150 = vmatprep.subr.mxu0 0.0
    %151 = vmatpush1.msra.mxu0 0.0
    %152 = vmatprep.subr.mxu0 0.0
    %153 = vmatpush1.msra.mxu0 0.0
    %154 = vmatprep.subr.mxu0 0.0
    %155 = vmatpush1.msra.mxu0 0.0
    %156 = vmatprep.subr.mxu0 0.0
    %157 = vmatpush1.msra.mxu0 0.0
    %158 = vmatprep.subr.mxu0 0.0
    %159 = vmatpush1.msra.mxu0 0.0
    %160 = vmatprep.subr.mxu0 0.0
    %161 = vmatpush1.msra.mxu0 0.0
    %162 = vmatprep.subr.mxu0 0.0
    %163 = vmatpush1.msra.mxu0 0.0
    %164 = vmatprep.subr.mxu0 0.0
    %165 = vmatpush1.msra.mxu0 0.0
    %166 = vmatprep.subr.mxu0 0.0
    %167 = vmatpush1.msra.mxu0 0.0
    %168 = vmatprep.subr.mxu0 0.0
    %169 = vmatpush1.msra.mxu0 0.0
    %170 = vmatprep.subr.mxu0 0.0
    %171 = vmatpush1.msra.mxu0 0.0
    %172 = vmatprep.subr.mxu0 0.0
    %173 = vmatpush1.msra.mxu0 0.0
    %174 = vmatprep.subr.mxu0 0.0
    %175 = vmatpush1.msra.mxu0 0.0
    %176 = vmatprep.subr.mxu0 0.0
    %177 = vmatpush1.msra.mxu0 0.0
    %178 = vmatprep.subr.mxu0 0.0
    %179 = vmatpush1.msra.mxu0 0.0
    %180 = vmatprep.subr.mxu0 0.0
    %181 = vmatpush1.msra.mxu0 0.0
    %182 = vmatprep.subr.mxu0 0.0
    %183 = vmatpush1.msra.mxu0 0.0
    %184 = vmatprep.subr.mxu0 0.0
    %185 = vmatpush1.msra.mxu0 0.0
    %186 = vmatprep.subr.mxu0 0.0
    %187 = vmatpush1.msra.mxu0 0.0
    %188 = vmatprep.mubr.f32.mxu0 0.0
    %189 = vmatmul.mubr.f32.gmra.mrb[0].mxu0 %v119
    %v190 = vpop.f32.mrb[0].mxu0
    %v191 = vadd.f32 %v115, %v190
    %v192 = vpop.f32.mrb[0].mxu0
    %193 = vmatprep.mubr.f32.mxu0 0.0
    %194 = vmatmul.mubr.f32.gmra.mrb[0].mxu0 %v122
    %v195 = vpop.f32.mrb[0].mxu0
    %v196 = vadd.f32 %v115, %v195
    %v197 = vpop.f32.mrb[0].mxu0
    %198 = vdwg.mxu0
    %201 = vrot.lane.b32.xlu0 %v191, 120
    %v202 = vpop.permute.xlu0 %201
    %203 = vrot.lane.b32.xlu0 %v196, 120
    %v204 = vpop.permute.xlu0 %203
    %207 = vrot.lane.b32.xlu0 %v191, 112
    %v208 = vpop.permute.xlu0 %207
    %209 = vrot.lane.b32.xlu0 %v196, 112
    %v210 = vpop.permute.xlu0 %209
    %213 = vrot.lane.b32.xlu0 %v191, 104
    %v214 = vpop.permute.xlu0 %213
    %215 = vrot.lane.b32.xlu0 %v196, 104
    %v216 = vpop.permute.xlu0 %215
    %v219 = vcombine.low %v191, %v208
    %v220 = vcombine.high %v191, %v208
    %v222 = vunpack.c.l.s4 1983009808
    %v223 = vunpack.c.0.s8 %v222
    %v224 = vlaneseq
    %v225 = vshrl.u32 %v224, 7
    %v226 = vsub.s32 %v223, %v225
    %v227 = vrot.slane %v219, %v226
    %v229 = vunpack.c.l.s4 1983009808
    %v230 = vunpack.c.0.s8 %v229
    %v231 = vlaneseq
    %v232 = vshrl.u32 %v231, 7
    %v233 = vsub.s32 %v230, %v232
    %v234 = vrot.slane %v220, %v233
    %v235 = vcombine.low %v202, %v214
    %v236 = vcombine.high %v202, %v214
    %v238 = vunpack.c.l.s4 1983009808
    %v239 = vunpack.c.0.s8 %v238
    %v240 = vlaneseq
    %v241 = vshrl.u32 %v240, 7
    %v242 = vsub.s32 %v239, %v241
    %v243 = vrot.slane %v235, %v242
    %v245 = vunpack.c.l.s4 1983009808
    %v246 = vunpack.c.0.s8 %v245
    %v247 = vlaneseq
    %v248 = vshrl.u32 %v247, 7
    %v249 = vsub.s32 %v246, %v248
    %v250 = vrot.slane %v236, %v249
    %v251 = vcombine.low %v227, %v243
    %v252 = vcombine.high %v227, %v243
    %v254 = vunpack.c.l.s4 1934713408
    %v255 = vunpack.c.0.s8 %v254
    %v256 = vlaneseq
    %v257 = vshrl.u32 %v256, 7
    %v258 = vsub.s32 %v255, %v257
    %v259 = vrot.slane %v251, %v258
    %v261 = vunpack.c.l.s4 1934713408
    %v262 = vunpack.c.0.s8 %v261
    %v263 = vlaneseq
    %v264 = vshrl.u32 %v263, 7
    %v265 = vsub.s32 %v262, %v264
    %v266 = vrot.slane %v252, %v265
    %v267 = vcombine.low %v234, %v250
    %v268 = vcombine.high %v234, %v250
    %v270 = vunpack.c.l.s4 1934713408
    %v271 = vunpack.c.0.s8 %v270
    %v272 = vlaneseq
    %v273 = vshrl.u32 %v272, 7
    %v274 = vsub.s32 %v271, %v273
    %v275 = vrot.slane %v267, %v274
    %v277 = vunpack.c.l.s4 1934713408
    %v278 = vunpack.c.0.s8 %v277
    %v279 = vlaneseq
    %v280 = vshrl.u32 %v279, 7
    %v281 = vsub.s32 %v278, %v280
    %v282 = vrot.slane %v268, %v281
    %v283 = vcombine.high %v259, 0.0
    %v284 = vcombine.high %v266, 0.0
    %v285 = vcombine.high %v275, 0.0
    %v286 = vcombine.high %v282, 0.0
    %v287 = vcombine.low %v196, %v210
    %v288 = vcombine.high %v196, %v210
    %v290 = vunpack.c.l.s4 1983009808
    %v291 = vunpack.c.0.s8 %v290
    %v292 = vlaneseq
    %v293 = vshrl.u32 %v292, 7
    %v294 = vsub.s32 %v291, %v293
    %v295 = vrot.slane %v287, %v294
    %v297 = vunpack.c.l.s4 1983009808
    %v298 = vunpack.c.0.s8 %v297
    %v299 = vlaneseq
    %v300 = vshrl.u32 %v299, 7
    %v301 = vsub.s32 %v298, %v300
    %v302 = vrot.slane %v288, %v301
    %v303 = vcombine.low %v204, %v216
    %v304 = vcombine.high %v204, %v216
    %v306 = vunpack.c.l.s4 1983009808
    %v307 = vunpack.c.0.s8 %v306
    %v308 = vlaneseq
    %v309 = vshrl.u32 %v308, 7
    %v310 = vsub.s32 %v307, %v309
    %v311 = vrot.slane %v303, %v310
    %v313 = vunpack.c.l.s4 1983009808
    %v314 = vunpack.c.0.s8 %v313
    %v315 = vlaneseq
    %v316 = vshrl.u32 %v315, 7
    %v317 = vsub.s32 %v314, %v316
    %v318 = vrot.slane %v304, %v317
    %v319 = vcombine.low %v295, %v311
    %v320 = vcombine.high %v295, %v311
    %v322 = vunpack.c.l.s4 1934713408
    %v323 = vunpack.c.0.s8 %v322
    %v324 = vlaneseq
    %v325 = vshrl.u32 %v324, 7
    %v326 = vsub.s32 %v323, %v325
    %v327 = vrot.slane %v319, %v326
    %v329 = vunpack.c.l.s4 1934713408
    %v330 = vunpack.c.0.s8 %v329
    %v331 = vlaneseq
    %v332 = vshrl.u32 %v331, 7
    %v333 = vsub.s32 %v330, %v332
    %v334 = vrot.slane %v320, %v333
    %v335 = vcombine.low %v302, %v318
    %v336 = vcombine.high %v302, %v318
    %v338 = vunpack.c.l.s4 1934713408
    %v339 = vunpack.c.0.s8 %v338
    %v340 = vlaneseq
    %v341 = vshrl.u32 %v340, 7
    %v342 = vsub.s32 %v339, %v341
    %v343 = vrot.slane %v335, %v342
    %v345 = vunpack.c.l.s4 1934713408
    %v346 = vunpack.c.0.s8 %v345
    %v347 = vlaneseq
    %v348 = vshrl.u32 %v347, 7
    %v349 = vsub.s32 %v346, %v348
    %v350 = vrot.slane %v336, %v349
    %v351 = vcombine.high %v327, 0.0
    %v352 = vcombine.high %v334, 0.0
    %v353 = vcombine.high %v343, 0.0
    %v354 = vcombine.high %v350, 0.0
    %v355 = vcombine.low %v259, %v266
    %v357 = vunpack.c.l.s4 1983009808
    %v358 = vunpack.c.0.s8 %v357
    %v359 = vlaneseq
    %v360 = vshrl.u32 %v359, 7
    %v361 = vsub.s32 %v358, %v360
    %v362 = vrot.slane %v355, %v361
    %v363 = vcombine.low %v283, %v284
    %v365 = vunpack.c.l.s4 1983009808
    %v366 = vunpack.c.0.s8 %v365
    %v367 = vlaneseq
    %v368 = vshrl.u32 %v367, 7
    %v369 = vsub.s32 %v366, %v368
    %v370 = vrot.slane %v363, %v369
    %v371 = vcombine.low %v275, %v282
    %v373 = vunpack.c.l.s4 1983009808
    %v374 = vunpack.c.0.s8 %v373
    %v375 = vlaneseq
    %v376 = vshrl.u32 %v375, 7
    %v377 = vsub.s32 %v374, %v376
    %v378 = vrot.slane %v371, %v377
    %v379 = vcombine.low %v285, %v286
    %v381 = vunpack.c.l.s4 1983009808
    %v382 = vunpack.c.0.s8 %v381
    %v383 = vlaneseq
    %v384 = vshrl.u32 %v383, 7
    %v385 = vsub.s32 %v382, %v384
    %v386 = vrot.slane %v379, %v385
    %v387 = vcombine.low %v362, %v370
    %v388 = vcombine.high %v362, %v370
    %v390 = vunpack.c.l.s4 1934713408
    %v391 = vunpack.c.0.s8 %v390
    %v392 = vlaneseq
    %v393 = vshrl.u32 %v392, 7
    %v394 = vsub.s32 %v391, %v393
    %v395 = vrot.slane %v387, %v394
    %v397 = vunpack.c.l.s4 1934713408
    %v398 = vunpack.c.0.s8 %v397
    %v399 = vlaneseq
    %v400 = vshrl.u32 %v399, 7
    %v401 = vsub.s32 %v398, %v400
    %v402 = vrot.slane %v388, %v401
    %v403 = vcombine.low %v378, %v386
    %v404 = vcombine.high %v378, %v386
    %v406 = vunpack.c.l.s4 1934713408
    %v407 = vunpack.c.0.s8 %v406
    %v408 = vlaneseq
    %v409 = vshrl.u32 %v408, 7
    %v410 = vsub.s32 %v407, %v409
    %v411 = vrot.slane %v403, %v410
    %v413 = vunpack.c.l.s4 1934713408
    %v414 = vunpack.c.0.s8 %v413
    %v415 = vlaneseq
    %v416 = vshrl.u32 %v415, 7
    %v417 = vsub.s32 %v414, %v416
    %v418 = vrot.slane %v404, %v417
    %v419 = vcombine.low %v395, %v411
    %v420 = vcombine.high %v395, %v411
    %v421 = vcombine.low %v402, %v418
    %v422 = vcombine.high %v402, %v418
    %v423 = vcombine.low %v327, %v334
    %v425 = vunpack.c.l.s4 1983009808
    %v426 = vunpack.c.0.s8 %v425
    %v427 = vlaneseq
    %v428 = vshrl.u32 %v427, 7
    %v429 = vsub.s32 %v426, %v428
    %v430 = vrot.slane %v423, %v429
    %v431 = vcombine.low %v351, %v352
    %v433 = vunpack.c.l.s4 1983009808
    %v434 = vunpack.c.0.s8 %v433
    %v435 = vlaneseq
    %v436 = vshrl.u32 %v435, 7
    %v437 = vsub.s32 %v434, %v436
    %v438 = vrot.slane %v431, %v437
    %v439 = vcombine.low %v343, %v350
    %v441 = vunpack.c.l.s4 1983009808
    %v442 = vunpack.c.0.s8 %v441
    %v443 = vlaneseq
    %v444 = vshrl.u32 %v443, 7
    %v445 = vsub.s32 %v442, %v444
    %v446 = vrot.slane %v439, %v445
    %v447 = vcombine.low %v353, %v354
    %v449 = vunpack.c.l.s4 1983009808
    %v450 = vunpack.c.0.s8 %v449
    %v451 = vlaneseq
    %v452 = vshrl.u32 %v451, 7
    %v453 = vsub.s32 %v450, %v452
    %v454 = vrot.slane %v447, %v453
    %v455 = vcombine.low %v430, %v438
    %v456 = vcombine.high %v430, %v438
    %v458 = vunpack.c.l.s4 1934713408
    %v459 = vunpack.c.0.s8 %v458
    %v460 = vlaneseq
    %v461 = vshrl.u32 %v460, 7
    %v462 = vsub.s32 %v459, %v461
    %v463 = vrot.slane %v455, %v462
    %v465 = vunpack.c.l.s4 1934713408
    %v466 = vunpack.c.0.s8 %v465
    %v467 = vlaneseq
    %v468 = vshrl.u32 %v467, 7
    %v469 = vsub.s32 %v466, %v468
    %v470 = vrot.slane %v456, %v469
    %v471 = vcombine.low %v446, %v454
    %v472 = vcombine.high %v446, %v454
    %v474 = vunpack.c.l.s4 1934713408
    %v475 = vunpack.c.0.s8 %v474
    %v476 = vlaneseq
    %v477 = vshrl.u32 %v476, 7
    %v478 = vsub.s32 %v475, %v477
    %v479 = vrot.slane %v471, %v478
    %v481 = vunpack.c.l.s4 1934713408
    %v482 = vunpack.c.0.s8 %v481
    %v483 = vlaneseq
    %v484 = vshrl.u32 %v483, 7
    %v485 = vsub.s32 %v482, %v484
    %v486 = vrot.slane %v472, %v485
    %v487 = vcombine.low %v463, %v479
    %v488 = vcombine.high %v463, %v479
    %v489 = vcombine.low %v470, %v486
    %v490 = vcombine.high %v470, %v486
    %491 = vrot.lane.b32.xlu0 %v191, 96
    %v492 = vpop.permute.xlu0 %491
    %493 = vrot.lane.b32.xlu0 %v196, 96
    %v494 = vpop.permute.xlu0 %493
    %495 = vrot.lane.b32.xlu0 %v202, 96
    %v496 = vpop.permute.xlu0 %495
    %497 = vrot.lane.b32.xlu0 %v204, 96
    %v498 = vpop.permute.xlu0 %497
    %499 = vrot.lane.b32.xlu0 %v208, 96
    %v500 = vpop.permute.xlu0 %499
    %501 = vrot.lane.b32.xlu0 %v210, 96
    %v502 = vpop.permute.xlu0 %501
    %503 = vrot.lane.b32.xlu0 %v214, 96
    %v504 = vpop.permute.xlu0 %503
    %505 = vrot.lane.b32.xlu0 %v216, 96
    %v506 = vpop.permute.xlu0 %505
    %v515 = vcombine.low %v492, %v500
    %v516 = vcombine.high %v492, %v500
    %v518 = vunpack.c.l.s4 1983009808
    %v519 = vunpack.c.0.s8 %v518
    %v520 = vlaneseq
    %v521 = vshrl.u32 %v520, 7
    %v522 = vsub.s32 %v519, %v521
    %v523 = vrot.slane %v515, %v522
    %v525 = vunpack.c.l.s4 1983009808
    %v526 = vunpack.c.0.s8 %v525
    %v527 = vlaneseq
    %v528 = vshrl.u32 %v527, 7
    %v529 = vsub.s32 %v526, %v528
    %v530 = vrot.slane %v516, %v529
    %v531 = vcombine.low %v496, %v504
    %v532 = vcombine.high %v496, %v504
    %v534 = vunpack.c.l.s4 1983009808
    %v535 = vunpack.c.0.s8 %v534
    %v536 = vlaneseq
    %v537 = vshrl.u32 %v536, 7
    %v538 = vsub.s32 %v535, %v537
    %v539 = vrot.slane %v531, %v538
    %v541 = vunpack.c.l.s4 1983009808
    %v542 = vunpack.c.0.s8 %v541
    %v543 = vlaneseq
    %v544 = vshrl.u32 %v543, 7
    %v545 = vsub.s32 %v542, %v544
    %v546 = vrot.slane %v532, %v545
    %v547 = vcombine.low %v523, %v539
    %v548 = vcombine.high %v523, %v539
    %v550 = vunpack.c.l.s4 1934713408
    %v551 = vunpack.c.0.s8 %v550
    %v552 = vlaneseq
    %v553 = vshrl.u32 %v552, 7
    %v554 = vsub.s32 %v551, %v553
    %v555 = vrot.slane %v547, %v554
    %v557 = vunpack.c.l.s4 1934713408
    %v558 = vunpack.c.0.s8 %v557
    %v559 = vlaneseq
    %v560 = vshrl.u32 %v559, 7
    %v561 = vsub.s32 %v558, %v560
    %v562 = vrot.slane %v548, %v561
    %v563 = vcombine.low %v530, %v546
    %v564 = vcombine.high %v530, %v546
    %v566 = vunpack.c.l.s4 1934713408
    %v567 = vunpack.c.0.s8 %v566
    %v568 = vlaneseq
    %v569 = vshrl.u32 %v568, 7
    %v570 = vsub.s32 %v567, %v569
    %v571 = vrot.slane %v563, %v570
    %v573 = vunpack.c.l.s4 1934713408
    %v574 = vunpack.c.0.s8 %v573
    %v575 = vlaneseq
    %v576 = vshrl.u32 %v575, 7
    %v577 = vsub.s32 %v574, %v576
    %v578 = vrot.slane %v564, %v577
    %v579 = vcombine.high %v555, 0.0
    %v580 = vcombine.high %v562, 0.0
    %v581 = vcombine.high %v571, 0.0
    %v582 = vcombine.high %v578, 0.0
    %v583 = vcombine.low %v494, %v502
    %v584 = vcombine.high %v494, %v502
    %v586 = vunpack.c.l.s4 1983009808
    %v587 = vunpack.c.0.s8 %v586
    %v588 = vlaneseq
    %v589 = vshrl.u32 %v588, 7
    %v590 = vsub.s32 %v587, %v589
    %v591 = vrot.slane %v583, %v590
    %v593 = vunpack.c.l.s4 1983009808
    %v594 = vunpack.c.0.s8 %v593
    %v595 = vlaneseq
    %v596 = vshrl.u32 %v595, 7
    %v597 = vsub.s32 %v594, %v596
    %v598 = vrot.slane %v584, %v597
    %v599 = vcombine.low %v498, %v506
    %v600 = vcombine.high %v498, %v506
    %v602 = vunpack.c.l.s4 1983009808
    %v603 = vunpack.c.0.s8 %v602
    %v604 = vlaneseq
    %v605 = vshrl.u32 %v604, 7
    %v606 = vsub.s32 %v603, %v605
    %v607 = vrot.slane %v599, %v606
    %v609 = vunpack.c.l.s4 1983009808
    %v610 = vunpack.c.0.s8 %v609
    %v611 = vlaneseq
    %v612 = vshrl.u32 %v611, 7
    %v613 = vsub.s32 %v610, %v612
    %v614 = vrot.slane %v600, %v613
    %v615 = vcombine.low %v591, %v607
    %v616 = vcombine.high %v591, %v607
    %v618 = vunpack.c.l.s4 1934713408
    %v619 = vunpack.c.0.s8 %v618
    %v620 = vlaneseq
    %v621 = vshrl.u32 %v620, 7
    %v622 = vsub.s32 %v619, %v621
    %v623 = vrot.slane %v615, %v622
    %v625 = vunpack.c.l.s4 1934713408
    %v626 = vunpack.c.0.s8 %v625
    %v627 = vlaneseq
    %v628 = vshrl.u32 %v627, 7
    %v629 = vsub.s32 %v626, %v628
    %v630 = vrot.slane %v616, %v629
    %v631 = vcombine.low %v598, %v614
    %v632 = vcombine.high %v598, %v614
    %v634 = vunpack.c.l.s4 1934713408
    %v635 = vunpack.c.0.s8 %v634
    %v636 = vlaneseq
    %v637 = vshrl.u32 %v636, 7
    %v638 = vsub.s32 %v635, %v637
    %v639 = vrot.slane %v631, %v638
    %v641 = vunpack.c.l.s4 1934713408
    %v642 = vunpack.c.0.s8 %v641
    %v643 = vlaneseq
    %v644 = vshrl.u32 %v643, 7
    %v645 = vsub.s32 %v642, %v644
    %v646 = vrot.slane %v632, %v645
    %v647 = vcombine.high %v623, 0.0
    %v648 = vcombine.high %v630, 0.0
    %v649 = vcombine.high %v639, 0.0
    %v650 = vcombine.high %v646, 0.0
    %v651 = vcombine.low %v555, %v562
    %v653 = vunpack.c.l.s4 1983009808
    %v654 = vunpack.c.0.s8 %v653
    %v655 = vlaneseq
    %v656 = vshrl.u32 %v655, 7
    %v657 = vsub.s32 %v654, %v656
    %v658 = vrot.slane %v651, %v657
    %v659 = vcombine.low %v579, %v580
    %v661 = vunpack.c.l.s4 1983009808
    %v662 = vunpack.c.0.s8 %v661
    %v663 = vlaneseq
    %v664 = vshrl.u32 %v663, 7
    %v665 = vsub.s32 %v662, %v664
    %v666 = vrot.slane %v659, %v665
    %v667 = vcombine.low %v571, %v578
    %v669 = vunpack.c.l.s4 1983009808
    %v670 = vunpack.c.0.s8 %v669
    %v671 = vlaneseq
    %v672 = vshrl.u32 %v671, 7
    %v673 = vsub.s32 %v670, %v672
    %v674 = vrot.slane %v667, %v673
    %v675 = vcombine.low %v581, %v582
    %v677 = vunpack.c.l.s4 1983009808
    %v678 = vunpack.c.0.s8 %v677
    %v679 = vlaneseq
    %v680 = vshrl.u32 %v679, 7
    %v681 = vsub.s32 %v678, %v680
    %v682 = vrot.slane %v675, %v681
    %v683 = vcombine.low %v658, %v666
    %v684 = vcombine.high %v658, %v666
    %v686 = vunpack.c.l.s4 1934713408
    %v687 = vunpack.c.0.s8 %v686
    %v688 = vlaneseq
    %v689 = vshrl.u32 %v688, 7
    %v690 = vsub.s32 %v687, %v689
    %v691 = vrot.slane %v683, %v690
    %v693 = vunpack.c.l.s4 1934713408
    %v694 = vunpack.c.0.s8 %v693
    %v695 = vlaneseq
    %v696 = vshrl.u32 %v695, 7
    %v697 = vsub.s32 %v694, %v696
    %v698 = vrot.slane %v684, %v697
    %v699 = vcombine.low %v674, %v682
    %v700 = vcombine.high %v674, %v682
    %v702 = vunpack.c.l.s4 1934713408
    %v703 = vunpack.c.0.s8 %v702
    %v704 = vlaneseq
    %v705 = vshrl.u32 %v704, 7
    %v706 = vsub.s32 %v703, %v705
    %v707 = vrot.slane %v699, %v706
    %v709 = vunpack.c.l.s4 1934713408
    %v710 = vunpack.c.0.s8 %v709
    %v711 = vlaneseq
    %v712 = vshrl.u32 %v711, 7
    %v713 = vsub.s32 %v710, %v712
    %v714 = vrot.slane %v700, %v713
    %v715 = vcombine.low %v691, %v707
    %v716 = vcombine.high %v691, %v707
    %v717 = vcombine.low %v698, %v714
    %v718 = vcombine.high %v698, %v714
    %v719 = vcombine.low %v623, %v630
    %v721 = vunpack.c.l.s4 1983009808
    %v722 = vunpack.c.0.s8 %v721
    %v723 = vlaneseq
    %v724 = vshrl.u32 %v723, 7
    %v725 = vsub.s32 %v722, %v724
    %v726 = vrot.slane %v719, %v725
    %v727 = vcombine.low %v647, %v648
    %v729 = vunpack.c.l.s4 1983009808
    %v730 = vunpack.c.0.s8 %v729
    %v731 = vlaneseq
    %v732 = vshrl.u32 %v731, 7
    %v733 = vsub.s32 %v730, %v732
    %v734 = vrot.slane %v727, %v733
    %v735 = vcombine.low %v639, %v646
    %v737 = vunpack.c.l.s4 1983009808
    %v738 = vunpack.c.0.s8 %v737
    %v739 = vlaneseq
    %v740 = vshrl.u32 %v739, 7
    %v741 = vsub.s32 %v738, %v740
    %v742 = vrot.slane %v735, %v741
    %v743 = vcombine.low %v649, %v650
    %v745 = vunpack.c.l.s4 1983009808
    %v746 = vunpack.c.0.s8 %v745
    %v747 = vlaneseq
    %v748 = vshrl.u32 %v747, 7
    %v749 = vsub.s32 %v746, %v748
    %v750 = vrot.slane %v743, %v749
    %v751 = vcombine.low %v726, %v734
    %v752 = vcombine.high %v726, %v734
    %v754 = vunpack.c.l.s4 1934713408
    %v755 = vunpack.c.0.s8 %v754
    %v756 = vlaneseq
    %v757 = vshrl.u32 %v756, 7
    %v758 = vsub.s32 %v755, %v757
    %v759 = vrot.slane %v751, %v758
    %v761 = vunpack.c.l.s4 1934713408
    %v762 = vunpack.c.0.s8 %v761
    %v763 = vlaneseq
    %v764 = vshrl.u32 %v763, 7
    %v765 = vsub.s32 %v762, %v764
    %v766 = vrot.slane %v752, %v765
    %v767 = vcombine.low %v742, %v750
    %v768 = vcombine.high %v742, %v750
    %v770 = vunpack.c.l.s4 1934713408
    %v771 = vunpack.c.0.s8 %v770
    %v772 = vlaneseq
    %v773 = vshrl.u32 %v772, 7
    %v774 = vsub.s32 %v771, %v773
    %v775 = vrot.slane %v767, %v774
    %v777 = vunpack.c.l.s4 1934713408
    %v778 = vunpack.c.0.s8 %v777
    %v779 = vlaneseq
    %v780 = vshrl.u32 %v779, 7
    %v781 = vsub.s32 %v778, %v780
    %v782 = vrot.slane %v768, %v781
    %v783 = vcombine.low %v759, %v775
    %v784 = vcombine.high %v759, %v775
    %v785 = vcombine.low %v766, %v782
    %v786 = vcombine.high %v766, %v782
    %787 = vrot.lane.b32.xlu0 %v191, 64
    %v788 = vpop.permute.xlu0 %787
    %789 = vrot.lane.b32.xlu0 %v196, 64
    %v790 = vpop.permute.xlu0 %789
    %791 = vrot.lane.b32.xlu0 %v202, 64
    %v792 = vpop.permute.xlu0 %791
    %793 = vrot.lane.b32.xlu0 %v204, 64
    %v794 = vpop.permute.xlu0 %793
    %795 = vrot.lane.b32.xlu0 %v208, 64
    %v796 = vpop.permute.xlu0 %795
    %797 = vrot.lane.b32.xlu0 %v210, 64
    %v798 = vpop.permute.xlu0 %797
    %799 = vrot.lane.b32.xlu0 %v214, 64
    %v800 = vpop.permute.xlu0 %799
    %801 = vrot.lane.b32.xlu0 %v216, 64
    %v802 = vpop.permute.xlu0 %801
    %v811 = vcombine.low %v788, %v796
    %v812 = vcombine.high %v788, %v796
    %v814 = vunpack.c.l.s4 1983009808
    %v815 = vunpack.c.0.s8 %v814
    %v816 = vlaneseq
    %v817 = vshrl.u32 %v816, 7
    %v818 = vsub.s32 %v815, %v817
    %v819 = vrot.slane %v811, %v818
    %v821 = vunpack.c.l.s4 1983009808
    %v822 = vunpack.c.0.s8 %v821
    %v823 = vlaneseq
    %v824 = vshrl.u32 %v823, 7
    %v825 = vsub.s32 %v822, %v824
    %v826 = vrot.slane %v812, %v825
    %v827 = vcombine.low %v792, %v800
    %v828 = vcombine.high %v792, %v800
    %v830 = vunpack.c.l.s4 1983009808
    %v831 = vunpack.c.0.s8 %v830
    %v832 = vlaneseq
    %v833 = vshrl.u32 %v832, 7
    %v834 = vsub.s32 %v831, %v833
    %v835 = vrot.slane %v827, %v834
    %v837 = vunpack.c.l.s4 1983009808
    %v838 = vunpack.c.0.s8 %v837
    %v839 = vlaneseq
    %v840 = vshrl.u32 %v839, 7
    %v841 = vsub.s32 %v838, %v840
    %v842 = vrot.slane %v828, %v841
    %v843 = vcombine.low %v819, %v835
    %v844 = vcombine.high %v819, %v835
    %v846 = vunpack.c.l.s4 1934713408
    %v847 = vunpack.c.0.s8 %v846
    %v848 = vlaneseq
    %v849 = vshrl.u32 %v848, 7
    %v850 = vsub.s32 %v847, %v849
    %v851 = vrot.slane %v843, %v850
    %v853 = vunpack.c.l.s4 1934713408
    %v854 = vunpack.c.0.s8 %v853
    %v855 = vlaneseq
    %v856 = vshrl.u32 %v855, 7
    %v857 = vsub.s32 %v854, %v856
    %v858 = vrot.slane %v844, %v857
    %v859 = vcombine.low %v826, %v842
    %v860 = vcombine.high %v826, %v842
    %v862 = vunpack.c.l.s4 1934713408
    %v863 = vunpack.c.0.s8 %v862
    %v864 = vlaneseq
    %v865 = vshrl.u32 %v864, 7
    %v866 = vsub.s32 %v863, %v865
    %v867 = vrot.slane %v859, %v866
    %v869 = vunpack.c.l.s4 1934713408
    %v870 = vunpack.c.0.s8 %v869
    %v871 = vlaneseq
    %v872 = vshrl.u32 %v871, 7
    %v873 = vsub.s32 %v870, %v872
    %v874 = vrot.slane %v860, %v873
    %v875 = vcombine.high %v851, 0.0
    %v876 = vcombine.high %v858, 0.0
    %v877 = vcombine.high %v867, 0.0
    %v878 = vcombine.high %v874, 0.0
    %v879 = vcombine.low %v790, %v798
    %v880 = vcombine.high %v790, %v798
    %v882 = vunpack.c.l.s4 1983009808
    %v883 = vunpack.c.0.s8 %v882
    %v884 = vlaneseq
    %v885 = vshrl.u32 %v884, 7
    %v886 = vsub.s32 %v883, %v885
    %v887 = vrot.slane %v879, %v886
    %v889 = vunpack.c.l.s4 1983009808
    %v890 = vunpack.c.0.s8 %v889
    %v891 = vlaneseq
    %v892 = vshrl.u32 %v891, 7
    %v893 = vsub.s32 %v890, %v892
    %v894 = vrot.slane %v880, %v893
    %v895 = vcombine.low %v794, %v802
    %v896 = vcombine.high %v794, %v802
    %v898 = vunpack.c.l.s4 1983009808
    %v899 = vunpack.c.0.s8 %v898
    %v900 = vlaneseq
    %v901 = vshrl.u32 %v900, 7
    %v902 = vsub.s32 %v899, %v901
    %v903 = vrot.slane %v895, %v902
    %v905 = vunpack.c.l.s4 1983009808
    %v906 = vunpack.c.0.s8 %v905
    %v907 = vlaneseq
    %v908 = vshrl.u32 %v907, 7
    %v909 = vsub.s32 %v906, %v908
    %v910 = vrot.slane %v896, %v909
    %v911 = vcombine.low %v887, %v903
    %v912 = vcombine.high %v887, %v903
    %v914 = vunpack.c.l.s4 1934713408
    %v915 = vunpack.c.0.s8 %v914
    %v916 = vlaneseq
    %v917 = vshrl.u32 %v916, 7
    %v918 = vsub.s32 %v915, %v917
    %v919 = vrot.slane %v911, %v918
    %v921 = vunpack.c.l.s4 1934713408
    %v922 = vunpack.c.0.s8 %v921
    %v923 = vlaneseq
    %v924 = vshrl.u32 %v923, 7
    %v925 = vsub.s32 %v922, %v924
    %v926 = vrot.slane %v912, %v925
    %v927 = vcombine.low %v894, %v910
    %v928 = vcombine.high %v894, %v910
    %v930 = vunpack.c.l.s4 1934713408
    %v931 = vunpack.c.0.s8 %v930
    %v932 = vlaneseq
    %v933 = vshrl.u32 %v932, 7
    %v934 = vsub.s32 %v931, %v933
    %v935 = vrot.slane %v927, %v934
    %v937 = vunpack.c.l.s4 1934713408
    %v938 = vunpack.c.0.s8 %v937
    %v939 = vlaneseq
    %v940 = vshrl.u32 %v939, 7
    %v941 = vsub.s32 %v938, %v940
    %v942 = vrot.slane %v928, %v941
    %v943 = vcombine.high %v919, 0.0
    %v944 = vcombine.high %v926, 0.0
    %v945 = vcombine.high %v935, 0.0
    %v946 = vcombine.high %v942, 0.0
    %v947 = vcombine.low %v851, %v858
    %v949 = vunpack.c.l.s4 1983009808
    %v950 = vunpack.c.0.s8 %v949
    %v951 = vlaneseq
    %v952 = vshrl.u32 %v951, 7
    %v953 = vsub.s32 %v950, %v952
    %v954 = vrot.slane %v947, %v953
    %v955 = vcombine.low %v875, %v876
    %v957 = vunpack.c.l.s4 1983009808
    %v958 = vunpack.c.0.s8 %v957
    %v959 = vlaneseq
    %v960 = vshrl.u32 %v959, 7
    %v961 = vsub.s32 %v958, %v960
    %v962 = vrot.slane %v955, %v961
    %v963 = vcombine.low %v867, %v874
    %v965 = vunpack.c.l.s4 1983009808
    %v966 = vunpack.c.0.s8 %v965
    %v967 = vlaneseq
    %v968 = vshrl.u32 %v967, 7
    %v969 = vsub.s32 %v966, %v968
    %v970 = vrot.slane %v963, %v969
    %v971 = vcombine.low %v877, %v878
    %v973 = vunpack.c.l.s4 1983009808
    %v974 = vunpack.c.0.s8 %v973
    %v975 = vlaneseq
    %v976 = vshrl.u32 %v975, 7
    %v977 = vsub.s32 %v974, %v976
    %v978 = vrot.slane %v971, %v977
    %v979 = vcombine.low %v954, %v962
    %v980 = vcombine.high %v954, %v962
    %v982 = vunpack.c.l.s4 1934713408
    %v983 = vunpack.c.0.s8 %v982
    %v984 = vlaneseq
    %v985 = vshrl.u32 %v984, 7
    %v986 = vsub.s32 %v983, %v985
    %v987 = vrot.slane %v979, %v986
    %v989 = vunpack.c.l.s4 1934713408
    %v990 = vunpack.c.0.s8 %v989
    %v991 = vlaneseq
    %v992 = vshrl.u32 %v991, 7
    %v993 = vsub.s32 %v990, %v992
    %v994 = vrot.slane %v980, %v993
    %v995 = vcombine.low %v970, %v978
    %v996 = vcombine.high %v970, %v978
    %v998 = vunpack.c.l.s4 1934713408
    %v999 = vunpack.c.0.s8 %v998
    %v1000 = vlaneseq
    %v1001 = vshrl.u32 %v1000, 7
    %v1002 = vsub.s32 %v999, %v1001
    %v1003 = vrot.slane %v995, %v1002
    %v1005 = vunpack.c.l.s4 1934713408
    %v1006 = vunpack.c.0.s8 %v1005
    %v1007 = vlaneseq
    %v1008 = vshrl.u32 %v1007, 7
    %v1009 = vsub.s32 %v1006, %v1008
    %v1010 = vrot.slane %v996, %v1009
    %v1011 = vcombine.low %v987, %v1003
    %v1012 = vcombine.high %v987, %v1003
    %v1013 = vcombine.low %v994, %v1010
    %v1014 = vcombine.high %v994, %v1010
    %v1015 = vcombine.low %v919, %v926
    %v1017 = vunpack.c.l.s4 1983009808
    %v1018 = vunpack.c.0.s8 %v1017
    %v1019 = vlaneseq
    %v1020 = vshrl.u32 %v1019, 7
    %v1021 = vsub.s32 %v1018, %v1020
    %v1022 = vrot.slane %v1015, %v1021
    %v1023 = vcombine.low %v943, %v944
    %v1025 = vunpack.c.l.s4 1983009808
    %v1026 = vunpack.c.0.s8 %v1025
    %v1027 = vlaneseq
    %v1028 = vshrl.u32 %v1027, 7
    %v1029 = vsub.s32 %v1026, %v1028
    %v1030 = vrot.slane %v1023, %v1029
    %v1031 = vcombine.low %v935, %v942
    %v1033 = vunpack.c.l.s4 1983009808
    %v1034 = vunpack.c.0.s8 %v1033
    %v1035 = vlaneseq
    %v1036 = vshrl.u32 %v1035, 7
    %v1037 = vsub.s32 %v1034, %v1036
    %v1038 = vrot.slane %v1031, %v1037
    %v1039 = vcombine.low %v945, %v946
    %v1041 = vunpack.c.l.s4 1983009808
    %v1042 = vunpack.c.0.s8 %v1041
    %v1043 = vlaneseq
    %v1044 = vshrl.u32 %v1043, 7
    %v1045 = vsub.s32 %v1042, %v1044
    %v1046 = vrot.slane %v1039, %v1045
    %v1047 = vcombine.low %v1022, %v1030
    %v1048 = vcombine.high %v1022, %v1030
    %v1050 = vunpack.c.l.s4 1934713408
    %v1051 = vunpack.c.0.s8 %v1050
    %v1052 = vlaneseq
    %v1053 = vshrl.u32 %v1052, 7
    %v1054 = vsub.s32 %v1051, %v1053
    %v1055 = vrot.slane %v1047, %v1054
    %v1057 = vunpack.c.l.s4 1934713408
    %v1058 = vunpack.c.0.s8 %v1057
    %v1059 = vlaneseq
    %v1060 = vshrl.u32 %v1059, 7
    %v1061 = vsub.s32 %v1058, %v1060
    %v1062 = vrot.slane %v1048, %v1061
    %v1063 = vcombine.low %v1038, %v1046
    %v1064 = vcombine.high %v1038, %v1046
    %v1066 = vunpack.c.l.s4 1934713408
    %v1067 = vunpack.c.0.s8 %v1066
    %v1068 = vlaneseq
    %v1069 = vshrl.u32 %v1068, 7
    %v1070 = vsub.s32 %v1067, %v1069
    %v1071 = vrot.slane %v1063, %v1070
    %v1073 = vunpack.c.l.s4 1934713408
    %v1074 = vunpack.c.0.s8 %v1073
    %v1075 = vlaneseq
    %v1076 = vshrl.u32 %v1075, 7
    %v1077 = vsub.s32 %v1074, %v1076
    %v1078 = vrot.slane %v1064, %v1077
    %v1079 = vcombine.low %v1055, %v1071
    %v1080 = vcombine.high %v1055, %v1071
    %v1081 = vcombine.low %v1062, %v1078
    %v1082 = vcombine.high %v1062, %v1078
    %vm1083 = vcmask 64512
    %v1085 = vsel %vm1083, %v419, 0
    %v1088 = vsel %vm1083, %v715, 0
    %1090 = vmatprep.subr.mxu0 0.0
    %1091 = vmatpush1.xpose.msra.mxu0 %v1088
    %1092 = vmatprep.subr.mxu0 0.0
    %1093 = vmatpush1.xpose.msra.mxu0 0.0
    %1094 = vmatprep.subr.mxu0 0.0
    %1095 = vmatpush1.xpose.msra.mxu0 0.0
    %1096 = vmatprep.subr.mxu0 0.0
    %1097 = vmatpush1.xpose.msra.mxu0 0.0
    %1098 = vmatprep.subr.mxu0 0.0
    %1099 = vmatpush1.xpose.msra.mxu0 0.0
    %1100 = vmatprep.subr.mxu0 0.0
    %1101 = vmatpush1.xpose.msra.mxu0 0.0
    %1102 = vmatprep.subr.mxu0 0.0
    %1103 = vmatpush1.xpose.msra.mxu0 0.0
    %1104 = vmatprep.subr.mxu0 0.0
    %1105 = vmatpush1.xpose.msra.mxu0 0.0
    %1106 = vmatprep.subr.mxu0 0.0
    %1107 = vmatpush1.xpose.msra.mxu0 0.0
    %1108 = vmatprep.subr.mxu0 0.0
    %1109 = vmatpush1.xpose.msra.mxu0 0.0
    %1110 = vmatprep.subr.mxu0 0.0
    %1111 = vmatpush1.xpose.msra.mxu0 0.0
    %1112 = vmatprep.subr.mxu0 0.0
    %1113 = vmatpush1.xpose.msra.mxu0 0.0
    %1114 = vmatprep.subr.mxu0 0.0
    %1115 = vmatpush1.xpose.msra.mxu0 0.0
    %1116 = vmatprep.subr.mxu0 0.0
    %1117 = vmatpush1.xpose.msra.mxu0 0.0
    %1118 = vmatprep.subr.mxu0 0.0
    %1119 = vmatpush1.xpose.msra.mxu0 0.0
    %1120 = vmatprep.subr.mxu0 0.0
    %1121 = vmatpush1.xpose.msra.mxu0 0.0
    %1122 = vmatprep.subr.mxu0 0.0
    %1123 = vmatpush1.xpose.msra.mxu0 0.0
    %1124 = vmatprep.subr.mxu0 0.0
    %1125 = vmatpush1.xpose.msra.mxu0 0.0
    %1126 = vmatprep.subr.mxu0 0.0
    %1127 = vmatpush1.xpose.msra.mxu0 0.0
    %1128 = vmatprep.subr.mxu0 0.0
    %1129 = vmatpush1.xpose.msra.mxu0 0.0
    %1130 = vmatprep.subr.mxu0 0.0
    %1131 = vmatpush1.xpose.msra.mxu0 0.0
    %1132 = vmatprep.subr.mxu0 0.0
    %1133 = vmatpush1.xpose.msra.mxu0 0.0
    %1134 = vmatprep.subr.mxu0 0.0
    %1135 = vmatpush1.xpose.msra.mxu0 0.0
    %1136 = vmatprep.subr.mxu0 0.0
    %1137 = vmatpush1.xpose.msra.mxu0 0.0
    %1138 = vmatprep.subr.mxu0 0.0
    %1139 = vmatpush1.xpose.msra.mxu0 0.0
    %1140 = vmatprep.subr.mxu0 0.0
    %1141 = vmatpush1.xpose.msra.mxu0 0.0
    %1142 = vmatprep.subr.mxu0 0.0
    %1143 = vmatpush1.xpose.msra.mxu0 0.0
    %1144 = vmatprep.subr.mxu0 0.0
    %1145 = vmatpush1.xpose.msra.mxu0 0.0
    %1146 = vmatprep.subr.mxu0 0.0
    %1147 = vmatpush1.xpose.msra.mxu0 0.0
    %1148 = vmatprep.subr.mxu0 0.0
    %1149 = vmatpush1.xpose.msra.mxu0 0.0
    %1150 = vmatprep.subr.mxu0 0.0
    %1151 = vmatpush1.xpose.msra.mxu0 0.0
    %1152 = vmatprep.subr.mxu0 0.0
    %1153 = vmatpush1.xpose.msra.mxu0 0.0
    %1154 = vmatprep.mubr.f32.mxu0 0.0
    %1155 = vmatmul.mubr.f32.gmra.mrb[0].mxu0 %v1085
    %v1156 = vpop.f32.mrb[0].mxu0
    %v1157 = vadd.f32 0.0, %v1156
    %v1158 = vpop.f32.mrb[0].mxu0
    %1159 = vdwg.mxu0
    %v1161 = vsel %vm1083, %v487, 0
    %v1164 = vsel %vm1083, %v783, 0
    %1166 = vmatprep.subr.mxu0 0.0
    %1167 = vmatpush1.xpose.msra.mxu0 %v1164
    %1168 = vmatprep.subr.mxu0 0.0
    %1169 = vmatpush1.xpose.msra.mxu0 0.0
    %1170 = vmatprep.subr.mxu0 0.0
    %1171 = vmatpush1.xpose.msra.mxu0 0.0
    %1172 = vmatprep.subr.mxu0 0.0
    %1173 = vmatpush1.xpose.msra.mxu0 0.0
    %1174 = vmatprep.subr.mxu0 0.0
    %1175 = vmatpush1.xpose.msra.mxu0 0.0
    %1176 = vmatprep.subr.mxu0 0.0
    %1177 = vmatpush1.xpose.msra.mxu0 0.0
    %1178 = vmatprep.subr.mxu0 0.0
    %1179 = vmatpush1.xpose.msra.mxu0 0.0
    %1180 = vmatprep.subr.mxu0 0.0
    %1181 = vmatpush1.xpose.msra.mxu0 0.0
    %1182 = vmatprep.subr.mxu0 0.0
    %1183 = vmatpush1.xpose.msra.mxu0 0.0
    %1184 = vmatprep.subr.mxu0 0.0
    %1185 = vmatpush1.xpose.msra.mxu0 0.0
    %1186 = vmatprep.subr.mxu0 0.0
    %1187 = vmatpush1.xpose.msra.mxu0 0.0
    %1188 = vmatprep.subr.mxu0 0.0
    %1189 = vmatpush1.xpose.msra.mxu0 0.0
    %1190 = vmatprep.subr.mxu0 0.0
    %1191 = vmatpush1.xpose.msra.mxu0 0.0
    %1192 = vmatprep.subr.mxu0 0.0
    %1193 = vmatpush1.xpose.msra.mxu0 0.0
    %1194 = vmatprep.subr.mxu0 0.0
    %1195 = vmatpush1.xpose.msra.mxu0 0.0
    %1196 = vmatprep.subr.mxu0 0.0
    %1197 = vmatpush1.xpose.msra.mxu0 0.0
    %1198 = vmatprep.subr.mxu0 0.0
    %1199 = vmatpush1.xpose.msra.mxu0 0.0
    %1200 = vmatprep.subr.mxu0 0.0
    %1201 = vmatpush1.xpose.msra.mxu0 0.0
    %1202 = vmatprep.subr.mxu0 0.0
    %1203 = vmatpush1.xpose.msra.mxu0 0.0
    %1204 = vmatprep.subr.mxu0 0.0
    %1205 = vmatpush1.xpose.msra.mxu0 0.0
    %1206 = vmatprep.subr.mxu0 0.0
    %1207 = vmatpush1.xpose.msra.mxu0 0.0
    %1208 = vmatprep.subr.mxu0 0.0
    %1209 = vmatpush1.xpose.msra.mxu0 0.0
    %1210 = vmatprep.subr.mxu0 0.0
    %1211 = vmatpush1.xpose.msra.mxu0 0.0
    %1212 = vmatprep.subr.mxu0 0.0
    %1213 = vmatpush1.xpose.msra.mxu0 0.0
    %1214 = vmatprep.subr.mxu0 0.0
    %1215 = vmatpush1.xpose.msra.mxu0 0.0
    %1216 = vmatprep.subr.mxu0 0.0
    %1217 = vmatpush1.xpose.msra.mxu0 0.0
    %1218 = vmatprep.subr.mxu0 0.0
    %1219 = vmatpush1.xpose.msra.mxu0 0.0
    %1220 = vmatprep.subr.mxu0 0.0
    %1221 = vmatpush1.xpose.msra.mxu0 0.0
    %1222 = vmatprep.subr.mxu0 0.0
    %1223 = vmatpush1.xpose.msra.mxu0 0.0
    %1224 = vmatprep.subr.mxu0 0.0
    %1225 = vmatpush1.xpose.msra.mxu0 0.0
    %1226 = vmatprep.subr.mxu0 0.0
    %1227 = vmatpush1.xpose.msra.mxu0 0.0
    %1228 = vmatprep.subr.mxu0 0.0
    %1229 = vmatpush1.xpose.msra.mxu0 0.0
    %1230 = vmatprep.mubr.f32.mxu0 0.0
    %1231 = vmatmul.mubr.f32.gmra.mrb[0].mxu0 %v1161
    %v1232 = vpop.f32.mrb[0].mxu0
    %v1233 = vadd.f32 0.0, %v1232
    %v1234 = vpop.f32.mrb[0].mxu0
    %1235 = vdwg.mxu0
    %v1237 = vsel %vm1083, %v420, 0
    %v1240 = vsel %vm1083, %v716, 0
    %1242 = vmatprep.subr.mxu0 0.0
    %1243 = vmatpush1.xpose.msra.mxu0 %v1240
    %1244 = vmatprep.subr.mxu0 0.0
    %1245 = vmatpush1.xpose.msra.mxu0 0.0
    %1246 = vmatprep.subr.mxu0 0.0
    %1247 = vmatpush1.xpose.msra.mxu0 0.0
    %1248 = vmatprep.subr.mxu0 0.0
    %1249 = vmatpush1.xpose.msra.mxu0 0.0
    %1250 = vmatprep.subr.mxu0 0.0
    %1251 = vmatpush1.xpose.msra.mxu0 0.0
    %1252 = vmatprep.subr.mxu0 0.0
    %1253 = vmatpush1.xpose.msra.mxu0 0.0
    %1254 = vmatprep.subr.mxu0 0.0
    %1255 = vmatpush1.xpose.msra.mxu0 0.0
    %1256 = vmatprep.subr.mxu0 0.0
    %1257 = vmatpush1.xpose.msra.mxu0 0.0
    %1258 = vmatprep.subr.mxu0 0.0
    %1259 = vmatpush1.xpose.msra.mxu0 0.0
    %1260 = vmatprep.subr.mxu0 0.0
    %1261 = vmatpush1.xpose.msra.mxu0 0.0
    %1262 = vmatprep.subr.mxu0 0.0
    %1263 = vmatpush1.xpose.msra.mxu0 0.0
    %1264 = vmatprep.subr.mxu0 0.0
    %1265 = vmatpush1.xpose.msra.mxu0 0.0
    %1266 = vmatprep.subr.mxu0 0.0
    %1267 = vmatpush1.xpose.msra.mxu0 0.0
    %1268 = vmatprep.subr.mxu0 0.0
    %1269 = vmatpush1.xpose.msra.mxu0 0.0
    %1270 = vmatprep.subr.mxu0 0.0
    %1271 = vmatpush1.xpose.msra.mxu0 0.0
    %1272 = vmatprep.subr.mxu0 0.0
    %1273 = vmatpush1.xpose.msra.mxu0 0.0
    %1274 = vmatprep.subr.mxu0 0.0
    %1275 = vmatpush1.xpose.msra.mxu0 0.0
    %1276 = vmatprep.subr.mxu0 0.0
    %1277 = vmatpush1.xpose.msra.mxu0 0.0
    %1278 = vmatprep.subr.mxu0 0.0
    %1279 = vmatpush1.xpose.msra.mxu0 0.0
    %1280 = vmatprep.subr.mxu0 0.0
    %1281 = vmatpush1.xpose.msra.mxu0 0.0
    %1282 = vmatprep.subr.mxu0 0.0
    %1283 = vmatpush1.xpose.msra.mxu0 0.0
    %1284 = vmatprep.subr.mxu0 0.0
    %1285 = vmatpush1.xpose.msra.mxu0 0.0
    %1286 = vmatprep.subr.mxu0 0.0
    %1287 = vmatpush1.xpose.msra.mxu0 0.0
    %1288 = vmatprep.subr.mxu0 0.0
    %1289 = vmatpush1.xpose.msra.mxu0 0.0
    %1290 = vmatprep.subr.mxu0 0.0
    %1291 = vmatpush1.xpose.msra.mxu0 0.0
    %1292 = vmatprep.subr.mxu0 0.0
    %1293 = vmatpush1.xpose.msra.mxu0 0.0
    %1294 = vmatprep.subr.mxu0 0.0
    %1295 = vmatpush1.xpose.msra.mxu0 0.0
    %1296 = vmatprep.subr.mxu0 0.0
    %1297 = vmatpush1.xpose.msra.mxu0 0.0
    %1298 = vmatprep.subr.mxu0 0.0
    %1299 = vmatpush1.xpose.msra.mxu0 0.0
    %1300 = vmatprep.subr.mxu0 0.0
    %1301 = vmatpush1.xpose.msra.mxu0 0.0
    %1302 = vmatprep.subr.mxu0 0.0
    %1303 = vmatpush1.xpose.msra.mxu0 0.0
    %1304 = vmatprep.subr.mxu0 0.0
    %1305 = vmatpush1.xpose.msra.mxu0 0.0
    %1306 = vmatprep.mubr.f32.mxu0 0.0
    %1307 = vmatmul.mubr.f32.gmra.mrb[0].mxu0 %v1237
    %v1308 = vpop.f32.mrb[0].mxu0
    %v1309 = vadd.f32 0.0, %v1308
    %v1310 = vpop.f32.mrb[0].mxu0
    %1311 = vdwg.mxu0
    %v1313 = vsel %vm1083, %v488, 0
    %v1316 = vsel %vm1083, %v784, 0
    %1318 = vmatprep.subr.mxu0 0.0
    %1319 = vmatpush1.xpose.msra.mxu0 %v1316
    %1320 = vmatprep.subr.mxu0 0.0
    %1321 = vmatpush1.xpose.msra.mxu0 0.0
    %1322 = vmatprep.subr.mxu0 0.0
    %1323 = vmatpush1.xpose.msra.mxu0 0.0
    %1324 = vmatprep.subr.mxu0 0.0
    %1325 = vmatpush1.xpose.msra.mxu0 0.0
    %1326 = vmatprep.subr.mxu0 0.0
    %1327 = vmatpush1.xpose.msra.mxu0 0.0
    %1328 = vmatprep.subr.mxu0 0.0
    %1329 = vmatpush1.xpose.msra.mxu0 0.0
    %1330 = vmatprep.subr.mxu0 0.0
    %1331 = vmatpush1.xpose.msra.mxu0 0.0
    %1332 = vmatprep.subr.mxu0 0.0
    %1333 = vmatpush1.xpose.msra.mxu0 0.0
    %1334 = vmatprep.subr.mxu0 0.0
    %1335 = vmatpush1.xpose.msra.mxu0 0.0
    %1336 = vmatprep.subr.mxu0 0.0
    %1337 = vmatpush1.xpose.msra.mxu0 0.0
    %1338 = vmatprep.subr.mxu0 0.0
    %1339 = vmatpush1.xpose.msra.mxu0 0.0
    %1340 = vmatprep.subr.mxu0 0.0
    %1341 = vmatpush1.xpose.msra.mxu0 0.0
    %1342 = vmatprep.subr.mxu0 0.0
    %1343 = vmatpush1.xpose.msra.mxu0 0.0
    %1344 = vmatprep.subr.mxu0 0.0
    %1345 = vmatpush1.xpose.msra.mxu0 0.0
    %1346 = vmatprep.subr.mxu0 0.0
    %1347 = vmatpush1.xpose.msra.mxu0 0.0
    %1348 = vmatprep.subr.mxu0 0.0
    %1349 = vmatpush1.xpose.msra.mxu0 0.0
    %1350 = vmatprep.subr.mxu0 0.0
    %1351 = vmatpush1.xpose.msra.mxu0 0.0
    %1352 = vmatprep.subr.mxu0 0.0
    %1353 = vmatpush1.xpose.msra.mxu0 0.0
    %1354 = vmatprep.subr.mxu0 0.0
    %1355 = vmatpush1.xpose.msra.mxu0 0.0
    %1356 = vmatprep.subr.mxu0 0.0
    %1357 = vmatpush1.xpose.msra.mxu0 0.0
    %1358 = vmatprep.subr.mxu0 0.0
    %1359 = vmatpush1.xpose.msra.mxu0 0.0
    %1360 = vmatprep.subr.mxu0 0.0
    %1361 = vmatpush1.xpose.msra.mxu0 0.0
    %1362 = vmatprep.subr.mxu0 0.0
    %1363 = vmatpush1.xpose.msra.mxu0 0.0
    %1364 = vmatprep.subr.mxu0 0.0
    %1365 = vmatpush1.xpose.msra.mxu0 0.0
    %1366 = vmatprep.subr.mxu0 0.0
    %1367 = vmatpush1.xpose.msra.mxu0 0.0
    %1368 = vmatprep.subr.mxu0 0.0
    %1369 = vmatpush1.xpose.msra.mxu0 0.0
    %1370 = vmatprep.subr.mxu0 0.0
    %1371 = vmatpush1.xpose.msra.mxu0 0.0
    %1372 = vmatprep.subr.mxu0 0.0
    %1373 = vmatpush1.xpose.msra.mxu0 0.0
    %1374 = vmatprep.subr.mxu0 0.0
    %1375 = vmatpush1.xpose.msra.mxu0 0.0
    %1376 = vmatprep.subr.mxu0 0.0
    %1377 = vmatpush1.xpose.msra.mxu0 0.0
    %1378 = vmatprep.subr.mxu0 0.0
    %1379 = vmatpush1.xpose.msra.mxu0 0.0
    %1380 = vmatprep.subr.mxu0 0.0
    %1381 = vmatpush1.xpose.msra.mxu0 0.0
    %1382 = vmatprep.mubr.f32.mxu0 0.0
    %1383 = vmatmul.mubr.f32.gmra.mrb[0].mxu0 %v1313
    %v1384 = vpop.f32.mrb[0].mxu0
    %v1385 = vadd.f32 0.0, %v1384
    %v1386 = vpop.f32.mrb[0].mxu0
    %1387 = vdwg.mxu0
    %v1389 = vsel %vm1083, %v421, 0
    %v1392 = vsel %vm1083, %v717, 0
    %1394 = vmatprep.subr.mxu0 0.0
    %1395 = vmatpush1.xpose.msra.mxu0 %v1392
    %1396 = vmatprep.subr.mxu0 0.0
    %1397 = vmatpush1.xpose.msra.mxu0 0.0
    %1398 = vmatprep.subr.mxu0 0.0
    %1399 = vmatpush1.xpose.msra.mxu0 0.0
    %1400 = vmatprep.subr.mxu0 0.0
    %1401 = vmatpush1.xpose.msra.mxu0 0.0
    %1402 = vmatprep.subr.mxu0 0.0
    %1403 = vmatpush1.xpose.msra.mxu0 0.0
    %1404 = vmatprep.subr.mxu0 0.0
    %1405 = vmatpush1.xpose.msra.mxu0 0.0
    %1406 = vmatprep.subr.mxu0 0.0
    %1407 = vmatpush1.xpose.msra.mxu0 0.0
    %1408 = vmatprep.subr.mxu0 0.0
    %1409 = vmatpush1.xpose.msra.mxu0 0.0
    %1410 = vmatprep.subr.mxu0 0.0
    %1411 = vmatpush1.xpose.msra.mxu0 0.0
    %1412 = vmatprep.subr.mxu0 0.0
    %1413 = vmatpush1.xpose.msra.mxu0 0.0
    %1414 = vmatprep.subr.mxu0 0.0
    %1415 = vmatpush1.xpose.msra.mxu0 0.0
    %1416 = vmatprep.subr.mxu0 0.0
    %1417 = vmatpush1.xpose.msra.mxu0 0.0
    %1418 = vmatprep.subr.mxu0 0.0
    %1419 = vmatpush1.xpose.msra.mxu0 0.0
    %1420 = vmatprep.subr.mxu0 0.0
    %1421 = vmatpush1.xpose.msra.mxu0 0.0
    %1422 = vmatprep.subr.mxu0 0.0
    %1423 = vmatpush1.xpose.msra.mxu0 0.0
    %1424 = vmatprep.subr.mxu0 0.0
    %1425 = vmatpush1.xpose.msra.mxu0 0.0
    %1426 = vmatprep.subr.mxu0 0.0
    %1427 = vmatpush1.xpose.msra.mxu0 0.0
    %1428 = vmatprep.subr.mxu0 0.0
    %1429 = vmatpush1.xpose.msra.mxu0 0.0
    %1430 = vmatprep.subr.mxu0 0.0
    %1431 = vmatpush1.xpose.msra.mxu0 0.0
    %1432 = vmatprep.subr.mxu0 0.0
    %1433 = vmatpush1.xpose.msra.mxu0 0.0
    %1434 = vmatprep.subr.mxu0 0.0
    %1435 = vmatpush1.xpose.msra.mxu0 0.0
    %1436 = vmatprep.subr.mxu0 0.0
    %1437 = vmatpush1.xpose.msra.mxu0 0.0
    %1438 = vmatprep.subr.mxu0 0.0
    %1439 = vmatpush1.xpose.msra.mxu0 0.0
    %1440 = vmatprep.subr.mxu0 0.0
    %1441 = vmatpush1.xpose.msra.mxu0 0.0
    %1442 = vmatprep.subr.mxu0 0.0
    %1443 = vmatpush1.xpose.msra.mxu0 0.0
    %1444 = vmatprep.subr.mxu0 0.0
    %1445 = vmatpush1.xpose.msra.mxu0 0.0
    %1446 = vmatprep.subr.mxu0 0.0
    %1447 = vmatpush1.xpose.msra.mxu0 0.0
    %1448 = vmatprep.subr.mxu0 0.0
    %1449 = vmatpush1.xpose.msra.mxu0 0.0
    %1450 = vmatprep.subr.mxu0 0.0
    %1451 = vmatpush1.xpose.msra.mxu0 0.0
    %1452 = vmatprep.subr.mxu0 0.0
    %1453 = vmatpush1.xpose.msra.mxu0 0.0
    %1454 = vmatprep.subr.mxu0 0.0
    %1455 = vmatpush1.xpose.msra.mxu0 0.0
    %1456 = vmatprep.subr.mxu0 0.0
    %1457 = vmatpush1.xpose.msra.mxu0 0.0
    %1458 = vmatprep.mubr.f32.mxu0 0.0
    %1459 = vmatmul.mubr.f32.gmra.mrb[0].mxu0 %v1389
    %v1460 = vpop.f32.mrb[0].mxu0
    %v1461 = vadd.f32 0.0, %v1460
    %v1462 = vpop.f32.mrb[0].mxu0
    %1463 = vdwg.mxu0
    %v1465 = vsel %vm1083, %v489, 0
    %v1468 = vsel %vm1083, %v785, 0
    %1470 = vmatprep.subr.mxu0 0.0
    %1471 = vmatpush1.xpose.msra.mxu0 %v1468
    %1472 = vmatprep.subr.mxu0 0.0
    %1473 = vmatpush1.xpose.msra.mxu0 0.0
    %1474 = vmatprep.subr.mxu0 0.0
    %1475 = vmatpush1.xpose.msra.mxu0 0.0
    %1476 = vmatprep.subr.mxu0 0.0
    %1477 = vmatpush1.xpose.msra.mxu0 0.0
    %1478 = vmatprep.subr.mxu0 0.0
    %1479 = vmatpush1.xpose.msra.mxu0 0.0
    %1480 = vmatprep.subr.mxu0 0.0
    %1481 = vmatpush1.xpose.msra.mxu0 0.0
    %1482 = vmatprep.subr.mxu0 0.0
    %1483 = vmatpush1.xpose.msra.mxu0 0.0
    %1484 = vmatprep.subr.mxu0 0.0
    %1485 = vmatpush1.xpose.msra.mxu0 0.0
    %1486 = vmatprep.subr.mxu0 0.0
    %1487 = vmatpush1.xpose.msra.mxu0 0.0
    %1488 = vmatprep.subr.mxu0 0.0
    %1489 = vmatpush1.xpose.msra.mxu0 0.0
    %1490 = vmatprep.subr.mxu0 0.0
    %1491 = vmatpush1.xpose.msra.mxu0 0.0
    %1492 = vmatprep.subr.mxu0 0.0
    %1493 = vmatpush1.xpose.msra.mxu0 0.0
    %1494 = vmatprep.subr.mxu0 0.0
    %1495 = vmatpush1.xpose.msra.mxu0 0.0
    %1496 = vmatprep.subr.mxu0 0.0
    %1497 = vmatpush1.xpose.msra.mxu0 0.0
    %1498 = vmatprep.subr.mxu0 0.0
    %1499 = vmatpush1.xpose.msra.mxu0 0.0
    %1500 = vmatprep.subr.mxu0 0.0
    %1501 = vmatpush1.xpose.msra.mxu0 0.0
    %1502 = vmatprep.subr.mxu0 0.0
    %1503 = vmatpush1.xpose.msra.mxu0 0.0
    %1504 = vmatprep.subr.mxu0 0.0
    %1505 = vmatpush1.xpose.msra.mxu0 0.0
    %1506 = vmatprep.subr.mxu0 0.0
    %1507 = vmatpush1.xpose.msra.mxu0 0.0
    %1508 = vmatprep.subr.mxu0 0.0
    %1509 = vmatpush1.xpose.msra.mxu0 0.0
    %1510 = vmatprep.subr.mxu0 0.0
    %1511 = vmatpush1.xpose.msra.mxu0 0.0
    %1512 = vmatprep.subr.mxu0 0.0
    %1513 = vmatpush1.xpose.msra.mxu0 0.0
    %1514 = vmatprep.subr.mxu0 0.0
    %1515 = vmatpush1.xpose.msra.mxu0 0.0
    %1516 = vmatprep.subr.mxu0 0.0
    %1517 = vmatpush1.xpose.msra.mxu0 0.0
    %1518 = vmatprep.subr.mxu0 0.0
    %1519 = vmatpush1.xpose.msra.mxu0 0.0
    %1520 = vmatprep.subr.mxu0 0.0
    %1521 = vmatpush1.xpose.msra.mxu0 0.0
    %1522 = vmatprep.subr.mxu0 0.0
    %1523 = vmatpush1.xpose.msra.mxu0 0.0
    %1524 = vmatprep.subr.mxu0 0.0
    %1525 = vmatpush1.xpose.msra.mxu0 0.0
    %1526 = vmatprep.subr.mxu0 0.0
    %1527 = vmatpush1.xpose.msra.mxu0 0.0
    %1528 = vmatprep.subr.mxu0 0.0
    %1529 = vmatpush1.xpose.msra.mxu0 0.0
    %1530 = vmatprep.subr.mxu0 0.0
    %1531 = vmatpush1.xpose.msra.mxu0 0.0
    %1532 = vmatprep.subr.mxu0 0.0
    %1533 = vmatpush1.xpose.msra.mxu0 0.0
    %1534 = vmatprep.mubr.f32.mxu0 0.0
    %1535 = vmatmul.mubr.f32.gmra.mrb[0].mxu0 %v1465
    %v1536 = vpop.f32.mrb[0].mxu0
    %v1537 = vadd.f32 0.0, %v1536
    %v1538 = vpop.f32.mrb[0].mxu0
    %1539 = vdwg.mxu0
    %v1541 = vsel %vm1083, %v422, 0
    %v1544 = vsel %vm1083, %v718, 0
    %1546 = vmatprep.subr.mxu0 0.0
    %1547 = vmatpush1.xpose.msra.mxu0 %v1544
    %1548 = vmatprep.subr.mxu0 0.0
    %1549 = vmatpush1.xpose.msra.mxu0 0.0
    %1550 = vmatprep.subr.mxu0 0.0
    %1551 = vmatpush1.xpose.msra.mxu0 0.0
    %1552 = vmatprep.subr.mxu0 0.0
    %1553 = vmatpush1.xpose.msra.mxu0 0.0
    %1554 = vmatprep.subr.mxu0 0.0
    %1555 = vmatpush1.xpose.msra.mxu0 0.0
    %1556 = vmatprep.subr.mxu0 0.0
    %1557 = vmatpush1.xpose.msra.mxu0 0.0
    %1558 = vmatprep.subr.mxu0 0.0
    %1559 = vmatpush1.xpose.msra.mxu0 0.0
    %1560 = vmatprep.subr.mxu0 0.0
    %1561 = vmatpush1.xpose.msra.mxu0 0.0
    %1562 = vmatprep.subr.mxu0 0.0
    %1563 = vmatpush1.xpose.msra.mxu0 0.0
    %1564 = vmatprep.subr.mxu0 0.0
    %1565 = vmatpush1.xpose.msra.mxu0 0.0
    %1566 = vmatprep.subr.mxu0 0.0
    %1567 = vmatpush1.xpose.msra.mxu0 0.0
    %1568 = vmatprep.subr.mxu0 0.0
    %1569 = vmatpush1.xpose.msra.mxu0 0.0
    %1570 = vmatprep.subr.mxu0 0.0
    %1571 = vmatpush1.xpose.msra.mxu0 0.0
    %1572 = vmatprep.subr.mxu0 0.0
    %1573 = vmatpush1.xpose.msra.mxu0 0.0
    %1574 = vmatprep.subr.mxu0 0.0
    %1575 = vmatpush1.xpose.msra.mxu0 0.0
    %1576 = vmatprep.subr.mxu0 0.0
    %1577 = vmatpush1.xpose.msra.mxu0 0.0
    %1578 = vmatprep.subr.mxu0 0.0
    %1579 = vmatpush1.xpose.msra.mxu0 0.0
    %1580 = vmatprep.subr.mxu0 0.0
    %1581 = vmatpush1.xpose.msra.mxu0 0.0
    %1582 = vmatprep.subr.mxu0 0.0
    %1583 = vmatpush1.xpose.msra.mxu0 0.0
    %1584 = vmatprep.subr.mxu0 0.0
    %1585 = vmatpush1.xpose.msra.mxu0 0.0
    %1586 = vmatprep.subr.mxu0 0.0
    %1587 = vmatpush1.xpose.msra.mxu0 0.0
    %1588 = vmatprep.subr.mxu0 0.0
    %1589 = vmatpush1.xpose.msra.mxu0 0.0
    %1590 = vmatprep.subr.mxu0 0.0
    %1591 = vmatpush1.xpose.msra.mxu0 0.0
    %1592 = vmatprep.subr.mxu0 0.0
    %1593 = vmatpush1.xpose.msra.mxu0 0.0
    %1594 = vmatprep.subr.mxu0 0.0
    %1595 = vmatpush1.xpose.msra.mxu0 0.0
    %1596 = vmatprep.subr.mxu0 0.0
    %1597 = vmatpush1.xpose.msra.mxu0 0.0
    %1598 = vmatprep.subr.mxu0 0.0
    %1599 = vmatpush1.xpose.msra.mxu0 0.0
    %1600 = vmatprep.subr.mxu0 0.0
    %1601 = vmatpush1.xpose.msra.mxu0 0.0
    %1602 = vmatprep.subr.mxu0 0.0
    %1603 = vmatpush1.xpose.msra.mxu0 0.0
    %1604 = vmatprep.subr.mxu0 0.0
    %1605 = vmatpush1.xpose.msra.mxu0 0.0
    %1606 = vmatprep.subr.mxu0 0.0
    %1607 = vmatpush1.xpose.msra.mxu0 0.0
    %1608 = vmatprep.subr.mxu0 0.0
    %1609 = vmatpush1.xpose.msra.mxu0 0.0
    %1610 = vmatprep.mubr.f32.mxu0 0.0
    %1611 = vmatmul.mubr.f32.gmra.mrb[0].mxu0 %v1541
    %v1612 = vpop.f32.mrb[0].mxu0
    %v1613 = vadd.f32 0.0, %v1612
    %v1614 = vpop.f32.mrb[0].mxu0
    %1615 = vdwg.mxu0
    %v1617 = vsel %vm1083, %v490, 0
    %v1620 = vsel %vm1083, %v786, 0
    %1622 = vmatprep.subr.mxu0 0.0
    %1623 = vmatpush1.xpose.msra.mxu0 %v1620
    %1624 = vmatprep.subr.mxu0 0.0
    %1625 = vmatpush1.xpose.msra.mxu0 0.0
    %1626 = vmatprep.subr.mxu0 0.0
    %1627 = vmatpush1.xpose.msra.mxu0 0.0
    %1628 = vmatprep.subr.mxu0 0.0
    %1629 = vmatpush1.xpose.msra.mxu0 0.0
    %1630 = vmatprep.subr.mxu0 0.0
    %1631 = vmatpush1.xpose.msra.mxu0 0.0
    %1632 = vmatprep.subr.mxu0 0.0
    %1633 = vmatpush1.xpose.msra.mxu0 0.0
    %1634 = vmatprep.subr.mxu0 0.0
    %1635 = vmatpush1.xpose.msra.mxu0 0.0
    %1636 = vmatprep.subr.mxu0 0.0
    %1637 = vmatpush1.xpose.msra.mxu0 0.0
    %1638 = vmatprep.subr.mxu0 0.0
    %1639 = vmatpush1.xpose.msra.mxu0 0.0
    %1640 = vmatprep.subr.mxu0 0.0
    %1641 = vmatpush1.xpose.msra.mxu0 0.0
    %1642 = vmatprep.subr.mxu0 0.0
    %1643 = vmatpush1.xpose.msra.mxu0 0.0
    %1644 = vmatprep.subr.mxu0 0.0
    %1645 = vmatpush1.xpose.msra.mxu0 0.0
    %1646 = vmatprep.subr.mxu0 0.0
    %1647 = vmatpush1.xpose.msra.mxu0 0.0
    %1648 = vmatprep.subr.mxu0 0.0
    %1649 = vmatpush1.xpose.msra.mxu0 0.0
    %1650 = vmatprep.subr.mxu0 0.0
    %1651 = vmatpush1.xpose.msra.mxu0 0.0
    %1652 = vmatprep.subr.mxu0 0.0
    %1653 = vmatpush1.xpose.msra.mxu0 0.0
    %1654 = vmatprep.subr.mxu0 0.0
    %1655 = vmatpush1.xpose.msra.mxu0 0.0
    %1656 = vmatprep.subr.mxu0 0.0
    %1657 = vmatpush1.xpose.msra.mxu0 0.0
    %1658 = vmatprep.subr.mxu0 0.0
    %1659 = vmatpush1.xpose.msra.mxu0 0.0
    %1660 = vmatprep.subr.mxu0 0.0
    %1661 = vmatpush1.xpose.msra.mxu0 0.0
    %1662 = vmatprep.subr.mxu0 0.0
    %1663 = vmatpush1.xpose.msra.mxu0 0.0
    %1664 = vmatprep.subr.mxu0 0.0
    %1665 = vmatpush1.xpose.msra.mxu0 0.0
    %1666 = vmatprep.subr.mxu0 0.0
    %1667 = vmatpush1.xpose.msra.mxu0 0.0
    %1668 = vmatprep.subr.mxu0 0.0
    %1669 = vmatpush1.xpose.msra.mxu0 0.0
    %1670 = vmatprep.subr.mxu0 0.0
    %1671 = vmatpush1.xpose.msra.mxu0 0.0
    %1672 = vmatprep.subr.mxu0 0.0
    %1673 = vmatpush1.xpose.msra.mxu0 0.0
    %1674 = vmatprep.subr.mxu0 0.0
    %1675 = vmatpush1.xpose.msra.mxu0 0.0
    %1676 = vmatprep.subr.mxu0 0.0
    %1677 = vmatpush1.xpose.msra.mxu0 0.0
    %1678 = vmatprep.subr.mxu0 0.0
    %1679 = vmatpush1.xpose.msra.mxu0 0.0
    %1680 = vmatprep.subr.mxu0 0.0
    %1681 = vmatpush1.xpose.msra.mxu0 0.0
    %1682 = vmatprep.subr.mxu0 0.0
    %1683 = vmatpush1.xpose.msra.mxu0 0.0
    %1684 = vmatprep.subr.mxu0 0.0
    %1685 = vmatpush1.xpose.msra.mxu0 0.0
    %1686 = vmatprep.mubr.f32.mxu0 0.0
    %1687 = vmatmul.mubr.f32.gmra.mrb[0].mxu0 %v1617
    %v1688 = vpop.f32.mrb[0].mxu0
    %v1689 = vadd.f32 0.0, %v1688
    %v1690 = vpop.f32.mrb[0].mxu0
    %1691 = vdwg.mxu0
    %v1692 = vmul.f32 %v1157, 0.17677669
    %v1693 = vmul.f32 %v1233, 0.17677669
    %v1694 = vmul.f32 %v1309, 0.17677669
    %v1695 = vmul.f32 %v1385, 0.17677669
    %v1696 = vmul.f32 %v1461, 0.17677669
    %v1697 = vmul.f32 %v1537, 0.17677669
    %v1698 = vmul.f32 %v1613, 0.17677669
    %v1699 = vmul.f32 %v1689, 0.17677669
    %v1700 = vsel %vm1083, %v1692, -inf
    %1701 = vmax.xlane.f32.xlu0 %v1700
    %v1702 = vpop.xlane.xlu0 %1701
    %v1703 = vsel %vm1083, %v1693, -inf
    %1704 = vmax.xlane.f32.xlu0 %v1703
    %v1705 = vpop.xlane.xlu0 %1704
    %v1706 = vsel %vm1083, %v1694, -inf
    %1707 = vmax.xlane.f32.xlu0 %v1706
    %v1708 = vpop.xlane.xlu0 %1707
    %v1709 = vsel %vm1083, %v1695, -inf
    %1710 = vmax.xlane.f32.xlu0 %v1709
    %v1711 = vpop.xlane.xlu0 %1710
    %v1712 = vsel %vm1083, %v1696, -inf
    %1713 = vmax.xlane.f32.xlu0 %v1712
    %v1714 = vpop.xlane.xlu0 %1713
    %v1715 = vsel %vm1083, %v1697, -inf
    %1716 = vmax.xlane.f32.xlu0 %v1715
    %v1717 = vpop.xlane.xlu0 %1716
    %v1718 = vsel %vm1083, %v1698, -inf
    %1719 = vmax.xlane.f32.xlu0 %v1718
    %v1720 = vpop.xlane.xlu0 %1719
    %v1721 = vsel %vm1083, %v1699, -inf
    %1722 = vmax.xlane.f32.xlu0 %v1721
    %v1723 = vpop.xlane.xlu0 %1722
    %v1724 = vsub.f32 %v1692, %v1702
    %v1725 = vsub.f32 %v1693, %v1705
    %v1726 = vsub.f32 %v1694, %v1708
    %v1727 = vsub.f32 %v1695, %v1711
    %v1728 = vsub.f32 %v1696, %v1714
    %v1729 = vsub.f32 %v1697, %v1717
    %v1730 = vsub.f32 %v1698, %v1720
    %v1731 = vsub.f32 %v1699, %v1723
    %v1732 = vmul.f32 %v1724, 1.442695
    %v1733 = vpow.pop %v1732
    %v1734 = vmul.f32 %v1725, 1.442695
    %v1735 = vpow.pop %v1734
    %v1736 = vmul.f32 %v1726, 1.442695
    %v1737 = vpow.pop %v1736
    %v1738 = vmul.f32 %v1727, 1.442695
    %v1739 = vpow.pop %v1738
    %v1740 = vmul.f32 %v1728, 1.442695
    %v1741 = vpow.pop %v1740
    %v1742 = vmul.f32 %v1729, 1.442695
    %v1743 = vpow.pop %v1742
    %v1744 = vmul.f32 %v1730, 1.442695
    %v1745 = vpow.pop %v1744
    %v1746 = vmul.f32 %v1731, 1.442695
    %v1747 = vpow.pop %v1746
    %v1748 = vsel %vm1083, %v1733, 0.0
    %1749 = vadd.xlane.f32.xlu0 %v1748
    %v1750 = vpop.xlane.xlu0 %1749
    %v1751 = vsel %vm1083, %v1735, 0.0
    %1752 = vadd.xlane.f32.xlu0 %v1751
    %v1753 = vpop.xlane.xlu0 %1752
    %v1754 = vsel %vm1083, %v1737, 0.0
    %1755 = vadd.xlane.f32.xlu0 %v1754
    %v1756 = vpop.xlane.xlu0 %1755
    %v1757 = vsel %vm1083, %v1739, 0.0
    %1758 = vadd.xlane.f32.xlu0 %v1757
    %v1759 = vpop.xlane.xlu0 %1758
    %v1760 = vsel %vm1083, %v1741, 0.0
    %1761 = vadd.xlane.f32.xlu0 %v1760
    %v1762 = vpop.xlane.xlu0 %1761
    %v1763 = vsel %vm1083, %v1743, 0.0
    %1764 = vadd.xlane.f32.xlu0 %v1763
    %v1765 = vpop.xlane.xlu0 %1764
    %v1766 = vsel %vm1083, %v1745, 0.0
    %1767 = vadd.xlane.f32.xlu0 %v1766
    %v1768 = vpop.xlane.xlu0 %1767
    %v1769 = vsel %vm1083, %v1747, 0.0
    %1770 = vadd.xlane.f32.xlu0 %v1769
    %v1771 = vpop.xlane.xlu0 %1770
    %v1772 = vrcp.pop %v1750
    %v1773 = vmul.f32 %v1733, %v1772
    %v1774 = vrcp.pop %v1753
    %v1775 = vmul.f32 %v1735, %v1774
    %v1776 = vrcp.pop %v1756
    %v1777 = vmul.f32 %v1737, %v1776
    %v1778 = vrcp.pop %v1759
    %v1779 = vmul.f32 %v1739, %v1778
    %v1780 = vrcp.pop %v1762
    %v1781 = vmul.f32 %v1741, %v1780
    %v1782 = vrcp.pop %v1765
    %v1783 = vmul.f32 %v1743, %v1782
    %v1784 = vrcp.pop %v1768
    %v1785 = vmul.f32 %v1745, %v1784
    %v1786 = vrcp.pop %v1771
    %v1787 = vmul.f32 %v1747, %v1786
    %v1789 = vsel %vm1083, %v1773, 0
    %1791 = vmatprep.subr.mxu0 0.0
    %1792 = vmatpush1.msra.mxu0 %v1011
    %1793 = vmatprep.subr.mxu0 0.0
    %1794 = vmatpush1.msra.mxu0 0.0
    %1795 = vmatprep.subr.mxu0 0.0
    %1796 = vmatpush1.msra.mxu0 0.0
    %1797 = vmatprep.subr.mxu0 0.0
    %1798 = vmatpush1.msra.mxu0 0.0
    %1799 = vmatprep.subr.mxu0 0.0
    %1800 = vmatpush1.msra.mxu0 0.0
    %1801 = vmatprep.subr.mxu0 0.0
    %1802 = vmatpush1.msra.mxu0 0.0
    %1803 = vmatprep.subr.mxu0 0.0
    %1804 = vmatpush1.msra.mxu0 0.0
    %1805 = vmatprep.subr.mxu0 0.0
    %1806 = vmatpush1.msra.mxu0 0.0
    %1807 = vmatprep.subr.mxu0 0.0
    %1808 = vmatpush1.msra.mxu0 0.0
    %1809 = vmatprep.subr.mxu0 0.0
    %1810 = vmatpush1.msra.mxu0 0.0
    %1811 = vmatprep.subr.mxu0 0.0
    %1812 = vmatpush1.msra.mxu0 0.0
    %1813 = vmatprep.subr.mxu0 0.0
    %1814 = vmatpush1.msra.mxu0 0.0
    %1815 = vmatprep.subr.mxu0 0.0
    %1816 = vmatpush1.msra.mxu0 0.0
    %1817 = vmatprep.subr.mxu0 0.0
    %1818 = vmatpush1.msra.mxu0 0.0
    %1819 = vmatprep.subr.mxu0 0.0
    %1820 = vmatpush1.msra.mxu0 0.0
    %1821 = vmatprep.subr.mxu0 0.0
    %1822 = vmatpush1.msra.mxu0 0.0
    %1823 = vmatprep.subr.mxu0 0.0
    %1824 = vmatpush1.msra.mxu0 0.0
    %1825 = vmatprep.subr.mxu0 0.0
    %1826 = vmatpush1.msra.mxu0 0.0
    %1827 = vmatprep.subr.mxu0 0.0
    %1828 = vmatpush1.msra.mxu0 0.0
    %1829 = vmatprep.subr.mxu0 0.0
    %1830 = vmatpush1.msra.mxu0 0.0
    %1831 = vmatprep.subr.mxu0 0.0
    %1832 = vmatpush1.msra.mxu0 0.0
    %1833 = vmatprep.subr.mxu0 0.0
    %1834 = vmatpush1.msra.mxu0 0.0
    %1835 = vmatprep.subr.mxu0 0.0
    %1836 = vmatpush1.msra.mxu0 0.0
    %1837 = vmatprep.subr.mxu0 0.0
    %1838 = vmatpush1.msra.mxu0 0.0
    %1839 = vmatprep.subr.mxu0 0.0
    %1840 = vmatpush1.msra.mxu0 0.0
    %1841 = vmatprep.subr.mxu0 0.0
    %1842 = vmatpush1.msra.mxu0 0.0
    %1843 = vmatprep.subr.mxu0 0.0
    %1844 = vmatpush1.msra.mxu0 0.0
    %1845 = vmatprep.subr.mxu0 0.0
    %1846 = vmatpush1.msra.mxu0 0.0
    %1847 = vmatprep.subr.mxu0 0.0
    %1848 = vmatpush1.msra.mxu0 0.0
    %1849 = vmatprep.subr.mxu0 0.0
    %1850 = vmatpush1.msra.mxu0 0.0
    %1851 = vmatprep.subr.mxu0 0.0
    %1852 = vmatpush1.msra.mxu0 0.0
    %1853 = vmatprep.subr.mxu0 0.0
    %1854 = vmatpush1.msra.mxu0 0.0
    %1855 = vmatprep.mubr.f32.mxu0 0.0
    %1856 = vmatmul.mubr.f32.gmra.mrb[0].mxu0 %v1789
    %v1857 = vpop.f32.mrb[0].mxu0
    %v1858 = vadd.f32 0.0, %v1857
    %v1859 = vpop.f32.mrb[0].mxu0
    %1860 = vdwg.mxu0
    %v1862 = vsel %vm1083, %v1775, 0
    %1864 = vmatprep.subr.mxu0 0.0
    %1865 = vmatpush1.msra.mxu0 %v1079
    %1866 = vmatprep.subr.mxu0 0.0
    %1867 = vmatpush1.msra.mxu0 0.0
    %1868 = vmatprep.subr.mxu0 0.0
    %1869 = vmatpush1.msra.mxu0 0.0
    %1870 = vmatprep.subr.mxu0 0.0
    %1871 = vmatpush1.msra.mxu0 0.0
    %1872 = vmatprep.subr.mxu0 0.0
    %1873 = vmatpush1.msra.mxu0 0.0
    %1874 = vmatprep.subr.mxu0 0.0
    %1875 = vmatpush1.msra.mxu0 0.0
    %1876 = vmatprep.subr.mxu0 0.0
    %1877 = vmatpush1.msra.mxu0 0.0
    %1878 = vmatprep.subr.mxu0 0.0
    %1879 = vmatpush1.msra.mxu0 0.0
    %1880 = vmatprep.subr.mxu0 0.0
    %1881 = vmatpush1.msra.mxu0 0.0
    %1882 = vmatprep.subr.mxu0 0.0
    %1883 = vmatpush1.msra.mxu0 0.0
    %1884 = vmatprep.subr.mxu0 0.0
    %1885 = vmatpush1.msra.mxu0 0.0
    %1886 = vmatprep.subr.mxu0 0.0
    %1887 = vmatpush1.msra.mxu0 0.0
    %1888 = vmatprep.subr.mxu0 0.0
    %1889 = vmatpush1.msra.mxu0 0.0
    %1890 = vmatprep.subr.mxu0 0.0
    %1891 = vmatpush1.msra.mxu0 0.0
    %1892 = vmatprep.subr.mxu0 0.0
    %1893 = vmatpush1.msra.mxu0 0.0
    %1894 = vmatprep.subr.mxu0 0.0
    %1895 = vmatpush1.msra.mxu0 0.0
    %1896 = vmatprep.subr.mxu0 0.0
    %1897 = vmatpush1.msra.mxu0 0.0
    %1898 = vmatprep.subr.mxu0 0.0
    %1899 = vmatpush1.msra.mxu0 0.0
    %1900 = vmatprep.subr.mxu0 0.0
    %1901 = vmatpush1.msra.mxu0 0.0
    %1902 = vmatprep.subr.mxu0 0.0
    %1903 = vmatpush1.msra.mxu0 0.0
    %1904 = vmatprep.subr.mxu0 0.0
    %1905 = vmatpush1.msra.mxu0 0.0
    %1906 = vmatprep.subr.mxu0 0.0
    %1907 = vmatpush1.msra.mxu0 0.0
    %1908 = vmatprep.subr.mxu0 0.0
    %1909 = vmatpush1.msra.mxu0 0.0
    %1910 = vmatprep.subr.mxu0 0.0
    %1911 = vmatpush1.msra.mxu0 0.0
    %1912 = vmatprep.subr.mxu0 0.0
    %1913 = vmatpush1.msra.mxu0 0.0
    %1914 = vmatprep.subr.mxu0 0.0
    %1915 = vmatpush1.msra.mxu0 0.0
    %1916 = vmatprep.subr.mxu0 0.0
    %1917 = vmatpush1.msra.mxu0 0.0
    %1918 = vmatprep.subr.mxu0 0.0
    %1919 = vmatpush1.msra.mxu0 0.0
    %1920 = vmatprep.subr.mxu0 0.0
    %1921 = vmatpush1.msra.mxu0 0.0
    %1922 = vmatprep.subr.mxu0 0.0
    %1923 = vmatpush1.msra.mxu0 0.0
    %1924 = vmatprep.subr.mxu0 0.0
    %1925 = vmatpush1.msra.mxu0 0.0
    %1926 = vmatprep.subr.mxu0 0.0
    %1927 = vmatpush1.msra.mxu0 0.0
    %1928 = vmatprep.mubr.f32.mxu0 0.0
    %1929 = vmatmul.mubr.f32.gmra.mrb[0].mxu0 %v1862
    %v1930 = vpop.f32.mrb[0].mxu0
    %v1931 = vadd.f32 0.0, %v1930
    %v1932 = vpop.f32.mrb[0].mxu0
    %1933 = vdwg.mxu0
    %v1935 = vsel %vm1083, %v1777, 0
    %1937 = vmatprep.subr.mxu0 0.0
    %1938 = vmatpush1.msra.mxu0 %v1012
    %1939 = vmatprep.subr.mxu0 0.0
    %1940 = vmatpush1.msra.mxu0 0.0
    %1941 = vmatprep.subr.mxu0 0.0
    %1942 = vmatpush1.msra.mxu0 0.0
    %1943 = vmatprep.subr.mxu0 0.0
    %1944 = vmatpush1.msra.mxu0 0.0
    %1945 = vmatprep.subr.mxu0 0.0
    %1946 = vmatpush1.msra.mxu0 0.0
    %1947 = vmatprep.subr.mxu0 0.0
    %1948 = vmatpush1.msra.mxu0 0.0
    %1949 = vmatprep.subr.mxu0 0.0
    %1950 = vmatpush1.msra.mxu0 0.0
    %1951 = vmatprep.subr.mxu0 0.0
    %1952 = vmatpush1.msra.mxu0 0.0
    %1953 = vmatprep.subr.mxu0 0.0
    %1954 = vmatpush1.msra.mxu0 0.0
    %1955 = vmatprep.subr.mxu0 0.0
    %1956 = vmatpush1.msra.mxu0 0.0
    %1957 = vmatprep.subr.mxu0 0.0
    %1958 = vmatpush1.msra.mxu0 0.0
    %1959 = vmatprep.subr.mxu0 0.0
    %1960 = vmatpush1.msra.mxu0 0.0
    %1961 = vmatprep.subr.mxu0 0.0
    %1962 = vmatpush1.msra.mxu0 0.0
    %1963 = vmatprep.subr.mxu0 0.0
    %1964 = vmatpush1.msra.mxu0 0.0
    %1965 = vmatprep.subr.mxu0 0.0
    %1966 = vmatpush1.msra.mxu0 0.0
    %1967 = vmatprep.subr.mxu0 0.0
    %1968 = vmatpush1.msra.mxu0 0.0
    %1969 = vmatprep.subr.mxu0 0.0
    %1970 = vmatpush1.msra.mxu0 0.0
    %1971 = vmatprep.subr.mxu0 0.0
    %1972 = vmatpush1.msra.mxu0 0.0
    %1973 = vmatprep.subr.mxu0 0.0
    %1974 = vmatpush1.msra.mxu0 0.0
    %1975 = vmatprep.subr.mxu0 0.0
    %1976 = vmatpush1.msra.mxu0 0.0
    %1977 = vmatprep.subr.mxu0 0.0
    %1978 = vmatpush1.msra.mxu0 0.0
    %1979 = vmatprep.subr.mxu0 0.0
    %1980 = vmatpush1.msra.mxu0 0.0
    %1981 = vmatprep.subr.mxu0 0.0
    %1982 = vmatpush1.msra.mxu0 0.0
    %1983 = vmatprep.subr.mxu0 0.0
    %1984 = vmatpush1.msra.mxu0 0.0
    %1985 = vmatprep.subr.mxu0 0.0
    %1986 = vmatpush1.msra.mxu0 0.0
    %1987 = vmatprep.subr.mxu0 0.0
    %1988 = vmatpush1.msra.mxu0 0.0
    %1989 = vmatprep.subr.mxu0 0.0
    %1990 = vmatpush1.msra.mxu0 0.0
    %1991 = vmatprep.subr.mxu0 0.0
    %1992 = vmatpush1.msra.mxu0 0.0
    %1993 = vmatprep.subr.mxu0 0.0
    %1994 = vmatpush1.msra.mxu0 0.0
    %1995 = vmatprep.subr.mxu0 0.0
    %1996 = vmatpush1.msra.mxu0 0.0
    %1997 = vmatprep.subr.mxu0 0.0
    %1998 = vmatpush1.msra.mxu0 0.0
    %1999 = vmatprep.subr.mxu0 0.0
    %2000 = vmatpush1.msra.mxu0 0.0
    %2001 = vmatprep.mubr.f32.mxu0 0.0
    %2002 = vmatmul.mubr.f32.gmra.mrb[0].mxu0 %v1935
    %v2003 = vpop.f32.mrb[0].mxu0
    %v2004 = vadd.f32 0.0, %v2003
    %v2005 = vpop.f32.mrb[0].mxu0
    %2006 = vdwg.mxu0
    %v2008 = vsel %vm1083, %v1779, 0
    %2010 = vmatprep.subr.mxu0 0.0
    %2011 = vmatpush1.msra.mxu0 %v1080
    %2012 = vmatprep.subr.mxu0 0.0
    %2013 = vmatpush1.msra.mxu0 0.0
    %2014 = vmatprep.subr.mxu0 0.0
    %2015 = vmatpush1.msra.mxu0 0.0
    %2016 = vmatprep.subr.mxu0 0.0
    %2017 = vmatpush1.msra.mxu0 0.0
    %2018 = vmatprep.subr.mxu0 0.0
    %2019 = vmatpush1.msra.mxu0 0.0
    %2020 = vmatprep.subr.mxu0 0.0
    %2021 = vmatpush1.msra.mxu0 0.0
    %2022 = vmatprep.subr.mxu0 0.0
    %2023 = vmatpush1.msra.mxu0 0.0
    %2024 = vmatprep.subr.mxu0 0.0
    %2025 = vmatpush1.msra.mxu0 0.0
    %2026 = vmatprep.subr.mxu0 0.0
    %2027 = vmatpush1.msra.mxu0 0.0
    %2028 = vmatprep.subr.mxu0 0.0
    %2029 = vmatpush1.msra.mxu0 0.0
    %2030 = vmatprep.subr.mxu0 0.0
    %2031 = vmatpush1.msra.mxu0 0.0
    %2032 = vmatprep.subr.mxu0 0.0
    %2033 = vmatpush1.msra.mxu0 0.0
    %2034 = vmatprep.subr.mxu0 0.0
    %2035 = vmatpush1.msra.mxu0 0.0
    %2036 = vmatprep.subr.mxu0 0.0
    %2037 = vmatpush1.msra.mxu0 0.0
    %2038 = vmatprep.subr.mxu0 0.0
    %2039 = vmatpush1.msra.mxu0 0.0
    %2040 = vmatprep.subr.mxu0 0.0
    %2041 = vmatpush1.msra.mxu0 0.0
    %2042 = vmatprep.subr.mxu0 0.0
    %2043 = vmatpush1.msra.mxu0 0.0
    %2044 = vmatprep.subr.mxu0 0.0
    %2045 = vmatpush1.msra.mxu0 0.0
    %2046 = vmatprep.subr.mxu0 0.0
    %2047 = vmatpush1.msra.mxu0 0.0
    %2048 = vmatprep.subr.mxu0 0.0
    %2049 = vmatpush1.msra.mxu0 0.0
    %2050 = vmatprep.subr.mxu0 0.0
    %2051 = vmatpush1.msra.mxu0 0.0
    %2052 = vmatprep.subr.mxu0 0.0
    %2053 = vmatpush1.msra.mxu0 0.0
    %2054 = vmatprep.subr.mxu0 0.0
    %2055 = vmatpush1.msra.mxu0 0.0
    %2056 = vmatprep.subr.mxu0 0.0
    %2057 = vmatpush1.msra.mxu0 0.0
    %2058 = vmatprep.subr.mxu0 0.0
    %2059 = vmatpush1.msra.mxu0 0.0
    %2060 = vmatprep.subr.mxu0 0.0
    %2061 = vmatpush1.msra.mxu0 0.0
    %2062 = vmatprep.subr.mxu0 0.0
    %2063 = vmatpush1.msra.mxu0 0.0
    %2064 = vmatprep.subr.mxu0 0.0
    %2065 = vmatpush1.msra.mxu0 0.0
    %2066 = vmatprep.subr.mxu0 0.0
    %2067 = vmatpush1.msra.mxu0 0.0
    %2068 = vmatprep.subr.mxu0 0.0
    %2069 = vmatpush1.msra.mxu0 0.0
    %2070 = vmatprep.subr.mxu0 0.0
    %2071 = vmatpush1.msra.mxu0 0.0
    %2072 = vmatprep.subr.mxu0 0.0
    %2073 = vmatpush1.msra.mxu0 0.0
    %2074 = vmatprep.mubr.f32.mxu0 0.0
    %2075 = vmatmul.mubr.f32.gmra.mrb[0].mxu0 %v2008
    %v2076 = vpop.f32.mrb[0].mxu0
    %v2077 = vadd.f32 0.0, %v2076
    %v2078 = vpop.f32.mrb[0].mxu0
    %2079 = vdwg.mxu0
    %v2081 = vsel %vm1083, %v1781, 0
    %2083 = vmatprep.subr.mxu0 0.0
    %2084 = vmatpush1.msra.mxu0 %v1013
    %2085 = vmatprep.subr.mxu0 0.0
    %2086 = vmatpush1.msra.mxu0 0.0
    %2087 = vmatprep.subr.mxu0 0.0
    %2088 = vmatpush1.msra.mxu0 0.0
    %2089 = vmatprep.subr.mxu0 0.0
    %2090 = vmatpush1.msra.mxu0 0.0
    %2091 = vmatprep.subr.mxu0 0.0
    %2092 = vmatpush1.msra.mxu0 0.0
    %2093 = vmatprep.subr.mxu0 0.0
    %2094 = vmatpush1.msra.mxu0 0.0
    %2095 = vmatprep.subr.mxu0 0.0
    %2096 = vmatpush1.msra.mxu0 0.0
    %2097 = vmatprep.subr.mxu0 0.0
    %2098 = vmatpush1.msra.mxu0 0.0
    %2099 = vmatprep.subr.mxu0 0.0
    %2100 = vmatpush1.msra.mxu0 0.0
    %2101 = vmatprep.subr.mxu0 0.0
    %2102 = vmatpush1.msra.mxu0 0.0
    %2103 = vmatprep.subr.mxu0 0.0
    %2104 = vmatpush1.msra.mxu0 0.0
    %2105 = vmatprep.subr.mxu0 0.0
    %2106 = vmatpush1.msra.mxu0 0.0
    %2107 = vmatprep.subr.mxu0 0.0
    %2108 = vmatpush1.msra.mxu0 0.0
    %2109 = vmatprep.subr.mxu0 0.0
    %2110 = vmatpush1.msra.mxu0 0.0
    %2111 = vmatprep.subr.mxu0 0.0
    %2112 = vmatpush1.msra.mxu0 0.0
    %2113 = vmatprep.subr.mxu0 0.0
    %2114 = vmatpush1.msra.mxu0 0.0
    %2115 = vmatprep.subr.mxu0 0.0
    %2116 = vmatpush1.msra.mxu0 0.0
    %2117 = vmatprep.subr.mxu0 0.0
    %2118 = vmatpush1.msra.mxu0 0.0
    %2119 = vmatprep.subr.mxu0 0.0
    %2120 = vmatpush1.msra.mxu0 0.0
    %2121 = vmatprep.subr.mxu0 0.0
    %2122 = vmatpush1.msra.mxu0 0.0
    %2123 = vmatprep.subr.mxu0 0.0
    %2124 = vmatpush1.msra.mxu0 0.0
    %2125 = vmatprep.subr.mxu0 0.0
    %2126 = vmatpush1.msra.mxu0 0.0
    %2127 = vmatprep.subr.mxu0 0.0
    %2128 = vmatpush1.msra.mxu0 0.0
    %2129 = vmatprep.subr.mxu0 0.0
    %2130 = vmatpush1.msra.mxu0 0.0
    %2131 = vmatprep.subr.mxu0 0.0
    %2132 = vmatpush1.msra.mxu0 0.0
    %2133 = vmatprep.subr.mxu0 0.0
    %2134 = vmatpush1.msra.mxu0 0.0
    %2135 = vmatprep.subr.mxu0 0.0
    %2136 = vmatpush1.msra.mxu0 0.0
    %2137 = vmatprep.subr.mxu0 0.0
    %2138 = vmatpush1.msra.mxu0 0.0
    %2139 = vmatprep.subr.mxu0 0.0
    %2140 = vmatpush1.msra.mxu0 0.0
    %2141 = vmatprep.subr.mxu0 0.0
    %2142 = vmatpush1.msra.mxu0 0.0
    %2143 = vmatprep.subr.mxu0 0.0
    %2144 = vmatpush1.msra.mxu0 0.0
    %2145 = vmatprep.subr.mxu0 0.0
    %2146 = vmatpush1.msra.mxu0 0.0
    %2147 = vmatprep.mubr.f32.mxu0 0.0
    %2148 = vmatmul.mubr.f32.gmra.mrb[0].mxu0 %v2081
    %v2149 = vpop.f32.mrb[0].mxu0
    %v2150 = vadd.f32 0.0, %v2149
    %v2151 = vpop.f32.mrb[0].mxu0
    %2152 = vdwg.mxu0
    %v2154 = vsel %vm1083, %v1783, 0
    %2156 = vmatprep.subr.mxu0 0.0
    %2157 = vmatpush1.msra.mxu0 %v1081
    %2158 = vmatprep.subr.mxu0 0.0
    %2159 = vmatpush1.msra.mxu0 0.0
    %2160 = vmatprep.subr.mxu0 0.0
    %2161 = vmatpush1.msra.mxu0 0.0
    %2162 = vmatprep.subr.mxu0 0.0
    %2163 = vmatpush1.msra.mxu0 0.0
    %2164 = vmatprep.subr.mxu0 0.0
    %2165 = vmatpush1.msra.mxu0 0.0
    %2166 = vmatprep.subr.mxu0 0.0
    %2167 = vmatpush1.msra.mxu0 0.0
    %2168 = vmatprep.subr.mxu0 0.0
    %2169 = vmatpush1.msra.mxu0 0.0
    %2170 = vmatprep.subr.mxu0 0.0
    %2171 = vmatpush1.msra.mxu0 0.0
    %2172 = vmatprep.subr.mxu0 0.0
    %2173 = vmatpush1.msra.mxu0 0.0
    %2174 = vmatprep.subr.mxu0 0.0
    %2175 = vmatpush1.msra.mxu0 0.0
    %2176 = vmatprep.subr.mxu0 0.0
    %2177 = vmatpush1.msra.mxu0 0.0
    %2178 = vmatprep.subr.mxu0 0.0
    %2179 = vmatpush1.msra.mxu0 0.0
    %2180 = vmatprep.subr.mxu0 0.0
    %2181 = vmatpush1.msra.mxu0 0.0
    %2182 = vmatprep.subr.mxu0 0.0
    %2183 = vmatpush1.msra.mxu0 0.0
    %2184 = vmatprep.subr.mxu0 0.0
    %2185 = vmatpush1.msra.mxu0 0.0
    %2186 = vmatprep.subr.mxu0 0.0
    %2187 = vmatpush1.msra.mxu0 0.0
    %2188 = vmatprep.subr.mxu0 0.0
    %2189 = vmatpush1.msra.mxu0 0.0
    %2190 = vmatprep.subr.mxu0 0.0
    %2191 = vmatpush1.msra.mxu0 0.0
    %2192 = vmatprep.subr.mxu0 0.0
    %2193 = vmatpush1.msra.mxu0 0.0
    %2194 = vmatprep.subr.mxu0 0.0
    %2195 = vmatpush1.msra.mxu0 0.0
    %2196 = vmatprep.subr.mxu0 0.0
    %2197 = vmatpush1.msra.mxu0 0.0
    %2198 = vmatprep.subr.mxu0 0.0
    %2199 = vmatpush1.msra.mxu0 0.0
    %2200 = vmatprep.subr.mxu0 0.0
    %2201 = vmatpush1.msra.mxu0 0.0
    %2202 = vmatprep.subr.mxu0 0.0
    %2203 = vmatpush1.msra.mxu0 0.0
    %2204 = vmatprep.subr.mxu0 0.0
    %2205 = vmatpush1.msra.mxu0 0.0
    %2206 = vmatprep.subr.mxu0 0.0
    %2207 = vmatpush1.msra.mxu0 0.0
    %2208 = vmatprep.subr.mxu0 0.0
    %2209 = vmatpush1.msra.mxu0 0.0
    %2210 = vmatprep.subr.mxu0 0.0
    %2211 = vmatpush1.msra.mxu0 0.0
    %2212 = vmatprep.subr.mxu0 0.0
    %2213 = vmatpush1.msra.mxu0 0.0
    %2214 = vmatprep.subr.mxu0 0.0
    %2215 = vmatpush1.msra.mxu0 0.0
    %2216 = vmatprep.subr.mxu0 0.0
    %2217 = vmatpush1.msra.mxu0 0.0
    %2218 = vmatprep.subr.mxu0 0.0
    %2219 = vmatpush1.msra.mxu0 0.0
    %2220 = vmatprep.mubr.f32.mxu0 0.0
    %2221 = vmatmul.mubr.f32.gmra.mrb[0].mxu0 %v2154
    %v2222 = vpop.f32.mrb[0].mxu0
    %v2223 = vadd.f32 0.0, %v2222
    %v2224 = vpop.f32.mrb[0].mxu0
    %2225 = vdwg.mxu0
    %v2227 = vsel %vm1083, %v1785, 0
    %2229 = vmatprep.subr.mxu0 0.0
    %2230 = vmatpush1.msra.mxu0 %v1014
    %2231 = vmatprep.subr.mxu0 0.0
    %2232 = vmatpush1.msra.mxu0 0.0
    %2233 = vmatprep.subr.mxu0 0.0
    %2234 = vmatpush1.msra.mxu0 0.0
    %2235 = vmatprep.subr.mxu0 0.0
    %2236 = vmatpush1.msra.mxu0 0.0
    %2237 = vmatprep.subr.mxu0 0.0
    %2238 = vmatpush1.msra.mxu0 0.0
    %2239 = vmatprep.subr.mxu0 0.0
    %2240 = vmatpush1.msra.mxu0 0.0
    %2241 = vmatprep.subr.mxu0 0.0
    %2242 = vmatpush1.msra.mxu0 0.0
    %2243 = vmatprep.subr.mxu0 0.0
    %2244 = vmatpush1.msra.mxu0 0.0
    %2245 = vmatprep.subr.mxu0 0.0
    %2246 = vmatpush1.msra.mxu0 0.0
    %2247 = vmatprep.subr.mxu0 0.0
    %2248 = vmatpush1.msra.mxu0 0.0
    %2249 = vmatprep.subr.mxu0 0.0
    %2250 = vmatpush1.msra.mxu0 0.0
    %2251 = vmatprep.subr.mxu0 0.0
    %2252 = vmatpush1.msra.mxu0 0.0
    %2253 = vmatprep.subr.mxu0 0.0
    %2254 = vmatpush1.msra.mxu0 0.0
    %2255 = vmatprep.subr.mxu0 0.0
    %2256 = vmatpush1.msra.mxu0 0.0
    %2257 = vmatprep.subr.mxu0 0.0
    %2258 = vmatpush1.msra.mxu0 0.0
    %2259 = vmatprep.subr.mxu0 0.0
    %2260 = vmatpush1.msra.mxu0 0.0
    %2261 = vmatprep.subr.mxu0 0.0
    %2262 = vmatpush1.msra.mxu0 0.0
    %2263 = vmatprep.subr.mxu0 0.0
    %2264 = vmatpush1.msra.mxu0 0.0
    %2265 = vmatprep.subr.mxu0 0.0
    %2266 = vmatpush1.msra.mxu0 0.0
    %2267 = vmatprep.subr.mxu0 0.0
    %2268 = vmatpush1.msra.mxu0 0.0
    %2269 = vmatprep.subr.mxu0 0.0
    %2270 = vmatpush1.msra.mxu0 0.0
    %2271 = vmatprep.subr.mxu0 0.0
    %2272 = vmatpush1.msra.mxu0 0.0
    %2273 = vmatprep.subr.mxu0 0.0
    %2274 = vmatpush1.msra.mxu0 0.0
    %2275 = vmatprep.subr.mxu0 0.0
    %2276 = vmatpush1.msra.mxu0 0.0
    %2277 = vmatprep.subr.mxu0 0.0
    %2278 = vmatpush1.msra.mxu0 0.0
    %2279 = vmatprep.subr.mxu0 0.0
    %2280 = vmatpush1.msra.mxu0 0.0
    %2281 = vmatprep.subr.mxu0 0.0
    %2282 = vmatpush1.msra.mxu0 0.0
    %2283 = vmatprep.subr.mxu0 0.0
    %2284 = vmatpush1.msra.mxu0 0.0
    %2285 = vmatprep.subr.mxu0 0.0
    %2286 = vmatpush1.msra.mxu0 0.0
    %2287 = vmatprep.subr.mxu0 0.0
    %2288 = vmatpush1.msra.mxu0 0.0
    %2289 = vmatprep.subr.mxu0 0.0
    %2290 = vmatpush1.msra.mxu0 0.0
    %2291 = vmatprep.subr.mxu0 0.0
    %2292 = vmatpush1.msra.mxu0 0.0
    %2293 = vmatprep.mubr.f32.mxu0 0.0
    %2294 = vmatmul.mubr.f32.gmra.mrb[0].mxu0 %v2227
    %v2295 = vpop.f32.mrb[0].mxu0
    %v2296 = vadd.f32 0.0, %v2295
    %v2297 = vpop.f32.mrb[0].mxu0
    %2298 = vdwg.mxu0
    %v2300 = vsel %vm1083, %v1787, 0
    %2302 = vmatprep.subr.mxu0 0.0
    %2303 = vmatpush1.msra.mxu0 %v1082
    %2304 = vmatprep.subr.mxu0 0.0
    %2305 = vmatpush1.msra.mxu0 0.0
    %2306 = vmatprep.subr.mxu0 0.0
    %2307 = vmatpush1.msra.mxu0 0.0
    %2308 = vmatprep.subr.mxu0 0.0
    %2309 = vmatpush1.msra.mxu0 0.0
    %2310 = vmatprep.subr.mxu0 0.0
    %2311 = vmatpush1.msra.mxu0 0.0
    %2312 = vmatprep.subr.mxu0 0.0
    %2313 = vmatpush1.msra.mxu0 0.0
    %2314 = vmatprep.subr.mxu0 0.0
    %2315 = vmatpush1.msra.mxu0 0.0
    %2316 = vmatprep.subr.mxu0 0.0
    %2317 = vmatpush1.msra.mxu0 0.0
    %2318 = vmatprep.subr.mxu0 0.0
    %2319 = vmatpush1.msra.mxu0 0.0
    %2320 = vmatprep.subr.mxu0 0.0
    %2321 = vmatpush1.msra.mxu0 0.0
    %2322 = vmatprep.subr.mxu0 0.0
    %2323 = vmatpush1.msra.mxu0 0.0
    %2324 = vmatprep.subr.mxu0 0.0
    %2325 = vmatpush1.msra.mxu0 0.0
    %2326 = vmatprep.subr.mxu0 0.0
    %2327 = vmatpush1.msra.mxu0 0.0
    %2328 = vmatprep.subr.mxu0 0.0
    %2329 = vmatpush1.msra.mxu0 0.0
    %2330 = vmatprep.subr.mxu0 0.0
    %2331 = vmatpush1.msra.mxu0 0.0
    %2332 = vmatprep.subr.mxu0 0.0
    %2333 = vmatpush1.msra.mxu0 0.0
    %2334 = vmatprep.subr.mxu0 0.0
    %2335 = vmatpush1.msra.mxu0 0.0
    %2336 = vmatprep.subr.mxu0 0.0
    %2337 = vmatpush1.msra.mxu0 0.0
    %2338 = vmatprep.subr.mxu0 0.0
    %2339 = vmatpush1.msra.mxu0 0.0
    %2340 = vmatprep.subr.mxu0 0.0
    %2341 = vmatpush1.msra.mxu0 0.0
    %2342 = vmatprep.subr.mxu0 0.0
    %2343 = vmatpush1.msra.mxu0 0.0
    %2344 = vmatprep.subr.mxu0 0.0
    %2345 = vmatpush1.msra.mxu0 0.0
    %2346 = vmatprep.subr.mxu0 0.0
    %2347 = vmatpush1.msra.mxu0 0.0
    %2348 = vmatprep.subr.mxu0 0.0
    %2349 = vmatpush1.msra.mxu0 0.0
    %2350 = vmatprep.subr.mxu0 0.0
    %2351 = vmatpush1.msra.mxu0 0.0
    %2352 = vmatprep.subr.mxu0 0.0
    %2353 = vmatpush1.msra.mxu0 0.0
    %2354 = vmatprep.subr.mxu0 0.0
    %2355 = vmatpush1.msra.mxu0 0.0
    %2356 = vmatprep.subr.mxu0 0.0
    %2357 = vmatpush1.msra.mxu0 0.0
    %2358 = vmatprep.subr.mxu0 0.0
    %2359 = vmatpush1.msra.mxu0 0.0
    %2360 = vmatprep.subr.mxu0 0.0
    %2361 = vmatpush1.msra.mxu0 0.0
    %2362 = vmatprep.subr.mxu0 0.0
    %2363 = vmatpush1.msra.mxu0 0.0
    %2364 = vmatprep.subr.mxu0 0.0
    %2365 = vmatpush1.msra.mxu0 0.0
    %2366 = vmatprep.mubr.f32.mxu0 0.0
    %2367 = vmatmul.mubr.f32.gmra.mrb[0].mxu0 %v2300
    %v2368 = vpop.f32.mrb[0].mxu0
    %v2369 = vadd.f32 0.0, %v2368
    %v2370 = vpop.f32.mrb[0].mxu0
    %2371 = vdwg.mxu0
    %v2372 = vcombine.low %v1858, %v2150
    %v2373 = vcombine.high %v1858, %v2150
    %v2375 = vunpack.c.l.s4 1983009808
    %v2376 = vunpack.c.0.s8 %v2375
    %v2377 = vlaneseq
    %v2378 = vshrl.u32 %v2377, 7
    %v2379 = vsub.s32 %v2376, %v2378
    %v2380 = vrot.slane %v2372, %v2379
    %v2382 = vunpack.c.l.s4 1983009808
    %v2383 = vunpack.c.0.s8 %v2382
    %v2384 = vlaneseq
    %v2385 = vshrl.u32 %v2384, 7
    %v2386 = vsub.s32 %v2383, %v2385
    %v2387 = vrot.slane %v2373, %v2386
    %v2388 = vcombine.low %v2004, %v2296
    %v2389 = vcombine.high %v2004, %v2296
    %v2391 = vunpack.c.l.s4 1983009808
    %v2392 = vunpack.c.0.s8 %v2391
    %v2393 = vlaneseq
    %v2394 = vshrl.u32 %v2393, 7
    %v2395 = vsub.s32 %v2392, %v2394
    %v2396 = vrot.slane %v2388, %v2395
    %v2398 = vunpack.c.l.s4 1983009808
    %v2399 = vunpack.c.0.s8 %v2398
    %v2400 = vlaneseq
    %v2401 = vshrl.u32 %v2400, 7
    %v2402 = vsub.s32 %v2399, %v2401
    %v2403 = vrot.slane %v2389, %v2402
    %v2404 = vcombine.low %v2380, %v2396
    %v2405 = vcombine.high %v2380, %v2396
    %v2407 = vunpack.c.l.s4 1934713408
    %v2408 = vunpack.c.0.s8 %v2407
    %v2409 = vlaneseq
    %v2410 = vshrl.u32 %v2409, 7
    %v2411 = vsub.s32 %v2408, %v2410
    %v2412 = vrot.slane %v2404, %v2411
    %v2414 = vunpack.c.l.s4 1934713408
    %v2415 = vunpack.c.0.s8 %v2414
    %v2416 = vlaneseq
    %v2417 = vshrl.u32 %v2416, 7
    %v2418 = vsub.s32 %v2415, %v2417
    %v2419 = vrot.slane %v2405, %v2418
    %v2420 = vcombine.low %v2387, %v2403
    %v2421 = vcombine.high %v2387, %v2403
    %v2423 = vunpack.c.l.s4 1934713408
    %v2424 = vunpack.c.0.s8 %v2423
    %v2425 = vlaneseq
    %v2426 = vshrl.u32 %v2425, 7
    %v2427 = vsub.s32 %v2424, %v2426
    %v2428 = vrot.slane %v2420, %v2427
    %v2430 = vunpack.c.l.s4 1934713408
    %v2431 = vunpack.c.0.s8 %v2430
    %v2432 = vlaneseq
    %v2433 = vshrl.u32 %v2432, 7
    %v2434 = vsub.s32 %v2431, %v2433
    %v2435 = vrot.slane %v2421, %v2434
    %v2436 = vcombine.high %v2412, 0.0
    %v2437 = vcombine.high %v2419, 0.0
    %v2438 = vcombine.high %v2428, 0.0
    %v2439 = vcombine.high %v2435, 0.0
    %v2440 = vcombine.low %v1931, %v2223
    %v2441 = vcombine.high %v1931, %v2223
    %v2443 = vunpack.c.l.s4 1983009808
    %v2444 = vunpack.c.0.s8 %v2443
    %v2445 = vlaneseq
    %v2446 = vshrl.u32 %v2445, 7
    %v2447 = vsub.s32 %v2444, %v2446
    %v2448 = vrot.slane %v2440, %v2447
    %v2450 = vunpack.c.l.s4 1983009808
    %v2451 = vunpack.c.0.s8 %v2450
    %v2452 = vlaneseq
    %v2453 = vshrl.u32 %v2452, 7
    %v2454 = vsub.s32 %v2451, %v2453
    %v2455 = vrot.slane %v2441, %v2454
    %v2456 = vcombine.low %v2077, %v2369
    %v2457 = vcombine.high %v2077, %v2369
    %v2459 = vunpack.c.l.s4 1983009808
    %v2460 = vunpack.c.0.s8 %v2459
    %v2461 = vlaneseq
    %v2462 = vshrl.u32 %v2461, 7
    %v2463 = vsub.s32 %v2460, %v2462
    %v2464 = vrot.slane %v2456, %v2463
    %v2466 = vunpack.c.l.s4 1983009808
    %v2467 = vunpack.c.0.s8 %v2466
    %v2468 = vlaneseq
    %v2469 = vshrl.u32 %v2468, 7
    %v2470 = vsub.s32 %v2467, %v2469
    %v2471 = vrot.slane %v2457, %v2470
    %v2472 = vcombine.low %v2448, %v2464
    %v2473 = vcombine.high %v2448, %v2464
    %v2475 = vunpack.c.l.s4 1934713408
    %v2476 = vunpack.c.0.s8 %v2475
    %v2477 = vlaneseq
    %v2478 = vshrl.u32 %v2477, 7
    %v2479 = vsub.s32 %v2476, %v2478
    %v2480 = vrot.slane %v2472, %v2479
    %v2482 = vunpack.c.l.s4 1934713408
    %v2483 = vunpack.c.0.s8 %v2482
    %v2484 = vlaneseq
    %v2485 = vshrl.u32 %v2484, 7
    %v2486 = vsub.s32 %v2483, %v2485
    %v2487 = vrot.slane %v2473, %v2486
    %v2488 = vcombine.low %v2455, %v2471
    %v2489 = vcombine.high %v2455, %v2471
    %v2491 = vunpack.c.l.s4 1934713408
    %v2492 = vunpack.c.0.s8 %v2491
    %v2493 = vlaneseq
    %v2494 = vshrl.u32 %v2493, 7
    %v2495 = vsub.s32 %v2492, %v2494
    %v2496 = vrot.slane %v2488, %v2495
    %v2498 = vunpack.c.l.s4 1934713408
    %v2499 = vunpack.c.0.s8 %v2498
    %v2500 = vlaneseq
    %v2501 = vshrl.u32 %v2500, 7
    %v2502 = vsub.s32 %v2499, %v2501
    %v2503 = vrot.slane %v2489, %v2502
    %v2504 = vcombine.high %v2480, 0.0
    %v2505 = vcombine.high %v2487, 0.0
    %v2506 = vcombine.high %v2496, 0.0
    %v2507 = vcombine.high %v2503, 0.0
    %v2508 = vcombine.low %v2412, %v2419
    %v2510 = vunpack.c.l.s4 1983009808
    %v2511 = vunpack.c.0.s8 %v2510
    %v2512 = vlaneseq
    %v2513 = vshrl.u32 %v2512, 7
    %v2514 = vsub.s32 %v2511, %v2513
    %v2515 = vrot.slane %v2508, %v2514
    %v2516 = vcombine.low %v2436, %v2437
    %v2518 = vunpack.c.l.s4 1983009808
    %v2519 = vunpack.c.0.s8 %v2518
    %v2520 = vlaneseq
    %v2521 = vshrl.u32 %v2520, 7
    %v2522 = vsub.s32 %v2519, %v2521
    %v2523 = vrot.slane %v2516, %v2522
    %v2524 = vcombine.low %v2428, %v2435
    %v2526 = vunpack.c.l.s4 1983009808
    %v2527 = vunpack.c.0.s8 %v2526
    %v2528 = vlaneseq
    %v2529 = vshrl.u32 %v2528, 7
    %v2530 = vsub.s32 %v2527, %v2529
    %v2531 = vrot.slane %v2524, %v2530
    %v2532 = vcombine.low %v2438, %v2439
    %v2534 = vunpack.c.l.s4 1983009808
    %v2535 = vunpack.c.0.s8 %v2534
    %v2536 = vlaneseq
    %v2537 = vshrl.u32 %v2536, 7
    %v2538 = vsub.s32 %v2535, %v2537
    %v2539 = vrot.slane %v2532, %v2538
    %v2540 = vcombine.low %v2515, %v2523
    %v2541 = vcombine.high %v2515, %v2523
    %v2543 = vunpack.c.l.s4 1934713408
    %v2544 = vunpack.c.0.s8 %v2543
    %v2545 = vlaneseq
    %v2546 = vshrl.u32 %v2545, 7
    %v2547 = vsub.s32 %v2544, %v2546
    %v2548 = vrot.slane %v2540, %v2547
    %v2550 = vunpack.c.l.s4 1934713408
    %v2551 = vunpack.c.0.s8 %v2550
    %v2552 = vlaneseq
    %v2553 = vshrl.u32 %v2552, 7
    %v2554 = vsub.s32 %v2551, %v2553
    %v2555 = vrot.slane %v2541, %v2554
    %v2556 = vcombine.low %v2531, %v2539
    %v2557 = vcombine.high %v2531, %v2539
    %v2559 = vunpack.c.l.s4 1934713408
    %v2560 = vunpack.c.0.s8 %v2559
    %v2561 = vlaneseq
    %v2562 = vshrl.u32 %v2561, 7
    %v2563 = vsub.s32 %v2560, %v2562
    %v2564 = vrot.slane %v2556, %v2563
    %v2566 = vunpack.c.l.s4 1934713408
    %v2567 = vunpack.c.0.s8 %v2566
    %v2568 = vlaneseq
    %v2569 = vshrl.u32 %v2568, 7
    %v2570 = vsub.s32 %v2567, %v2569
    %v2571 = vrot.slane %v2557, %v2570
    %v2572 = vcombine.low %v2548, %v2564
    %v2573 = vcombine.high %v2548, %v2564
    %v2574 = vcombine.low %v2555, %v2571
    %v2575 = vcombine.high %v2555, %v2571
    %v2576 = vcombine.low %v2480, %v2487
    %v2578 = vunpack.c.l.s4 1983009808
    %v2579 = vunpack.c.0.s8 %v2578
    %v2580 = vlaneseq
    %v2581 = vshrl.u32 %v2580, 7
    %v2582 = vsub.s32 %v2579, %v2581
    %v2583 = vrot.slane %v2576, %v2582
    %v2584 = vcombine.low %v2504, %v2505
    %v2586 = vunpack.c.l.s4 1983009808
    %v2587 = vunpack.c.0.s8 %v2586
    %v2588 = vlaneseq
    %v2589 = vshrl.u32 %v2588, 7
    %v2590 = vsub.s32 %v2587, %v2589
    %v2591 = vrot.slane %v2584, %v2590
    %v2592 = vcombine.low %v2496, %v2503
    %v2594 = vunpack.c.l.s4 1983009808
    %v2595 = vunpack.c.0.s8 %v2594
    %v2596 = vlaneseq
    %v2597 = vshrl.u32 %v2596, 7
    %v2598 = vsub.s32 %v2595, %v2597
    %v2599 = vrot.slane %v2592, %v2598
    %v2600 = vcombine.low %v2506, %v2507
    %v2602 = vunpack.c.l.s4 1983009808
    %v2603 = vunpack.c.0.s8 %v2602
    %v2604 = vlaneseq
    %v2605 = vshrl.u32 %v2604, 7
    %v2606 = vsub.s32 %v2603, %v2605
    %v2607 = vrot.slane %v2600, %v2606
    %v2608 = vcombine.low %v2583, %v2591
    %v2609 = vcombine.high %v2583, %v2591
    %v2611 = vunpack.c.l.s4 1934713408
    %v2612 = vunpack.c.0.s8 %v2611
    %v2613 = vlaneseq
    %v2614 = vshrl.u32 %v2613, 7
    %v2615 = vsub.s32 %v2612, %v2614
    %v2616 = vrot.slane %v2608, %v2615
    %v2618 = vunpack.c.l.s4 1934713408
    %v2619 = vunpack.c.0.s8 %v2618
    %v2620 = vlaneseq
    %v2621 = vshrl.u32 %v2620, 7
    %v2622 = vsub.s32 %v2619, %v2621
    %v2623 = vrot.slane %v2609, %v2622
    %v2624 = vcombine.low %v2599, %v2607
    %v2625 = vcombine.high %v2599, %v2607
    %v2627 = vunpack.c.l.s4 1934713408
    %v2628 = vunpack.c.0.s8 %v2627
    %v2629 = vlaneseq
    %v2630 = vshrl.u32 %v2629, 7
    %v2631 = vsub.s32 %v2628, %v2630
    %v2632 = vrot.slane %v2624, %v2631
    %v2634 = vunpack.c.l.s4 1934713408
    %v2635 = vunpack.c.0.s8 %v2634
    %v2636 = vlaneseq
    %v2637 = vshrl.u32 %v2636, 7
    %v2638 = vsub.s32 %v2635, %v2637
    %v2639 = vrot.slane %v2625, %v2638
    %v2640 = vcombine.low %v2616, %v2632
    %v2641 = vcombine.high %v2616, %v2632
    %v2642 = vcombine.low %v2623, %v2639
    %v2643 = vcombine.high %v2623, %v2639
    %2646 = vrot.lane.b32.xlu0 %v2573, 8
    %v2647 = vpop.permute.xlu0 %2646
    %2648 = vrot.lane.b32.xlu0 %v2641, 8
    %v2649 = vpop.permute.xlu0 %2648
    %2654 = vrot.lane.b32.xlu0 %v2574, 16
    %v2655 = vpop.permute.xlu0 %2654
    %2656 = vrot.lane.b32.xlu0 %v2642, 16
    %v2657 = vpop.permute.xlu0 %2656
    %2662 = vrot.lane.b32.xlu0 %v2575, 24
    %v2663 = vpop.permute.xlu0 %2662
    %2664 = vrot.lane.b32.xlu0 %v2643, 24
    %v2665 = vpop.permute.xlu0 %2664
    %v2668 = vsel %vm1083, %v2572, %v2647
    %v2669 = vsel %vm1083, %v2640, %v2649
    %v2670 = vsel %vm117, %v2668, %v2655
    %v2671 = vsel %vm117, %v2669, %v2657
    %vm2672 = vcmask 195584
    %v2673 = vsel %vm2672, %v2670, %v2663
    %v2674 = vsel %vm2672, %v2671, %v2665
    %v2675 = vadd.f32 %v191, %v2673
    %v2676 = vadd.f32 %v196, %v2674
    %v2678 = vlaneseq
    %v2679 = vshrl.u32 %v2678, 7
    %v2680 = vsub.s32 0, %v2679
    %v2681 = vrot.slane %v110, %v2680
    %vm2683 = vcmask 261120
    %v2685 = vsel %vm2683, %v2675, 0
    %v2688 = vsel %vm2683, %v2676, 0
    %2690 = vmatprep.subr.mxu0 0.0
    %2691 = vmatpush1.msra.mxu0 %v106
    %2692 = vmatprep.subr.mxu0 0.0
    %2693 = vmatpush1.msra.mxu0 %v107
    %2694 = vmatprep.subr.mxu0 0.0
    %2695 = vmatpush1.msra.mxu0 %v108
    %2696 = vmatprep.subr.mxu0 0.0
    %2697 = vmatpush1.msra.mxu0 %v109
    %2698 = vmatprep.subr.mxu0 0.0
    %2699 = vmatpush1.msra.mxu0 0.0
    %2700 = vmatprep.subr.mxu0 0.0
    %2701 = vmatpush1.msra.mxu0 0.0
    %2702 = vmatprep.subr.mxu0 0.0
    %2703 = vmatpush1.msra.mxu0 0.0
    %2704 = vmatprep.subr.mxu0 0.0
    %2705 = vmatpush1.msra.mxu0 0.0
    %2706 = vmatprep.subr.mxu0 0.0
    %2707 = vmatpush1.msra.mxu0 0.0
    %2708 = vmatprep.subr.mxu0 0.0
    %2709 = vmatpush1.msra.mxu0 0.0
    %2710 = vmatprep.subr.mxu0 0.0
    %2711 = vmatpush1.msra.mxu0 0.0
    %2712 = vmatprep.subr.mxu0 0.0
    %2713 = vmatpush1.msra.mxu0 0.0
    %2714 = vmatprep.subr.mxu0 0.0
    %2715 = vmatpush1.msra.mxu0 0.0
    %2716 = vmatprep.subr.mxu0 0.0
    %2717 = vmatpush1.msra.mxu0 0.0
    %2718 = vmatprep.subr.mxu0 0.0
    %2719 = vmatpush1.msra.mxu0 0.0
    %2720 = vmatprep.subr.mxu0 0.0
    %2721 = vmatpush1.msra.mxu0 0.0
    %2722 = vmatprep.subr.mxu0 0.0
    %2723 = vmatpush1.msra.mxu0 0.0
    %2724 = vmatprep.subr.mxu0 0.0
    %2725 = vmatpush1.msra.mxu0 0.0
    %2726 = vmatprep.subr.mxu0 0.0
    %2727 = vmatpush1.msra.mxu0 0.0
    %2728 = vmatprep.subr.mxu0 0.0
    %2729 = vmatpush1.msra.mxu0 0.0
    %2730 = vmatprep.subr.mxu0 0.0
    %2731 = vmatpush1.msra.mxu0 0.0
    %2732 = vmatprep.subr.mxu0 0.0
    %2733 = vmatpush1.msra.mxu0 0.0
    %2734 = vmatprep.subr.mxu0 0.0
    %2735 = vmatpush1.msra.mxu0 0.0
    %2736 = vmatprep.subr.mxu0 0.0
    %2737 = vmatpush1.msra.mxu0 0.0
    %2738 = vmatprep.subr.mxu0 0.0
    %2739 = vmatpush1.msra.mxu0 0.0
    %2740 = vmatprep.subr.mxu0 0.0
    %2741 = vmatpush1.msra.mxu0 0.0
    %2742 = vmatprep.subr.mxu0 0.0
    %2743 = vmatpush1.msra.mxu0 0.0
    %2744 = vmatprep.subr.mxu0 0.0
    %2745 = vmatpush1.msra.mxu0 0.0
    %2746 = vmatprep.subr.mxu0 0.0
    %2747 = vmatpush1.msra.mxu0 0.0
    %2748 = vmatprep.subr.mxu0 0.0
    %2749 = vmatpush1.msra.mxu0 0.0
    %2750 = vmatprep.subr.mxu0 0.0
    %2751 = vmatpush1.msra.mxu0 0.0
    %2752 = vmatprep.subr.mxu0 0.0
    %2753 = vmatpush1.msra.mxu0 0.0
    %2754 = vmatprep.mubr.f32.mxu0 0.0
    %2755 = vmatmul.mubr.f32.gmra.mrb[0].mxu0 %v2685
    %v2756 = vpop.f32.mrb[0].mxu0
    %v2757 = vadd.f32 %v2681, %v2756
    %v2758 = vpop.f32.mrb[0].mxu0
    %2759 = vmatprep.mubr.f32.mxu0 0.0
    %2760 = vmatmul.mubr.f32.gmra.mrb[0].mxu0 %v2688
    %v2761 = vpop.f32.mrb[0].mxu0
    %v2762 = vadd.f32 %v2681, %v2761
    %v2763 = vpop.f32.mrb[0].mxu0
    %2764 = vdwg.mxu0
    %v2765 = vmax.f32 %v2757, 0.0
    %v2766 = vmax.f32 %v2762, 0.0
    %v2767 = vadd.f32 %v2675, %v2765
    %v2768 = vadd.f32 %v2676, %v2766
    %v2769 = vld [vmem:[#allocation8] sm:$0xff]
    %v2770 = vld [vmem:[#allocation8 + $0x8] sm:$0xff]
    %v2771 = vld [vmem:[#allocation8 + $0x10] sm:$0xff]
    %v2772 = vld [vmem:[#allocation8 + $0x18] sm:$0xff]
    %v2773 = vld [vmem:[%s6] sm:$0x1]
    %v2774 = vld [vmem:[#allocation10] sm:$0xff]
    %v2775 = vld [vmem:[#allocation10 + $0x8] sm:$0xff]
    %v2776 = vld [vmem:[#allocation10 + $0x10] sm:$0xff]
    %v2777 = vld [vmem:[#allocation10 + $0x18] sm:$0xff]
    %v2778 = vld [vmem:[%s8] sm:$0x1]
    %v2780 = vlaneseq
    %v2781 = vshrl.u32 %v2780, 7
    %v2782 = vsub.s32 0, %v2781
    %v2783 = vrot.slane %v2773, %v2782
    %v2786 = vsel %vm2683, %v2767, 0
    %v2789 = vsel %vm2683, %v2768, 0
    %2791 = vmatprep.subr.mxu0 0.0
    %2792 = vmatpush1.msra.mxu0 %v2769
    %2793 = vmatprep.subr.mxu0 0.0
    %2794 = vmatpush1.msra.mxu0 %v2770
    %2795 = vmatprep.subr.mxu0 0.0
    %2796 = vmatpush1.msra.mxu0 %v2771
    %2797 = vmatprep.subr.mxu0 0.0
    %2798 = vmatpush1.msra.mxu0 %v2772
    %2799 = vmatprep.subr.mxu0 0.0
    %2800 = vmatpush1.msra.mxu0 0.0
    %2801 = vmatprep.subr.mxu0 0.0
    %2802 = vmatpush1.msra.mxu0 0.0
    %2803 = vmatprep.subr.mxu0 0.0
    %2804 = vmatpush1.msra.mxu0 0.0
    %2805 = vmatprep.subr.mxu0 0.0
    %2806 = vmatpush1.msra.mxu0 0.0
    %2807 = vmatprep.subr.mxu0 0.0
    %2808 = vmatpush1.msra.mxu0 0.0
    %2809 = vmatprep.subr.mxu0 0.0
    %2810 = vmatpush1.msra.mxu0 0.0
    %2811 = vmatprep.subr.mxu0 0.0
    %2812 = vmatpush1.msra.mxu0 0.0
    %2813 = vmatprep.subr.mxu0 0.0
    %2814 = vmatpush1.msra.mxu0 0.0
    %2815 = vmatprep.subr.mxu0 0.0
    %2816 = vmatpush1.msra.mxu0 0.0
    %2817 = vmatprep.subr.mxu0 0.0
    %2818 = vmatpush1.msra.mxu0 0.0
    %2819 = vmatprep.subr.mxu0 0.0
    %2820 = vmatpush1.msra.mxu0 0.0
    %2821 = vmatprep.subr.mxu0 0.0
    %2822 = vmatpush1.msra.mxu0 0.0
    %2823 = vmatprep.subr.mxu0 0.0
    %2824 = vmatpush1.msra.mxu0 0.0
    %2825 = vmatprep.subr.mxu0 0.0
    %2826 = vmatpush1.msra.mxu0 0.0
    %2827 = vmatprep.subr.mxu0 0.0
    %2828 = vmatpush1.msra.mxu0 0.0
    %2829 = vmatprep.subr.mxu0 0.0
    %2830 = vmatpush1.msra.mxu0 0.0
    %2831 = vmatprep.subr.mxu0 0.0
    %2832 = vmatpush1.msra.mxu0 0.0
    %2833 = vmatprep.subr.mxu0 0.0
    %2834 = vmatpush1.msra.mxu0 0.0
    %2835 = vmatprep.subr.mxu0 0.0
    %2836 = vmatpush1.msra.mxu0 0.0
    %2837 = vmatprep.subr.mxu0 0.0
    %2838 = vmatpush1.msra.mxu0 0.0
    %2839 = vmatprep.subr.mxu0 0.0
    %2840 = vmatpush1.msra.mxu0 0.0
    %2841 = vmatprep.subr.mxu0 0.0
    %2842 = vmatpush1.msra.mxu0 0.0
    %2843 = vmatprep.subr.mxu0 0.0
    %2844 = vmatpush1.msra.mxu0 0.0
    %2845 = vmatprep.subr.mxu0 0.0
    %2846 = vmatpush1.msra.mxu0 0.0
    %2847 = vmatprep.subr.mxu0 0.0
    %2848 = vmatpush1.msra.mxu0 0.0
    %2849 = vmatprep.subr.mxu0 0.0
    %2850 = vmatpush1.msra.mxu0 0.0
    %2851 = vmatprep.subr.mxu0 0.0
    %2852 = vmatpush1.msra.mxu0 0.0
    %2853 = vmatprep.subr.mxu0 0.0
    %2854 = vmatpush1.msra.mxu0 0.0
    %2855 = vmatprep.mubr.f32.mxu0 0.0
    %2856 = vmatmul.mubr.f32.gmra.mrb[0].mxu0 %v2786
    %v2857 = vpop.f32.mrb[0].mxu0
    %v2858 = vadd.f32 %v2783, %v2857
    %v2859 = vpop.f32.mrb[0].mxu0
    %2860 = vmatprep.mubr.f32.mxu0 0.0
    %2861 = vmatmul.mubr.f32.gmra.mrb[0].mxu0 %v2789
    %v2862 = vpop.f32.mrb[0].mxu0
    %v2863 = vadd.f32 %v2783, %v2862
    %v2864 = vpop.f32.mrb[0].mxu0
    %2865 = vdwg.mxu0
    %2868 = vrot.lane.b32.xlu0 %v2858, 120
    %v2869 = vpop.permute.xlu0 %2868
    %2870 = vrot.lane.b32.xlu0 %v2863, 120
    %v2871 = vpop.permute.xlu0 %2870
    %2874 = vrot.lane.b32.xlu0 %v2858, 112
    %v2875 = vpop.permute.xlu0 %2874
    %2876 = vrot.lane.b32.xlu0 %v2863, 112
    %v2877 = vpop.permute.xlu0 %2876
    %2880 = vrot.lane.b32.xlu0 %v2858, 104
    %v2881 = vpop.permute.xlu0 %2880
    %2882 = vrot.lane.b32.xlu0 %v2863, 104
    %v2883 = vpop.permute.xlu0 %2882
    %v2886 = vcombine.low %v2858, %v2875
    %v2887 = vcombine.high %v2858, %v2875
    %v2889 = vunpack.c.l.s4 1983009808
    %v2890 = vunpack.c.0.s8 %v2889
    %v2891 = vlaneseq
    %v2892 = vshrl.u32 %v2891, 7
    %v2893 = vsub.s32 %v2890, %v2892
    %v2894 = vrot.slane %v2886, %v2893
    %v2896 = vunpack.c.l.s4 1983009808
    %v2897 = vunpack.c.0.s8 %v2896
    %v2898 = vlaneseq
    %v2899 = vshrl.u32 %v2898, 7
    %v2900 = vsub.s32 %v2897, %v2899
    %v2901 = vrot.slane %v2887, %v2900
    %v2902 = vcombine.low %v2869, %v2881
    %v2903 = vcombine.high %v2869, %v2881
    %v2905 = vunpack.c.l.s4 1983009808
    %v2906 = vunpack.c.0.s8 %v2905
    %v2907 = vlaneseq
    %v2908 = vshrl.u32 %v2907, 7
    %v2909 = vsub.s32 %v2906, %v2908
    %v2910 = vrot.slane %v2902, %v2909
    %v2912 = vunpack.c.l.s4 1983009808
    %v2913 = vunpack.c.0.s8 %v2912
    %v2914 = vlaneseq
    %v2915 = vshrl.u32 %v2914, 7
    %v2916 = vsub.s32 %v2913, %v2915
    %v2917 = vrot.slane %v2903, %v2916
    %v2918 = vcombine.low %v2894, %v2910
    %v2919 = vcombine.high %v2894, %v2910
    %v2921 = vunpack.c.l.s4 1934713408
    %v2922 = vunpack.c.0.s8 %v2921
    %v2923 = vlaneseq
    %v2924 = vshrl.u32 %v2923, 7
    %v2925 = vsub.s32 %v2922, %v2924
    %v2926 = vrot.slane %v2918, %v2925
    %v2928 = vunpack.c.l.s4 1934713408
    %v2929 = vunpack.c.0.s8 %v2928
    %v2930 = vlaneseq
    %v2931 = vshrl.u32 %v2930, 7
    %v2932 = vsub.s32 %v2929, %v2931
    %v2933 = vrot.slane %v2919, %v2932
    %v2934 = vcombine.low %v2901, %v2917
    %v2935 = vcombine.high %v2901, %v2917
    %v2937 = vunpack.c.l.s4 1934713408
    %v2938 = vunpack.c.0.s8 %v2937
    %v2939 = vlaneseq
    %v2940 = vshrl.u32 %v2939, 7
    %v2941 = vsub.s32 %v2938, %v2940
    %v2942 = vrot.slane %v2934, %v2941
    %v2944 = vunpack.c.l.s4 1934713408
    %v2945 = vunpack.c.0.s8 %v2944
    %v2946 = vlaneseq
    %v2947 = vshrl.u32 %v2946, 7
    %v2948 = vsub.s32 %v2945, %v2947
    %v2949 = vrot.slane %v2935, %v2948
    %v2950 = vcombine.high %v2926, 0.0
    %v2951 = vcombine.high %v2933, 0.0
    %v2952 = vcombine.high %v2942, 0.0
    %v2953 = vcombine.high %v2949, 0.0
    %v2954 = vcombine.low %v2863, %v2877
    %v2955 = vcombine.high %v2863, %v2877
    %v2957 = vunpack.c.l.s4 1983009808
    %v2958 = vunpack.c.0.s8 %v2957
    %v2959 = vlaneseq
    %v2960 = vshrl.u32 %v2959, 7
    %v2961 = vsub.s32 %v2958, %v2960
    %v2962 = vrot.slane %v2954, %v2961
    %v2964 = vunpack.c.l.s4 1983009808
    %v2965 = vunpack.c.0.s8 %v2964
    %v2966 = vlaneseq
    %v2967 = vshrl.u32 %v2966, 7
    %v2968 = vsub.s32 %v2965, %v2967
    %v2969 = vrot.slane %v2955, %v2968
    %v2970 = vcombine.low %v2871, %v2883
    %v2971 = vcombine.high %v2871, %v2883
    %v2973 = vunpack.c.l.s4 1983009808
    %v2974 = vunpack.c.0.s8 %v2973
    %v2975 = vlaneseq
    %v2976 = vshrl.u32 %v2975, 7
    %v2977 = vsub.s32 %v2974, %v2976
    %v2978 = vrot.slane %v2970, %v2977
    %v2980 = vunpack.c.l.s4 1983009808
    %v2981 = vunpack.c.0.s8 %v2980
    %v2982 = vlaneseq
    %v2983 = vshrl.u32 %v2982, 7
    %v2984 = vsub.s32 %v2981, %v2983
    %v2985 = vrot.slane %v2971, %v2984
    %v2986 = vcombine.low %v2962, %v2978
    %v2987 = vcombine.high %v2962, %v2978
    %v2989 = vunpack.c.l.s4 1934713408
    %v2990 = vunpack.c.0.s8 %v2989
    %v2991 = vlaneseq
    %v2992 = vshrl.u32 %v2991, 7
    %v2993 = vsub.s32 %v2990, %v2992
    %v2994 = vrot.slane %v2986, %v2993
    %v2996 = vunpack.c.l.s4 1934713408
    %v2997 = vunpack.c.0.s8 %v2996
    %v2998 = vlaneseq
    %v2999 = vshrl.u32 %v2998, 7
    %v3000 = vsub.s32 %v2997, %v2999
    %v3001 = vrot.slane %v2987, %v3000
    %v3002 = vcombine.low %v2969, %v2985
    %v3003 = vcombine.high %v2969, %v2985
    %v3005 = vunpack.c.l.s4 1934713408
    %v3006 = vunpack.c.0.s8 %v3005
    %v3007 = vlaneseq
    %v3008 = vshrl.u32 %v3007, 7
    %v3009 = vsub.s32 %v3006, %v3008
    %v3010 = vrot.slane %v3002, %v3009
    %v3012 = vunpack.c.l.s4 1934713408
    %v3013 = vunpack.c.0.s8 %v3012
    %v3014 = vlaneseq
    %v3015 = vshrl.u32 %v3014, 7
    %v3016 = vsub.s32 %v3013, %v3015
    %v3017 = vrot.slane %v3003, %v3016
    %v3018 = vcombine.high %v2994, 0.0
    %v3019 = vcombine.high %v3001, 0.0
    %v3020 = vcombine.high %v3010, 0.0
    %v3021 = vcombine.high %v3017, 0.0
    %v3022 = vcombine.low %v2926, %v2933
    %v3024 = vunpack.c.l.s4 1983009808
    %v3025 = vunpack.c.0.s8 %v3024
    %v3026 = vlaneseq
    %v3027 = vshrl.u32 %v3026, 7
    %v3028 = vsub.s32 %v3025, %v3027
    %v3029 = vrot.slane %v3022, %v3028
    %v3030 = vcombine.low %v2950, %v2951
    %v3032 = vunpack.c.l.s4 1983009808
    %v3033 = vunpack.c.0.s8 %v3032
    %v3034 = vlaneseq
    %v3035 = vshrl.u32 %v3034, 7
    %v3036 = vsub.s32 %v3033, %v3035
    %v3037 = vrot.slane %v3030, %v3036
    %v3038 = vcombine.low %v2942, %v2949
    %v3040 = vunpack.c.l.s4 1983009808
    %v3041 = vunpack.c.0.s8 %v3040
    %v3042 = vlaneseq
    %v3043 = vshrl.u32 %v3042, 7
    %v3044 = vsub.s32 %v3041, %v3043
    %v3045 = vrot.slane %v3038, %v3044
    %v3046 = vcombine.low %v2952, %v2953
    %v3048 = vunpack.c.l.s4 1983009808
    %v3049 = vunpack.c.0.s8 %v3048
    %v3050 = vlaneseq
    %v3051 = vshrl.u32 %v3050, 7
    %v3052 = vsub.s32 %v3049, %v3051
    %v3053 = vrot.slane %v3046, %v3052
    %v3054 = vcombine.low %v3029, %v3037
    %v3055 = vcombine.high %v3029, %v3037
    %v3057 = vunpack.c.l.s4 1934713408
    %v3058 = vunpack.c.0.s8 %v3057
    %v3059 = vlaneseq
    %v3060 = vshrl.u32 %v3059, 7
    %v3061 = vsub.s32 %v3058, %v3060
    %v3062 = vrot.slane %v3054, %v3061
    %v3064 = vunpack.c.l.s4 1934713408
    %v3065 = vunpack.c.0.s8 %v3064
    %v3066 = vlaneseq
    %v3067 = vshrl.u32 %v3066, 7
    %v3068 = vsub.s32 %v3065, %v3067
    %v3069 = vrot.slane %v3055, %v3068
    %v3070 = vcombine.low %v3045, %v3053
    %v3071 = vcombine.high %v3045, %v3053
    %v3073 = vunpack.c.l.s4 1934713408
    %v3074 = vunpack.c.0.s8 %v3073
    %v3075 = vlaneseq
    %v3076 = vshrl.u32 %v3075, 7
    %v3077 = vsub.s32 %v3074, %v3076
    %v3078 = vrot.slane %v3070, %v3077
    %v3080 = vunpack.c.l.s4 1934713408
    %v3081 = vunpack.c.0.s8 %v3080
    %v3082 = vlaneseq
    %v3083 = vshrl.u32 %v3082, 7
    %v3084 = vsub.s32 %v3081, %v3083
    %v3085 = vrot.slane %v3071, %v3084
    %v3086 = vcombine.low %v3062, %v3078
    %v3087 = vcombine.high %v3062, %v3078
    %v3088 = vcombine.low %v3069, %v3085
    %v3089 = vcombine.high %v3069, %v3085
    %v3090 = vcombine.low %v2994, %v3001
    %v3092 = vunpack.c.l.s4 1983009808
    %v3093 = vunpack.c.0.s8 %v3092
    %v3094 = vlaneseq
    %v3095 = vshrl.u32 %v3094, 7
    %v3096 = vsub.s32 %v3093, %v3095
    %v3097 = vrot.slane %v3090, %v3096
    %v3098 = vcombine.low %v3018, %v3019
    %v3100 = vunpack.c.l.s4 1983009808
    %v3101 = vunpack.c.0.s8 %v3100
    %v3102 = vlaneseq
    %v3103 = vshrl.u32 %v3102, 7
    %v3104 = vsub.s32 %v3101, %v3103
    %v3105 = vrot.slane %v3098, %v3104
    %v3106 = vcombine.low %v3010, %v3017
    %v3108 = vunpack.c.l.s4 1983009808
    %v3109 = vunpack.c.0.s8 %v3108
    %v3110 = vlaneseq
    %v3111 = vshrl.u32 %v3110, 7
    %v3112 = vsub.s32 %v3109, %v3111
    %v3113 = vrot.slane %v3106, %v3112
    %v3114 = vcombine.low %v3020, %v3021
    %v3116 = vunpack.c.l.s4 1983009808
    %v3117 = vunpack.c.0.s8 %v3116
    %v3118 = vlaneseq
    %v3119 = vshrl.u32 %v3118, 7
    %v3120 = vsub.s32 %v3117, %v3119
    %v3121 = vrot.slane %v3114, %v3120
    %v3122 = vcombine.low %v3097, %v3105
    %v3123 = vcombine.high %v3097, %v3105
    %v3125 = vunpack.c.l.s4 1934713408
    %v3126 = vunpack.c.0.s8 %v3125
    %v3127 = vlaneseq
    %v3128 = vshrl.u32 %v3127, 7
    %v3129 = vsub.s32 %v3126, %v3128
    %v3130 = vrot.slane %v3122, %v3129
    %v3132 = vunpack.c.l.s4 1934713408
    %v3133 = vunpack.c.0.s8 %v3132
    %v3134 = vlaneseq
    %v3135 = vshrl.u32 %v3134, 7
    %v3136 = vsub.s32 %v3133, %v3135
    %v3137 = vrot.slane %v3123, %v3136
    %v3138 = vcombine.low %v3113, %v3121
    %v3139 = vcombine.high %v3113, %v3121
    %v3141 = vunpack.c.l.s4 1934713408
    %v3142 = vunpack.c.0.s8 %v3141
    %v3143 = vlaneseq
    %v3144 = vshrl.u32 %v3143, 7
    %v3145 = vsub.s32 %v3142, %v3144
    %v3146 = vrot.slane %v3138, %v3145
    %v3148 = vunpack.c.l.s4 1934713408
    %v3149 = vunpack.c.0.s8 %v3148
    %v3150 = vlaneseq
    %v3151 = vshrl.u32 %v3150, 7
    %v3152 = vsub.s32 %v3149, %v3151
    %v3153 = vrot.slane %v3139, %v3152
    %v3154 = vcombine.low %v3130, %v3146
    %v3155 = vcombine.high %v3130, %v3146
    %v3156 = vcombine.low %v3137, %v3153
    %v3157 = vcombine.high %v3137, %v3153
    %3158 = vrot.lane.b32.xlu0 %v2858, 96
    %v3159 = vpop.permute.xlu0 %3158
    %3160 = vrot.lane.b32.xlu0 %v2863, 96
    %v3161 = vpop.permute.xlu0 %3160
    %3162 = vrot.lane.b32.xlu0 %v2869, 96
    %v3163 = vpop.permute.xlu0 %3162
    %3164 = vrot.lane.b32.xlu0 %v2871, 96
    %v3165 = vpop.permute.xlu0 %3164
    %3166 = vrot.lane.b32.xlu0 %v2875, 96
    %v3167 = vpop.permute.xlu0 %3166
    %3168 = vrot.lane.b32.xlu0 %v2877, 96
    %v3169 = vpop.permute.xlu0 %3168
    %3170 = vrot.lane.b32.xlu0 %v2881, 96
    %v3171 = vpop.permute.xlu0 %3170
    %3172 = vrot.lane.b32.xlu0 %v2883, 96
    %v3173 = vpop.permute.xlu0 %3172
    %v3182 = vcombine.low %v3159, %v3167
    %v3183 = vcombine.high %v3159, %v3167
    %v3185 = vunpack.c.l.s4 1983009808
    %v3186 = vunpack.c.0.s8 %v3185
    %v3187 = vlaneseq
    %v3188 = vshrl.u32 %v3187, 7
    %v3189 = vsub.s32 %v3186, %v3188
    %v3190 = vrot.slane %v3182, %v3189
    %v3192 = vunpack.c.l.s4 1983009808
    %v3193 = vunpack.c.0.s8 %v3192
    %v3194 = vlaneseq
    %v3195 = vshrl.u32 %v3194, 7
    %v3196 = vsub.s32 %v3193, %v3195
    %v3197 = vrot.slane %v3183, %v3196
    %v3198 = vcombine.low %v3163, %v3171
    %v3199 = vcombine.high %v3163, %v3171
    %v3201 = vunpack.c.l.s4 1983009808
    %v3202 = vunpack.c.0.s8 %v3201
    %v3203 = vlaneseq
    %v3204 = vshrl.u32 %v3203, 7
    %v3205 = vsub.s32 %v3202, %v3204
    %v3206 = vrot.slane %v3198, %v3205
    %v3208 = vunpack.c.l.s4 1983009808
    %v3209 = vunpack.c.0.s8 %v3208
    %v3210 = vlaneseq
    %v3211 = vshrl.u32 %v3210, 7
    %v3212 = vsub.s32 %v3209, %v3211
    %v3213 = vrot.slane %v3199, %v3212
    %v3214 = vcombine.low %v3190, %v3206
    %v3215 = vcombine.high %v3190, %v3206
    %v3217 = vunpack.c.l.s4 1934713408
    %v3218 = vunpack.c.0.s8 %v3217
    %v3219 = vlaneseq
    %v3220 = vshrl.u32 %v3219, 7
    %v3221 = vsub.s32 %v3218, %v3220
    %v3222 = vrot.slane %v3214, %v3221
    %v3224 = vunpack.c.l.s4 1934713408
    %v3225 = vunpack.c.0.s8 %v3224
    %v3226 = vlaneseq
    %v3227 = vshrl.u32 %v3226, 7
    %v3228 = vsub.s32 %v3225, %v3227
    %v3229 = vrot.slane %v3215, %v3228
    %v3230 = vcombine.low %v3197, %v3213
    %v3231 = vcombine.high %v3197, %v3213
    %v3233 = vunpack.c.l.s4 1934713408
    %v3234 = vunpack.c.0.s8 %v3233
    %v3235 = vlaneseq
    %v3236 = vshrl.u32 %v3235, 7
    %v3237 = vsub.s32 %v3234, %v3236
    %v3238 = vrot.slane %v3230, %v3237
    %v3240 = vunpack.c.l.s4 1934713408
    %v3241 = vunpack.c.0.s8 %v3240
    %v3242 = vlaneseq
    %v3243 = vshrl.u32 %v3242, 7
    %v3244 = vsub.s32 %v3241, %v3243
    %v3245 = vrot.slane %v3231, %v3244
    %v3246 = vcombine.high %v3222, 0.0
    %v3247 = vcombine.high %v3229, 0.0
    %v3248 = vcombine.high %v3238, 0.0
    %v3249 = vcombine.high %v3245, 0.0
    %v3250 = vcombine.low %v3161, %v3169
    %v3251 = vcombine.high %v3161, %v3169
    %v3253 = vunpack.c.l.s4 1983009808
    %v3254 = vunpack.c.0.s8 %v3253
    %v3255 = vlaneseq
    %v3256 = vshrl.u32 %v3255, 7
    %v3257 = vsub.s32 %v3254, %v3256
    %v3258 = vrot.slane %v3250, %v3257
    %v3260 = vunpack.c.l.s4 1983009808
    %v3261 = vunpack.c.0.s8 %v3260
    %v3262 = vlaneseq
    %v3263 = vshrl.u32 %v3262, 7
    %v3264 = vsub.s32 %v3261, %v3263
    %v3265 = vrot.slane %v3251, %v3264
    %v3266 = vcombine.low %v3165, %v3173
    %v3267 = vcombine.high %v3165, %v3173
    %v3269 = vunpack.c.l.s4 1983009808
    %v3270 = vunpack.c.0.s8 %v3269
    %v3271 = vlaneseq
    %v3272 = vshrl.u32 %v3271, 7
    %v3273 = vsub.s32 %v3270, %v3272
    %v3274 = vrot.slane %v3266, %v3273
    %v3276 = vunpack.c.l.s4 1983009808
    %v3277 = vunpack.c.0.s8 %v3276
    %v3278 = vlaneseq
    %v3279 = vshrl.u32 %v3278, 7
    %v3280 = vsub.s32 %v3277, %v3279
    %v3281 = vrot.slane %v3267, %v3280
    %v3282 = vcombine.low %v3258, %v3274
    %v3283 = vcombine.high %v3258, %v3274
    %v3285 = vunpack.c.l.s4 1934713408
    %v3286 = vunpack.c.0.s8 %v3285
    %v3287 = vlaneseq
    %v3288 = vshrl.u32 %v3287, 7
    %v3289 = vsub.s32 %v3286, %v3288
    %v3290 = vrot.slane %v3282, %v3289
    %v3292 = vunpack.c.l.s4 1934713408
    %v3293 = vunpack.c.0.s8 %v3292
    %v3294 = vlaneseq
    %v3295 = vshrl.u32 %v3294, 7
    %v3296 = vsub.s32 %v3293, %v3295
    %v3297 = vrot.slane %v3283, %v3296
    %v3298 = vcombine.low %v3265, %v3281
    %v3299 = vcombine.high %v3265, %v3281
    %v3301 = vunpack.c.l.s4 1934713408
    %v3302 = vunpack.c.0.s8 %v3301
    %v3303 = vlaneseq
    %v3304 = vshrl.u32 %v3303, 7
    %v3305 = vsub.s32 %v3302, %v3304
    %v3306 = vrot.slane %v3298, %v3305
    %v3308 = vunpack.c.l.s4 1934713408
    %v3309 = vunpack.c.0.s8 %v3308
    %v3310 = vlaneseq
    %v3311 = vshrl.u32 %v3310, 7
    %v3312 = vsub.s32 %v3309, %v3311
    %v3313 = vrot.slane %v3299, %v3312
    %v3314 = vcombine.high %v3290, 0.0
    %v3315 = vcombine.high %v3297, 0.0
    %v3316 = vcombine.high %v3306, 0.0
    %v3317 = vcombine.high %v3313, 0.0
    %v3318 = vcombine.low %v3222, %v3229
    %v3320 = vunpack.c.l.s4 1983009808
    %v3321 = vunpack.c.0.s8 %v3320
    %v3322 = vlaneseq
    %v3323 = vshrl.u32 %v3322, 7
    %v3324 = vsub.s32 %v3321, %v3323
    %v3325 = vrot.slane %v3318, %v3324
    %v3326 = vcombine.low %v3246, %v3247
    %v3328 = vunpack.c.l.s4 1983009808
    %v3329 = vunpack.c.0.s8 %v3328
    %v3330 = vlaneseq
    %v3331 = vshrl.u32 %v3330, 7
    %v3332 = vsub.s32 %v3329, %v3331
    %v3333 = vrot.slane %v3326, %v3332
    %v3334 = vcombine.low %v3238, %v3245
    %v3336 = vunpack.c.l.s4 1983009808
    %v3337 = vunpack.c.0.s8 %v3336
    %v3338 = vlaneseq
    %v3339 = vshrl.u32 %v3338, 7
    %v3340 = vsub.s32 %v3337, %v3339
    %v3341 = vrot.slane %v3334, %v3340
    %v3342 = vcombine.low %v3248, %v3249
    %v3344 = vunpack.c.l.s4 1983009808
    %v3345 = vunpack.c.0.s8 %v3344
    %v3346 = vlaneseq
    %v3347 = vshrl.u32 %v3346, 7
    %v3348 = vsub.s32 %v3345, %v3347
    %v3349 = vrot.slane %v3342, %v3348
    %v3350 = vcombine.low %v3325, %v3333
    %v3351 = vcombine.high %v3325, %v3333
    %v3353 = vunpack.c.l.s4 1934713408
    %v3354 = vunpack.c.0.s8 %v3353
    %v3355 = vlaneseq
    %v3356 = vshrl.u32 %v3355, 7
    %v3357 = vsub.s32 %v3354, %v3356
    %v3358 = vrot.slane %v3350, %v3357
    %v3360 = vunpack.c.l.s4 1934713408
    %v3361 = vunpack.c.0.s8 %v3360
    %v3362 = vlaneseq
    %v3363 = vshrl.u32 %v3362, 7
    %v3364 = vsub.s32 %v3361, %v3363
    %v3365 = vrot.slane %v3351, %v3364
    %v3366 = vcombine.low %v3341, %v3349
    %v3367 = vcombine.high %v3341, %v3349
    %v3369 = vunpack.c.l.s4 1934713408
    %v3370 = vunpack.c.0.s8 %v3369
    %v3371 = vlaneseq
    %v3372 = vshrl.u32 %v3371, 7
    %v3373 = vsub.s32 %v3370, %v3372
    %v3374 = vrot.slane %v3366, %v3373
    %v3376 = vunpack.c.l.s4 1934713408
    %v3377 = vunpack.c.0.s8 %v3376
    %v3378 = vlaneseq
    %v3379 = vshrl.u32 %v3378, 7
    %v3380 = vsub.s32 %v3377, %v3379
    %v3381 = vrot.slane %v3367, %v3380
    %v3382 = vcombine.low %v3358, %v3374
    %v3383 = vcombine.high %v3358, %v3374
    %v3384 = vcombine.low %v3365, %v3381
    %v3385 = vcombine.high %v3365, %v3381
    %v3386 = vcombine.low %v3290, %v3297
    %v3388 = vunpack.c.l.s4 1983009808
    %v3389 = vunpack.c.0.s8 %v3388
    %v3390 = vlaneseq
    %v3391 = vshrl.u32 %v3390, 7
    %v3392 = vsub.s32 %v3389, %v3391
    %v3393 = vrot.slane %v3386, %v3392
    %v3394 = vcombine.low %v3314, %v3315
    %v3396 = vunpack.c.l.s4 1983009808
    %v3397 = vunpack.c.0.s8 %v3396
    %v3398 = vlaneseq
    %v3399 = vshrl.u32 %v3398, 7
    %v3400 = vsub.s32 %v3397, %v3399
    %v3401 = vrot.slane %v3394, %v3400
    %v3402 = vcombine.low %v3306, %v3313
    %v3404 = vunpack.c.l.s4 1983009808
    %v3405 = vunpack.c.0.s8 %v3404
    %v3406 = vlaneseq
    %v3407 = vshrl.u32 %v3406, 7
    %v3408 = vsub.s32 %v3405, %v3407
    %v3409 = vrot.slane %v3402, %v3408
    %v3410 = vcombine.low %v3316, %v3317
    %v3412 = vunpack.c.l.s4 1983009808
    %v3413 = vunpack.c.0.s8 %v3412
    %v3414 = vlaneseq
    %v3415 = vshrl.u32 %v3414, 7
    %v3416 = vsub.s32 %v3413, %v3415
    %v3417 = vrot.slane %v3410, %v3416
    %v3418 = vcombine.low %v3393, %v3401
    %v3419 = vcombine.high %v3393, %v3401
    %v3421 = vunpack.c.l.s4 1934713408
    %v3422 = vunpack.c.0.s8 %v3421
    %v3423 = vlaneseq
    %v3424 = vshrl.u32 %v3423, 7
    %v3425 = vsub.s32 %v3422, %v3424
    %v3426 = vrot.slane %v3418, %v3425
    %v3428 = vunpack.c.l.s4 1934713408
    %v3429 = vunpack.c.0.s8 %v3428
    %v3430 = vlaneseq
    %v3431 = vshrl.u32 %v3430, 7
    %v3432 = vsub.s32 %v3429, %v3431
    %v3433 = vrot.slane %v3419, %v3432
    %v3434 = vcombine.low %v3409, %v3417
    %v3435 = vcombine.high %v3409, %v3417
    %v3437 = vunpack.c.l.s4 1934713408
    %v3438 = vunpack.c.0.s8 %v3437
    %v3439 = vlaneseq
    %v3440 = vshrl.u32 %v3439, 7
    %v3441 = vsub.s32 %v3438, %v3440
    %v3442 = vrot.slane %v3434, %v3441
    %v3444 = vunpack.c.l.s4 1934713408
    %v3445 = vunpack.c.0.s8 %v3444
    %v3446 = vlaneseq
    %v3447 = vshrl.u32 %v3446, 7
    %v3448 = vsub.s32 %v3445, %v3447
    %v3449 = vrot.slane %v3435, %v3448
    %v3450 = vcombine.low %v3426, %v3442
    %v3451 = vcombine.high %v3426, %v3442
    %v3452 = vcombine.low %v3433, %v3449
    %v3453 = vcombine.high %v3433, %v3449
    %3454 = vrot.lane.b32.xlu0 %v2858, 64
    %v3455 = vpop.permute.xlu0 %3454
    %3456 = vrot.lane.b32.xlu0 %v2863, 64
    %v3457 = vpop.permute.xlu0 %3456
    %3458 = vrot.lane.b32.xlu0 %v2869, 64
    %v3459 = vpop.permute.xlu0 %3458
    %3460 = vrot.lane.b32.xlu0 %v2871, 64
    %v3461 = vpop.permute.xlu0 %3460
    %3462 = vrot.lane.b32.xlu0 %v2875, 64
    %v3463 = vpop.permute.xlu0 %3462
    %3464 = vrot.lane.b32.xlu0 %v2877, 64
    %v3465 = vpop.permute.xlu0 %3464
    %3466 = vrot.lane.b32.xlu0 %v2881, 64
    %v3467 = vpop.permute.xlu0 %3466
    %3468 = vrot.lane.b32.xlu0 %v2883, 64
    %v3469 = vpop.permute.xlu0 %3468
    %v3478 = vcombine.low %v3455, %v3463
    %v3479 = vcombine.high %v3455, %v3463
    %v3481 = vunpack.c.l.s4 1983009808
    %v3482 = vunpack.c.0.s8 %v3481
    %v3483 = vlaneseq
    %v3484 = vshrl.u32 %v3483, 7
    %v3485 = vsub.s32 %v3482, %v3484
    %v3486 = vrot.slane %v3478, %v3485
    %v3488 = vunpack.c.l.s4 1983009808
    %v3489 = vunpack.c.0.s8 %v3488
    %v3490 = vlaneseq
    %v3491 = vshrl.u32 %v3490, 7
    %v3492 = vsub.s32 %v3489, %v3491
    %v3493 = vrot.slane %v3479, %v3492
    %v3494 = vcombine.low %v3459, %v3467
    %v3495 = vcombine.high %v3459, %v3467
    %v3497 = vunpack.c.l.s4 1983009808
    %v3498 = vunpack.c.0.s8 %v3497
    %v3499 = vlaneseq
    %v3500 = vshrl.u32 %v3499, 7
    %v3501 = vsub.s32 %v3498, %v3500
    %v3502 = vrot.slane %v3494, %v3501
    %v3504 = vunpack.c.l.s4 1983009808
    %v3505 = vunpack.c.0.s8 %v3504
    %v3506 = vlaneseq
    %v3507 = vshrl.u32 %v3506, 7
    %v3508 = vsub.s32 %v3505, %v3507
    %v3509 = vrot.slane %v3495, %v3508
    %v3510 = vcombine.low %v3486, %v3502
    %v3511 = vcombine.high %v3486, %v3502
    %v3513 = vunpack.c.l.s4 1934713408
    %v3514 = vunpack.c.0.s8 %v3513
    %v3515 = vlaneseq
    %v3516 = vshrl.u32 %v3515, 7
    %v3517 = vsub.s32 %v3514, %v3516
    %v3518 = vrot.slane %v3510, %v3517
    %v3520 = vunpack.c.l.s4 1934713408
    %v3521 = vunpack.c.0.s8 %v3520
    %v3522 = vlaneseq
    %v3523 = vshrl.u32 %v3522, 7
    %v3524 = vsub.s32 %v3521, %v3523
    %v3525 = vrot.slane %v3511, %v3524
    %v3526 = vcombine.low %v3493, %v3509
    %v3527 = vcombine.high %v3493, %v3509
    %v3529 = vunpack.c.l.s4 1934713408
    %v3530 = vunpack.c.0.s8 %v3529
    %v3531 = vlaneseq
    %v3532 = vshrl.u32 %v3531, 7
    %v3533 = vsub.s32 %v3530, %v3532
    %v3534 = vrot.slane %v3526, %v3533
    %v3536 = vunpack.c.l.s4 1934713408
    %v3537 = vunpack.c.0.s8 %v3536
    %v3538 = vlaneseq
    %v3539 = vshrl.u32 %v3538, 7
    %v3540 = vsub.s32 %v3537, %v3539
    %v3541 = vrot.slane %v3527, %v3540
    %v3542 = vcombine.high %v3518, 0.0
    %v3543 = vcombine.high %v3525, 0.0
    %v3544 = vcombine.high %v3534, 0.0
    %v3545 = vcombine.high %v3541, 0.0
    %v3546 = vcombine.low %v3457, %v3465
    %v3547 = vcombine.high %v3457, %v3465
    %v3549 = vunpack.c.l.s4 1983009808
    %v3550 = vunpack.c.0.s8 %v3549
    %v3551 = vlaneseq
    %v3552 = vshrl.u32 %v3551, 7
    %v3553 = vsub.s32 %v3550, %v3552
    %v3554 = vrot.slane %v3546, %v3553
    %v3556 = vunpack.c.l.s4 1983009808
    %v3557 = vunpack.c.0.s8 %v3556
    %v3558 = vlaneseq
    %v3559 = vshrl.u32 %v3558, 7
    %v3560 = vsub.s32 %v3557, %v3559
    %v3561 = vrot.slane %v3547, %v3560
    %v3562 = vcombine.low %v3461, %v3469
    %v3563 = vcombine.high %v3461, %v3469
    %v3565 = vunpack.c.l.s4 1983009808
    %v3566 = vunpack.c.0.s8 %v3565
    %v3567 = vlaneseq
    %v3568 = vshrl.u32 %v3567, 7
    %v3569 = vsub.s32 %v3566, %v3568
    %v3570 = vrot.slane %v3562, %v3569
    %v3572 = vunpack.c.l.s4 1983009808
    %v3573 = vunpack.c.0.s8 %v3572
    %v3574 = vlaneseq
    %v3575 = vshrl.u32 %v3574, 7
    %v3576 = vsub.s32 %v3573, %v3575
    %v3577 = vrot.slane %v3563, %v3576
    %v3578 = vcombine.low %v3554, %v3570
    %v3579 = vcombine.high %v3554, %v3570
    %v3581 = vunpack.c.l.s4 1934713408
    %v3582 = vunpack.c.0.s8 %v3581
    %v3583 = vlaneseq
    %v3584 = vshrl.u32 %v3583, 7
    %v3585 = vsub.s32 %v3582, %v3584
    %v3586 = vrot.slane %v3578, %v3585
    %v3588 = vunpack.c.l.s4 1934713408
    %v3589 = vunpack.c.0.s8 %v3588
    %v3590 = vlaneseq
    %v3591 = vshrl.u32 %v3590, 7
    %v3592 = vsub.s32 %v3589, %v3591
    %v3593 = vrot.slane %v3579, %v3592
    %v3594 = vcombine.low %v3561, %v3577
    %v3595 = vcombine.high %v3561, %v3577
    %v3597 = vunpack.c.l.s4 1934713408
    %v3598 = vunpack.c.0.s8 %v3597
    %v3599 = vlaneseq
    %v3600 = vshrl.u32 %v3599, 7
    %v3601 = vsub.s32 %v3598, %v3600
    %v3602 = vrot.slane %v3594, %v3601
    %v3604 = vunpack.c.l.s4 1934713408
    %v3605 = vunpack.c.0.s8 %v3604
    %v3606 = vlaneseq
    %v3607 = vshrl.u32 %v3606, 7
    %v3608 = vsub.s32 %v3605, %v3607
    %v3609 = vrot.slane %v3595, %v3608
    %v3610 = vcombine.high %v3586, 0.0
    %v3611 = vcombine.high %v3593, 0.0
    %v3612 = vcombine.high %v3602, 0.0
    %v3613 = vcombine.high %v3609, 0.0
    %v3614 = vcombine.low %v3518, %v3525
    %v3616 = vunpack.c.l.s4 1983009808
    %v3617 = vunpack.c.0.s8 %v3616
    %v3618 = vlaneseq
    %v3619 = vshrl.u32 %v3618, 7
    %v3620 = vsub.s32 %v3617, %v3619
    %v3621 = vrot.slane %v3614, %v3620
    %v3622 = vcombine.low %v3542, %v3543
    %v3624 = vunpack.c.l.s4 1983009808
    %v3625 = vunpack.c.0.s8 %v3624
    %v3626 = vlaneseq
    %v3627 = vshrl.u32 %v3626, 7
    %v3628 = vsub.s32 %v3625, %v3627
    %v3629 = vrot.slane %v3622, %v3628
    %v3630 = vcombine.low %v3534, %v3541
    %v3632 = vunpack.c.l.s4 1983009808
    %v3633 = vunpack.c.0.s8 %v3632
    %v3634 = vlaneseq
    %v3635 = vshrl.u32 %v3634, 7
    %v3636 = vsub.s32 %v3633, %v3635
    %v3637 = vrot.slane %v3630, %v3636
    %v3638 = vcombine.low %v3544, %v3545
    %v3640 = vunpack.c.l.s4 1983009808
    %v3641 = vunpack.c.0.s8 %v3640
    %v3642 = vlaneseq
    %v3643 = vshrl.u32 %v3642, 7
    %v3644 = vsub.s32 %v3641, %v3643
    %v3645 = vrot.slane %v3638, %v3644
    %v3646 = vcombine.low %v3621, %v3629
    %v3647 = vcombine.high %v3621, %v3629
    %v3649 = vunpack.c.l.s4 1934713408
    %v3650 = vunpack.c.0.s8 %v3649
    %v3651 = vlaneseq
    %v3652 = vshrl.u32 %v3651, 7
    %v3653 = vsub.s32 %v3650, %v3652
    %v3654 = vrot.slane %v3646, %v3653
    %v3656 = vunpack.c.l.s4 1934713408
    %v3657 = vunpack.c.0.s8 %v3656
    %v3658 = vlaneseq
    %v3659 = vshrl.u32 %v3658, 7
    %v3660 = vsub.s32 %v3657, %v3659
    %v3661 = vrot.slane %v3647, %v3660
    %v3662 = vcombine.low %v3637, %v3645
    %v3663 = vcombine.high %v3637, %v3645
    %v3665 = vunpack.c.l.s4 1934713408
    %v3666 = vunpack.c.0.s8 %v3665
    %v3667 = vlaneseq
    %v3668 = vshrl.u32 %v3667, 7
    %v3669 = vsub.s32 %v3666, %v3668
    %v3670 = vrot.slane %v3662, %v3669
    %v3672 = vunpack.c.l.s4 1934713408
    %v3673 = vunpack.c.0.s8 %v3672
    %v3674 = vlaneseq
    %v3675 = vshrl.u32 %v3674, 7
    %v3676 = vsub.s32 %v3673, %v3675
    %v3677 = vrot.slane %v3663, %v3676
    %v3678 = vcombine.low %v3654, %v3670
    %v3679 = vcombine.high %v3654, %v3670
    %v3680 = vcombine.low %v3661, %v3677
    %v3681 = vcombine.high %v3661, %v3677
    %v3682 = vcombine.low %v3586, %v3593
    %v3684 = vunpack.c.l.s4 1983009808
    %v3685 = vunpack.c.0.s8 %v3684
    %v3686 = vlaneseq
    %v3687 = vshrl.u32 %v3686, 7
    %v3688 = vsub.s32 %v3685, %v3687
    %v3689 = vrot.slane %v3682, %v3688
    %v3690 = vcombine.low %v3610, %v3611
    %v3692 = vunpack.c.l.s4 1983009808
    %v3693 = vunpack.c.0.s8 %v3692
    %v3694 = vlaneseq
    %v3695 = vshrl.u32 %v3694, 7
    %v3696 = vsub.s32 %v3693, %v3695
    %v3697 = vrot.slane %v3690, %v3696
    %v3698 = vcombine.low %v3602, %v3609
    %v3700 = vunpack.c.l.s4 1983009808
    %v3701 = vunpack.c.0.s8 %v3700
    %v3702 = vlaneseq
    %v3703 = vshrl.u32 %v3702, 7
    %v3704 = vsub.s32 %v3701, %v3703
    %v3705 = vrot.slane %v3698, %v3704
    %v3706 = vcombine.low %v3612, %v3613
    %v3708 = vunpack.c.l.s4 1983009808
    %v3709 = vunpack.c.0.s8 %v3708
    %v3710 = vlaneseq
    %v3711 = vshrl.u32 %v3710, 7
    %v3712 = vsub.s32 %v3709, %v3711
    %v3713 = vrot.slane %v3706, %v3712
    %v3714 = vcombine.low %v3689, %v3697
    %v3715 = vcombine.high %v3689, %v3697
    %v3717 = vunpack.c.l.s4 1934713408
    %v3718 = vunpack.c.0.s8 %v3717
    %v3719 = vlaneseq
    %v3720 = vshrl.u32 %v3719, 7
    %v3721 = vsub.s32 %v3718, %v3720
    %v3722 = vrot.slane %v3714, %v3721
    %v3724 = vunpack.c.l.s4 1934713408
    %v3725 = vunpack.c.0.s8 %v3724
    %v3726 = vlaneseq
    %v3727 = vshrl.u32 %v3726, 7
    %v3728 = vsub.s32 %v3725, %v3727
    %v3729 = vrot.slane %v3715, %v3728
    %v3730 = vcombine.low %v3705, %v3713
    %v3731 = vcombine.high %v3705, %v3713
    %v3733 = vunpack.c.l.s4 1934713408
    %v3734 = vunpack.c.0.s8 %v3733
    %v3735 = vlaneseq
    %v3736 = vshrl.u32 %v3735, 7
    %v3737 = vsub.s32 %v3734, %v3736
    %v3738 = vrot.slane %v3730, %v3737
    %v3740 = vunpack.c.l.s4 1934713408
    %v3741 = vunpack.c.0.s8 %v3740
    %v3742 = vlaneseq
    %v3743 = vshrl.u32 %v3742, 7
    %v3744 = vsub.s32 %v3741, %v3743
    %v3745 = vrot.slane %v3731, %v3744
    %v3746 = vcombine.low %v3722, %v3738
    %v3747 = vcombine.high %v3722, %v3738
    %v3748 = vcombine.low %v3729, %v3745
    %v3749 = vcombine.high %v3729, %v3745
    %v3751 = vsel %vm1083, %v3086, 0
    %v3754 = vsel %vm1083, %v3382, 0
    %3756 = vmatprep.subr.mxu0 0.0
    %3757 = vmatpush1.xpose.msra.mxu0 %v3754
    %3758 = vmatprep.subr.mxu0 0.0
    %3759 = vmatpush1.xpose.msra.mxu0 0.0
    %3760 = vmatprep.subr.mxu0 0.0
    %3761 = vmatpush1.xpose.msra.mxu0 0.0
    %3762 = vmatprep.subr.mxu0 0.0
    %3763 = vmatpush1.xpose.msra.mxu0 0.0
    %3764 = vmatprep.subr.mxu0 0.0
    %3765 = vmatpush1.xpose.msra.mxu0 0.0
    %3766 = vmatprep.subr.mxu0 0.0
    %3767 = vmatpush1.xpose.msra.mxu0 0.0
    %3768 = vmatprep.subr.mxu0 0.0
    %3769 = vmatpush1.xpose.msra.mxu0 0.0
    %3770 = vmatprep.subr.mxu0 0.0
    %3771 = vmatpush1.xpose.msra.mxu0 0.0
    %3772 = vmatprep.subr.mxu0 0.0
    %3773 = vmatpush1.xpose.msra.mxu0 0.0
    %3774 = vmatprep.subr.mxu0 0.0
    %3775 = vmatpush1.xpose.msra.mxu0 0.0
    %3776 = vmatprep.subr.mxu0 0.0
    %3777 = vmatpush1.xpose.msra.mxu0 0.0
    %3778 = vmatprep.subr.mxu0 0.0
    %3779 = vmatpush1.xpose.msra.mxu0 0.0
    %3780 = vmatprep.subr.mxu0 0.0
    %3781 = vmatpush1.xpose.msra.mxu0 0.0
    %3782 = vmatprep.subr.mxu0 0.0
    %3783 = vmatpush1.xpose.msra.mxu0 0.0
    %3784 = vmatprep.subr.mxu0 0.0
    %3785 = vmatpush1.xpose.msra.mxu0 0.0
    %3786 = vmatprep.subr.mxu0 0.0
    %3787 = vmatpush1.xpose.msra.mxu0 0.0
    %3788 = vmatprep.subr.mxu0 0.0
    %3789 = vmatpush1.xpose.msra.mxu0 0.0
    %3790 = vmatprep.subr.mxu0 0.0
    %3791 = vmatpush1.xpose.msra.mxu0 0.0
    %3792 = vmatprep.subr.mxu0 0.0
    %3793 = vmatpush1.xpose.msra.mxu0 0.0
    %3794 = vmatprep.subr.mxu0 0.0
    %3795 = vmatpush1.xpose.msra.mxu0 0.0
    %3796 = vmatprep.subr.mxu0 0.0
    %3797 = vmatpush1.xpose.msra.mxu0 0.0
    %3798 = vmatprep.subr.mxu0 0.0
    %3799 = vmatpush1.xpose.msra.mxu0 0.0
    %3800 = vmatprep.subr.mxu0 0.0
    %3801 = vmatpush1.xpose.msra.mxu0 0.0
    %3802 = vmatprep.subr.mxu0 0.0
    %3803 = vmatpush1.xpose.msra.mxu0 0.0
    %3804 = vmatprep.subr.mxu0 0.0
    %3805 = vmatpush1.xpose.msra.mxu0 0.0
    %3806 = vmatprep.subr.mxu0 0.0
    %3807 = vmatpush1.xpose.msra.mxu0 0.0
    %3808 = vmatprep.subr.mxu0 0.0
    %3809 = vmatpush1.xpose.msra.mxu0 0.0
    %3810 = vmatprep.subr.mxu0 0.0
    %3811 = vmatpush1.xpose.msra.mxu0 0.0
    %3812 = vmatprep.subr.mxu0 0.0
    %3813 = vmatpush1.xpose.msra.mxu0 0.0
    %3814 = vmatprep.subr.mxu0 0.0
    %3815 = vmatpush1.xpose.msra.mxu0 0.0
    %3816 = vmatprep.subr.mxu0 0.0
    %3817 = vmatpush1.xpose.msra.mxu0 0.0
    %3818 = vmatprep.subr.mxu0 0.0
    %3819 = vmatpush1.xpose.msra.mxu0 0.0
    %3820 = vmatprep.mubr.f32.mxu0 0.0
    %3821 = vmatmul.mubr.f32.gmra.mrb[0].mxu0 %v3751
    %v3822 = vpop.f32.mrb[0].mxu0
    %v3823 = vadd.f32 0.0, %v3822
    %v3824 = vpop.f32.mrb[0].mxu0
    %3825 = vdwg.mxu0
    %v3827 = vsel %vm1083, %v3154, 0
    %v3830 = vsel %vm1083, %v3450, 0
    %3832 = vmatprep.subr.mxu0 0.0
    %3833 = vmatpush1.xpose.msra.mxu0 %v3830
    %3834 = vmatprep.subr.mxu0 0.0
    %3835 = vmatpush1.xpose.msra.mxu0 0.0
    %3836 = vmatprep.subr.mxu0 0.0
    %3837 = vmatpush1.xpose.msra.mxu0 0.0
    %3838 = vmatprep.subr.mxu0 0.0
    %3839 = vmatpush1.xpose.msra.mxu0 0.0
    %3840 = vmatprep.subr.mxu0 0.0
    %3841 = vmatpush1.xpose.msra.mxu0 0.0
    %3842 = vmatprep.subr.mxu0 0.0
    %3843 = vmatpush1.xpose.msra.mxu0 0.0
    %3844 = vmatprep.subr.mxu0 0.0
    %3845 = vmatpush1.xpose.msra.mxu0 0.0
    %3846 = vmatprep.subr.mxu0 0.0
    %3847 = vmatpush1.xpose.msra.mxu0 0.0
    %3848 = vmatprep.subr.mxu0 0.0
    %3849 = vmatpush1.xpose.msra.mxu0 0.0
    %3850 = vmatprep.subr.mxu0 0.0
    %3851 = vmatpush1.xpose.msra.mxu0 0.0
    %3852 = vmatprep.subr.mxu0 0.0
    %3853 = vmatpush1.xpose.msra.mxu0 0.0
    %3854 = vmatprep.subr.mxu0 0.0
    %3855 = vmatpush1.xpose.msra.mxu0 0.0
    %3856 = vmatprep.subr.mxu0 0.0
    %3857 = vmatpush1.xpose.msra.mxu0 0.0
    %3858 = vmatprep.subr.mxu0 0.0
    %3859 = vmatpush1.xpose.msra.mxu0 0.0
    %3860 = vmatprep.subr.mxu0 0.0
    %3861 = vmatpush1.xpose.msra.mxu0 0.0
    %3862 = vmatprep.subr.mxu0 0.0
    %3863 = vmatpush1.xpose.msra.mxu0 0.0
    %3864 = vmatprep.subr.mxu0 0.0
    %3865 = vmatpush1.xpose.msra.mxu0 0.0
    %3866 = vmatprep.subr.mxu0 0.0
    %3867 = vmatpush1.xpose.msra.mxu0 0.0
    %3868 = vmatprep.subr.mxu0 0.0
    %3869 = vmatpush1.xpose.msra.mxu0 0.0
    %3870 = vmatprep.subr.mxu0 0.0
    %3871 = vmatpush1.xpose.msra.mxu0 0.0
    %3872 = vmatprep.subr.mxu0 0.0
    %3873 = vmatpush1.xpose.msra.mxu0 0.0
    %3874 = vmatprep.subr.mxu0 0.0
    %3875 = vmatpush1.xpose.msra.mxu0 0.0
    %3876 = vmatprep.subr.mxu0 0.0
    %3877 = vmatpush1.xpose.msra.mxu0 0.0
    %3878 = vmatprep.subr.mxu0 0.0
    %3879 = vmatpush1.xpose.msra.mxu0 0.0
    %3880 = vmatprep.subr.mxu0 0.0
    %3881 = vmatpush1.xpose.msra.mxu0 0.0
    %3882 = vmatprep.subr.mxu0 0.0
    %3883 = vmatpush1.xpose.msra.mxu0 0.0
    %3884 = vmatprep.subr.mxu0 0.0
    %3885 = vmatpush1.xpose.msra.mxu0 0.0
    %3886 = vmatprep.subr.mxu0 0.0
    %3887 = vmatpush1.xpose.msra.mxu0 0.0
    %3888 = vmatprep.subr.mxu0 0.0
    %3889 = vmatpush1.xpose.msra.mxu0 0.0
    %3890 = vmatprep.subr.mxu0 0.0
    %3891 = vmatpush1.xpose.msra.mxu0 0.0
    %3892 = vmatprep.subr.mxu0 0.0
    %3893 = vmatpush1.xpose.msra.mxu0 0.0
    %3894 = vmatprep.subr.mxu0 0.0
    %3895 = vmatpush1.xpose.msra.mxu0 0.0
    %3896 = vmatprep.mubr.f32.mxu0 0.0
    %3897 = vmatmul.mubr.f32.gmra.mrb[0].mxu0 %v3827
    %v3898 = vpop.f32.mrb[0].mxu0
    %v3899 = vadd.f32 0.0, %v3898
    %v3900 = vpop.f32.mrb[0].mxu0
    %3901 = vdwg.mxu0
    %v3903 = vsel %vm1083, %v3087, 0
    %v3906 = vsel %vm1083, %v3383, 0
    %3908 = vmatprep.subr.mxu0 0.0
    %3909 = vmatpush1.xpose.msra.mxu0 %v3906
    %3910 = vmatprep.subr.mxu0 0.0
    %3911 = vmatpush1.xpose.msra.mxu0 0.0
    %3912 = vmatprep.subr.mxu0 0.0
    %3913 = vmatpush1.xpose.msra.mxu0 0.0
    %3914 = vmatprep.subr.mxu0 0.0
    %3915 = vmatpush1.xpose.msra.mxu0 0.0
    %3916 = vmatprep.subr.mxu0 0.0
    %3917 = vmatpush1.xpose.msra.mxu0 0.0
    %3918 = vmatprep.subr.mxu0 0.0
    %3919 = vmatpush1.xpose.msra.mxu0 0.0
    %3920 = vmatprep.subr.mxu0 0.0
    %3921 = vmatpush1.xpose.msra.mxu0 0.0
    %3922 = vmatprep.subr.mxu0 0.0
    %3923 = vmatpush1.xpose.msra.mxu0 0.0
    %3924 = vmatprep.subr.mxu0 0.0
    %3925 = vmatpush1.xpose.msra.mxu0 0.0
    %3926 = vmatprep.subr.mxu0 0.0
    %3927 = vmatpush1.xpose.msra.mxu0 0.0
    %3928 = vmatprep.subr.mxu0 0.0
    %3929 = vmatpush1.xpose.msra.mxu0 0.0
    %3930 = vmatprep.subr.mxu0 0.0
    %3931 = vmatpush1.xpose.msra.mxu0 0.0
    %3932 = vmatprep.subr.mxu0 0.0
    %3933 = vmatpush1.xpose.msra.mxu0 0.0
    %3934 = vmatprep.subr.mxu0 0.0
    %3935 = vmatpush1.xpose.msra.mxu0 0.0
    %3936 = vmatprep.subr.mxu0 0.0
    %3937 = vmatpush1.xpose.msra.mxu0 0.0
    %3938 = vmatprep.subr.mxu0 0.0
    %3939 = vmatpush1.xpose.msra.mxu0 0.0
    %3940 = vmatprep.subr.mxu0 0.0
    %3941 = vmatpush1.xpose.msra.mxu0 0.0
    %3942 = vmatprep.subr.mxu0 0.0
    %3943 = vmatpush1.xpose.msra.mxu0 0.0
    %3944 = vmatprep.subr.mxu0 0.0
    %3945 = vmatpush1.xpose.msra.mxu0 0.0
    %3946 = vmatprep.subr.mxu0 0.0
    %3947 = vmatpush1.xpose.msra.mxu0 0.0
    %3948 = vmatprep.subr.mxu0 0.0
    %3949 = vmatpush1.xpose.msra.mxu0 0.0
    %3950 = vmatprep.subr.mxu0 0.0
    %3951 = vmatpush1.xpose.msra.mxu0 0.0
    %3952 = vmatprep.subr.mxu0 0.0
    %3953 = vmatpush1.xpose.msra.mxu0 0.0
    %3954 = vmatprep.subr.mxu0 0.0
    %3955 = vmatpush1.xpose.msra.mxu0 0.0
    %3956 = vmatprep.subr.mxu0 0.0
    %3957 = vmatpush1.xpose.msra.mxu0 0.0
    %3958 = vmatprep.subr.mxu0 0.0
    %3959 = vmatpush1.xpose.msra.mxu0 0.0
    %3960 = vmatprep.subr.mxu0 0.0
    %3961 = vmatpush1.xpose.msra.mxu0 0.0
    %3962 = vmatprep.subr.mxu0 0.0
    %3963 = vmatpush1.xpose.msra.mxu0 0.0
    %3964 = vmatprep.subr.mxu0 0.0
    %3965 = vmatpush1.xpose.msra.mxu0 0.0
    %3966 = vmatprep.subr.mxu0 0.0
    %3967 = vmatpush1.xpose.msra.mxu0 0.0
    %3968 = vmatprep.subr.mxu0 0.0
    %3969 = vmatpush1.xpose.msra.mxu0 0.0
    %3970 = vmatprep.subr.mxu0 0.0
    %3971 = vmatpush1.xpose.msra.mxu0 0.0
    %3972 = vmatprep.mubr.f32.mxu0 0.0
    %3973 = vmatmul.mubr.f32.gmra.mrb[0].mxu0 %v3903
    %v3974 = vpop.f32.mrb[0].mxu0
    %v3975 = vadd.f32 0.0, %v3974
    %v3976 = vpop.f32.mrb[0].mxu0
    %3977 = vdwg.mxu0
    %v3979 = vsel %vm1083, %v3155, 0
    %v3982 = vsel %vm1083, %v3451, 0
    %3984 = vmatprep.subr.mxu0 0.0
    %3985 = vmatpush1.xpose.msra.mxu0 %v3982
    %3986 = vmatprep.subr.mxu0 0.0
    %3987 = vmatpush1.xpose.msra.mxu0 0.0
    %3988 = vmatprep.subr.mxu0 0.0
    %3989 = vmatpush1.xpose.msra.mxu0 0.0
    %3990 = vmatprep.subr.mxu0 0.0
    %3991 = vmatpush1.xpose.msra.mxu0 0.0
    %3992 = vmatprep.subr.mxu0 0.0
    %3993 = vmatpush1.xpose.msra.mxu0 0.0
    %3994 = vmatprep.subr.mxu0 0.0
    %3995 = vmatpush1.xpose.msra.mxu0 0.0
    %3996 = vmatprep.subr.mxu0 0.0
    %3997 = vmatpush1.xpose.msra.mxu0 0.0
    %3998 = vmatprep.subr.mxu0 0.0
    %3999 = vmatpush1.xpose.msra.mxu0 0.0
    %4000 = vmatprep.subr.mxu0 0.0
    %4001 = vmatpush1.xpose.msra.mxu0 0.0
    %4002 = vmatprep.subr.mxu0 0.0
    %4003 = vmatpush1.xpose.msra.mxu0 0.0
    %4004 = vmatprep.subr.mxu0 0.0
    %4005 = vmatpush1.xpose.msra.mxu0 0.0
    %4006 = vmatprep.subr.mxu0 0.0
    %4007 = vmatpush1.xpose.msra.mxu0 0.0
    %4008 = vmatprep.subr.mxu0 0.0
    %4009 = vmatpush1.xpose.msra.mxu0 0.0
    %4010 = vmatprep.subr.mxu0 0.0
    %4011 = vmatpush1.xpose.msra.mxu0 0.0
    %4012 = vmatprep.subr.mxu0 0.0
    %4013 = vmatpush1.xpose.msra.mxu0 0.0
    %4014 = vmatprep.subr.mxu0 0.0
    %4015 = vmatpush1.xpose.msra.mxu0 0.0
    %4016 = vmatprep.subr.mxu0 0.0
    %4017 = vmatpush1.xpose.msra.mxu0 0.0
    %4018 = vmatprep.subr.mxu0 0.0
    %4019 = vmatpush1.xpose.msra.mxu0 0.0
    %4020 = vmatprep.subr.mxu0 0.0
    %4021 = vmatpush1.xpose.msra.mxu0 0.0
    %4022 = vmatprep.subr.mxu0 0.0
    %4023 = vmatpush1.xpose.msra.mxu0 0.0
    %4024 = vmatprep.subr.mxu0 0.0
    %4025 = vmatpush1.xpose.msra.mxu0 0.0
    %4026 = vmatprep.subr.mxu0 0.0
    %4027 = vmatpush1.xpose.msra.mxu0 0.0
    %4028 = vmatprep.subr.mxu0 0.0
    %4029 = vmatpush1.xpose.msra.mxu0 0.0
    %4030 = vmatprep.subr.mxu0 0.0
    %4031 = vmatpush1.xpose.msra.mxu0 0.0
    %4032 = vmatprep.subr.mxu0 0.0
    %4033 = vmatpush1.xpose.msra.mxu0 0.0
    %4034 = vmatprep.subr.mxu0 0.0
    %4035 = vmatpush1.xpose.msra.mxu0 0.0
    %4036 = vmatprep.subr.mxu0 0.0
    %4037 = vmatpush1.xpose.msra.mxu0 0.0
    %4038 = vmatprep.subr.mxu0 0.0
    %4039 = vmatpush1.xpose.msra.mxu0 0.0
    %4040 = vmatprep.subr.mxu0 0.0
    %4041 = vmatpush1.xpose.msra.mxu0 0.0
    %4042 = vmatprep.subr.mxu0 0.0
    %4043 = vmatpush1.xpose.msra.mxu0 0.0
    %4044 = vmatprep.subr.mxu0 0.0
    %4045 = vmatpush1.xpose.msra.mxu0 0.0
    %4046 = vmatprep.subr.mxu0 0.0
    %4047 = vmatpush1.xpose.msra.mxu0 0.0
    %4048 = vmatprep.mubr.f32.mxu0 0.0
    %4049 = vmatmul.mubr.f32.gmra.mrb[0].mxu0 %v3979
    %v4050 = vpop.f32.mrb[0].mxu0
    %v4051 = vadd.f32 0.0, %v4050
    %v4052 = vpop.f32.mrb[0].mxu0
    %4053 = vdwg.mxu0
    %v4055 = vsel %vm1083, %v3088, 0
    %v4058 = vsel %vm1083, %v3384, 0
    %4060 = vmatprep.subr.mxu0 0.0
    %4061 = vmatpush1.xpose.msra.mxu0 %v4058
    %4062 = vmatprep.subr.mxu0 0.0
    %4063 = vmatpush1.xpose.msra.mxu0 0.0
    %4064 = vmatprep.subr.mxu0 0.0
    %4065 = vmatpush1.xpose.msra.mxu0 0.0
    %4066 = vmatprep.subr.mxu0 0.0
    %4067 = vmatpush1.xpose.msra.mxu0 0.0
    %4068 = vmatprep.subr.mxu0 0.0
    %4069 = vmatpush1.xpose.msra.mxu0 0.0
    %4070 = vmatprep.subr.mxu0 0.0
    %4071 = vmatpush1.xpose.msra.mxu0 0.0
    %4072 = vmatprep.subr.mxu0 0.0
    %4073 = vmatpush1.xpose.msra.mxu0 0.0
    %4074 = vmatprep.subr.mxu0 0.0
    %4075 = vmatpush1.xpose.msra.mxu0 0.0
    %4076 = vmatprep.subr.mxu0 0.0
    %4077 = vmatpush1.xpose.msra.mxu0 0.0
    %4078 = vmatprep.subr.mxu0 0.0
    %4079 = vmatpush1.xpose.msra.mxu0 0.0
    %4080 = vmatprep.subr.mxu0 0.0
    %4081 = vmatpush1.xpose.msra.mxu0 0.0
    %4082 = vmatprep.subr.mxu0 0.0
    %4083 = vmatpush1.xpose.msra.mxu0 0.0
    %4084 = vmatprep.subr.mxu0 0.0
    %4085 = vmatpush1.xpose.msra.mxu0 0.0
    %4086 = vmatprep.subr.mxu0 0.0
    %4087 = vmatpush1.xpose.msra.mxu0 0.0
    %4088 = vmatprep.subr.mxu0 0.0
    %4089 = vmatpush1.xpose.msra.mxu0 0.0
    %4090 = vmatprep.subr.mxu0 0.0
    %4091 = vmatpush1.xpose.msra.mxu0 0.0
    %4092 = vmatprep.subr.mxu0 0.0
    %4093 = vmatpush1.xpose.msra.mxu0 0.0
    %4094 = vmatprep.subr.mxu0 0.0
    %4095 = vmatpush1.xpose.msra.mxu0 0.0
    %4096 = vmatprep.subr.mxu0 0.0
    %4097 = vmatpush1.xpose.msra.mxu0 0.0
    %4098 = vmatprep.subr.mxu0 0.0
    %4099 = vmatpush1.xpose.msra.mxu0 0.0
    %4100 = vmatprep.subr.mxu0 0.0
    %4101 = vmatpush1.xpose.msra.mxu0 0.0
    %4102 = vmatprep.subr.mxu0 0.0
    %4103 = vmatpush1.xpose.msra.mxu0 0.0
    %4104 = vmatprep.subr.mxu0 0.0
    %4105 = vmatpush1.xpose.msra.mxu0 0.0
    %4106 = vmatprep.subr.mxu0 0.0
    %4107 = vmatpush1.xpose.msra.mxu0 0.0
    %4108 = vmatprep.subr.mxu0 0.0
    %4109 = vmatpush1.xpose.msra.mxu0 0.0
    %4110 = vmatprep.subr.mxu0 0.0
    %4111 = vmatpush1.xpose.msra.mxu0 0.0
    %4112 = vmatprep.subr.mxu0 0.0
    %4113 = vmatpush1.xpose.msra.mxu0 0.0
    %4114 = vmatprep.subr.mxu0 0.0
    %4115 = vmatpush1.xpose.msra.mxu0 0.0
    %4116 = vmatprep.subr.mxu0 0.0
    %4117 = vmatpush1.xpose.msra.mxu0 0.0
    %4118 = vmatprep.subr.mxu0 0.0
    %4119 = vmatpush1.xpose.msra.mxu0 0.0
    %4120 = vmatprep.subr.mxu0 0.0
    %4121 = vmatpush1.xpose.msra.mxu0 0.0
    %4122 = vmatprep.subr.mxu0 0.0
    %4123 = vmatpush1.xpose.msra.mxu0 0.0
    %4124 = vmatprep.mubr.f32.mxu0 0.0
    %4125 = vmatmul.mubr.f32.gmra.mrb[0].mxu0 %v4055
    %v4126 = vpop.f32.mrb[0].mxu0
    %v4127 = vadd.f32 0.0, %v4126
    %v4128 = vpop.f32.mrb[0].mxu0
    %4129 = vdwg.mxu0
    %v4131 = vsel %vm1083, %v3156, 0
    %v4134 = vsel %vm1083, %v3452, 0
    %4136 = vmatprep.subr.mxu0 0.0
    %4137 = vmatpush1.xpose.msra.mxu0 %v4134
    %4138 = vmatprep.subr.mxu0 0.0
    %4139 = vmatpush1.xpose.msra.mxu0 0.0
    %4140 = vmatprep.subr.mxu0 0.0
    %4141 = vmatpush1.xpose.msra.mxu0 0.0
    %4142 = vmatprep.subr.mxu0 0.0
    %4143 = vmatpush1.xpose.msra.mxu0 0.0
    %4144 = vmatprep.subr.mxu0 0.0
    %4145 = vmatpush1.xpose.msra.mxu0 0.0
    %4146 = vmatprep.subr.mxu0 0.0
    %4147 = vmatpush1.xpose.msra.mxu0 0.0
    %4148 = vmatprep.subr.mxu0 0.0
    %4149 = vmatpush1.xpose.msra.mxu0 0.0
    %4150 = vmatprep.subr.mxu0 0.0
    %4151 = vmatpush1.xpose.msra.mxu0 0.0
    %4152 = vmatprep.subr.mxu0 0.0
    %4153 = vmatpush1.xpose.msra.mxu0 0.0
    %4154 = vmatprep.subr.mxu0 0.0
    %4155 = vmatpush1.xpose.msra.mxu0 0.0
    %4156 = vmatprep.subr.mxu0 0.0
    %4157 = vmatpush1.xpose.msra.mxu0 0.0
    %4158 = vmatprep.subr.mxu0 0.0
    %4159 = vmatpush1.xpose.msra.mxu0 0.0
    %4160 = vmatprep.subr.mxu0 0.0
    %4161 = vmatpush1.xpose.msra.mxu0 0.0
    %4162 = vmatprep.subr.mxu0 0.0
    %4163 = vmatpush1.xpose.msra.mxu0 0.0
    %4164 = vmatprep.subr.mxu0 0.0
    %4165 = vmatpush1.xpose.msra.mxu0 0.0
    %4166 = vmatprep.subr.mxu0 0.0
    %4167 = vmatpush1.xpose.msra.mxu0 0.0
    %4168 = vmatprep.subr.mxu0 0.0
    %4169 = vmatpush1.xpose.msra.mxu0 0.0
    %4170 = vmatprep.subr.mxu0 0.0
    %4171 = vmatpush1.xpose.msra.mxu0 0.0
    %4172 = vmatprep.subr.mxu0 0.0
    %4173 = vmatpush1.xpose.msra.mxu0 0.0
    %4174 = vmatprep.subr.mxu0 0.0
    %4175 = vmatpush1.xpose.msra.mxu0 0.0
    %4176 = vmatprep.subr.mxu0 0.0
    %4177 = vmatpush1.xpose.msra.mxu0 0.0
    %4178 = vmatprep.subr.mxu0 0.0
    %4179 = vmatpush1.xpose.msra.mxu0 0.0
    %4180 = vmatprep.subr.mxu0 0.0
    %4181 = vmatpush1.xpose.msra.mxu0 0.0
    %4182 = vmatprep.subr.mxu0 0.0
    %4183 = vmatpush1.xpose.msra.mxu0 0.0
    %4184 = vmatprep.subr.mxu0 0.0
    %4185 = vmatpush1.xpose.msra.mxu0 0.0
    %4186 = vmatprep.subr.mxu0 0.0
    %4187 = vmatpush1.xpose.msra.mxu0 0.0
    %4188 = vmatprep.subr.mxu0 0.0
    %4189 = vmatpush1.xpose.msra.mxu0 0.0
    %4190 = vmatprep.subr.mxu0 0.0
    %4191 = vmatpush1.xpose.msra.mxu0 0.0
    %4192 = vmatprep.subr.mxu0 0.0
    %4193 = vmatpush1.xpose.msra.mxu0 0.0
    %4194 = vmatprep.subr.mxu0 0.0
    %4195 = vmatpush1.xpose.msra.mxu0 0.0
    %4196 = vmatprep.subr.mxu0 0.0
    %4197 = vmatpush1.xpose.msra.mxu0 0.0
    %4198 = vmatprep.subr.mxu0 0.0
    %4199 = vmatpush1.xpose.msra.mxu0 0.0
    %4200 = vmatprep.mubr.f32.mxu0 0.0
    %4201 = vmatmul.mubr.f32.gmra.mrb[0].mxu0 %v4131
    %v4202 = vpop.f32.mrb[0].mxu0
    %v4203 = vadd.f32 0.0, %v4202
    %v4204 = vpop.f32.mrb[0].mxu0
    %4205 = vdwg.mxu0
    %v4207 = vsel %vm1083, %v3089, 0
    %v4210 = vsel %vm1083, %v3385, 0
    %4212 = vmatprep.subr.mxu0 0.0
    %4213 = vmatpush1.xpose.msra.mxu0 %v4210
    %4214 = vmatprep.subr.mxu0 0.0
    %4215 = vmatpush1.xpose.msra.mxu0 0.0
    %4216 = vmatprep.subr.mxu0 0.0
    %4217 = vmatpush1.xpose.msra.mxu0 0.0
    %4218 = vmatprep.subr.mxu0 0.0
    %4219 = vmatpush1.xpose.msra.mxu0 0.0
    %4220 = vmatprep.subr.mxu0 0.0
    %4221 = vmatpush1.xpose.msra.mxu0 0.0
    %4222 = vmatprep.subr.mxu0 0.0
    %4223 = vmatpush1.xpose.msra.mxu0 0.0
    %4224 = vmatprep.subr.mxu0 0.0
    %4225 = vmatpush1.xpose.msra.mxu0 0.0
    %4226 = vmatprep.subr.mxu0 0.0
    %4227 = vmatpush1.xpose.msra.mxu0 0.0
    %4228 = vmatprep.subr.mxu0 0.0
    %4229 = vmatpush1.xpose.msra.mxu0 0.0
    %4230 = vmatprep.subr.mxu0 0.0
    %4231 = vmatpush1.xpose.msra.mxu0 0.0
    %4232 = vmatprep.subr.mxu0 0.0
    %4233 = vmatpush1.xpose.msra.mxu0 0.0
    %4234 = vmatprep.subr.mxu0 0.0
    %4235 = vmatpush1.xpose.msra.mxu0 0.0
    %4236 = vmatprep.subr.mxu0 0.0
    %4237 = vmatpush1.xpose.msra.mxu0 0.0
    %4238 = vmatprep.subr.mxu0 0.0
    %4239 = vmatpush1.xpose.msra.mxu0 0.0
    %4240 = vmatprep.subr.mxu0 0.0
    %4241 = vmatpush1.xpose.msra.mxu0 0.0
    %4242 = vmatprep.subr.mxu0 0.0
    %4243 = vmatpush1.xpose.msra.mxu0 0.0
    %4244 = vmatprep.subr.mxu0 0.0
    %4245 = vmatpush1.xpose.msra.mxu0 0.0
    %4246 = vmatprep.subr.mxu0 0.0
    %4247 = vmatpush1.xpose.msra.mxu0 0.0
    %4248 = vmatprep.subr.mxu0 0.0
    %4249 = vmatpush1.xpose.msra.mxu0 0.0
    %4250 = vmatprep.subr.mxu0 0.0
    %4251 = vmatpush1.xpose.msra.mxu0 0.0
    %4252 = vmatprep.subr.mxu0 0.0
    %4253 = vmatpush1.xpose.msra.mxu0 0.0
    %4254 = vmatprep.subr.mxu0 0.0
    %4255 = vmatpush1.xpose.msra.mxu0 0.0
    %4256 = vmatprep.subr.mxu0 0.0
    %4257 = vmatpush1.xpose.msra.mxu0 0.0
    %4258 = vmatprep.subr.mxu0 0.0
    %4259 = vmatpush1.xpose.msra.mxu0 0.0
    %4260 = vmatprep.subr.mxu0 0.0
    %4261 = vmatpush1.xpose.msra.mxu0 0.0
    %4262 = vmatprep.subr.mxu0 0.0
    %4263 = vmatpush1.xpose.msra.mxu0 0.0
    %4264 = vmatprep.subr.mxu0 0.0
    %4265 = vmatpush1.xpose.msra.mxu0 0.0
    %4266 = vmatprep.subr.mxu0 0.0
    %4267 = vmatpush1.xpose.msra.mxu0 0.0
    %4268 = vmatprep.subr.mxu0 0.0
    %4269 = vmatpush1.xpose.msra.mxu0 0.0
    %4270 = vmatprep.subr.mxu0 0.0
    %4271 = vmatpush1.xpose.msra.mxu0 0.0
    %4272 = vmatprep.subr.mxu0 0.0
    %4273 = vmatpush1.xpose.msra.mxu0 0.0
    %4274 = vmatprep.subr.mxu0 0.0
    %4275 = vmatpush1.xpose.msra.mxu0 0.0
    %4276 = vmatprep.mubr.f32.mxu0 0.0
    %4277 = vmatmul.mubr.f32.gmra.mrb[0].mxu0 %v4207
    %v4278 = vpop.f32.mrb[0].mxu0
    %v4279 = vadd.f32 0.0, %v4278
    %v4280 = vpop.f32.mrb[0].mxu0
    %4281 = vdwg.mxu0
    %v4283 = vsel %vm1083, %v3157, 0
    %v4286 = vsel %vm1083, %v3453, 0
    %4288 = vmatprep.subr.mxu0 0.0
    %4289 = vmatpush1.xpose.msra.mxu0 %v4286
    %4290 = vmatprep.subr.mxu0 0.0
    %4291 = vmatpush1.xpose.msra.mxu0 0.0
    %4292 = vmatprep.subr.mxu0 0.0
    %4293 = vmatpush1.xpose.msra.mxu0 0.0
    %4294 = vmatprep.subr.mxu0 0.0
    %4295 = vmatpush1.xpose.msra.mxu0 0.0
    %4296 = vmatprep.subr.mxu0 0.0
    %4297 = vmatpush1.xpose.msra.mxu0 0.0
    %4298 = vmatprep.subr.mxu0 0.0
    %4299 = vmatpush1.xpose.msra.mxu0 0.0
    %4300 = vmatprep.subr.mxu0 0.0
    %4301 = vmatpush1.xpose.msra.mxu0 0.0
    %4302 = vmatprep.subr.mxu0 0.0
    %4303 = vmatpush1.xpose.msra.mxu0 0.0
    %4304 = vmatprep.subr.mxu0 0.0
    %4305 = vmatpush1.xpose.msra.mxu0 0.0
    %4306 = vmatprep.subr.mxu0 0.0
    %4307 = vmatpush1.xpose.msra.mxu0 0.0
    %4308 = vmatprep.subr.mxu0 0.0
    %4309 = vmatpush1.xpose.msra.mxu0 0.0
    %4310 = vmatprep.subr.mxu0 0.0
    %4311 = vmatpush1.xpose.msra.mxu0 0.0
    %4312 = vmatprep.subr.mxu0 0.0
    %4313 = vmatpush1.xpose.msra.mxu0 0.0
    %4314 = vmatprep.subr.mxu0 0.0
    %4315 = vmatpush1.xpose.msra.mxu0 0.0
    %4316 = vmatprep.subr.mxu0 0.0
    %4317 = vmatpush1.xpose.msra.mxu0 0.0
    %4318 = vmatprep.subr.mxu0 0.0
    %4319 = vmatpush1.xpose.msra.mxu0 0.0
    %4320 = vmatprep.subr.mxu0 0.0
    %4321 = vmatpush1.xpose.msra.mxu0 0.0
    %4322 = vmatprep.subr.mxu0 0.0
    %4323 = vmatpush1.xpose.msra.mxu0 0.0
    %4324 = vmatprep.subr.mxu0 0.0
    %4325 = vmatpush1.xpose.msra.mxu0 0.0
    %4326 = vmatprep.subr.mxu0 0.0
    %4327 = vmatpush1.xpose.msra.mxu0 0.0
    %4328 = vmatprep.subr.mxu0 0.0
    %4329 = vmatpush1.xpose.msra.mxu0 0.0
    %4330 = vmatprep.subr.mxu0 0.0
    %4331 = vmatpush1.xpose.msra.mxu0 0.0
    %4332 = vmatprep.subr.mxu0 0.0
    %4333 = vmatpush1.xpose.msra.mxu0 0.0
    %4334 = vmatprep.subr.mxu0 0.0
    %4335 = vmatpush1.xpose.msra.mxu0 0.0
    %4336 = vmatprep.subr.mxu0 0.0
    %4337 = vmatpush1.xpose.msra.mxu0 0.0
    %4338 = vmatprep.subr.mxu0 0.0
    %4339 = vmatpush1.xpose.msra.mxu0 0.0
    %4340 = vmatprep.subr.mxu0 0.0
    %4341 = vmatpush1.xpose.msra.mxu0 0.0
    %4342 = vmatprep.subr.mxu0 0.0
    %4343 = vmatpush1.xpose.msra.mxu0 0.0
    %4344 = vmatprep.subr.mxu0 0.0
    %4345 = vmatpush1.xpose.msra.mxu0 0.0
    %4346 = vmatprep.subr.mxu0 0.0
    %4347 = vmatpush1.xpose.msra.mxu0 0.0
    %4348 = vmatprep.subr.mxu0 0.0
    %4349 = vmatpush1.xpose.msra.mxu0 0.0
    %4350 = vmatprep.subr.mxu0 0.0
    %4351 = vmatpush1.xpose.msra.mxu0 0.0
    %4352 = vmatprep.mubr.f32.mxu0 0.0
    %4353 = vmatmul.mubr.f32.gmra.mrb[0].mxu0 %v4283
    %v4354 = vpop.f32.mrb[0].mxu0
    %v4355 = vadd.f32 0.0, %v4354
    %v4356 = vpop.f32.mrb[0].mxu0
    %4357 = vdwg.mxu0
    %v4358 = vmul.f32 %v3823, 0.17677669
    %v4359 = vmul.f32 %v3899, 0.17677669
    %v4360 = vmul.f32 %v3975, 0.17677669
    %v4361 = vmul.f32 %v4051, 0.17677669
    %v4362 = vmul.f32 %v4127, 0.17677669
    %v4363 = vmul.f32 %v4203, 0.17677669
    %v4364 = vmul.f32 %v4279, 0.17677669
    %v4365 = vmul.f32 %v4355, 0.17677669
    %v4366 = vsel %vm1083, %v4358, -inf
    %4367 = vmax.xlane.f32.xlu0 %v4366
    %v4368 = vpop.xlane.xlu0 %4367
    %v4369 = vsel %vm1083, %v4359, -inf
    %4370 = vmax.xlane.f32.xlu0 %v4369
    %v4371 = vpop.xlane.xlu0 %4370
    %v4372 = vsel %vm1083, %v4360, -inf
    %4373 = vmax.xlane.f32.xlu0 %v4372
    %v4374 = vpop.xlane.xlu0 %4373
    %v4375 = vsel %vm1083, %v4361, -inf
    %4376 = vmax.xlane.f32.xlu0 %v4375
    %v4377 = vpop.xlane.xlu0 %4376
    %v4378 = vsel %vm1083, %v4362, -inf
    %4379 = vmax.xlane.f32.xlu0 %v4378
    %v4380 = vpop.xlane.xlu0 %4379
    %v4381 = vsel %vm1083, %v4363, -inf
    %4382 = vmax.xlane.f32.xlu0 %v4381
    %v4383 = vpop.xlane.xlu0 %4382
    %v4384 = vsel %vm1083, %v4364, -inf
    %4385 = vmax.xlane.f32.xlu0 %v4384
    %v4386 = vpop.xlane.xlu0 %4385
    %v4387 = vsel %vm1083, %v4365, -inf
    %4388 = vmax.xlane.f32.xlu0 %v4387
    %v4389 = vpop.xlane.xlu0 %4388
    %v4390 = vsub.f32 %v4358, %v4368
    %v4391 = vsub.f32 %v4359, %v4371
    %v4392 = vsub.f32 %v4360, %v4374
    %v4393 = vsub.f32 %v4361, %v4377
    %v4394 = vsub.f32 %v4362, %v4380
    %v4395 = vsub.f32 %v4363, %v4383
    %v4396 = vsub.f32 %v4364, %v4386
    %v4397 = vsub.f32 %v4365, %v4389
    %v4398 = vmul.f32 %v4390, 1.442695
    %v4399 = vpow.pop %v4398
    %v4400 = vmul.f32 %v4391, 1.442695
    %v4401 = vpow.pop %v4400
    %v4402 = vmul.f32 %v4392, 1.442695
    %v4403 = vpow.pop %v4402
    %v4404 = vmul.f32 %v4393, 1.442695
    %v4405 = vpow.pop %v4404
    %v4406 = vmul.f32 %v4394, 1.442695
    %v4407 = vpow.pop %v4406
    %v4408 = vmul.f32 %v4395, 1.442695
    %v4409 = vpow.pop %v4408
    %v4410 = vmul.f32 %v4396, 1.442695
    %v4411 = vpow.pop %v4410
    %v4412 = vmul.f32 %v4397, 1.442695
    %v4413 = vpow.pop %v4412
    %v4414 = vsel %vm1083, %v4399, 0.0
    %4415 = vadd.xlane.f32.xlu0 %v4414
    %v4416 = vpop.xlane.xlu0 %4415
    %v4417 = vsel %vm1083, %v4401, 0.0
    %4418 = vadd.xlane.f32.xlu0 %v4417
    %v4419 = vpop.xlane.xlu0 %4418
    %v4420 = vsel %vm1083, %v4403, 0.0
    %4421 = vadd.xlane.f32.xlu0 %v4420
    %v4422 = vpop.xlane.xlu0 %4421
    %v4423 = vsel %vm1083, %v4405, 0.0
    %4424 = vadd.xlane.f32.xlu0 %v4423
    %v4425 = vpop.xlane.xlu0 %4424
    %v4426 = vsel %vm1083, %v4407, 0.0
    %4427 = vadd.xlane.f32.xlu0 %v4426
    %v4428 = vpop.xlane.xlu0 %4427
    %v4429 = vsel %vm1083, %v4409, 0.0
    %4430 = vadd.xlane.f32.xlu0 %v4429
    %v4431 = vpop.xlane.xlu0 %4430
    %v4432 = vsel %vm1083, %v4411, 0.0
    %4433 = vadd.xlane.f32.xlu0 %v4432
    %v4434 = vpop.xlane.xlu0 %4433
    %v4435 = vsel %vm1083, %v4413, 0.0
    %4436 = vadd.xlane.f32.xlu0 %v4435
    %v4437 = vpop.xlane.xlu0 %4436
    %v4438 = vrcp.pop %v4416
    %v4439 = vmul.f32 %v4399, %v4438
    %v4440 = vrcp.pop %v4419
    %v4441 = vmul.f32 %v4401, %v4440
    %v4442 = vrcp.pop %v4422
    %v4443 = vmul.f32 %v4403, %v4442
    %v4444 = vrcp.pop %v4425
    %v4445 = vmul.f32 %v4405, %v4444
    %v4446 = vrcp.pop %v4428
    %v4447 = vmul.f32 %v4407, %v4446
    %v4448 = vrcp.pop %v4431
    %v4449 = vmul.f32 %v4409, %v4448
    %v4450 = vrcp.pop %v4434
    %v4451 = vmul.f32 %v4411, %v4450
    %v4452 = vrcp.pop %v4437
    %v4453 = vmul.f32 %v4413, %v4452
    %v4455 = vsel %vm1083, %v4439, 0
    %4457 = vmatprep.subr.mxu0 0.0
    %4458 = vmatpush1.msra.mxu0 %v3678
    %4459 = vmatprep.subr.mxu0 0.0
    %4460 = vmatpush1.msra.mxu0 0.0
    %4461 = vmatprep.subr.mxu0 0.0
    %4462 = vmatpush1.msra.mxu0 0.0
    %4463 = vmatprep.subr.mxu0 0.0
    %4464 = vmatpush1.msra.mxu0 0.0
    %4465 = vmatprep.subr.mxu0 0.0
    %4466 = vmatpush1.msra.mxu0 0.0
    %4467 = vmatprep.subr.mxu0 0.0
    %4468 = vmatpush1.msra.mxu0 0.0
    %4469 = vmatprep.subr.mxu0 0.0
    %4470 = vmatpush1.msra.mxu0 0.0
    %4471 = vmatprep.subr.mxu0 0.0
    %4472 = vmatpush1.msra.mxu0 0.0
    %4473 = vmatprep.subr.mxu0 0.0
    %4474 = vmatpush1.msra.mxu0 0.0
    %4475 = vmatprep.subr.mxu0 0.0
    %4476 = vmatpush1.msra.mxu0 0.0
    %4477 = vmatprep.subr.mxu0 0.0
    %4478 = vmatpush1.msra.mxu0 0.0
    %4479 = vmatprep.subr.mxu0 0.0
    %4480 = vmatpush1.msra.mxu0 0.0
    %4481 = vmatprep.subr.mxu0 0.0
    %4482 = vmatpush1.msra.mxu0 0.0
    %4483 = vmatprep.subr.mxu0 0.0
    %4484 = vmatpush1.msra.mxu0 0.0
    %4485 = vmatprep.subr.mxu0 0.0
    %4486 = vmatpush1.msra.mxu0 0.0
    %4487 = vmatprep.subr.mxu0 0.0
    %4488 = vmatpush1.msra.mxu0 0.0
    %4489 = vmatprep.subr.mxu0 0.0
    %4490 = vmatpush1.msra.mxu0 0.0
    %4491 = vmatprep.subr.mxu0 0.0
    %4492 = vmatpush1.msra.mxu0 0.0
    %4493 = vmatprep.subr.mxu0 0.0
    %4494 = vmatpush1.msra.mxu0 0.0
    %4495 = vmatprep.subr.mxu0 0.0
    %4496 = vmatpush1.msra.mxu0 0.0
    %4497 = vmatprep.subr.mxu0 0.0
    %4498 = vmatpush1.msra.mxu0 0.0
    %4499 = vmatprep.subr.mxu0 0.0
    %4500 = vmatpush1.msra.mxu0 0.0
    %4501 = vmatprep.subr.mxu0 0.0
    %4502 = vmatpush1.msra.mxu0 0.0
    %4503 = vmatprep.subr.mxu0 0.0
    %4504 = vmatpush1.msra.mxu0 0.0
    %4505 = vmatprep.subr.mxu0 0.0
    %4506 = vmatpush1.msra.mxu0 0.0
    %4507 = vmatprep.subr.mxu0 0.0
    %4508 = vmatpush1.msra.mxu0 0.0
    %4509 = vmatprep.subr.mxu0 0.0
    %4510 = vmatpush1.msra.mxu0 0.0
    %4511 = vmatprep.subr.mxu0 0.0
    %4512 = vmatpush1.msra.mxu0 0.0
    %4513 = vmatprep.subr.mxu0 0.0
    %4514 = vmatpush1.msra.mxu0 0.0
    %4515 = vmatprep.subr.mxu0 0.0
    %4516 = vmatpush1.msra.mxu0 0.0
    %4517 = vmatprep.subr.mxu0 0.0
    %4518 = vmatpush1.msra.mxu0 0.0
    %4519 = vmatprep.subr.mxu0 0.0
    %4520 = vmatpush1.msra.mxu0 0.0
    %4521 = vmatprep.mubr.f32.mxu0 0.0
    %4522 = vmatmul.mubr.f32.gmra.mrb[0].mxu0 %v4455
    %v4523 = vpop.f32.mrb[0].mxu0
    %v4524 = vadd.f32 0.0, %v4523
    %v4525 = vpop.f32.mrb[0].mxu0
    %4526 = vdwg.mxu0
    %v4528 = vsel %vm1083, %v4441, 0
    %4530 = vmatprep.subr.mxu0 0.0
    %4531 = vmatpush1.msra.mxu0 %v3746
    %4532 = vmatprep.subr.mxu0 0.0
    %4533 = vmatpush1.msra.mxu0 0.0
    %4534 = vmatprep.subr.mxu0 0.0
    %4535 = vmatpush1.msra.mxu0 0.0
    %4536 = vmatprep.subr.mxu0 0.0
    %4537 = vmatpush1.msra.mxu0 0.0
    %4538 = vmatprep.subr.mxu0 0.0
    %4539 = vmatpush1.msra.mxu0 0.0
    %4540 = vmatprep.subr.mxu0 0.0
    %4541 = vmatpush1.msra.mxu0 0.0
    %4542 = vmatprep.subr.mxu0 0.0
    %4543 = vmatpush1.msra.mxu0 0.0
    %4544 = vmatprep.subr.mxu0 0.0
    %4545 = vmatpush1.msra.mxu0 0.0
    %4546 = vmatprep.subr.mxu0 0.0
    %4547 = vmatpush1.msra.mxu0 0.0
    %4548 = vmatprep.subr.mxu0 0.0
    %4549 = vmatpush1.msra.mxu0 0.0
    %4550 = vmatprep.subr.mxu0 0.0
    %4551 = vmatpush1.msra.mxu0 0.0
    %4552 = vmatprep.subr.mxu0 0.0
    %4553 = vmatpush1.msra.mxu0 0.0
    %4554 = vmatprep.subr.mxu0 0.0
    %4555 = vmatpush1.msra.mxu0 0.0
    %4556 = vmatprep.subr.mxu0 0.0
    %4557 = vmatpush1.msra.mxu0 0.0
    %4558 = vmatprep.subr.mxu0 0.0
    %4559 = vmatpush1.msra.mxu0 0.0
    %4560 = vmatprep.subr.mxu0 0.0
    %4561 = vmatpush1.msra.mxu0 0.0
    %4562 = vmatprep.subr.mxu0 0.0
    %4563 = vmatpush1.msra.mxu0 0.0
    %4564 = vmatprep.subr.mxu0 0.0
    %4565 = vmatpush1.msra.mxu0 0.0
    %4566 = vmatprep.subr.mxu0 0.0
    %4567 = vmatpush1.msra.mxu0 0.0
    %4568 = vmatprep.subr.mxu0 0.0
    %4569 = vmatpush1.msra.mxu0 0.0
    %4570 = vmatprep.subr.mxu0 0.0
    %4571 = vmatpush1.msra.mxu0 0.0
    %4572 = vmatprep.subr.mxu0 0.0
    %4573 = vmatpush1.msra.mxu0 0.0
    %4574 = vmatprep.subr.mxu0 0.0
    %4575 = vmatpush1.msra.mxu0 0.0
    %4576 = vmatprep.subr.mxu0 0.0
    %4577 = vmatpush1.msra.mxu0 0.0
    %4578 = vmatprep.subr.mxu0 0.0
    %4579 = vmatpush1.msra.mxu0 0.0
    %4580 = vmatprep.subr.mxu0 0.0
    %4581 = vmatpush1.msra.mxu0 0.0
    %4582 = vmatprep.subr.mxu0 0.0
    %4583 = vmatpush1.msra.mxu0 0.0
    %4584 = vmatprep.subr.mxu0 0.0
    %4585 = vmatpush1.msra.mxu0 0.0
    %4586 = vmatprep.subr.mxu0 0.0
    %4587 = vmatpush1.msra.mxu0 0.0
    %4588 = vmatprep.subr.mxu0 0.0
    %4589 = vmatpush1.msra.mxu0 0.0
    %4590 = vmatprep.subr.mxu0 0.0
    %4591 = vmatpush1.msra.mxu0 0.0
    %4592 = vmatprep.subr.mxu0 0.0
    %4593 = vmatpush1.msra.mxu0 0.0
    %4594 = vmatprep.mubr.f32.mxu0 0.0
    %4595 = vmatmul.mubr.f32.gmra.mrb[0].mxu0 %v4528
    %v4596 = vpop.f32.mrb[0].mxu0
    %v4597 = vadd.f32 0.0, %v4596
    %v4598 = vpop.f32.mrb[0].mxu0
    %4599 = vdwg.mxu0
    %v4601 = vsel %vm1083, %v4443, 0
    %4603 = vmatprep.subr.mxu0 0.0
    %4604 = vmatpush1.msra.mxu0 %v3679
    %4605 = vmatprep.subr.mxu0 0.0
    %4606 = vmatpush1.msra.mxu0 0.0
    %4607 = vmatprep.subr.mxu0 0.0
    %4608 = vmatpush1.msra.mxu0 0.0
    %4609 = vmatprep.subr.mxu0 0.0
    %4610 = vmatpush1.msra.mxu0 0.0
    %4611 = vmatprep.subr.mxu0 0.0
    %4612 = vmatpush1.msra.mxu0 0.0
    %4613 = vmatprep.subr.mxu0 0.0
    %4614 = vmatpush1.msra.mxu0 0.0
    %4615 = vmatprep.subr.mxu0 0.0
    %4616 = vmatpush1.msra.mxu0 0.0
    %4617 = vmatprep.subr.mxu0 0.0
    %4618 = vmatpush1.msra.mxu0 0.0
    %4619 = vmatprep.subr.mxu0 0.0
    %4620 = vmatpush1.msra.mxu0 0.0
    %4621 = vmatprep.subr.mxu0 0.0
    %4622 = vmatpush1.msra.mxu0 0.0
    %4623 = vmatprep.subr.mxu0 0.0
    %4624 = vmatpush1.msra.mxu0 0.0
    %4625 = vmatprep.subr.mxu0 0.0
    %4626 = vmatpush1.msra.mxu0 0.0
    %4627 = vmatprep.subr.mxu0 0.0
    %4628 = vmatpush1.msra.mxu0 0.0
    %4629 = vmatprep.subr.mxu0 0.0
    %4630 = vmatpush1.msra.mxu0 0.0
    %4631 = vmatprep.subr.mxu0 0.0
    %4632 = vmatpush1.msra.mxu0 0.0
    %4633 = vmatprep.subr.mxu0 0.0
    %4634 = vmatpush1.msra.mxu0 0.0
    %4635 = vmatprep.subr.mxu0 0.0
    %4636 = vmatpush1.msra.mxu0 0.0
    %4637 = vmatprep.subr.mxu0 0.0
    %4638 = vmatpush1.msra.mxu0 0.0
    %4639 = vmatprep.subr.mxu0 0.0
    %4640 = vmatpush1.msra.mxu0 0.0
    %4641 = vmatprep.subr.mxu0 0.0
    %4642 = vmatpush1.msra.mxu0 0.0
    %4643 = vmatprep.subr.mxu0 0.0
    %4644 = vmatpush1.msra.mxu0 0.0
    %4645 = vmatprep.subr.mxu0 0.0
    %4646 = vmatpush1.msra.mxu0 0.0
    %4647 = vmatprep.subr.mxu0 0.0
    %4648 = vmatpush1.msra.mxu0 0.0
    %4649 = vmatprep.subr.mxu0 0.0
    %4650 = vmatpush1.msra.mxu0 0.0
    %4651 = vmatprep.subr.mxu0 0.0
    %4652 = vmatpush1.msra.mxu0 0.0
    %4653 = vmatprep.subr.mxu0 0.0
    %4654 = vmatpush1.msra.mxu0 0.0
    %4655 = vmatprep.subr.mxu0 0.0
    %4656 = vmatpush1.msra.mxu0 0.0
    %4657 = vmatprep.subr.mxu0 0.0
    %4658 = vmatpush1.msra.mxu0 0.0
    %4659 = vmatprep.subr.mxu0 0.0
    %4660 = vmatpush1.msra.mxu0 0.0
    %4661 = vmatprep.subr.mxu0 0.0
    %4662 = vmatpush1.msra.mxu0 0.0
    %4663 = vmatprep.subr.mxu0 0.0
    %4664 = vmatpush1.msra.mxu0 0.0
    %4665 = vmatprep.subr.mxu0 0.0
    %4666 = vmatpush1.msra.mxu0 0.0
    %4667 = vmatprep.mubr.f32.mxu0 0.0
    %4668 = vmatmul.mubr.f32.gmra.mrb[0].mxu0 %v4601
    %v4669 = vpop.f32.mrb[0].mxu0
    %v4670 = vadd.f32 0.0, %v4669
    %v4671 = vpop.f32.mrb[0].mxu0
    %4672 = vdwg.mxu0
    %v4674 = vsel %vm1083, %v4445, 0
    %4676 = vmatprep.subr.mxu0 0.0
    %4677 = vmatpush1.msra.mxu0 %v3747
    %4678 = vmatprep.subr.mxu0 0.0
    %4679 = vmatpush1.msra.mxu0 0.0
    %4680 = vmatprep.subr.mxu0 0.0
    %4681 = vmatpush1.msra.mxu0 0.0
    %4682 = vmatprep.subr.mxu0 0.0
    %4683 = vmatpush1.msra.mxu0 0.0
    %4684 = vmatprep.subr.mxu0 0.0
    %4685 = vmatpush1.msra.mxu0 0.0
    %4686 = vmatprep.subr.mxu0 0.0
    %4687 = vmatpush1.msra.mxu0 0.0
    %4688 = vmatprep.subr.mxu0 0.0
    %4689 = vmatpush1.msra.mxu0 0.0
    %4690 = vmatprep.subr.mxu0 0.0
    %4691 = vmatpush1.msra.mxu0 0.0
    %4692 = vmatprep.subr.mxu0 0.0
    %4693 = vmatpush1.msra.mxu0 0.0
    %4694 = vmatprep.subr.mxu0 0.0
    %4695 = vmatpush1.msra.mxu0 0.0
    %4696 = vmatprep.subr.mxu0 0.0
    %4697 = vmatpush1.msra.mxu0 0.0
    %4698 = vmatprep.subr.mxu0 0.0
    %4699 = vmatpush1.msra.mxu0 0.0
    %4700 = vmatprep.subr.mxu0 0.0
    %4701 = vmatpush1.msra.mxu0 0.0
    %4702 = vmatprep.subr.mxu0 0.0
    %4703 = vmatpush1.msra.mxu0 0.0
    %4704 = vmatprep.subr.mxu0 0.0
    %4705 = vmatpush1.msra.mxu0 0.0
    %4706 = vmatprep.subr.mxu0 0.0
    %4707 = vmatpush1.msra.mxu0 0.0
    %4708 = vmatprep.subr.mxu0 0.0
    %4709 = vmatpush1.msra.mxu0 0.0
    %4710 = vmatprep.subr.mxu0 0.0
    %4711 = vmatpush1.msra.mxu0 0.0
    %4712 = vmatprep.subr.mxu0 0.0
    %4713 = vmatpush1.msra.mxu0 0.0
    %4714 = vmatprep.subr.mxu0 0.0
    %4715 = vmatpush1.msra.mxu0 0.0
    %4716 = vmatprep.subr.mxu0 0.0
    %4717 = vmatpush1.msra.mxu0 0.0
    %4718 = vmatprep.subr.mxu0 0.0
    %4719 = vmatpush1.msra.mxu0 0.0
    %4720 = vmatprep.subr.mxu0 0.0
    %4721 = vmatpush1.msra.mxu0 0.0
    %4722 = vmatprep.subr.mxu0 0.0
    %4723 = vmatpush1.msra.mxu0 0.0
    %4724 = vmatprep.subr.mxu0 0.0
    %4725 = vmatpush1.msra.mxu0 0.0
    %4726 = vmatprep.subr.mxu0 0.0
    %4727 = vmatpush1.msra.mxu0 0.0
    %4728 = vmatprep.subr.mxu0 0.0
    %4729 = vmatpush1.msra.mxu0 0.0
    %4730 = vmatprep.subr.mxu0 0.0
    %4731 = vmatpush1.msra.mxu0 0.0
    %4732 = vmatprep.subr.mxu0 0.0
    %4733 = vmatpush1.msra.mxu0 0.0
    %4734 = vmatprep.subr.mxu0 0.0
    %4735 = vmatpush1.msra.mxu0 0.0
    %4736 = vmatprep.subr.mxu0 0.0
    %4737 = vmatpush1.msra.mxu0 0.0
    %4738 = vmatprep.subr.mxu0 0.0
    %4739 = vmatpush1.msra.mxu0 0.0
    %4740 = vmatprep.mubr.f32.mxu0 0.0
    %4741 = vmatmul.mubr.f32.gmra.mrb[0].mxu0 %v4674
    %v4742 = vpop.f32.mrb[0].mxu0
    %v4743 = vadd.f32 0.0, %v4742
    %v4744 = vpop.f32.mrb[0].mxu0
    %4745 = vdwg.mxu0
    %v4747 = vsel %vm1083, %v4447, 0
    %4749 = vmatprep.subr.mxu0 0.0
    %4750 = vmatpush1.msra.mxu0 %v3680
    %4751 = vmatprep.subr.mxu0 0.0
    %4752 = vmatpush1.msra.mxu0 0.0
    %4753 = vmatprep.subr.mxu0 0.0
    %4754 = vmatpush1.msra.mxu0 0.0
    %4755 = vmatprep.subr.mxu0 0.0
    %4756 = vmatpush1.msra.mxu0 0.0
    %4757 = vmatprep.subr.mxu0 0.0
    %4758 = vmatpush1.msra.mxu0 0.0
    %4759 = vmatprep.subr.mxu0 0.0
    %4760 = vmatpush1.msra.mxu0 0.0
    %4761 = vmatprep.subr.mxu0 0.0
    %4762 = vmatpush1.msra.mxu0 0.0
    %4763 = vmatprep.subr.mxu0 0.0
    %4764 = vmatpush1.msra.mxu0 0.0
    %4765 = vmatprep.subr.mxu0 0.0
    %4766 = vmatpush1.msra.mxu0 0.0
    %4767 = vmatprep.subr.mxu0 0.0
    %4768 = vmatpush1.msra.mxu0 0.0
    %4769 = vmatprep.subr.mxu0 0.0
    %4770 = vmatpush1.msra.mxu0 0.0
    %4771 = vmatprep.subr.mxu0 0.0
    %4772 = vmatpush1.msra.mxu0 0.0
    %4773 = vmatprep.subr.mxu0 0.0
    %4774 = vmatpush1.msra.mxu0 0.0
    %4775 = vmatprep.subr.mxu0 0.0
    %4776 = vmatpush1.msra.mxu0 0.0
    %4777 = vmatprep.subr.mxu0 0.0
    %4778 = vmatpush1.msra.mxu0 0.0
    %4779 = vmatprep.subr.mxu0 0.0
    %4780 = vmatpush1.msra.mxu0 0.0
    %4781 = vmatprep.subr.mxu0 0.0
    %4782 = vmatpush1.msra.mxu0 0.0
    %4783 = vmatprep.subr.mxu0 0.0
    %4784 = vmatpush1.msra.mxu0 0.0
    %4785 = vmatprep.subr.mxu0 0.0
    %4786 = vmatpush1.msra.mxu0 0.0
    %4787 = vmatprep.subr.mxu0 0.0
    %4788 = vmatpush1.msra.mxu0 0.0
    %4789 = vmatprep.subr.mxu0 0.0
    %4790 = vmatpush1.msra.mxu0 0.0
    %4791 = vmatprep.subr.mxu0 0.0
    %4792 = vmatpush1.msra.mxu0 0.0
    %4793 = vmatprep.subr.mxu0 0.0
    %4794 = vmatpush1.msra.mxu0 0.0
    %4795 = vmatprep.subr.mxu0 0.0
    %4796 = vmatpush1.msra.mxu0 0.0
    %4797 = vmatprep.subr.mxu0 0.0
    %4798 = vmatpush1.msra.mxu0 0.0
    %4799 = vmatprep.subr.mxu0 0.0
    %4800 = vmatpush1.msra.mxu0 0.0
    %4801 = vmatprep.subr.mxu0 0.0
    %4802 = vmatpush1.msra.mxu0 0.0
    %4803 = vmatprep.subr.mxu0 0.0
    %4804 = vmatpush1.msra.mxu0 0.0
    %4805 = vmatprep.subr.mxu0 0.0
    %4806 = vmatpush1.msra.mxu0 0.0
    %4807 = vmatprep.subr.mxu0 0.0
    %4808 = vmatpush1.msra.mxu0 0.0
    %4809 = vmatprep.subr.mxu0 0.0
    %4810 = vmatpush1.msra.mxu0 0.0
    %4811 = vmatprep.subr.mxu0 0.0
    %4812 = vmatpush1.msra.mxu0 0.0
    %4813 = vmatprep.mubr.f32.mxu0 0.0
    %4814 = vmatmul.mubr.f32.gmra.mrb[0].mxu0 %v4747
    %v4815 = vpop.f32.mrb[0].mxu0
    %v4816 = vadd.f32 0.0, %v4815
    %v4817 = vpop.f32.mrb[0].mxu0
    %4818 = vdwg.mxu0
    %v4820 = vsel %vm1083, %v4449, 0
    %4822 = vmatprep.subr.mxu0 0.0
    %4823 = vmatpush1.msra.mxu0 %v3748
    %4824 = vmatprep.subr.mxu0 0.0
    %4825 = vmatpush1.msra.mxu0 0.0
    %4826 = vmatprep.subr.mxu0 0.0
    %4827 = vmatpush1.msra.mxu0 0.0
    %4828 = vmatprep.subr.mxu0 0.0
    %4829 = vmatpush1.msra.mxu0 0.0
    %4830 = vmatprep.subr.mxu0 0.0
    %4831 = vmatpush1.msra.mxu0 0.0
    %4832 = vmatprep.subr.mxu0 0.0
    %4833 = vmatpush1.msra.mxu0 0.0
    %4834 = vmatprep.subr.mxu0 0.0
    %4835 = vmatpush1.msra.mxu0 0.0
    %4836 = vmatprep.subr.mxu0 0.0
    %4837 = vmatpush1.msra.mxu0 0.0
    %4838 = vmatprep.subr.mxu0 0.0
    %4839 = vmatpush1.msra.mxu0 0.0
    %4840 = vmatprep.subr.mxu0 0.0
    %4841 = vmatpush1.msra.mxu0 0.0
    %4842 = vmatprep.subr.mxu0 0.0
    %4843 = vmatpush1.msra.mxu0 0.0
    %4844 = vmatprep.subr.mxu0 0.0
    %4845 = vmatpush1.msra.mxu0 0.0
    %4846 = vmatprep.subr.mxu0 0.0
    %4847 = vmatpush1.msra.mxu0 0.0
    %4848 = vmatprep.subr.mxu0 0.0
    %4849 = vmatpush1.msra.mxu0 0.0
    %4850 = vmatprep.subr.mxu0 0.0
    %4851 = vmatpush1.msra.mxu0 0.0
    %4852 = vmatprep.subr.mxu0 0.0
    %4853 = vmatpush1.msra.mxu0 0.0
    %4854 = vmatprep.subr.mxu0 0.0
    %4855 = vmatpush1.msra.mxu0 0.0
    %4856 = vmatprep.subr.mxu0 0.0
    %4857 = vmatpush1.msra.mxu0 0.0
    %4858 = vmatprep.subr.mxu0 0.0
    %4859 = vmatpush1.msra.mxu0 0.0
    %4860 = vmatprep.subr.mxu0 0.0
    %4861 = vmatpush1.msra.mxu0 0.0
    %4862 = vmatprep.subr.mxu0 0.0
    %4863 = vmatpush1.msra.mxu0 0.0
    %4864 = vmatprep.subr.mxu0 0.0
    %4865 = vmatpush1.msra.mxu0 0.0
    %4866 = vmatprep.subr.mxu0 0.0
    %4867 = vmatpush1.msra.mxu0 0.0
    %4868 = vmatprep.subr.mxu0 0.0
    %4869 = vmatpush1.msra.mxu0 0.0
    %4870 = vmatprep.subr.mxu0 0.0
    %4871 = vmatpush1.msra.mxu0 0.0
    %4872 = vmatprep.subr.mxu0 0.0
    %4873 = vmatpush1.msra.mxu0 0.0
    %4874 = vmatprep.subr.mxu0 0.0
    %4875 = vmatpush1.msra.mxu0 0.0
    %4876 = vmatprep.subr.mxu0 0.0
    %4877 = vmatpush1.msra.mxu0 0.0
    %4878 = vmatprep.subr.mxu0 0.0
    %4879 = vmatpush1.msra.mxu0 0.0
    %4880 = vmatprep.subr.mxu0 0.0
    %4881 = vmatpush1.msra.mxu0 0.0
    %4882 = vmatprep.subr.mxu0 0.0
    %4883 = vmatpush1.msra.mxu0 0.0
    %4884 = vmatprep.subr.mxu0 0.0
    %4885 = vmatpush1.msra.mxu0 0.0
    %4886 = vmatprep.mubr.f32.mxu0 0.0
    %4887 = vmatmul.mubr.f32.gmra.mrb[0].mxu0 %v4820
    %v4888 = vpop.f32.mrb[0].mxu0
    %v4889 = vadd.f32 0.0, %v4888
    %v4890 = vpop.f32.mrb[0].mxu0
    %4891 = vdwg.mxu0
    %v4893 = vsel %vm1083, %v4451, 0
    %4895 = vmatprep.subr.mxu0 0.0
    %4896 = vmatpush1.msra.mxu0 %v3681
    %4897 = vmatprep.subr.mxu0 0.0
    %4898 = vmatpush1.msra.mxu0 0.0
    %4899 = vmatprep.subr.mxu0 0.0
    %4900 = vmatpush1.msra.mxu0 0.0
    %4901 = vmatprep.subr.mxu0 0.0
    %4902 = vmatpush1.msra.mxu0 0.0
    %4903 = vmatprep.subr.mxu0 0.0
    %4904 = vmatpush1.msra.mxu0 0.0
    %4905 = vmatprep.subr.mxu0 0.0
    %4906 = vmatpush1.msra.mxu0 0.0
    %4907 = vmatprep.subr.mxu0 0.0
    %4908 = vmatpush1.msra.mxu0 0.0
    %4909 = vmatprep.subr.mxu0 0.0
    %4910 = vmatpush1.msra.mxu0 0.0
    %4911 = vmatprep.subr.mxu0 0.0
    %4912 = vmatpush1.msra.mxu0 0.0
    %4913 = vmatprep.subr.mxu0 0.0
    %4914 = vmatpush1.msra.mxu0 0.0
    %4915 = vmatprep.subr.mxu0 0.0
    %4916 = vmatpush1.msra.mxu0 0.0
    %4917 = vmatprep.subr.mxu0 0.0
    %4918 = vmatpush1.msra.mxu0 0.0
    %4919 = vmatprep.subr.mxu0 0.0
    %4920 = vmatpush1.msra.mxu0 0.0
    %4921 = vmatprep.subr.mxu0 0.0
    %4922 = vmatpush1.msra.mxu0 0.0
    %4923 = vmatprep.subr.mxu0 0.0
    %4924 = vmatpush1.msra.mxu0 0.0
    %4925 = vmatprep.subr.mxu0 0.0
    %4926 = vmatpush1.msra.mxu0 0.0
    %4927 = vmatprep.subr.mxu0 0.0
    %4928 = vmatpush1.msra.mxu0 0.0
    %4929 = vmatprep.subr.mxu0 0.0
    %4930 = vmatpush1.msra.mxu0 0.0
    %4931 = vmatprep.subr.mxu0 0.0
    %4932 = vmatpush1.msra.mxu0 0.0
    %4933 = vmatprep.subr.mxu0 0.0
    %4934 = vmatpush1.msra.mxu0 0.0
    %4935 = vmatprep.subr.mxu0 0.0
    %4936 = vmatpush1.msra.mxu0 0.0
    %4937 = vmatprep.subr.mxu0 0.0
    %4938 = vmatpush1.msra.mxu0 0.0
    %4939 = vmatprep.subr.mxu0 0.0
    %4940 = vmatpush1.msra.mxu0 0.0
    %4941 = vmatprep.subr.mxu0 0.0
    %4942 = vmatpush1.msra.mxu0 0.0
    %4943 = vmatprep.subr.mxu0 0.0
    %4944 = vmatpush1.msra.mxu0 0.0
    %4945 = vmatprep.subr.mxu0 0.0
    %4946 = vmatpush1.msra.mxu0 0.0
    %4947 = vmatprep.subr.mxu0 0.0
    %4948 = vmatpush1.msra.mxu0 0.0
    %4949 = vmatprep.subr.mxu0 0.0
    %4950 = vmatpush1.msra.mxu0 0.0
    %4951 = vmatprep.subr.mxu0 0.0
    %4952 = vmatpush1.msra.mxu0 0.0
    %4953 = vmatprep.subr.mxu0 0.0
    %4954 = vmatpush1.msra.mxu0 0.0
    %4955 = vmatprep.subr.mxu0 0.0
    %4956 = vmatpush1.msra.mxu0 0.0
    %4957 = vmatprep.subr.mxu0 0.0
    %4958 = vmatpush1.msra.mxu0 0.0
    %4959 = vmatprep.mubr.f32.mxu0 0.0
    %4960 = vmatmul.mubr.f32.gmra.mrb[0].mxu0 %v4893
    %v4961 = vpop.f32.mrb[0].mxu0
    %v4962 = vadd.f32 0.0, %v4961
    %v4963 = vpop.f32.mrb[0].mxu0
    %4964 = vdwg.mxu0
    %v4966 = vsel %vm1083, %v4453, 0
    %4968 = vmatprep.subr.mxu0 0.0
    %4969 = vmatpush1.msra.mxu0 %v3749
    %4970 = vmatprep.subr.mxu0 0.0
    %4971 = vmatpush1.msra.mxu0 0.0
    %4972 = vmatprep.subr.mxu0 0.0
    %4973 = vmatpush1.msra.mxu0 0.0
    %4974 = vmatprep.subr.mxu0 0.0
    %4975 = vmatpush1.msra.mxu0 0.0
    %4976 = vmatprep.subr.mxu0 0.0
    %4977 = vmatpush1.msra.mxu0 0.0
    %4978 = vmatprep.subr.mxu0 0.0
    %4979 = vmatpush1.msra.mxu0 0.0
    %4980 = vmatprep.subr.mxu0 0.0
    %4981 = vmatpush1.msra.mxu0 0.0
    %4982 = vmatprep.subr.mxu0 0.0
    %4983 = vmatpush1.msra.mxu0 0.0
    %4984 = vmatprep.subr.mxu0 0.0
    %4985 = vmatpush1.msra.mxu0 0.0
    %4986 = vmatprep.subr.mxu0 0.0
    %4987 = vmatpush1.msra.mxu0 0.0
    %4988 = vmatprep.subr.mxu0 0.0
    %4989 = vmatpush1.msra.mxu0 0.0
    %4990 = vmatprep.subr.mxu0 0.0
    %4991 = vmatpush1.msra.mxu0 0.0
    %4992 = vmatprep.subr.mxu0 0.0
    %4993 = vmatpush1.msra.mxu0 0.0
    %4994 = vmatprep.subr.mxu0 0.0
    %4995 = vmatpush1.msra.mxu0 0.0
    %4996 = vmatprep.subr.mxu0 0.0
    %4997 = vmatpush1.msra.mxu0 0.0
    %4998 = vmatprep.subr.mxu0 0.0
    %4999 = vmatpush1.msra.mxu0 0.0
    %5000 = vmatprep.subr.mxu0 0.0
    %5001 = vmatpush1.msra.mxu0 0.0
    %5002 = vmatprep.subr.mxu0 0.0
    %5003 = vmatpush1.msra.mxu0 0.0
    %5004 = vmatprep.subr.mxu0 0.0
    %5005 = vmatpush1.msra.mxu0 0.0
    %5006 = vmatprep.subr.mxu0 0.0
    %5007 = vmatpush1.msra.mxu0 0.0
    %5008 = vmatprep.subr.mxu0 0.0
    %5009 = vmatpush1.msra.mxu0 0.0
    %5010 = vmatprep.subr.mxu0 0.0
    %5011 = vmatpush1.msra.mxu0 0.0
    %5012 = vmatprep.subr.mxu0 0.0
    %5013 = vmatpush1.msra.mxu0 0.0
    %5014 = vmatprep.subr.mxu0 0.0
    %5015 = vmatpush1.msra.mxu0 0.0
    %5016 = vmatprep.subr.mxu0 0.0
    %5017 = vmatpush1.msra.mxu0 0.0
    %5018 = vmatprep.subr.mxu0 0.0
    %5019 = vmatpush1.msra.mxu0 0.0
    %5020 = vmatprep.subr.mxu0 0.0
    %5021 = vmatpush1.msra.mxu0 0.0
    %5022 = vmatprep.subr.mxu0 0.0
    %5023 = vmatpush1.msra.mxu0 0.0
    %5024 = vmatprep.subr.mxu0 0.0
    %5025 = vmatpush1.msra.mxu0 0.0
    %5026 = vmatprep.subr.mxu0 0.0
    %5027 = vmatpush1.msra.mxu0 0.0
    %5028 = vmatprep.subr.mxu0 0.0
    %5029 = vmatpush1.msra.mxu0 0.0
    %5030 = vmatprep.subr.mxu0 0.0
    %5031 = vmatpush1.msra.mxu0 0.0
    %5032 = vmatprep.mubr.f32.mxu0 0.0
    %5033 = vmatmul.mubr.f32.gmra.mrb[0].mxu0 %v4966
    %v5034 = vpop.f32.mrb[0].mxu0
    %v5035 = vadd.f32 0.0, %v5034
    %v5036 = vpop.f32.mrb[0].mxu0
    %5037 = vdwg.mxu0
    %v5038 = vcombine.low %v4524, %v4816
    %v5039 = vcombine.high %v4524, %v4816
    %v5041 = vunpack.c.l.s4 1983009808
    %v5042 = vunpack.c.0.s8 %v5041
    %v5043 = vlaneseq
    %v5044 = vshrl.u32 %v5043, 7
    %v5045 = vsub.s32 %v5042, %v5044
    %v5046 = vrot.slane %v5038, %v5045
    %v5048 = vunpack.c.l.s4 1983009808
    %v5049 = vunpack.c.0.s8 %v5048
    %v5050 = vlaneseq
    %v5051 = vshrl.u32 %v5050, 7
    %v5052 = vsub.s32 %v5049, %v5051
    %v5053 = vrot.slane %v5039, %v5052
    %v5054 = vcombine.low %v4670, %v4962
    %v5055 = vcombine.high %v4670, %v4962
    %v5057 = vunpack.c.l.s4 1983009808
    %v5058 = vunpack.c.0.s8 %v5057
    %v5059 = vlaneseq
    %v5060 = vshrl.u32 %v5059, 7
    %v5061 = vsub.s32 %v5058, %v5060
    %v5062 = vrot.slane %v5054, %v5061
    %v5064 = vunpack.c.l.s4 1983009808
    %v5065 = vunpack.c.0.s8 %v5064
    %v5066 = vlaneseq
    %v5067 = vshrl.u32 %v5066, 7
    %v5068 = vsub.s32 %v5065, %v5067
    %v5069 = vrot.slane %v5055, %v5068
    %v5070 = vcombine.low %v5046, %v5062
    %v5071 = vcombine.high %v5046, %v5062
    %v5073 = vunpack.c.l.s4 1934713408
    %v5074 = vunpack.c.0.s8 %v5073
    %v5075 = vlaneseq
    %v5076 = vshrl.u32 %v5075, 7
    %v5077 = vsub.s32 %v5074, %v5076
    %v5078 = vrot.slane %v5070, %v5077
    %v5080 = vunpack.c.l.s4 1934713408
    %v5081 = vunpack.c.0.s8 %v5080
    %v5082 = vlaneseq
    %v5083 = vshrl.u32 %v5082, 7
    %v5084 = vsub.s32 %v5081, %v5083
    %v5085 = vrot.slane %v5071, %v5084
    %v5086 = vcombine.low %v5053, %v5069
    %v5087 = vcombine.high %v5053, %v5069
    %v5089 = vunpack.c.l.s4 1934713408
    %v5090 = vunpack.c.0.s8 %v5089
    %v5091 = vlaneseq
    %v5092 = vshrl.u32 %v5091, 7
    %v5093 = vsub.s32 %v5090, %v5092
    %v5094 = vrot.slane %v5086, %v5093
    %v5096 = vunpack.c.l.s4 1934713408
    %v5097 = vunpack.c.0.s8 %v5096
    %v5098 = vlaneseq
    %v5099 = vshrl.u32 %v5098, 7
    %v5100 = vsub.s32 %v5097, %v5099
    %v5101 = vrot.slane %v5087, %v5100
    %v5102 = vcombine.high %v5078, 0.0
    %v5103 = vcombine.high %v5085, 0.0
    %v5104 = vcombine.high %v5094, 0.0
    %v5105 = vcombine.high %v5101, 0.0
    %v5106 = vcombine.low %v4597, %v4889
    %v5107 = vcombine.high %v4597, %v4889
    %v5109 = vunpack.c.l.s4 1983009808
    %v5110 = vunpack.c.0.s8 %v5109
    %v5111 = vlaneseq
    %v5112 = vshrl.u32 %v5111, 7
    %v5113 = vsub.s32 %v5110, %v5112
    %v5114 = vrot.slane %v5106, %v5113
    %v5116 = vunpack.c.l.s4 1983009808
    %v5117 = vunpack.c.0.s8 %v5116
    %v5118 = vlaneseq
    %v5119 = vshrl.u32 %v5118, 7
    %v5120 = vsub.s32 %v5117, %v5119
    %v5121 = vrot.slane %v5107, %v5120
    %v5122 = vcombine.low %v4743, %v5035
    %v5123 = vcombine.high %v4743, %v5035
    %v5125 = vunpack.c.l.s4 1983009808
    %v5126 = vunpack.c.0.s8 %v5125
    %v5127 = vlaneseq
    %v5128 = vshrl.u32 %v5127, 7
    %v5129 = vsub.s32 %v5126, %v5128
    %v5130 = vrot.slane %v5122, %v5129
    %v5132 = vunpack.c.l.s4 1983009808
    %v5133 = vunpack.c.0.s8 %v5132
    %v5134 = vlaneseq
    %v5135 = vshrl.u32 %v5134, 7
    %v5136 = vsub.s32 %v5133, %v5135
    %v5137 = vrot.slane %v5123, %v5136
    %v5138 = vcombine.low %v5114, %v5130
    %v5139 = vcombine.high %v5114, %v5130
    %v5141 = vunpack.c.l.s4 1934713408
    %v5142 = vunpack.c.0.s8 %v5141
    %v5143 = vlaneseq
    %v5144 = vshrl.u32 %v5143, 7
    %v5145 = vsub.s32 %v5142, %v5144
    %v5146 = vrot.slane %v5138, %v5145
    %v5148 = vunpack.c.l.s4 1934713408
    %v5149 = vunpack.c.0.s8 %v5148
    %v5150 = vlaneseq
    %v5151 = vshrl.u32 %v5150, 7
    %v5152 = vsub.s32 %v5149, %v5151
    %v5153 = vrot.slane %v5139, %v5152
    %v5154 = vcombine.low %v5121, %v5137
    %v5155 = vcombine.high %v5121, %v5137
    %v5157 = vunpack.c.l.s4 1934713408
    %v5158 = vunpack.c.0.s8 %v5157
    %v5159 = vlaneseq
    %v5160 = vshrl.u32 %v5159, 7
    %v5161 = vsub.s32 %v5158, %v5160
    %v5162 = vrot.slane %v5154, %v5161
    %v5164 = vunpack.c.l.s4 1934713408
    %v5165 = vunpack.c.0.s8 %v5164
    %v5166 = vlaneseq
    %v5167 = vshrl.u32 %v5166, 7
    %v5168 = vsub.s32 %v5165, %v5167
    %v5169 = vrot.slane %v5155, %v5168
    %v5170 = vcombine.high %v5146, 0.0
    %v5171 = vcombine.high %v5153, 0.0
    %v5172 = vcombine.high %v5162, 0.0
    %v5173 = vcombine.high %v5169, 0.0
    %v5174 = vcombine.low %v5078, %v5085
    %v5176 = vunpack.c.l.s4 1983009808
    %v5177 = vunpack.c.0.s8 %v5176
    %v5178 = vlaneseq
    %v5179 = vshrl.u32 %v5178, 7
    %v5180 = vsub.s32 %v5177, %v5179
    %v5181 = vrot.slane %v5174, %v5180
    %v5182 = vcombine.low %v5102, %v5103
    %v5184 = vunpack.c.l.s4 1983009808
    %v5185 = vunpack.c.0.s8 %v5184
    %v5186 = vlaneseq
    %v5187 = vshrl.u32 %v5186, 7
    %v5188 = vsub.s32 %v5185, %v5187
    %v5189 = vrot.slane %v5182, %v5188
    %v5190 = vcombine.low %v5094, %v5101
    %v5192 = vunpack.c.l.s4 1983009808
    %v5193 = vunpack.c.0.s8 %v5192
    %v5194 = vlaneseq
    %v5195 = vshrl.u32 %v5194, 7
    %v5196 = vsub.s32 %v5193, %v5195
    %v5197 = vrot.slane %v5190, %v5196
    %v5198 = vcombine.low %v5104, %v5105
    %v5200 = vunpack.c.l.s4 1983009808
    %v5201 = vunpack.c.0.s8 %v5200
    %v5202 = vlaneseq
    %v5203 = vshrl.u32 %v5202, 7
    %v5204 = vsub.s32 %v5201, %v5203
    %v5205 = vrot.slane %v5198, %v5204
    %v5206 = vcombine.low %v5181, %v5189
    %v5207 = vcombine.high %v5181, %v5189
    %v5209 = vunpack.c.l.s4 1934713408
    %v5210 = vunpack.c.0.s8 %v5209
    %v5211 = vlaneseq
    %v5212 = vshrl.u32 %v5211, 7
    %v5213 = vsub.s32 %v5210, %v5212
    %v5214 = vrot.slane %v5206, %v5213
    %v5216 = vunpack.c.l.s4 1934713408
    %v5217 = vunpack.c.0.s8 %v5216
    %v5218 = vlaneseq
    %v5219 = vshrl.u32 %v5218, 7
    %v5220 = vsub.s32 %v5217, %v5219
    %v5221 = vrot.slane %v5207, %v5220
    %v5222 = vcombine.low %v5197, %v5205
    %v5223 = vcombine.high %v5197, %v5205
    %v5225 = vunpack.c.l.s4 1934713408
    %v5226 = vunpack.c.0.s8 %v5225
    %v5227 = vlaneseq
    %v5228 = vshrl.u32 %v5227, 7
    %v5229 = vsub.s32 %v5226, %v5228
    %v5230 = vrot.slane %v5222, %v5229
    %v5232 = vunpack.c.l.s4 1934713408
    %v5233 = vunpack.c.0.s8 %v5232
    %v5234 = vlaneseq
    %v5235 = vshrl.u32 %v5234, 7
    %v5236 = vsub.s32 %v5233, %v5235
    %v5237 = vrot.slane %v5223, %v5236
    %v5238 = vcombine.low %v5214, %v5230
    %v5239 = vcombine.high %v5214, %v5230
    %v5240 = vcombine.low %v5221, %v5237
    %v5241 = vcombine.high %v5221, %v5237
    %v5242 = vcombine.low %v5146, %v5153
    %v5244 = vunpack.c.l.s4 1983009808
    %v5245 = vunpack.c.0.s8 %v5244
    %v5246 = vlaneseq
    %v5247 = vshrl.u32 %v5246, 7
    %v5248 = vsub.s32 %v5245, %v5247
    %v5249 = vrot.slane %v5242, %v5248
    %v5250 = vcombine.low %v5170, %v5171
    %v5252 = vunpack.c.l.s4 1983009808
    %v5253 = vunpack.c.0.s8 %v5252
    %v5254 = vlaneseq
    %v5255 = vshrl.u32 %v5254, 7
    %v5256 = vsub.s32 %v5253, %v5255
    %v5257 = vrot.slane %v5250, %v5256
    %v5258 = vcombine.low %v5162, %v5169
    %v5260 = vunpack.c.l.s4 1983009808
    %v5261 = vunpack.c.0.s8 %v5260
    %v5262 = vlaneseq
    %v5263 = vshrl.u32 %v5262, 7
    %v5264 = vsub.s32 %v5261, %v5263
    %v5265 = vrot.slane %v5258, %v5264
    %v5266 = vcombine.low %v5172, %v5173
    %v5268 = vunpack.c.l.s4 1983009808
    %v5269 = vunpack.c.0.s8 %v5268
    %v5270 = vlaneseq
    %v5271 = vshrl.u32 %v5270, 7
    %v5272 = vsub.s32 %v5269, %v5271
    %v5273 = vrot.slane %v5266, %v5272
    %v5274 = vcombine.low %v5249, %v5257
    %v5275 = vcombine.high %v5249, %v5257
    %v5277 = vunpack.c.l.s4 1934713408
    %v5278 = vunpack.c.0.s8 %v5277
    %v5279 = vlaneseq
    %v5280 = vshrl.u32 %v5279, 7
    %v5281 = vsub.s32 %v5278, %v5280
    %v5282 = vrot.slane %v5274, %v5281
    %v5284 = vunpack.c.l.s4 1934713408
    %v5285 = vunpack.c.0.s8 %v5284
    %v5286 = vlaneseq
    %v5287 = vshrl.u32 %v5286, 7
    %v5288 = vsub.s32 %v5285, %v5287
    %v5289 = vrot.slane %v5275, %v5288
    %v5290 = vcombine.low %v5265, %v5273
    %v5291 = vcombine.high %v5265, %v5273
    %v5293 = vunpack.c.l.s4 1934713408
    %v5294 = vunpack.c.0.s8 %v5293
    %v5295 = vlaneseq
    %v5296 = vshrl.u32 %v5295, 7
    %v5297 = vsub.s32 %v5294, %v5296
    %v5298 = vrot.slane %v5290, %v5297
    %v5300 = vunpack.c.l.s4 1934713408
    %v5301 = vunpack.c.0.s8 %v5300
    %v5302 = vlaneseq
    %v5303 = vshrl.u32 %v5302, 7
    %v5304 = vsub.s32 %v5301, %v5303
    %v5305 = vrot.slane %v5291, %v5304
    %v5306 = vcombine.low %v5282, %v5298
    %v5307 = vcombine.high %v5282, %v5298
    %v5308 = vcombine.low %v5289, %v5305
    %v5309 = vcombine.high %v5289, %v5305
    %5312 = vrot.lane.b32.xlu0 %v5239, 8
    %v5313 = vpop.permute.xlu0 %5312
    %5314 = vrot.lane.b32.xlu0 %v5307, 8
    %v5315 = vpop.permute.xlu0 %5314
    %5320 = vrot.lane.b32.xlu0 %v5240, 16
    %v5321 = vpop.permute.xlu0 %5320
    %5322 = vrot.lane.b32.xlu0 %v5308, 16
    %v5323 = vpop.permute.xlu0 %5322
    %5328 = vrot.lane.b32.xlu0 %v5241, 24
    %v5329 = vpop.permute.xlu0 %5328
    %5330 = vrot.lane.b32.xlu0 %v5309, 24
    %v5331 = vpop.permute.xlu0 %5330
    %v5334 = vsel %vm1083, %v5238, %v5313
    %v5335 = vsel %vm1083, %v5306, %v5315
    %v5336 = vsel %vm117, %v5334, %v5321
    %v5337 = vsel %vm117, %v5335, %v5323
    %v5338 = vsel %vm2672, %v5336, %v5329
    %v5339 = vsel %vm2672, %v5337, %v5331
    %v5340 = vadd.f32 %v2858, %v5338
    %v5341 = vadd.f32 %v2863, %v5339
    %v5343 = vlaneseq
    %v5344 = vshrl.u32 %v5343, 7
    %v5345 = vsub.s32 0, %v5344
    %v5346 = vrot.slane %v2778, %v5345
    %v5349 = vsel %vm2683, %v5340, 0
    %v5352 = vsel %vm2683, %v5341, 0
    %5354 = vmatprep.subr.mxu0 0.0
    %5355 = vmatpush1.msra.mxu0 %v2774
    %5356 = vmatprep.subr.mxu0 0.0
    %5357 = vmatpush1.msra.mxu0 %v2775
    %5358 = vmatprep.subr.mxu0 0.0
    %5359 = vmatpush1.msra.mxu0 %v2776
    %5360 = vmatprep.subr.mxu0 0.0
    %5361 = vmatpush1.msra.mxu0 %v2777
    %5362 = vmatprep.subr.mxu0 0.0
    %5363 = vmatpush1.msra.mxu0 0.0
    %5364 = vmatprep.subr.mxu0 0.0
    %5365 = vmatpush1.msra.mxu0 0.0
    %5366 = vmatprep.subr.mxu0 0.0
    %5367 = vmatpush1.msra.mxu0 0.0
    %5368 = vmatprep.subr.mxu0 0.0
    %5369 = vmatpush1.msra.mxu0 0.0
    %5370 = vmatprep.subr.mxu0 0.0
    %5371 = vmatpush1.msra.mxu0 0.0
    %5372 = vmatprep.subr.mxu0 0.0
    %5373 = vmatpush1.msra.mxu0 0.0
    %5374 = vmatprep.subr.mxu0 0.0
    %5375 = vmatpush1.msra.mxu0 0.0
    %5376 = vmatprep.subr.mxu0 0.0
    %5377 = vmatpush1.msra.mxu0 0.0
    %5378 = vmatprep.subr.mxu0 0.0
    %5379 = vmatpush1.msra.mxu0 0.0
    %5380 = vmatprep.subr.mxu0 0.0
    %5381 = vmatpush1.msra.mxu0 0.0
    %5382 = vmatprep.subr.mxu0 0.0
    %5383 = vmatpush1.msra.mxu0 0.0
    %5384 = vmatprep.subr.mxu0 0.0
    %5385 = vmatpush1.msra.mxu0 0.0
    %5386 = vmatprep.subr.mxu0 0.0
    %5387 = vmatpush1.msra.mxu0 0.0
    %5388 = vmatprep.subr.mxu0 0.0
    %5389 = vmatpush1.msra.mxu0 0.0
    %5390 = vmatprep.subr.mxu0 0.0
    %5391 = vmatpush1.msra.mxu0 0.0
    %5392 = vmatprep.subr.mxu0 0.0
    %5393 = vmatpush1.msra.mxu0 0.0
    %5394 = vmatprep.subr.mxu0 0.0
    %5395 = vmatpush1.msra.mxu0 0.0
    %5396 = vmatprep.subr.mxu0 0.0
    %5397 = vmatpush1.msra.mxu0 0.0
    %5398 = vmatprep.subr.mxu0 0.0
    %5399 = vmatpush1.msra.mxu0 0.0
    %5400 = vmatprep.subr.mxu0 0.0
    %5401 = vmatpush1.msra.mxu0 0.0
    %5402 = vmatprep.subr.mxu0 0.0
    %5403 = vmatpush1.msra.mxu0 0.0
    %5404 = vmatprep.subr.mxu0 0.0
    %5405 = vmatpush1.msra.mxu0 0.0
    %5406 = vmatprep.subr.mxu0 0.0
    %5407 = vmatpush1.msra.mxu0 0.0
    %5408 = vmatprep.subr.mxu0 0.0
    %5409 = vmatpush1.msra.mxu0 0.0
    %5410 = vmatprep.subr.mxu0 0.0
    %5411 = vmatpush1.msra.mxu0 0.0
    %5412 = vmatprep.subr.mxu0 0.0
    %5413 = vmatpush1.msra.mxu0 0.0
    %5414 = vmatprep.subr.mxu0 0.0
    %5415 = vmatpush1.msra.mxu0 0.0
    %5416 = vmatprep.subr.mxu0 0.0
    %5417 = vmatpush1.msra.mxu0 0.0
    %5418 = vmatprep.mubr.f32.mxu0 0.0
    %5419 = vmatmul.mubr.f32.gmra.mrb[0].mxu0 %v5349
    %v5420 = vpop.f32.mrb[0].mxu0
    %v5421 = vadd.f32 %v5346, %v5420
    %v5422 = vpop.f32.mrb[0].mxu0
    %5423 = vmatprep.mubr.f32.mxu0 0.0
    %5424 = vmatmul.mubr.f32.gmra.mrb[0].mxu0 %v5352
    %v5425 = vpop.f32.mrb[0].mxu0
    %v5426 = vadd.f32 %v5346, %v5425
    %v5427 = vpop.f32.mrb[0].mxu0
    %5428 = vdwg.mxu0
    %v5429 = vmax.f32 %v5421, 0.0
    %v5430 = vmax.f32 %v5426, 0.0
    %v5431 = vadd.f32 %v5340, %v5429
    %v5432 = vadd.f32 %v5341, %v5430
    %5433 = vst.msk [vmem:[#allocation11] sm:$0xff] %vm2683, %v5431
    %5434 = vst.msk [vmem:[#allocation11 + $0x8] sm:$0xff] %vm2683, %v5432
    // Predicated region
    $region58: #{tpu_custom_call.1} parent=1 // pred_check
      _
    $region59: #{tpu_custom_call.1} parent=1 // pred_check_branch
      %5436 = sbr.rel (0) target = $region61
    $region60: #{tpu_custom_call.1} parent=1 // pred_region
      %s5438 = ssub.s32 256, 256
      %5439 = vsyncadd [#allocation4], %s5438
      %s5440 = sshll.u32 [#allocation11], 4
      %s5441 = int_to_ptr.vmem [resolvable:$true] %s5440
      %5446 = dma.vmem_to_hbm [thread:$0]  %s5441, 256, %s9, [#allocation4], 128, 128, 8
    $region61: #{tpu_custom_call.1} parent=1 // pred_fallthru
      _
    // Predicated region
    $region62: #{tpu_custom_call.1} parent=1 // pred_check
      _
    $region63: #{tpu_custom_call.1} parent=1 // pred_check_branch
      %5448 = sbr.rel (0) target = $region65
    $region64: #{tpu_custom_call.1} parent=1 // pred_region
      %5449 = dma.done [#allocation4], 256
    $region65: #{tpu_custom_call.1} parent=1 // pred_fallthru
      _
    %5450 = vsyncpa [#allocation3], 1
    %5451 = vsyncpa [#allocation6], 1
    %5452 = vsyncpa [#allocation9], 1
    %5453 = vsyncpa [#allocation4], 1

// kernel: tpu_custom_call.1
$region0: #{tpu_custom_call.1}
  #allocation0 [shape = 'u32[]', space=smem, size = 0x4, offset = 0x4, fixed_abs, tag = 'smem constant byte address 0x4 - core index']
  #allocation1 [shape = 'u32[144,128]{1,0:T(1,128)}', space=vmem, size = 0x12000, scoped, tag = 'internal scratch']
  %s0 = inlined_call_operand.hbm [shape: f32[2,8,16], index: 0, kind: input, shape index: {}]
  %s1 = inlined_call_operand.hbm [shape: f32[16,96], index: 1, kind: input, shape index: {}]
  %s2 = inlined_call_operand.vmem [shape: f32[1,96], index: 2, kind: input, shape index: {}]
  %s3 = inlined_call_operand.hbm [shape: f32[32,32], index: 3, kind: input, shape index: {}]
  %s4 = inlined_call_operand.vmem [shape: f32[1,32], index: 4, kind: input, shape index: {}]
  %s5 = inlined_call_operand.hbm [shape: f32[1,32,96], index: 5, kind: input, shape index: {}]
  %s6 = inlined_call_operand.vmem [shape: f32[1,1,96], index: 6, kind: input, shape index: {}]
  %s7 = inlined_call_operand.hbm [shape: f32[1,32,32], index: 7, kind: input, shape index: {}]
  %s8 = inlined_call_operand.vmem [shape: f32[1,1,32], index: 8, kind: input, shape index: {}]
  %s9 = inlined_call_operand.hbm [shape: f32[2,8,32], index: 9, kind: output, shape index: {}]
  %s10 = sld [smem:[#allocation0]]
  $region66: #{tpu_custom_call.1} parent=0
    _
  %s12 = ssub.s32 1, %s10
  %s13 = scalar_select 0, %s12, %s10
  $region1: #{tpu_custom_call.1} parent=0
    #allocation2 [shape = 'u8[8192]{0}', space=vmem, size = 0x2000, scoped, tag = 'input window, operand 0, single buffered']
    #allocation3 [shape = 's32[1]{0}', space=sflag, size = 0x4, scoped, tag = 'scoped memory for tpu_custom_call.1']
    #allocation4 [shape = 's32[1]{0}', space=sflag, size = 0x4, scoped, tag = 'scoped memory for tpu_custom_call.1']
    #allocation5 [shape = 'u8[8192]{0}', space=vmem, size = 0x2000, scoped, tag = 'input window, operand 1, single buffered']
    #allocation6 [shape = 's32[1]{0}', space=sflag, size = 0x4, scoped, tag = 'scoped memory for tpu_custom_call.1']
    #allocation7 [shape = 'u8[16384]{0}', space=vmem, size = 0x4000, scoped, tag = 'input window, operand 3, single buffered']
    #allocation8 [shape = 'u8[16384]{0}', space=vmem, size = 0x4000, scoped, tag = 'input window, operand 5, single buffered']
    #allocation9 [shape = 's32[1]{0}', space=sflag, size = 0x4, scoped, tag = 'scoped memory for tpu_custom_call.1']
    #allocation10 [shape = 'u8[16384]{0}', space=vmem, size = 0x4000, scoped, tag = 'input window, operand 7, single buffered']
    #allocation11 [shape = 'u8[8192]{0}', space=vmem, size = 0x2000, scoped, tag = 'output window, operand 0, single buffered']
    %14 = vsyncpa [#allocation3], 0
    %15 = vsyncpa [#allocation6], 0
    %16 = vsyncpa [#allocation9], 0
    %17 = vsyncpa [#allocation4], 0
    // Predicated region
    $region2: #{tpu_custom_call.1} parent=1 // pred_check
      _
    $region3: #{tpu_custom_call.1} parent=1 // pred_check_branch
      %19 = sbr.rel (0) target = $region5
    $region4: #{tpu_custom_call.1} parent=1 // pred_region
      %s21 = ssub.s32 256, 256
      %22 = vsyncadd [#allocation3], %s21
      %s23 = sshll.u32 [#allocation2], 4
      %s24 = int_to_ptr.vmem [resolvable:$true] %s23
      %29 = dma.hbm_to_vmem [thread:$0]  %s0, 256, %s24, [#allocation3], 128, 128, 8
    $region5: #{tpu_custom_call.1} parent=1 // pred_fallthru
      _
    // Predicated region
    $region6: #{tpu_custom_call.1} parent=1 // pred_check
      _
    $region7: #{tpu_custom_call.1} parent=1 // pred_check_branch
      %31 = sbr.rel (0) target = $region9
    $region8: #{tpu_custom_call.1} parent=1 // pred_region
      %s33 = ssub.s32 256, 256
      %34 = vsyncadd [#allocation6], %s33
      %s35 = sshll.u32 [#allocation5], 4
      %s36 = int_to_ptr.vmem [resolvable:$true] %s35
      %41 = dma.hbm_to_vmem [thread:$0]  %s1, 256, %s36, [#allocation6], 128, 128, 8
    $region9: #{tpu_custom_call.1} parent=1 // pred_fallthru
      _
    // Predicated region
    $region10: #{tpu_custom_call.1} parent=1 // pred_check
      _
    $region11: #{tpu_custom_call.1} parent=1 // pred_check_branch
      %43 = sbr.rel (0) target = $region13
    $region12: #{tpu_custom_call.1} parent=1 // pred_region
      _
    $region13: #{tpu_custom_call.1} parent=1 // pred_fallthru
      _
    // Predicated region
    $region14: #{tpu_custom_call.1} parent=1 // pred_check
      _
    $region15: #{tpu_custom_call.1} parent=1 // pred_check_branch
      %45 = sbr.rel (0) target = $region17
    $region16: #{tpu_custom_call.1} parent=1 // pred_region
      %s47 = ssub.s32 512, 512
      %48 = vsyncadd [#allocation6], %s47
      %s49 = sshll.u32 [#allocation7], 4
      %s50 = int_to_ptr.vmem [resolvable:$true] %s49
      %55 = dma.hbm_to_vmem [thread:$0]  %s3, 512, %s50, [#allocation6], 128, 128, 8
    $region17: #{tpu_custom_call.1} parent=1 // pred_fallthru
      _
    // Predicated region
    $region18: #{tpu_custom_call.1} parent=1 // pred_check
      _
    $region19: #{tpu_custom_call.1} parent=1 // pred_check_branch
      %57 = sbr.rel (0) target = $region21
    $region20: #{tpu_custom_call.1} parent=1 // pred_region
      _
    $region21: #{tpu_custom_call.1} parent=1 // pred_fallthru
      _
    // Predicated region
    $region22: #{tpu_custom_call.1} parent=1 // pred_check
      _
    $region23: #{tpu_custom_call.1} parent=1 // pred_check_branch
      %59 = sbr.rel (0) target = $region25
    $region24: #{tpu_custom_call.1} parent=1 // pred_region
      %s61 = ssub.s32 512, 512
      %62 = vsyncadd [#allocation9], %s61
      %s63 = sshll.u32 [#allocation8], 4
      %s64 = int_to_ptr.vmem [resolvable:$true] %s63
      %69 = dma.hbm_to_vmem [thread:$0]  %s5, 512, %s64, [#allocation9], 128, 128, 8
    $region25: #{tpu_custom_call.1} parent=1 // pred_fallthru
      _
    // Predicated region
    $region26: #{tpu_custom_call.1} parent=1 // pred_check
      _
    $region27: #{tpu_custom_call.1} parent=1 // pred_check_branch
      %71 = sbr.rel (0) target = $region29
    $region28: #{tpu_custom_call.1} parent=1 // pred_region
      _
    $region29: #{tpu_custom_call.1} parent=1 // pred_fallthru
      _
    // Predicated region
    $region30: #{tpu_custom_call.1} parent=1 // pred_check
      _
    $region31: #{tpu_custom_call.1} parent=1 // pred_check_branch
      %73 = sbr.rel (0) target = $region33
    $region32: #{tpu_custom_call.1} parent=1 // pred_region
      %s75 = ssub.s32 512, 512
      %76 = vsyncadd [#allocation9], %s75
      %s77 = sshll.u32 [#allocation10], 4
      %s78 = int_to_ptr.vmem [resolvable:$true] %s77
      %83 = dma.hbm_to_vmem [thread:$0]  %s7, 512, %s78, [#allocation9], 128, 128, 8
    $region33: #{tpu_custom_call.1} parent=1 // pred_fallthru
      _
    // Predicated region
    $region34: #{tpu_custom_call.1} parent=1 // pred_check
      _
    $region35: #{tpu_custom_call.1} parent=1 // pred_check_branch
      %85 = sbr.rel (0) target = $region37
    $region36: #{tpu_custom_call.1} parent=1 // pred_region
      _
    $region37: #{tpu_custom_call.1} parent=1 // pred_fallthru
      _
    // Predicated region
    $region38: #{tpu_custom_call.1} parent=1 // pred_check
      _
    $region39: #{tpu_custom_call.1} parent=1 // pred_check_branch
      %87 = sbr.rel (0) target = $region41
    $region40: #{tpu_custom_call.1} parent=1 // pred_region
      %88 = dma.done [#allocation3], 256
    $region41: #{tpu_custom_call.1} parent=1 // pred_fallthru
      _
    // Predicated region
    $region42: #{tpu_custom_call.1} parent=1 // pred_check
      _
    $region43: #{tpu_custom_call.1} parent=1 // pred_check_branch
      %90 = sbr.rel (0) target = $region45
    $region44: #{tpu_custom_call.1} parent=1 // pred_region
      %91 = dma.done [#allocation6], 256
    $region45: #{tpu_custom_call.1} parent=1 // pred_fallthru
      _
    // Predicated region
    $region46: #{tpu_custom_call.1} parent=1 // pred_check
      _
    $region47: #{tpu_custom_call.1} parent=1 // pred_check_branch
      %93 = sbr.rel (0) target = $region49
    $region48: #{tpu_custom_call.1} parent=1 // pred_region
      %94 = dma.done [#allocation6], 512
    $region49: #{tpu_custom_call.1} parent=1 // pred_fallthru
      _
    // Predicated region
    $region50: #{tpu_custom_call.1} parent=1 // pred_check
      _
    $region51: #{tpu_custom_call.1} parent=1 // pred_check_branch
      %96 = sbr.rel (0) target = $region53
    $region52: #{tpu_custom_call.1} parent=1 // pred_region
      %97 = dma.done [#allocation9], 512
    $region53: #{tpu_custom_call.1} parent=1 // pred_fallthru
      _
    // Predicated region
    $region54: #{tpu_custom_call.1} parent=1 // pred_check
      _
    $region55: #{tpu_custom_call.1} parent=1 // pred_check_branch
      %99 = sbr.rel (0) target = $region57
    $region56: #{tpu_custom_call.1} parent=1 // pred_region
      %100 = dma.done [#allocation9], 512
    $region57: #{tpu_custom_call.1} parent=1 // pred_fallthru
      _
    %v101 = vld [vmem:[#allocation2] sm:$0xff]
    %v102 = vld [vmem:[#allocation2 + $0x8] sm:$0xff]
    %v103 = vld [vmem:[#allocation5] sm:$0xff]
    %v104 = vld [vmem:[#allocation5 + $0x8] sm:$0xff]
    %v105 = vld [vmem:[%s2] sm:$0x1]
    %v106 = vld [vmem:[#allocation7] sm:$0xff]
    %v107 = vld [vmem:[#allocation7 + $0x8] sm:$0xff]
    %v108 = vld [vmem:[#allocation7 + $0x10] sm:$0xff]
    %v109 = vld [vmem:[#allocation7 + $0x18] sm:$0xff]
    %v110 = vld [vmem:[%s4] sm:$0x1]
    %v112 = vlaneseq
    %v113 = vshrl.u32 %v112, 7
    %v114 = vsub.s32 0, %v113
    %v115 = vrot.slane %v105, %v114
    %vm117 = vcmask 130048
    %v119 = vsel %vm117, %v101, 0
    %v122 = vsel %vm117, %v102, 0
    %124 = vmatprep.subr.mxu0 0.0
    %125 = vmatpush1.msra.mxu0 %v103
    %126 = vmatprep.subr.mxu0 0.0
    %127 = vmatpush1.msra.mxu0 %v104
    %128 = vmatprep.subr.mxu0 0.0
    %129 = vmatpush1.msra.mxu0 0.0
    %130 = vmatprep.subr.mxu0 0.0
    %131 = vmatpush1.msra.mxu0 0.0
    %132 = vmatprep.subr.mxu0 0.0
    %133 = vmatpush1.msra.mxu0 0.0
    %134 = vmatprep.subr.mxu0 0.0
    %135 = vmatpush1.msra.mxu0 0.0
    %136 = vmatprep.subr.mxu0 0.0
    %137 = vmatpush1.msra.mxu0 0.0
    %138 = vmatprep.subr.mxu0 0.0
    %139 = vmatpush1.msra.mxu0 0.0
    %140 = vmatprep.subr.mxu0 0.0
    %141 = vmatpush1.msra.mxu0 0.0
    %142 = vmatprep.subr.mxu0 0.0
    %143 = vmatpush1.msra.mxu0 0.0
    %144 = vmatprep.subr.mxu0 0.0
    %145 = vmatpush1.msra.mxu0 0.0
    %146 = vmatprep.subr.mxu0 0.0
    %147 = vmatpush1.msra.mxu0 0.0
    %148 = vmatprep.subr.mxu0 0.0
    %149 = vmatpush1.msra.mxu0 0.0
    %150 = vmatprep.subr.mxu0 0.0
    %151 = vmatpush1.msra.mxu0 0.0
    %152 = vmatprep.subr.mxu0 0.0
    %153 = vmatpush1.msra.mxu0 0.0
    %154 = vmatprep.subr.mxu0 0.0
    %155 = vmatpush1.msra.mxu0 0.0
    %156 = vmatprep.subr.mxu0 0.0
    %157 = vmatpush1.msra.mxu0 0.0
    %158 = vmatprep.subr.mxu0 0.0
    %159 = vmatpush1.msra.mxu0 0.0
    %160 = vmatprep.subr.mxu0 0.0
    %161 = vmatpush1.msra.mxu0 0.0
    %162 = vmatprep.subr.mxu0 0.0
    %163 = vmatpush1.msra.mxu0 0.0
    %164 = vmatprep.subr.mxu0 0.0
    %165 = vmatpush1.msra.mxu0 0.0
    %166 = vmatprep.subr.mxu0 0.0
    %167 = vmatpush1.msra.mxu0 0.0
    %168 = vmatprep.subr.mxu0 0.0
    %169 = vmatpush1.msra.mxu0 0.0
    %170 = vmatprep.subr.mxu0 0.0
    %171 = vmatpush1.msra.mxu0 0.0
    %172 = vmatprep.subr.mxu0 0.0
    %173 = vmatpush1.msra.mxu0 0.0
    %174 = vmatprep.subr.mxu0 0.0
    %175 = vmatpush1.msra.mxu0 0.0
    %176 = vmatprep.subr.mxu0 0.0
    %177 = vmatpush1.msra.mxu0 0.0
    %178 = vmatprep.subr.mxu0 0.0
    %179 = vmatpush1.msra.mxu0 0.0
    %180 = vmatprep.subr.mxu0 0.0
    %181 = vmatpush1.msra.mxu0 0.0
    %182 = vmatprep.subr.mxu0 0.0
    %183 = vmatpush1.msra.mxu0 0.0
    %184 = vmatprep.subr.mxu0 0.0
    %185 = vmatpush1.msra.mxu0 0.0
    %186 = vmatprep.subr.mxu0 0.0
    %187 = vmatpush1.msra.mxu0 0.0
    %188 = vmatprep.mubr.f32.mxu0 0.0
    %189 = vmatmul.mubr.f32.gmra.mrb[0].mxu0 %v119
    %v190 = vpop.f32.mrb[0].mxu0
    %v191 = vadd.f32 %v115, %v190
    %v192 = vpop.f32.mrb[0].mxu0
    %193 = vmatprep.mubr.f32.mxu0 0.0
    %194 = vmatmul.mubr.f32.gmra.mrb[0].mxu0 %v122
    %v195 = vpop.f32.mrb[0].mxu0
    %v196 = vadd.f32 %v115, %v195
    %v197 = vpop.f32.mrb[0].mxu0
    %198 = vdwg.mxu0
    %201 = vrot.lane.b32.xlu0 %v191, 120
    %v202 = vpop.permute.xlu0 %201
    %203 = vrot.lane.b32.xlu0 %v196, 120
    %v204 = vpop.permute.xlu0 %203
    %205 = vrot.lane.b32.xlu0 %v191, 112
    %v206 = vpop.permute.xlu0 %205
    %207 = vrot.lane.b32.xlu0 %v196, 112
    %v208 = vpop.permute.xlu0 %207
    %209 = vrot.lane.b32.xlu0 %v191, 104
    %v210 = vpop.permute.xlu0 %209
    %211 = vrot.lane.b32.xlu0 %v196, 104
    %v212 = vpop.permute.xlu0 %211
    %213 = vrot.lane.b32.xlu0 %v191, 96
    %v214 = vpop.permute.xlu0 %213
    %vm215 = vcmask 64512
    %v216 = vsel %vm215, %v191, 0
    %v218 = vsel %vm215, %v214, 0
    %220 = vmatprep.subr.mxu0 0.0
    %221 = vmatpush1.xpose.msra.mxu0 %v218
    %222 = vmatprep.subr.mxu0 0.0
    %223 = vmatpush1.xpose.msra.mxu0 0.0
    %224 = vmatprep.subr.mxu0 0.0
    %225 = vmatpush1.xpose.msra.mxu0 0.0
    %226 = vmatprep.subr.mxu0 0.0
    %227 = vmatpush1.xpose.msra.mxu0 0.0
    %228 = vmatprep.subr.mxu0 0.0
    %229 = vmatpush1.xpose.msra.mxu0 0.0
    %230 = vmatprep.subr.mxu0 0.0
    %231 = vmatpush1.xpose.msra.mxu0 0.0
    %232 = vmatprep.subr.mxu0 0.0
    %233 = vmatpush1.xpose.msra.mxu0 0.0
    %234 = vmatprep.subr.mxu0 0.0
    %235 = vmatpush1.xpose.msra.mxu0 0.0
    %236 = vmatprep.subr.mxu0 0.0
    %237 = vmatpush1.xpose.msra.mxu0 0.0
    %238 = vmatprep.subr.mxu0 0.0
    %239 = vmatpush1.xpose.msra.mxu0 0.0
    %240 = vmatprep.subr.mxu0 0.0
    %241 = vmatpush1.xpose.msra.mxu0 0.0
    %242 = vmatprep.subr.mxu0 0.0
    %243 = vmatpush1.xpose.msra.mxu0 0.0
    %244 = vmatprep.subr.mxu0 0.0
    %245 = vmatpush1.xpose.msra.mxu0 0.0
    %246 = vmatprep.subr.mxu0 0.0
    %247 = vmatpush1.xpose.msra.mxu0 0.0
    %248 = vmatprep.subr.mxu0 0.0
    %249 = vmatpush1.xpose.msra.mxu0 0.0
    %250 = vmatprep.subr.mxu0 0.0
    %251 = vmatpush1.xpose.msra.mxu0 0.0
    %252 = vmatprep.subr.mxu0 0.0
    %253 = vmatpush1.xpose.msra.mxu0 0.0
    %254 = vmatprep.subr.mxu0 0.0
    %255 = vmatpush1.xpose.msra.mxu0 0.0
    %256 = vmatprep.subr.mxu0 0.0
    %257 = vmatpush1.xpose.msra.mxu0 0.0
    %258 = vmatprep.subr.mxu0 0.0
    %259 = vmatpush1.xpose.msra.mxu0 0.0
    %260 = vmatprep.subr.mxu0 0.0
    %261 = vmatpush1.xpose.msra.mxu0 0.0
    %262 = vmatprep.subr.mxu0 0.0
    %263 = vmatpush1.xpose.msra.mxu0 0.0
    %264 = vmatprep.subr.mxu0 0.0
    %265 = vmatpush1.xpose.msra.mxu0 0.0
    %266 = vmatprep.subr.mxu0 0.0
    %267 = vmatpush1.xpose.msra.mxu0 0.0
    %268 = vmatprep.subr.mxu0 0.0
    %269 = vmatpush1.xpose.msra.mxu0 0.0
    %270 = vmatprep.subr.mxu0 0.0
    %271 = vmatpush1.xpose.msra.mxu0 0.0
    %272 = vmatprep.subr.mxu0 0.0
    %273 = vmatpush1.xpose.msra.mxu0 0.0
    %274 = vmatprep.subr.mxu0 0.0
    %275 = vmatpush1.xpose.msra.mxu0 0.0
    %276 = vmatprep.subr.mxu0 0.0
    %277 = vmatpush1.xpose.msra.mxu0 0.0
    %278 = vmatprep.subr.mxu0 0.0
    %279 = vmatpush1.xpose.msra.mxu0 0.0
    %280 = vmatprep.subr.mxu0 0.0
    %281 = vmatpush1.xpose.msra.mxu0 0.0
    %282 = vmatprep.subr.mxu0 0.0
    %283 = vmatpush1.xpose.msra.mxu0 0.0
    %284 = vmatprep.mubr.f32.mxu0 0.0
    %285 = vmatmul.mubr.f32.gmra.mrb[0].mxu0 %v216
    %v286 = vpop.f32.mrb[0].mxu0
    %v287 = vadd.f32 0.0, %v286
    %v288 = vpop.f32.mrb[0].mxu0
    %289 = vdwg.mxu0
    %290 = vrot.lane.b32.xlu0 %v196, 96
    %v291 = vpop.permute.xlu0 %290
    %v292 = vsel %vm215, %v196, 0
    %v294 = vsel %vm215, %v291, 0
    %296 = vmatprep.subr.mxu0 0.0
    %297 = vmatpush1.xpose.msra.mxu0 %v294
    %298 = vmatprep.subr.mxu0 0.0
    %299 = vmatpush1.xpose.msra.mxu0 0.0
    %300 = vmatprep.subr.mxu0 0.0
    %301 = vmatpush1.xpose.msra.mxu0 0.0
    %302 = vmatprep.subr.mxu0 0.0
    %303 = vmatpush1.xpose.msra.mxu0 0.0
    %304 = vmatprep.subr.mxu0 0.0
    %305 = vmatpush1.xpose.msra.mxu0 0.0
    %306 = vmatprep.subr.mxu0 0.0
    %307 = vmatpush1.xpose.msra.mxu0 0.0
    %308 = vmatprep.subr.mxu0 0.0
    %309 = vmatpush1.xpose.msra.mxu0 0.0
    %310 = vmatprep.subr.mxu0 0.0
    %311 = vmatpush1.xpose.msra.mxu0 0.0
    %312 = vmatprep.subr.mxu0 0.0
    %313 = vmatpush1.xpose.msra.mxu0 0.0
    %314 = vmatprep.subr.mxu0 0.0
    %315 = vmatpush1.xpose.msra.mxu0 0.0
    %316 = vmatprep.subr.mxu0 0.0
    %317 = vmatpush1.xpose.msra.mxu0 0.0
    %318 = vmatprep.subr.mxu0 0.0
    %319 = vmatpush1.xpose.msra.mxu0 0.0
    %320 = vmatprep.subr.mxu0 0.0
    %321 = vmatpush1.xpose.msra.mxu0 0.0
    %322 = vmatprep.subr.mxu0 0.0
    %323 = vmatpush1.xpose.msra.mxu0 0.0
    %324 = vmatprep.subr.mxu0 0.0
    %325 = vmatpush1.xpose.msra.mxu0 0.0
    %326 = vmatprep.subr.mxu0 0.0
    %327 = vmatpush1.xpose.msra.mxu0 0.0
    %328 = vmatprep.subr.mxu0 0.0
    %329 = vmatpush1.xpose.msra.mxu0 0.0
    %330 = vmatprep.subr.mxu0 0.0
    %331 = vmatpush1.xpose.msra.mxu0 0.0
    %332 = vmatprep.subr.mxu0 0.0
    %333 = vmatpush1.xpose.msra.mxu0 0.0
    %334 = vmatprep.subr.mxu0 0.0
    %335 = vmatpush1.xpose.msra.mxu0 0.0
    %336 = vmatprep.subr.mxu0 0.0
    %337 = vmatpush1.xpose.msra.mxu0 0.0
    %338 = vmatprep.subr.mxu0 0.0
    %339 = vmatpush1.xpose.msra.mxu0 0.0
    %340 = vmatprep.subr.mxu0 0.0
    %341 = vmatpush1.xpose.msra.mxu0 0.0
    %342 = vmatprep.subr.mxu0 0.0
    %343 = vmatpush1.xpose.msra.mxu0 0.0
    %344 = vmatprep.subr.mxu0 0.0
    %345 = vmatpush1.xpose.msra.mxu0 0.0
    %346 = vmatprep.subr.mxu0 0.0
    %347 = vmatpush1.xpose.msra.mxu0 0.0
    %348 = vmatprep.subr.mxu0 0.0
    %349 = vmatpush1.xpose.msra.mxu0 0.0
    %350 = vmatprep.subr.mxu0 0.0
    %351 = vmatpush1.xpose.msra.mxu0 0.0
    %352 = vmatprep.subr.mxu0 0.0
    %353 = vmatpush1.xpose.msra.mxu0 0.0
    %354 = vmatprep.subr.mxu0 0.0
    %355 = vmatpush1.xpose.msra.mxu0 0.0
    %356 = vmatprep.subr.mxu0 0.0
    %357 = vmatpush1.xpose.msra.mxu0 0.0
    %358 = vmatprep.subr.mxu0 0.0
    %359 = vmatpush1.xpose.msra.mxu0 0.0
    %360 = vmatprep.mubr.f32.mxu0 0.0
    %361 = vmatmul.mubr.f32.gmra.mrb[0].mxu0 %v292
    %v362 = vpop.f32.mrb[0].mxu0
    %v363 = vadd.f32 0.0, %v362
    %v364 = vpop.f32.mrb[0].mxu0
    %365 = vdwg.mxu0
    %366 = vrot.lane.b32.xlu0 %v202, 96
    %v367 = vpop.permute.xlu0 %366
    %v368 = vsel %vm215, %v202, 0
    %v370 = vsel %vm215, %v367, 0
    %372 = vmatprep.subr.mxu0 0.0
    %373 = vmatpush1.xpose.msra.mxu0 %v370
    %374 = vmatprep.subr.mxu0 0.0
    %375 = vmatpush1.xpose.msra.mxu0 0.0
    %376 = vmatprep.subr.mxu0 0.0
    %377 = vmatpush1.xpose.msra.mxu0 0.0
    %378 = vmatprep.subr.mxu0 0.0
    %379 = vmatpush1.xpose.msra.mxu0 0.0
    %380 = vmatprep.subr.mxu0 0.0
    %381 = vmatpush1.xpose.msra.mxu0 0.0
    %382 = vmatprep.subr.mxu0 0.0
    %383 = vmatpush1.xpose.msra.mxu0 0.0
    %384 = vmatprep.subr.mxu0 0.0
    %385 = vmatpush1.xpose.msra.mxu0 0.0
    %386 = vmatprep.subr.mxu0 0.0
    %387 = vmatpush1.xpose.msra.mxu0 0.0
    %388 = vmatprep.subr.mxu0 0.0
    %389 = vmatpush1.xpose.msra.mxu0 0.0
    %390 = vmatprep.subr.mxu0 0.0
    %391 = vmatpush1.xpose.msra.mxu0 0.0
    %392 = vmatprep.subr.mxu0 0.0
    %393 = vmatpush1.xpose.msra.mxu0 0.0
    %394 = vmatprep.subr.mxu0 0.0
    %395 = vmatpush1.xpose.msra.mxu0 0.0
    %396 = vmatprep.subr.mxu0 0.0
    %397 = vmatpush1.xpose.msra.mxu0 0.0
    %398 = vmatprep.subr.mxu0 0.0
    %399 = vmatpush1.xpose.msra.mxu0 0.0
    %400 = vmatprep.subr.mxu0 0.0
    %401 = vmatpush1.xpose.msra.mxu0 0.0
    %402 = vmatprep.subr.mxu0 0.0
    %403 = vmatpush1.xpose.msra.mxu0 0.0
    %404 = vmatprep.subr.mxu0 0.0
    %405 = vmatpush1.xpose.msra.mxu0 0.0
    %406 = vmatprep.subr.mxu0 0.0
    %407 = vmatpush1.xpose.msra.mxu0 0.0
    %408 = vmatprep.subr.mxu0 0.0
    %409 = vmatpush1.xpose.msra.mxu0 0.0
    %410 = vmatprep.subr.mxu0 0.0
    %411 = vmatpush1.xpose.msra.mxu0 0.0
    %412 = vmatprep.subr.mxu0 0.0
    %413 = vmatpush1.xpose.msra.mxu0 0.0
    %414 = vmatprep.subr.mxu0 0.0
    %415 = vmatpush1.xpose.msra.mxu0 0.0
    %416 = vmatprep.subr.mxu0 0.0
    %417 = vmatpush1.xpose.msra.mxu0 0.0
    %418 = vmatprep.subr.mxu0 0.0
    %419 = vmatpush1.xpose.msra.mxu0 0.0
    %420 = vmatprep.subr.mxu0 0.0
    %421 = vmatpush1.xpose.msra.mxu0 0.0
    %422 = vmatprep.subr.mxu0 0.0
    %423 = vmatpush1.xpose.msra.mxu0 0.0
    %424 = vmatprep.subr.mxu0 0.0
    %425 = vmatpush1.xpose.msra.mxu0 0.0
    %426 = vmatprep.subr.mxu0 0.0
    %427 = vmatpush1.xpose.msra.mxu0 0.0
    %428 = vmatprep.subr.mxu0 0.0
    %429 = vmatpush1.xpose.msra.mxu0 0.0
    %430 = vmatprep.subr.mxu0 0.0
    %431 = vmatpush1.xpose.msra.mxu0 0.0
    %432 = vmatprep.subr.mxu0 0.0
    %433 = vmatpush1.xpose.msra.mxu0 0.0
    %434 = vmatprep.subr.mxu0 0.0
    %435 = vmatpush1.xpose.msra.mxu0 0.0
    %436 = vmatprep.mubr.f32.mxu0 0.0
    %437 = vmatmul.mubr.f32.gmra.mrb[0].mxu0 %v368
    %v438 = vpop.f32.mrb[0].mxu0
    %v439 = vadd.f32 0.0, %v438
    %v440 = vpop.f32.mrb[0].mxu0
    %441 = vdwg.mxu0
    %442 = vrot.lane.b32.xlu0 %v204, 96
    %v443 = vpop.permute.xlu0 %442
    %v444 = vsel %vm215, %v204, 0
    %v446 = vsel %vm215, %v443, 0
    %448 = vmatprep.subr.mxu0 0.0
    %449 = vmatpush1.xpose.msra.mxu0 %v446
    %450 = vmatprep.subr.mxu0 0.0
    %451 = vmatpush1.xpose.msra.mxu0 0.0
    %452 = vmatprep.subr.mxu0 0.0
    %453 = vmatpush1.xpose.msra.mxu0 0.0
    %454 = vmatprep.subr.mxu0 0.0
    %455 = vmatpush1.xpose.msra.mxu0 0.0
    %456 = vmatprep.subr.mxu0 0.0
    %457 = vmatpush1.xpose.msra.mxu0 0.0
    %458 = vmatprep.subr.mxu0 0.0
    %459 = vmatpush1.xpose.msra.mxu0 0.0
    %460 = vmatprep.subr.mxu0 0.0
    %461 = vmatpush1.xpose.msra.mxu0 0.0
    %462 = vmatprep.subr.mxu0 0.0
    %463 = vmatpush1.xpose.msra.mxu0 0.0
    %464 = vmatprep.subr.mxu0 0.0
    %465 = vmatpush1.xpose.msra.mxu0 0.0
    %466 = vmatprep.subr.mxu0 0.0
    %467 = vmatpush1.xpose.msra.mxu0 0.0
    %468 = vmatprep.subr.mxu0 0.0
    %469 = vmatpush1.xpose.msra.mxu0 0.0
    %470 = vmatprep.subr.mxu0 0.0
    %471 = vmatpush1.xpose.msra.mxu0 0.0
    %472 = vmatprep.subr.mxu0 0.0
    %473 = vmatpush1.xpose.msra.mxu0 0.0
    %474 = vmatprep.subr.mxu0 0.0
    %475 = vmatpush1.xpose.msra.mxu0 0.0
    %476 = vmatprep.subr.mxu0 0.0
    %477 = vmatpush1.xpose.msra.mxu0 0.0
    %478 = vmatprep.subr.mxu0 0.0
    %479 = vmatpush1.xpose.msra.mxu0 0.0
    %480 = vmatprep.subr.mxu0 0.0
    %481 = vmatpush1.xpose.msra.mxu0 0.0
    %482 = vmatprep.subr.mxu0 0.0
    %483 = vmatpush1.xpose.msra.mxu0 0.0
    %484 = vmatprep.subr.mxu0 0.0
    %485 = vmatpush1.xpose.msra.mxu0 0.0
    %486 = vmatprep.subr.mxu0 0.0
    %487 = vmatpush1.xpose.msra.mxu0 0.0
    %488 = vmatprep.subr.mxu0 0.0
    %489 = vmatpush1.xpose.msra.mxu0 0.0
    %490 = vmatprep.subr.mxu0 0.0
    %491 = vmatpush1.xpose.msra.mxu0 0.0
    %492 = vmatprep.subr.mxu0 0.0
    %493 = vmatpush1.xpose.msra.mxu0 0.0
    %494 = vmatprep.subr.mxu0 0.0
    %495 = vmatpush1.xpose.msra.mxu0 0.0
    %496 = vmatprep.subr.mxu0 0.0
    %497 = vmatpush1.xpose.msra.mxu0 0.0
    %498 = vmatprep.subr.mxu0 0.0
    %499 = vmatpush1.xpose.msra.mxu0 0.0
    %500 = vmatprep.subr.mxu0 0.0
    %501 = vmatpush1.xpose.msra.mxu0 0.0
    %502 = vmatprep.subr.mxu0 0.0
    %503 = vmatpush1.xpose.msra.mxu0 0.0
    %504 = vmatprep.subr.mxu0 0.0
    %505 = vmatpush1.xpose.msra.mxu0 0.0
    %506 = vmatprep.subr.mxu0 0.0
    %507 = vmatpush1.xpose.msra.mxu0 0.0
    %508 = vmatprep.subr.mxu0 0.0
    %509 = vmatpush1.xpose.msra.mxu0 0.0
    %510 = vmatprep.subr.mxu0 0.0
    %511 = vmatpush1.xpose.msra.mxu0 0.0
    %512 = vmatprep.mubr.f32.mxu0 0.0
    %513 = vmatmul.mubr.f32.gmra.mrb[0].mxu0 %v444
    %v514 = vpop.f32.mrb[0].mxu0
    %v515 = vadd.f32 0.0, %v514
    %v516 = vpop.f32.mrb[0].mxu0
    %517 = vdwg.mxu0
    %518 = vrot.lane.b32.xlu0 %v206, 96
    %v519 = vpop.permute.xlu0 %518
    %v520 = vsel %vm215, %v206, 0
    %v522 = vsel %vm215, %v519, 0
    %524 = vmatprep.subr.mxu0 0.0
    %525 = vmatpush1.xpose.msra.mxu0 %v522
    %526 = vmatprep.subr.mxu0 0.0
    %527 = vmatpush1.xpose.msra.mxu0 0.0
    %528 = vmatprep.subr.mxu0 0.0
    %529 = vmatpush1.xpose.msra.mxu0 0.0
    %530 = vmatprep.subr.mxu0 0.0
    %531 = vmatpush1.xpose.msra.mxu0 0.0
    %532 = vmatprep.subr.mxu0 0.0
    %533 = vmatpush1.xpose.msra.mxu0 0.0
    %534 = vmatprep.subr.mxu0 0.0
    %535 = vmatpush1.xpose.msra.mxu0 0.0
    %536 = vmatprep.subr.mxu0 0.0
    %537 = vmatpush1.xpose.msra.mxu0 0.0
    %538 = vmatprep.subr.mxu0 0.0
    %539 = vmatpush1.xpose.msra.mxu0 0.0
    %540 = vmatprep.subr.mxu0 0.0
    %541 = vmatpush1.xpose.msra.mxu0 0.0
    %542 = vmatprep.subr.mxu0 0.0
    %543 = vmatpush1.xpose.msra.mxu0 0.0
    %544 = vmatprep.subr.mxu0 0.0
    %545 = vmatpush1.xpose.msra.mxu0 0.0
    %546 = vmatprep.subr.mxu0 0.0
    %547 = vmatpush1.xpose.msra.mxu0 0.0
    %548 = vmatprep.subr.mxu0 0.0
    %549 = vmatpush1.xpose.msra.mxu0 0.0
    %550 = vmatprep.subr.mxu0 0.0
    %551 = vmatpush1.xpose.msra.mxu0 0.0
    %552 = vmatprep.subr.mxu0 0.0
    %553 = vmatpush1.xpose.msra.mxu0 0.0
    %554 = vmatprep.subr.mxu0 0.0
    %555 = vmatpush1.xpose.msra.mxu0 0.0
    %556 = vmatprep.subr.mxu0 0.0
    %557 = vmatpush1.xpose.msra.mxu0 0.0
    %558 = vmatprep.subr.mxu0 0.0
    %559 = vmatpush1.xpose.msra.mxu0 0.0
    %560 = vmatprep.subr.mxu0 0.0
    %561 = vmatpush1.xpose.msra.mxu0 0.0
    %562 = vmatprep.subr.mxu0 0.0
    %563 = vmatpush1.xpose.msra.mxu0 0.0
    %564 = vmatprep.subr.mxu0 0.0
    %565 = vmatpush1.xpose.msra.mxu0 0.0
    %566 = vmatprep.subr.mxu0 0.0
    %567 = vmatpush1.xpose.msra.mxu0 0.0
    %568 = vmatprep.subr.mxu0 0.0
    %569 = vmatpush1.xpose.msra.mxu0 0.0
    %570 = vmatprep.subr.mxu0 0.0
    %571 = vmatpush1.xpose.msra.mxu0 0.0
    %572 = vmatprep.subr.mxu0 0.0
    %573 = vmatpush1.xpose.msra.mxu0 0.0
    %574 = vmatprep.subr.mxu0 0.0
    %575 = vmatpush1.xpose.msra.mxu0 0.0
    %576 = vmatprep.subr.mxu0 0.0
    %577 = vmatpush1.xpose.msra.mxu0 0.0
    %578 = vmatprep.subr.mxu0 0.0
    %579 = vmatpush1.xpose.msra.mxu0 0.0
    %580 = vmatprep.subr.mxu0 0.0
    %581 = vmatpush1.xpose.msra.mxu0 0.0
    %582 = vmatprep.subr.mxu0 0.0
    %583 = vmatpush1.xpose.msra.mxu0 0.0
    %584 = vmatprep.subr.mxu0 0.0
    %585 = vmatpush1.xpose.msra.mxu0 0.0
    %586 = vmatprep.subr.mxu0 0.0
    %587 = vmatpush1.xpose.msra.mxu0 0.0
    %588 = vmatprep.mubr.f32.mxu0 0.0
    %589 = vmatmul.mubr.f32.gmra.mrb[0].mxu0 %v520
    %v590 = vpop.f32.mrb[0].mxu0
    %v591 = vadd.f32 0.0, %v590
    %v592 = vpop.f32.mrb[0].mxu0
    %593 = vdwg.mxu0
    %594 = vrot.lane.b32.xlu0 %v208, 96
    %v595 = vpop.permute.xlu0 %594
    %v596 = vsel %vm215, %v208, 0
    %v598 = vsel %vm215, %v595, 0
    %600 = vmatprep.subr.mxu0 0.0
    %601 = vmatpush1.xpose.msra.mxu0 %v598
    %602 = vmatprep.subr.mxu0 0.0
    %603 = vmatpush1.xpose.msra.mxu0 0.0
    %604 = vmatprep.subr.mxu0 0.0
    %605 = vmatpush1.xpose.msra.mxu0 0.0
    %606 = vmatprep.subr.mxu0 0.0
    %607 = vmatpush1.xpose.msra.mxu0 0.0
    %608 = vmatprep.subr.mxu0 0.0
    %609 = vmatpush1.xpose.msra.mxu0 0.0
    %610 = vmatprep.subr.mxu0 0.0
    %611 = vmatpush1.xpose.msra.mxu0 0.0
    %612 = vmatprep.subr.mxu0 0.0
    %613 = vmatpush1.xpose.msra.mxu0 0.0
    %614 = vmatprep.subr.mxu0 0.0
    %615 = vmatpush1.xpose.msra.mxu0 0.0
    %616 = vmatprep.subr.mxu0 0.0
    %617 = vmatpush1.xpose.msra.mxu0 0.0
    %618 = vmatprep.subr.mxu0 0.0
    %619 = vmatpush1.xpose.msra.mxu0 0.0
    %620 = vmatprep.subr.mxu0 0.0
    %621 = vmatpush1.xpose.msra.mxu0 0.0
    %622 = vmatprep.subr.mxu0 0.0
    %623 = vmatpush1.xpose.msra.mxu0 0.0
    %624 = vmatprep.subr.mxu0 0.0
    %625 = vmatpush1.xpose.msra.mxu0 0.0
    %626 = vmatprep.subr.mxu0 0.0
    %627 = vmatpush1.xpose.msra.mxu0 0.0
    %628 = vmatprep.subr.mxu0 0.0
    %629 = vmatpush1.xpose.msra.mxu0 0.0
    %630 = vmatprep.subr.mxu0 0.0
    %631 = vmatpush1.xpose.msra.mxu0 0.0
    %632 = vmatprep.subr.mxu0 0.0
    %633 = vmatpush1.xpose.msra.mxu0 0.0
    %634 = vmatprep.subr.mxu0 0.0
    %635 = vmatpush1.xpose.msra.mxu0 0.0
    %636 = vmatprep.subr.mxu0 0.0
    %637 = vmatpush1.xpose.msra.mxu0 0.0
    %638 = vmatprep.subr.mxu0 0.0
    %639 = vmatpush1.xpose.msra.mxu0 0.0
    %640 = vmatprep.subr.mxu0 0.0
    %641 = vmatpush1.xpose.msra.mxu0 0.0
    %642 = vmatprep.subr.mxu0 0.0
    %643 = vmatpush1.xpose.msra.mxu0 0.0
    %644 = vmatprep.subr.mxu0 0.0
    %645 = vmatpush1.xpose.msra.mxu0 0.0
    %646 = vmatprep.subr.mxu0 0.0
    %647 = vmatpush1.xpose.msra.mxu0 0.0
    %648 = vmatprep.subr.mxu0 0.0
    %649 = vmatpush1.xpose.msra.mxu0 0.0
    %650 = vmatprep.subr.mxu0 0.0
    %651 = vmatpush1.xpose.msra.mxu0 0.0
    %652 = vmatprep.subr.mxu0 0.0
    %653 = vmatpush1.xpose.msra.mxu0 0.0
    %654 = vmatprep.subr.mxu0 0.0
    %655 = vmatpush1.xpose.msra.mxu0 0.0
    %656 = vmatprep.subr.mxu0 0.0
    %657 = vmatpush1.xpose.msra.mxu0 0.0
    %658 = vmatprep.subr.mxu0 0.0
    %659 = vmatpush1.xpose.msra.mxu0 0.0
    %660 = vmatprep.subr.mxu0 0.0
    %661 = vmatpush1.xpose.msra.mxu0 0.0
    %662 = vmatprep.subr.mxu0 0.0
    %663 = vmatpush1.xpose.msra.mxu0 0.0
    %664 = vmatprep.mubr.f32.mxu0 0.0
    %665 = vmatmul.mubr.f32.gmra.mrb[0].mxu0 %v596
    %v666 = vpop.f32.mrb[0].mxu0
    %v667 = vadd.f32 0.0, %v666
    %v668 = vpop.f32.mrb[0].mxu0
    %669 = vdwg.mxu0
    %670 = vrot.lane.b32.xlu0 %v210, 96
    %v671 = vpop.permute.xlu0 %670
    %v672 = vsel %vm215, %v210, 0
    %v674 = vsel %vm215, %v671, 0
    %676 = vmatprep.subr.mxu0 0.0
    %677 = vmatpush1.xpose.msra.mxu0 %v674
    %678 = vmatprep.subr.mxu0 0.0
    %679 = vmatpush1.xpose.msra.mxu0 0.0
    %680 = vmatprep.subr.mxu0 0.0
    %681 = vmatpush1.xpose.msra.mxu0 0.0
    %682 = vmatprep.subr.mxu0 0.0
    %683 = vmatpush1.xpose.msra.mxu0 0.0
    %684 = vmatprep.subr.mxu0 0.0
    %685 = vmatpush1.xpose.msra.mxu0 0.0
    %686 = vmatprep.subr.mxu0 0.0
    %687 = vmatpush1.xpose.msra.mxu0 0.0
    %688 = vmatprep.subr.mxu0 0.0
    %689 = vmatpush1.xpose.msra.mxu0 0.0
    %690 = vmatprep.subr.mxu0 0.0
    %691 = vmatpush1.xpose.msra.mxu0 0.0
    %692 = vmatprep.subr.mxu0 0.0
    %693 = vmatpush1.xpose.msra.mxu0 0.0
    %694 = vmatprep.subr.mxu0 0.0
    %695 = vmatpush1.xpose.msra.mxu0 0.0
    %696 = vmatprep.subr.mxu0 0.0
    %697 = vmatpush1.xpose.msra.mxu0 0.0
    %698 = vmatprep.subr.mxu0 0.0
    %699 = vmatpush1.xpose.msra.mxu0 0.0
    %700 = vmatprep.subr.mxu0 0.0
    %701 = vmatpush1.xpose.msra.mxu0 0.0
    %702 = vmatprep.subr.mxu0 0.0
    %703 = vmatpush1.xpose.msra.mxu0 0.0
    %704 = vmatprep.subr.mxu0 0.0
    %705 = vmatpush1.xpose.msra.mxu0 0.0
    %706 = vmatprep.subr.mxu0 0.0
    %707 = vmatpush1.xpose.msra.mxu0 0.0
    %708 = vmatprep.subr.mxu0 0.0
    %709 = vmatpush1.xpose.msra.mxu0 0.0
    %710 = vmatprep.subr.mxu0 0.0
    %711 = vmatpush1.xpose.msra.mxu0 0.0
    %712 = vmatprep.subr.mxu0 0.0
    %713 = vmatpush1.xpose.msra.mxu0 0.0
    %714 = vmatprep.subr.mxu0 0.0
    %715 = vmatpush1.xpose.msra.mxu0 0.0
    %716 = vmatprep.subr.mxu0 0.0
    %717 = vmatpush1.xpose.msra.mxu0 0.0
    %718 = vmatprep.subr.mxu0 0.0
    %719 = vmatpush1.xpose.msra.mxu0 0.0
    %720 = vmatprep.subr.mxu0 0.0
    %721 = vmatpush1.xpose.msra.mxu0 0.0
    %722 = vmatprep.subr.mxu0 0.0
    %723 = vmatpush1.xpose.msra.mxu0 0.0
    %724 = vmatprep.subr.mxu0 0.0
    %725 = vmatpush1.xpose.msra.mxu0 0.0
    %726 = vmatprep.subr.mxu0 0.0
    %727 = vmatpush1.xpose.msra.mxu0 0.0
    %728 = vmatprep.subr.mxu0 0.0
    %729 = vmatpush1.xpose.msra.mxu0 0.0
    %730 = vmatprep.subr.mxu0 0.0
    %731 = vmatpush1.xpose.msra.mxu0 0.0
    %732 = vmatprep.subr.mxu0 0.0
    %733 = vmatpush1.xpose.msra.mxu0 0.0
    %734 = vmatprep.subr.mxu0 0.0
    %735 = vmatpush1.xpose.msra.mxu0 0.0
    %736 = vmatprep.subr.mxu0 0.0
    %737 = vmatpush1.xpose.msra.mxu0 0.0
    %738 = vmatprep.subr.mxu0 0.0
    %739 = vmatpush1.xpose.msra.mxu0 0.0
    %740 = vmatprep.mubr.f32.mxu0 0.0
    %741 = vmatmul.mubr.f32.gmra.mrb[0].mxu0 %v672
    %v742 = vpop.f32.mrb[0].mxu0
    %v743 = vadd.f32 0.0, %v742
    %v744 = vpop.f32.mrb[0].mxu0
    %745 = vdwg.mxu0
    %746 = vrot.lane.b32.xlu0 %v212, 96
    %v747 = vpop.permute.xlu0 %746
    %v748 = vsel %vm215, %v212, 0
    %v750 = vsel %vm215, %v747, 0
    %752 = vmatprep.subr.mxu0 0.0
    %753 = vmatpush1.xpose.msra.mxu0 %v750
    %754 = vmatprep.subr.mxu0 0.0
    %755 = vmatpush1.xpose.msra.mxu0 0.0
    %756 = vmatprep.subr.mxu0 0.0
    %757 = vmatpush1.xpose.msra.mxu0 0.0
    %758 = vmatprep.subr.mxu0 0.0
    %759 = vmatpush1.xpose.msra.mxu0 0.0
    %760 = vmatprep.subr.mxu0 0.0
    %761 = vmatpush1.xpose.msra.mxu0 0.0
    %762 = vmatprep.subr.mxu0 0.0
    %763 = vmatpush1.xpose.msra.mxu0 0.0
    %764 = vmatprep.subr.mxu0 0.0
    %765 = vmatpush1.xpose.msra.mxu0 0.0
    %766 = vmatprep.subr.mxu0 0.0
    %767 = vmatpush1.xpose.msra.mxu0 0.0
    %768 = vmatprep.subr.mxu0 0.0
    %769 = vmatpush1.xpose.msra.mxu0 0.0
    %770 = vmatprep.subr.mxu0 0.0
    %771 = vmatpush1.xpose.msra.mxu0 0.0
    %772 = vmatprep.subr.mxu0 0.0
    %773 = vmatpush1.xpose.msra.mxu0 0.0
    %774 = vmatprep.subr.mxu0 0.0
    %775 = vmatpush1.xpose.msra.mxu0 0.0
    %776 = vmatprep.subr.mxu0 0.0
    %777 = vmatpush1.xpose.msra.mxu0 0.0
    %778 = vmatprep.subr.mxu0 0.0
    %779 = vmatpush1.xpose.msra.mxu0 0.0
    %780 = vmatprep.subr.mxu0 0.0
    %781 = vmatpush1.xpose.msra.mxu0 0.0
    %782 = vmatprep.subr.mxu0 0.0
    %783 = vmatpush1.xpose.msra.mxu0 0.0
    %784 = vmatprep.subr.mxu0 0.0
    %785 = vmatpush1.xpose.msra.mxu0 0.0
    %786 = vmatprep.subr.mxu0 0.0
    %787 = vmatpush1.xpose.msra.mxu0 0.0
    %788 = vmatprep.subr.mxu0 0.0
    %789 = vmatpush1.xpose.msra.mxu0 0.0
    %790 = vmatprep.subr.mxu0 0.0
    %791 = vmatpush1.xpose.msra.mxu0 0.0
    %792 = vmatprep.subr.mxu0 0.0
    %793 = vmatpush1.xpose.msra.mxu0 0.0
    %794 = vmatprep.subr.mxu0 0.0
    %795 = vmatpush1.xpose.msra.mxu0 0.0
    %796 = vmatprep.subr.mxu0 0.0
    %797 = vmatpush1.xpose.msra.mxu0 0.0
    %798 = vmatprep.subr.mxu0 0.0
    %799 = vmatpush1.xpose.msra.mxu0 0.0
    %800 = vmatprep.subr.mxu0 0.0
    %801 = vmatpush1.xpose.msra.mxu0 0.0
    %802 = vmatprep.subr.mxu0 0.0
    %803 = vmatpush1.xpose.msra.mxu0 0.0
    %804 = vmatprep.subr.mxu0 0.0
    %805 = vmatpush1.xpose.msra.mxu0 0.0
    %806 = vmatprep.subr.mxu0 0.0
    %807 = vmatpush1.xpose.msra.mxu0 0.0
    %808 = vmatprep.subr.mxu0 0.0
    %809 = vmatpush1.xpose.msra.mxu0 0.0
    %810 = vmatprep.subr.mxu0 0.0
    %811 = vmatpush1.xpose.msra.mxu0 0.0
    %812 = vmatprep.subr.mxu0 0.0
    %813 = vmatpush1.xpose.msra.mxu0 0.0
    %814 = vmatprep.subr.mxu0 0.0
    %815 = vmatpush1.xpose.msra.mxu0 0.0
    %816 = vmatprep.mubr.f32.mxu0 0.0
    %817 = vmatmul.mubr.f32.gmra.mrb[0].mxu0 %v748
    %v818 = vpop.f32.mrb[0].mxu0
    %v819 = vadd.f32 0.0, %v818
    %v820 = vpop.f32.mrb[0].mxu0
    %821 = vdwg.mxu0
    %v822 = vmul.f32 %v287, 0.17677669
    %v823 = vmul.f32 %v363, 0.17677669
    %v824 = vmul.f32 %v439, 0.17677669
    %v825 = vmul.f32 %v515, 0.17677669
    %v826 = vmul.f32 %v591, 0.17677669
    %v827 = vmul.f32 %v667, 0.17677669
    %v828 = vmul.f32 %v743, 0.17677669
    %v829 = vmul.f32 %v819, 0.17677669
    %v830 = vsel %vm215, %v822, -inf
    %831 = vmax.xlane.f32.xlu0 %v830
    %v832 = vpop.xlane.xlu0 %831
    %v833 = vsel %vm215, %v823, -inf
    %834 = vmax.xlane.f32.xlu0 %v833
    %v835 = vpop.xlane.xlu0 %834
    %v836 = vsel %vm215, %v824, -inf
    %837 = vmax.xlane.f32.xlu0 %v836
    %v838 = vpop.xlane.xlu0 %837
    %v839 = vsel %vm215, %v825, -inf
    %840 = vmax.xlane.f32.xlu0 %v839
    %v841 = vpop.xlane.xlu0 %840
    %v842 = vsel %vm215, %v826, -inf
    %843 = vmax.xlane.f32.xlu0 %v842
    %v844 = vpop.xlane.xlu0 %843
    %v845 = vsel %vm215, %v827, -inf
    %846 = vmax.xlane.f32.xlu0 %v845
    %v847 = vpop.xlane.xlu0 %846
    %v848 = vsel %vm215, %v828, -inf
    %849 = vmax.xlane.f32.xlu0 %v848
    %v850 = vpop.xlane.xlu0 %849
    %v851 = vsel %vm215, %v829, -inf
    %852 = vmax.xlane.f32.xlu0 %v851
    %v853 = vpop.xlane.xlu0 %852
    %v854 = vsub.f32 %v822, %v832
    %v855 = vsub.f32 %v823, %v835
    %v856 = vsub.f32 %v824, %v838
    %v857 = vsub.f32 %v825, %v841
    %v858 = vsub.f32 %v826, %v844
    %v859 = vsub.f32 %v827, %v847
    %v860 = vsub.f32 %v828, %v850
    %v861 = vsub.f32 %v829, %v853
    %v862 = vmul.f32 %v854, 1.442695
    %v863 = vpow.pop %v862
    %v864 = vmul.f32 %v855, 1.442695
    %v865 = vpow.pop %v864
    %v866 = vmul.f32 %v856, 1.442695
    %v867 = vpow.pop %v866
    %v868 = vmul.f32 %v857, 1.442695
    %v869 = vpow.pop %v868
    %v870 = vmul.f32 %v858, 1.442695
    %v871 = vpow.pop %v870
    %v872 = vmul.f32 %v859, 1.442695
    %v873 = vpow.pop %v872
    %v874 = vmul.f32 %v860, 1.442695
    %v875 = vpow.pop %v874
    %v876 = vmul.f32 %v861, 1.442695
    %v877 = vpow.pop %v876
    %v878 = vsel %vm215, %v863, 0.0
    %879 = vadd.xlane.f32.xlu0 %v878
    %v880 = vpop.xlane.xlu0 %879
    %v881 = vsel %vm215, %v865, 0.0
    %882 = vadd.xlane.f32.xlu0 %v881
    %v883 = vpop.xlane.xlu0 %882
    %v884 = vsel %vm215, %v867, 0.0
    %885 = vadd.xlane.f32.xlu0 %v884
    %v886 = vpop.xlane.xlu0 %885
    %v887 = vsel %vm215, %v869, 0.0
    %888 = vadd.xlane.f32.xlu0 %v887
    %v889 = vpop.xlane.xlu0 %888
    %v890 = vsel %vm215, %v871, 0.0
    %891 = vadd.xlane.f32.xlu0 %v890
    %v892 = vpop.xlane.xlu0 %891
    %v893 = vsel %vm215, %v873, 0.0
    %894 = vadd.xlane.f32.xlu0 %v893
    %v895 = vpop.xlane.xlu0 %894
    %v896 = vsel %vm215, %v875, 0.0
    %897 = vadd.xlane.f32.xlu0 %v896
    %v898 = vpop.xlane.xlu0 %897
    %v899 = vsel %vm215, %v877, 0.0
    %900 = vadd.xlane.f32.xlu0 %v899
    %v901 = vpop.xlane.xlu0 %900
    %v902 = vrcp.pop %v880
    %v903 = vmul.f32 %v863, %v902
    %v904 = vrcp.pop %v883
    %v905 = vmul.f32 %v865, %v904
    %v906 = vrcp.pop %v886
    %v907 = vmul.f32 %v867, %v906
    %v908 = vrcp.pop %v889
    %v909 = vmul.f32 %v869, %v908
    %v910 = vrcp.pop %v892
    %v911 = vmul.f32 %v871, %v910
    %v912 = vrcp.pop %v895
    %v913 = vmul.f32 %v873, %v912
    %v914 = vrcp.pop %v898
    %v915 = vmul.f32 %v875, %v914
    %v916 = vrcp.pop %v901
    %v917 = vmul.f32 %v877, %v916
    %918 = vrot.lane.b32.xlu0 %v191, 64
    %v919 = vpop.permute.xlu0 %918
    %v922 = vsel %vm215, %v903, 0
    %924 = vmatprep.subr.mxu0 0.0
    %925 = vmatpush1.msra.mxu0 %v919
    %926 = vmatprep.subr.mxu0 0.0
    %927 = vmatpush1.msra.mxu0 0.0
    %928 = vmatprep.subr.mxu0 0.0
    %929 = vmatpush1.msra.mxu0 0.0
    %930 = vmatprep.subr.mxu0 0.0
    %931 = vmatpush1.msra.mxu0 0.0
    %932 = vmatprep.subr.mxu0 0.0
    %933 = vmatpush1.msra.mxu0 0.0
    %934 = vmatprep.subr.mxu0 0.0
    %935 = vmatpush1.msra.mxu0 0.0
    %936 = vmatprep.subr.mxu0 0.0
    %937 = vmatpush1.msra.mxu0 0.0
    %938 = vmatprep.subr.mxu0 0.0
    %939 = vmatpush1.msra.mxu0 0.0
    %940 = vmatprep.subr.mxu0 0.0
    %941 = vmatpush1.msra.mxu0 0.0
    %942 = vmatprep.subr.mxu0 0.0
    %943 = vmatpush1.msra.mxu0 0.0
    %944 = vmatprep.subr.mxu0 0.0
    %945 = vmatpush1.msra.mxu0 0.0
    %946 = vmatprep.subr.mxu0 0.0
    %947 = vmatpush1.msra.mxu0 0.0
    %948 = vmatprep.subr.mxu0 0.0
    %949 = vmatpush1.msra.mxu0 0.0
    %950 = vmatprep.subr.mxu0 0.0
    %951 = vmatpush1.msra.mxu0 0.0
    %952 = vmatprep.subr.mxu0 0.0
    %953 = vmatpush1.msra.mxu0 0.0
    %954 = vmatprep.subr.mxu0 0.0
    %955 = vmatpush1.msra.mxu0 0.0
    %956 = vmatprep.subr.mxu0 0.0
    %957 = vmatpush1.msra.mxu0 0.0
    %958 = vmatprep.subr.mxu0 0.0
    %959 = vmatpush1.msra.mxu0 0.0
    %960 = vmatprep.subr.mxu0 0.0
    %961 = vmatpush1.msra.mxu0 0.0
    %962 = vmatprep.subr.mxu0 0.0
    %963 = vmatpush1.msra.mxu0 0.0
    %964 = vmatprep.subr.mxu0 0.0
    %965 = vmatpush1.msra.mxu0 0.0
    %966 = vmatprep.subr.mxu0 0.0
    %967 = vmatpush1.msra.mxu0 0.0
    %968 = vmatprep.subr.mxu0 0.0
    %969 = vmatpush1.msra.mxu0 0.0
    %970 = vmatprep.subr.mxu0 0.0
    %971 = vmatpush1.msra.mxu0 0.0
    %972 = vmatprep.subr.mxu0 0.0
    %973 = vmatpush1.msra.mxu0 0.0
    %974 = vmatprep.subr.mxu0 0.0
    %975 = vmatpush1.msra.mxu0 0.0
    %976 = vmatprep.subr.mxu0 0.0
    %977 = vmatpush1.msra.mxu0 0.0
    %978 = vmatprep.subr.mxu0 0.0
    %979 = vmatpush1.msra.mxu0 0.0
    %980 = vmatprep.subr.mxu0 0.0
    %981 = vmatpush1.msra.mxu0 0.0
    %982 = vmatprep.subr.mxu0 0.0
    %983 = vmatpush1.msra.mxu0 0.0
    %984 = vmatprep.subr.mxu0 0.0
    %985 = vmatpush1.msra.mxu0 0.0
    %986 = vmatprep.subr.mxu0 0.0
    %987 = vmatpush1.msra.mxu0 0.0
    %988 = vmatprep.mubr.f32.mxu0 0.0
    %989 = vmatmul.mubr.f32.gmra.mrb[0].mxu0 %v922
    %v990 = vpop.f32.mrb[0].mxu0
    %v991 = vadd.f32 0.0, %v990
    %v992 = vpop.f32.mrb[0].mxu0
    %993 = vdwg.mxu0
    %994 = vrot.lane.b32.xlu0 %v196, 64
    %v995 = vpop.permute.xlu0 %994
    %v998 = vsel %vm215, %v905, 0
    %1000 = vmatprep.subr.mxu0 0.0
    %1001 = vmatpush1.msra.mxu0 %v995
    %1002 = vmatprep.subr.mxu0 0.0
    %1003 = vmatpush1.msra.mxu0 0.0
    %1004 = vmatprep.subr.mxu0 0.0
    %1005 = vmatpush1.msra.mxu0 0.0
    %1006 = vmatprep.subr.mxu0 0.0
    %1007 = vmatpush1.msra.mxu0 0.0
    %1008 = vmatprep.subr.mxu0 0.0
    %1009 = vmatpush1.msra.mxu0 0.0
    %1010 = vmatprep.subr.mxu0 0.0
    %1011 = vmatpush1.msra.mxu0 0.0
    %1012 = vmatprep.subr.mxu0 0.0
    %1013 = vmatpush1.msra.mxu0 0.0
    %1014 = vmatprep.subr.mxu0 0.0
    %1015 = vmatpush1.msra.mxu0 0.0
    %1016 = vmatprep.subr.mxu0 0.0
    %1017 = vmatpush1.msra.mxu0 0.0
    %1018 = vmatprep.subr.mxu0 0.0
    %1019 = vmatpush1.msra.mxu0 0.0
    %1020 = vmatprep.subr.mxu0 0.0
    %1021 = vmatpush1.msra.mxu0 0.0
    %1022 = vmatprep.subr.mxu0 0.0
    %1023 = vmatpush1.msra.mxu0 0.0
    %1024 = vmatprep.subr.mxu0 0.0
    %1025 = vmatpush1.msra.mxu0 0.0
    %1026 = vmatprep.subr.mxu0 0.0
    %1027 = vmatpush1.msra.mxu0 0.0
    %1028 = vmatprep.subr.mxu0 0.0
    %1029 = vmatpush1.msra.mxu0 0.0
    %1030 = vmatprep.subr.mxu0 0.0
    %1031 = vmatpush1.msra.mxu0 0.0
    %1032 = vmatprep.subr.mxu0 0.0
    %1033 = vmatpush1.msra.mxu0 0.0
    %1034 = vmatprep.subr.mxu0 0.0
    %1035 = vmatpush1.msra.mxu0 0.0
    %1036 = vmatprep.subr.mxu0 0.0
    %1037 = vmatpush1.msra.mxu0 0.0
    %1038 = vmatprep.subr.mxu0 0.0
    %1039 = vmatpush1.msra.mxu0 0.0
    %1040 = vmatprep.subr.mxu0 0.0
    %1041 = vmatpush1.msra.mxu0 0.0
    %1042 = vmatprep.subr.mxu0 0.0
    %1043 = vmatpush1.msra.mxu0 0.0
    %1044 = vmatprep.subr.mxu0 0.0
    %1045 = vmatpush1.msra.mxu0 0.0
    %1046 = vmatprep.subr.mxu0 0.0
    %1047 = vmatpush1.msra.mxu0 0.0
    %1048 = vmatprep.subr.mxu0 0.0
    %1049 = vmatpush1.msra.mxu0 0.0
    %1050 = vmatprep.subr.mxu0 0.0
    %1051 = vmatpush1.msra.mxu0 0.0
    %1052 = vmatprep.subr.mxu0 0.0
    %1053 = vmatpush1.msra.mxu0 0.0
    %1054 = vmatprep.subr.mxu0 0.0
    %1055 = vmatpush1.msra.mxu0 0.0
    %1056 = vmatprep.subr.mxu0 0.0
    %1057 = vmatpush1.msra.mxu0 0.0
    %1058 = vmatprep.subr.mxu0 0.0
    %1059 = vmatpush1.msra.mxu0 0.0
    %1060 = vmatprep.subr.mxu0 0.0
    %1061 = vmatpush1.msra.mxu0 0.0
    %1062 = vmatprep.subr.mxu0 0.0
    %1063 = vmatpush1.msra.mxu0 0.0
    %1064 = vmatprep.mubr.f32.mxu0 0.0
    %1065 = vmatmul.mubr.f32.gmra.mrb[0].mxu0 %v998
    %v1066 = vpop.f32.mrb[0].mxu0
    %v1067 = vadd.f32 0.0, %v1066
    %v1068 = vpop.f32.mrb[0].mxu0
    %1069 = vdwg.mxu0
    %1070 = vrot.lane.b32.xlu0 %v202, 64
    %v1071 = vpop.permute.xlu0 %1070
    %v1074 = vsel %vm215, %v907, 0
    %1076 = vmatprep.subr.mxu0 0.0
    %1077 = vmatpush1.msra.mxu0 %v1071
    %1078 = vmatprep.subr.mxu0 0.0
    %1079 = vmatpush1.msra.mxu0 0.0
    %1080 = vmatprep.subr.mxu0 0.0
    %1081 = vmatpush1.msra.mxu0 0.0
    %1082 = vmatprep.subr.mxu0 0.0
    %1083 = vmatpush1.msra.mxu0 0.0
    %1084 = vmatprep.subr.mxu0 0.0
    %1085 = vmatpush1.msra.mxu0 0.0
    %1086 = vmatprep.subr.mxu0 0.0
    %1087 = vmatpush1.msra.mxu0 0.0
    %1088 = vmatprep.subr.mxu0 0.0
    %1089 = vmatpush1.msra.mxu0 0.0
    %1090 = vmatprep.subr.mxu0 0.0
    %1091 = vmatpush1.msra.mxu0 0.0
    %1092 = vmatprep.subr.mxu0 0.0
    %1093 = vmatpush1.msra.mxu0 0.0
    %1094 = vmatprep.subr.mxu0 0.0
    %1095 = vmatpush1.msra.mxu0 0.0
    %1096 = vmatprep.subr.mxu0 0.0
    %1097 = vmatpush1.msra.mxu0 0.0
    %1098 = vmatprep.subr.mxu0 0.0
    %1099 = vmatpush1.msra.mxu0 0.0
    %1100 = vmatprep.subr.mxu0 0.0
    %1101 = vmatpush1.msra.mxu0 0.0
    %1102 = vmatprep.subr.mxu0 0.0
    %1103 = vmatpush1.msra.mxu0 0.0
    %1104 = vmatprep.subr.mxu0 0.0
    %1105 = vmatpush1.msra.mxu0 0.0
    %1106 = vmatprep.subr.mxu0 0.0
    %1107 = vmatpush1.msra.mxu0 0.0
    %1108 = vmatprep.subr.mxu0 0.0
    %1109 = vmatpush1.msra.mxu0 0.0
    %1110 = vmatprep.subr.mxu0 0.0
    %1111 = vmatpush1.msra.mxu0 0.0
    %1112 = vmatprep.subr.mxu0 0.0
    %1113 = vmatpush1.msra.mxu0 0.0
    %1114 = vmatprep.subr.mxu0 0.0
    %1115 = vmatpush1.msra.mxu0 0.0
    %1116 = vmatprep.subr.mxu0 0.0
    %1117 = vmatpush1.msra.mxu0 0.0
    %1118 = vmatprep.subr.mxu0 0.0
    %1119 = vmatpush1.msra.mxu0 0.0
    %1120 = vmatprep.subr.mxu0 0.0
    %1121 = vmatpush1.msra.mxu0 0.0
    %1122 = vmatprep.subr.mxu0 0.0
    %1123 = vmatpush1.msra.mxu0 0.0
    %1124 = vmatprep.subr.mxu0 0.0
    %1125 = vmatpush1.msra.mxu0 0.0
    %1126 = vmatprep.subr.mxu0 0.0
    %1127 = vmatpush1.msra.mxu0 0.0
    %1128 = vmatprep.subr.mxu0 0.0
    %1129 = vmatpush1.msra.mxu0 0.0
    %1130 = vmatprep.subr.mxu0 0.0
    %1131 = vmatpush1.msra.mxu0 0.0
    %1132 = vmatprep.subr.mxu0 0.0
    %1133 = vmatpush1.msra.mxu0 0.0
    %1134 = vmatprep.subr.mxu0 0.0
    %1135 = vmatpush1.msra.mxu0 0.0
    %1136 = vmatprep.subr.mxu0 0.0
    %1137 = vmatpush1.msra.mxu0 0.0
    %1138 = vmatprep.subr.mxu0 0.0
    %1139 = vmatpush1.msra.mxu0 0.0
    %1140 = vmatprep.mubr.f32.mxu0 0.0
    %1141 = vmatmul.mubr.f32.gmra.mrb[0].mxu0 %v1074
    %v1142 = vpop.f32.mrb[0].mxu0
    %v1143 = vadd.f32 0.0, %v1142
    %v1144 = vpop.f32.mrb[0].mxu0
    %1145 = vdwg.mxu0
    %1146 = vrot.lane.b32.xlu0 %v204, 64
    %v1147 = vpop.permute.xlu0 %1146
    %v1150 = vsel %vm215, %v909, 0
    %1152 = vmatprep.subr.mxu0 0.0
    %1153 = vmatpush1.msra.mxu0 %v1147
    %1154 = vmatprep.subr.mxu0 0.0
    %1155 = vmatpush1.msra.mxu0 0.0
    %1156 = vmatprep.subr.mxu0 0.0
    %1157 = vmatpush1.msra.mxu0 0.0
    %1158 = vmatprep.subr.mxu0 0.0
    %1159 = vmatpush1.msra.mxu0 0.0
    %1160 = vmatprep.subr.mxu0 0.0
    %1161 = vmatpush1.msra.mxu0 0.0
    %1162 = vmatprep.subr.mxu0 0.0
    %1163 = vmatpush1.msra.mxu0 0.0
    %1164 = vmatprep.subr.mxu0 0.0
    %1165 = vmatpush1.msra.mxu0 0.0
    %1166 = vmatprep.subr.mxu0 0.0
    %1167 = vmatpush1.msra.mxu0 0.0
    %1168 = vmatprep.subr.mxu0 0.0
    %1169 = vmatpush1.msra.mxu0 0.0
    %1170 = vmatprep.subr.mxu0 0.0
    %1171 = vmatpush1.msra.mxu0 0.0
    %1172 = vmatprep.subr.mxu0 0.0
    %1173 = vmatpush1.msra.mxu0 0.0
    %1174 = vmatprep.subr.mxu0 0.0
    %1175 = vmatpush1.msra.mxu0 0.0
    %1176 = vmatprep.subr.mxu0 0.0
    %1177 = vmatpush1.msra.mxu0 0.0
    %1178 = vmatprep.subr.mxu0 0.0
    %1179 = vmatpush1.msra.mxu0 0.0
    %1180 = vmatprep.subr.mxu0 0.0
    %1181 = vmatpush1.msra.mxu0 0.0
    %1182 = vmatprep.subr.mxu0 0.0
    %1183 = vmatpush1.msra.mxu0 0.0
    %1184 = vmatprep.subr.mxu0 0.0
    %1185 = vmatpush1.msra.mxu0 0.0
    %1186 = vmatprep.subr.mxu0 0.0
    %1187 = vmatpush1.msra.mxu0 0.0
    %1188 = vmatprep.subr.mxu0 0.0
    %1189 = vmatpush1.msra.mxu0 0.0
    %1190 = vmatprep.subr.mxu0 0.0
    %1191 = vmatpush1.msra.mxu0 0.0
    %1192 = vmatprep.subr.mxu0 0.0
    %1193 = vmatpush1.msra.mxu0 0.0
    %1194 = vmatprep.subr.mxu0 0.0
    %1195 = vmatpush1.msra.mxu0 0.0
    %1196 = vmatprep.subr.mxu0 0.0
    %1197 = vmatpush1.msra.mxu0 0.0
    %1198 = vmatprep.subr.mxu0 0.0
    %1199 = vmatpush1.msra.mxu0 0.0
    %1200 = vmatprep.subr.mxu0 0.0
    %1201 = vmatpush1.msra.mxu0 0.0
    %1202 = vmatprep.subr.mxu0 0.0
    %1203 = vmatpush1.msra.mxu0 0.0
    %1204 = vmatprep.subr.mxu0 0.0
    %1205 = vmatpush1.msra.mxu0 0.0
    %1206 = vmatprep.subr.mxu0 0.0
    %1207 = vmatpush1.msra.mxu0 0.0
    %1208 = vmatprep.subr.mxu0 0.0
    %1209 = vmatpush1.msra.mxu0 0.0
    %1210 = vmatprep.subr.mxu0 0.0
    %1211 = vmatpush1.msra.mxu0 0.0
    %1212 = vmatprep.subr.mxu0 0.0
    %1213 = vmatpush1.msra.mxu0 0.0
    %1214 = vmatprep.subr.mxu0 0.0
    %1215 = vmatpush1.msra.mxu0 0.0
    %1216 = vmatprep.mubr.f32.mxu0 0.0
    %1217 = vmatmul.mubr.f32.gmra.mrb[0].mxu0 %v1150
    %v1218 = vpop.f32.mrb[0].mxu0
    %v1219 = vadd.f32 0.0, %v1218
    %v1220 = vpop.f32.mrb[0].mxu0
    %1221 = vdwg.mxu0
    %1222 = vrot.lane.b32.xlu0 %v206, 64
    %v1223 = vpop.permute.xlu0 %1222
    %v1226 = vsel %vm215, %v911, 0
    %1228 = vmatprep.subr.mxu0 0.0
    %1229 = vmatpush1.msra.mxu0 %v1223
    %1230 = vmatprep.subr.mxu0 0.0
    %1231 = vmatpush1.msra.mxu0 0.0
    %1232 = vmatprep.subr.mxu0 0.0
    %1233 = vmatpush1.msra.mxu0 0.0
    %1234 = vmatprep.subr.mxu0 0.0
    %1235 = vmatpush1.msra.mxu0 0.0
    %1236 = vmatprep.subr.mxu0 0.0
    %1237 = vmatpush1.msra.mxu0 0.0
    %1238 = vmatprep.subr.mxu0 0.0
    %1239 = vmatpush1.msra.mxu0 0.0
    %1240 = vmatprep.subr.mxu0 0.0
    %1241 = vmatpush1.msra.mxu0 0.0
    %1242 = vmatprep.subr.mxu0 0.0
    %1243 = vmatpush1.msra.mxu0 0.0
    %1244 = vmatprep.subr.mxu0 0.0
    %1245 = vmatpush1.msra.mxu0 0.0
    %1246 = vmatprep.subr.mxu0 0.0
    %1247 = vmatpush1.msra.mxu0 0.0
    %1248 = vmatprep.subr.mxu0 0.0
    %1249 = vmatpush1.msra.mxu0 0.0
    %1250 = vmatprep.subr.mxu0 0.0
    %1251 = vmatpush1.msra.mxu0 0.0
    %1252 = vmatprep.subr.mxu0 0.0
    %1253 = vmatpush1.msra.mxu0 0.0
    %1254 = vmatprep.subr.mxu0 0.0
    %1255 = vmatpush1.msra.mxu0 0.0
    %1256 = vmatprep.subr.mxu0 0.0
    %1257 = vmatpush1.msra.mxu0 0.0
    %1258 = vmatprep.subr.mxu0 0.0
    %1259 = vmatpush1.msra.mxu0 0.0
    %1260 = vmatprep.subr.mxu0 0.0
    %1261 = vmatpush1.msra.mxu0 0.0
    %1262 = vmatprep.subr.mxu0 0.0
    %1263 = vmatpush1.msra.mxu0 0.0
    %1264 = vmatprep.subr.mxu0 0.0
    %1265 = vmatpush1.msra.mxu0 0.0
    %1266 = vmatprep.subr.mxu0 0.0
    %1267 = vmatpush1.msra.mxu0 0.0
    %1268 = vmatprep.subr.mxu0 0.0
    %1269 = vmatpush1.msra.mxu0 0.0
    %1270 = vmatprep.subr.mxu0 0.0
    %1271 = vmatpush1.msra.mxu0 0.0
    %1272 = vmatprep.subr.mxu0 0.0
    %1273 = vmatpush1.msra.mxu0 0.0
    %1274 = vmatprep.subr.mxu0 0.0
    %1275 = vmatpush1.msra.mxu0 0.0
    %1276 = vmatprep.subr.mxu0 0.0
    %1277 = vmatpush1.msra.mxu0 0.0
    %1278 = vmatprep.subr.mxu0 0.0
    %1279 = vmatpush1.msra.mxu0 0.0
    %1280 = vmatprep.subr.mxu0 0.0
    %1281 = vmatpush1.msra.mxu0 0.0
    %1282 = vmatprep.subr.mxu0 0.0
    %1283 = vmatpush1.msra.mxu0 0.0
    %1284 = vmatprep.subr.mxu0 0.0
    %1285 = vmatpush1.msra.mxu0 0.0
    %1286 = vmatprep.subr.mxu0 0.0
    %1287 = vmatpush1.msra.mxu0 0.0
    %1288 = vmatprep.subr.mxu0 0.0
    %1289 = vmatpush1.msra.mxu0 0.0
    %1290 = vmatprep.subr.mxu0 0.0
    %1291 = vmatpush1.msra.mxu0 0.0
    %1292 = vmatprep.mubr.f32.mxu0 0.0
    %1293 = vmatmul.mubr.f32.gmra.mrb[0].mxu0 %v1226
    %v1294 = vpop.f32.mrb[0].mxu0
    %v1295 = vadd.f32 0.0, %v1294
    %v1296 = vpop.f32.mrb[0].mxu0
    %1297 = vdwg.mxu0
    %1298 = vrot.lane.b32.xlu0 %v208, 64
    %v1299 = vpop.permute.xlu0 %1298
    %v1302 = vsel %vm215, %v913, 0
    %1304 = vmatprep.subr.mxu0 0.0
    %1305 = vmatpush1.msra.mxu0 %v1299
    %1306 = vmatprep.subr.mxu0 0.0
    %1307 = vmatpush1.msra.mxu0 0.0
    %1308 = vmatprep.subr.mxu0 0.0
    %1309 = vmatpush1.msra.mxu0 0.0
    %1310 = vmatprep.subr.mxu0 0.0
    %1311 = vmatpush1.msra.mxu0 0.0
    %1312 = vmatprep.subr.mxu0 0.0
    %1313 = vmatpush1.msra.mxu0 0.0
    %1314 = vmatprep.subr.mxu0 0.0
    %1315 = vmatpush1.msra.mxu0 0.0
    %1316 = vmatprep.subr.mxu0 0.0
    %1317 = vmatpush1.msra.mxu0 0.0
    %1318 = vmatprep.subr.mxu0 0.0
    %1319 = vmatpush1.msra.mxu0 0.0
    %1320 = vmatprep.subr.mxu0 0.0
    %1321 = vmatpush1.msra.mxu0 0.0
    %1322 = vmatprep.subr.mxu0 0.0
    %1323 = vmatpush1.msra.mxu0 0.0
    %1324 = vmatprep.subr.mxu0 0.0
    %1325 = vmatpush1.msra.mxu0 0.0
    %1326 = vmatprep.subr.mxu0 0.0
    %1327 = vmatpush1.msra.mxu0 0.0
    %1328 = vmatprep.subr.mxu0 0.0
    %1329 = vmatpush1.msra.mxu0 0.0
    %1330 = vmatprep.subr.mxu0 0.0
    %1331 = vmatpush1.msra.mxu0 0.0
    %1332 = vmatprep.subr.mxu0 0.0
    %1333 = vmatpush1.msra.mxu0 0.0
    %1334 = vmatprep.subr.mxu0 0.0
    %1335 = vmatpush1.msra.mxu0 0.0
    %1336 = vmatprep.subr.mxu0 0.0
    %1337 = vmatpush1.msra.mxu0 0.0
    %1338 = vmatprep.subr.mxu0 0.0
    %1339 = vmatpush1.msra.mxu0 0.0
    %1340 = vmatprep.subr.mxu0 0.0
    %1341 = vmatpush1.msra.mxu0 0.0
    %1342 = vmatprep.subr.mxu0 0.0
    %1343 = vmatpush1.msra.mxu0 0.0
    %1344 = vmatprep.subr.mxu0 0.0
    %1345 = vmatpush1.msra.mxu0 0.0
    %1346 = vmatprep.subr.mxu0 0.0
    %1347 = vmatpush1.msra.mxu0 0.0
    %1348 = vmatprep.subr.mxu0 0.0
    %1349 = vmatpush1.msra.mxu0 0.0
    %1350 = vmatprep.subr.mxu0 0.0
    %1351 = vmatpush1.msra.mxu0 0.0
    %1352 = vmatprep.subr.mxu0 0.0
    %1353 = vmatpush1.msra.mxu0 0.0
    %1354 = vmatprep.subr.mxu0 0.0
    %1355 = vmatpush1.msra.mxu0 0.0
    %1356 = vmatprep.subr.mxu0 0.0
    %1357 = vmatpush1.msra.mxu0 0.0
    %1358 = vmatprep.subr.mxu0 0.0
    %1359 = vmatpush1.msra.mxu0 0.0
    %1360 = vmatprep.subr.mxu0 0.0
    %1361 = vmatpush1.msra.mxu0 0.0
    %1362 = vmatprep.subr.mxu0 0.0
    %1363 = vmatpush1.msra.mxu0 0.0
    %1364 = vmatprep.subr.mxu0 0.0
    %1365 = vmatpush1.msra.mxu0 0.0
    %1366 = vmatprep.subr.mxu0 0.0
    %1367 = vmatpush1.msra.mxu0 0.0
    %1368 = vmatprep.mubr.f32.mxu0 0.0
    %1369 = vmatmul.mubr.f32.gmra.mrb[0].mxu0 %v1302
    %v1370 = vpop.f32.mrb[0].mxu0
    %v1371 = vadd.f32 0.0, %v1370
    %v1372 = vpop.f32.mrb[0].mxu0
    %1373 = vdwg.mxu0
    %1374 = vrot.lane.b32.xlu0 %v210, 64
    %v1375 = vpop.permute.xlu0 %1374
    %v1378 = vsel %vm215, %v915, 0
    %1380 = vmatprep.subr.mxu0 0.0
    %1381 = vmatpush1.msra.mxu0 %v1375
    %1382 = vmatprep.subr.mxu0 0.0
    %1383 = vmatpush1.msra.mxu0 0.0
    %1384 = vmatprep.subr.mxu0 0.0
    %1385 = vmatpush1.msra.mxu0 0.0
    %1386 = vmatprep.subr.mxu0 0.0
    %1387 = vmatpush1.msra.mxu0 0.0
    %1388 = vmatprep.subr.mxu0 0.0
    %1389 = vmatpush1.msra.mxu0 0.0
    %1390 = vmatprep.subr.mxu0 0.0
    %1391 = vmatpush1.msra.mxu0 0.0
    %1392 = vmatprep.subr.mxu0 0.0
    %1393 = vmatpush1.msra.mxu0 0.0
    %1394 = vmatprep.subr.mxu0 0.0
    %1395 = vmatpush1.msra.mxu0 0.0
    %1396 = vmatprep.subr.mxu0 0.0
    %1397 = vmatpush1.msra.mxu0 0.0
    %1398 = vmatprep.subr.mxu0 0.0
    %1399 = vmatpush1.msra.mxu0 0.0
    %1400 = vmatprep.subr.mxu0 0.0
    %1401 = vmatpush1.msra.mxu0 0.0
    %1402 = vmatprep.subr.mxu0 0.0
    %1403 = vmatpush1.msra.mxu0 0.0
    %1404 = vmatprep.subr.mxu0 0.0
    %1405 = vmatpush1.msra.mxu0 0.0
    %1406 = vmatprep.subr.mxu0 0.0
    %1407 = vmatpush1.msra.mxu0 0.0
    %1408 = vmatprep.subr.mxu0 0.0
    %1409 = vmatpush1.msra.mxu0 0.0
    %1410 = vmatprep.subr.mxu0 0.0
    %1411 = vmatpush1.msra.mxu0 0.0
    %1412 = vmatprep.subr.mxu0 0.0
    %1413 = vmatpush1.msra.mxu0 0.0
    %1414 = vmatprep.subr.mxu0 0.0
    %1415 = vmatpush1.msra.mxu0 0.0
    %1416 = vmatprep.subr.mxu0 0.0
    %1417 = vmatpush1.msra.mxu0 0.0
    %1418 = vmatprep.subr.mxu0 0.0
    %1419 = vmatpush1.msra.mxu0 0.0
    %1420 = vmatprep.subr.mxu0 0.0
    %1421 = vmatpush1.msra.mxu0 0.0
    %1422 = vmatprep.subr.mxu0 0.0
    %1423 = vmatpush1.msra.mxu0 0.0
    %1424 = vmatprep.subr.mxu0 0.0
    %1425 = vmatpush1.msra.mxu0 0.0
    %1426 = vmatprep.subr.mxu0 0.0
    %1427 = vmatpush1.msra.mxu0 0.0
    %1428 = vmatprep.subr.mxu0 0.0
    %1429 = vmatpush1.msra.mxu0 0.0
    %1430 = vmatprep.subr.mxu0 0.0
    %1431 = vmatpush1.msra.mxu0 0.0
    %1432 = vmatprep.subr.mxu0 0.0
    %1433 = vmatpush1.msra.mxu0 0.0
    %1434 = vmatprep.subr.mxu0 0.0
    %1435 = vmatpush1.msra.mxu0 0.0
    %1436 = vmatprep.subr.mxu0 0.0
    %1437 = vmatpush1.msra.mxu0 0.0
    %1438 = vmatprep.subr.mxu0 0.0
    %1439 = vmatpush1.msra.mxu0 0.0
    %1440 = vmatprep.subr.mxu0 0.0
    %1441 = vmatpush1.msra.mxu0 0.0
    %1442 = vmatprep.subr.mxu0 0.0
    %1443 = vmatpush1.msra.mxu0 0.0
    %1444 = vmatprep.mubr.f32.mxu0 0.0
    %1445 = vmatmul.mubr.f32.gmra.mrb[0].mxu0 %v1378
    %v1446 = vpop.f32.mrb[0].mxu0
    %v1447 = vadd.f32 0.0, %v1446
    %v1448 = vpop.f32.mrb[0].mxu0
    %1449 = vdwg.mxu0
    %1450 = vrot.lane.b32.xlu0 %v212, 64
    %v1451 = vpop.permute.xlu0 %1450
    %v1454 = vsel %vm215, %v917, 0
    %1456 = vmatprep.subr.mxu0 0.0
    %1457 = vmatpush1.msra.mxu0 %v1451
    %1458 = vmatprep.subr.mxu0 0.0
    %1459 = vmatpush1.msra.mxu0 0.0
    %1460 = vmatprep.subr.mxu0 0.0
    %1461 = vmatpush1.msra.mxu0 0.0
    %1462 = vmatprep.subr.mxu0 0.0
    %1463 = vmatpush1.msra.mxu0 0.0
    %1464 = vmatprep.subr.mxu0 0.0
    %1465 = vmatpush1.msra.mxu0 0.0
    %1466 = vmatprep.subr.mxu0 0.0
    %1467 = vmatpush1.msra.mxu0 0.0
    %1468 = vmatprep.subr.mxu0 0.0
    %1469 = vmatpush1.msra.mxu0 0.0
    %1470 = vmatprep.subr.mxu0 0.0
    %1471 = vmatpush1.msra.mxu0 0.0
    %1472 = vmatprep.subr.mxu0 0.0
    %1473 = vmatpush1.msra.mxu0 0.0
    %1474 = vmatprep.subr.mxu0 0.0
    %1475 = vmatpush1.msra.mxu0 0.0
    %1476 = vmatprep.subr.mxu0 0.0
    %1477 = vmatpush1.msra.mxu0 0.0
    %1478 = vmatprep.subr.mxu0 0.0
    %1479 = vmatpush1.msra.mxu0 0.0
    %1480 = vmatprep.subr.mxu0 0.0
    %1481 = vmatpush1.msra.mxu0 0.0
    %1482 = vmatprep.subr.mxu0 0.0
    %1483 = vmatpush1.msra.mxu0 0.0
    %1484 = vmatprep.subr.mxu0 0.0
    %1485 = vmatpush1.msra.mxu0 0.0
    %1486 = vmatprep.subr.mxu0 0.0
    %1487 = vmatpush1.msra.mxu0 0.0
    %1488 = vmatprep.subr.mxu0 0.0
    %1489 = vmatpush1.msra.mxu0 0.0
    %1490 = vmatprep.subr.mxu0 0.0
    %1491 = vmatpush1.msra.mxu0 0.0
    %1492 = vmatprep.subr.mxu0 0.0
    %1493 = vmatpush1.msra.mxu0 0.0
    %1494 = vmatprep.subr.mxu0 0.0
    %1495 = vmatpush1.msra.mxu0 0.0
    %1496 = vmatprep.subr.mxu0 0.0
    %1497 = vmatpush1.msra.mxu0 0.0
    %1498 = vmatprep.subr.mxu0 0.0
    %1499 = vmatpush1.msra.mxu0 0.0
    %1500 = vmatprep.subr.mxu0 0.0
    %1501 = vmatpush1.msra.mxu0 0.0
    %1502 = vmatprep.subr.mxu0 0.0
    %1503 = vmatpush1.msra.mxu0 0.0
    %1504 = vmatprep.subr.mxu0 0.0
    %1505 = vmatpush1.msra.mxu0 0.0
    %1506 = vmatprep.subr.mxu0 0.0
    %1507 = vmatpush1.msra.mxu0 0.0
    %1508 = vmatprep.subr.mxu0 0.0
    %1509 = vmatpush1.msra.mxu0 0.0
    %1510 = vmatprep.subr.mxu0 0.0
    %1511 = vmatpush1.msra.mxu0 0.0
    %1512 = vmatprep.subr.mxu0 0.0
    %1513 = vmatpush1.msra.mxu0 0.0
    %1514 = vmatprep.subr.mxu0 0.0
    %1515 = vmatpush1.msra.mxu0 0.0
    %1516 = vmatprep.subr.mxu0 0.0
    %1517 = vmatpush1.msra.mxu0 0.0
    %1518 = vmatprep.subr.mxu0 0.0
    %1519 = vmatpush1.msra.mxu0 0.0
    %1520 = vmatprep.mubr.f32.mxu0 0.0
    %1521 = vmatmul.mubr.f32.gmra.mrb[0].mxu0 %v1454
    %v1522 = vpop.f32.mrb[0].mxu0
    %v1523 = vadd.f32 0.0, %v1522
    %v1524 = vpop.f32.mrb[0].mxu0
    %1525 = vdwg.mxu0
    %1528 = vrot.lane.b32.xlu0 %v1143, 8
    %v1529 = vpop.permute.xlu0 %1528
    %1530 = vrot.lane.b32.xlu0 %v1219, 8
    %v1531 = vpop.permute.xlu0 %1530
    %1536 = vrot.lane.b32.xlu0 %v1295, 16
    %v1537 = vpop.permute.xlu0 %1536
    %1538 = vrot.lane.b32.xlu0 %v1371, 16
    %v1539 = vpop.permute.xlu0 %1538
    %1544 = vrot.lane.b32.xlu0 %v1447, 24
    %v1545 = vpop.permute.xlu0 %1544
    %1546 = vrot.lane.b32.xlu0 %v1523, 24
    %v1547 = vpop.permute.xlu0 %1546
    %v1550 = vsel %vm215, %v991, %v1529
    %v1551 = vsel %vm215, %v1067, %v1531
    %v1552 = vsel %vm117, %v1550, %v1537
    %v1553 = vsel %vm117, %v1551, %v1539
    %vm1554 = vcmask 195584
    %v1555 = vsel %vm1554, %v1552, %v1545
    %v1556 = vsel %vm1554, %v1553, %v1547
    %v1557 = vadd.f32 %v191, %v1555
    %v1558 = vadd.f32 %v196, %v1556
    %v1560 = vlaneseq
    %v1561 = vshrl.u32 %v1560, 7
    %v1562 = vsub.s32 0, %v1561
    %v1563 = vrot.slane %v110, %v1562
    %vm1565 = vcmask 261120
    %v1567 = vsel %vm1565, %v1557, 0
    %v1570 = vsel %vm1565, %v1558, 0
    %1572 = vmatprep.subr.mxu0 0.0
    %1573 = vmatpush1.msra.mxu0 %v106
    %1574 = vmatprep.subr.mxu0 0.0
    %1575 = vmatpush1.msra.mxu0 %v107
    %1576 = vmatprep.subr.mxu0 0.0
    %1577 = vmatpush1.msra.mxu0 %v108
    %1578 = vmatprep.subr.mxu0 0.0
    %1579 = vmatpush1.msra.mxu0 %v109
    %1580 = vmatprep.subr.mxu0 0.0
    %1581 = vmatpush1.msra.mxu0 0.0
    %1582 = vmatprep.subr.mxu0 0.0
    %1583 = vmatpush1.msra.mxu0 0.0
    %1584 = vmatprep.subr.mxu0 0.0
    %1585 = vmatpush1.msra.mxu0 0.0
    %1586 = vmatprep.subr.mxu0 0.0
    %1587 = vmatpush1.msra.mxu0 0.0
    %1588 = vmatprep.subr.mxu0 0.0
    %1589 = vmatpush1.msra.mxu0 0.0
    %1590 = vmatprep.subr.mxu0 0.0
    %1591 = vmatpush1.msra.mxu0 0.0
    %1592 = vmatprep.subr.mxu0 0.0
    %1593 = vmatpush1.msra.mxu0 0.0
    %1594 = vmatprep.subr.mxu0 0.0
    %1595 = vmatpush1.msra.mxu0 0.0
    %1596 = vmatprep.subr.mxu0 0.0
    %1597 = vmatpush1.msra.mxu0 0.0
    %1598 = vmatprep.subr.mxu0 0.0
    %1599 = vmatpush1.msra.mxu0 0.0
    %1600 = vmatprep.subr.mxu0 0.0
    %1601 = vmatpush1.msra.mxu0 0.0
    %1602 = vmatprep.subr.mxu0 0.0
    %1603 = vmatpush1.msra.mxu0 0.0
    %1604 = vmatprep.subr.mxu0 0.0
    %1605 = vmatpush1.msra.mxu0 0.0
    %1606 = vmatprep.subr.mxu0 0.0
    %1607 = vmatpush1.msra.mxu0 0.0
    %1608 = vmatprep.subr.mxu0 0.0
    %1609 = vmatpush1.msra.mxu0 0.0
    %1610 = vmatprep.subr.mxu0 0.0
    %1611 = vmatpush1.msra.mxu0 0.0
    %1612 = vmatprep.subr.mxu0 0.0
    %1613 = vmatpush1.msra.mxu0 0.0
    %1614 = vmatprep.subr.mxu0 0.0
    %1615 = vmatpush1.msra.mxu0 0.0
    %1616 = vmatprep.subr.mxu0 0.0
    %1617 = vmatpush1.msra.mxu0 0.0
    %1618 = vmatprep.subr.mxu0 0.0
    %1619 = vmatpush1.msra.mxu0 0.0
    %1620 = vmatprep.subr.mxu0 0.0
    %1621 = vmatpush1.msra.mxu0 0.0
    %1622 = vmatprep.subr.mxu0 0.0
    %1623 = vmatpush1.msra.mxu0 0.0
    %1624 = vmatprep.subr.mxu0 0.0
    %1625 = vmatpush1.msra.mxu0 0.0
    %1626 = vmatprep.subr.mxu0 0.0
    %1627 = vmatpush1.msra.mxu0 0.0
    %1628 = vmatprep.subr.mxu0 0.0
    %1629 = vmatpush1.msra.mxu0 0.0
    %1630 = vmatprep.subr.mxu0 0.0
    %1631 = vmatpush1.msra.mxu0 0.0
    %1632 = vmatprep.subr.mxu0 0.0
    %1633 = vmatpush1.msra.mxu0 0.0
    %1634 = vmatprep.subr.mxu0 0.0
    %1635 = vmatpush1.msra.mxu0 0.0
    %1636 = vmatprep.mubr.f32.mxu0 0.0
    %1637 = vmatmul.mubr.f32.gmra.mrb[0].mxu0 %v1567
    %v1638 = vpop.f32.mrb[0].mxu0
    %v1639 = vadd.f32 %v1563, %v1638
    %v1640 = vpop.f32.mrb[0].mxu0
    %1641 = vmatprep.mubr.f32.mxu0 0.0
    %1642 = vmatmul.mubr.f32.gmra.mrb[0].mxu0 %v1570
    %v1643 = vpop.f32.mrb[0].mxu0
    %v1644 = vadd.f32 %v1563, %v1643
    %v1645 = vpop.f32.mrb[0].mxu0
    %1646 = vdwg.mxu0
    %v1647 = vmax.f32 %v1639, 0.0
    %v1648 = vmax.f32 %v1644, 0.0
    %v1649 = vadd.f32 %v1557, %v1647
    %v1650 = vadd.f32 %v1558, %v1648
    %v1651 = vld [vmem:[#allocation8] sm:$0xff]
    %v1652 = vld [vmem:[#allocation8 + $0x8] sm:$0xff]
    %v1653 = vld [vmem:[#allocation8 + $0x10] sm:$0xff]
    %v1654 = vld [vmem:[#allocation8 + $0x18] sm:$0xff]
    %v1655 = vld [vmem:[%s6] sm:$0x1]
    %v1656 = vld [vmem:[#allocation10] sm:$0xff]
    %v1657 = vld [vmem:[#allocation10 + $0x8] sm:$0xff]
    %v1658 = vld [vmem:[#allocation10 + $0x10] sm:$0xff]
    %v1659 = vld [vmem:[#allocation10 + $0x18] sm:$0xff]
    %v1660 = vld [vmem:[%s8] sm:$0x1]
    %v1662 = vlaneseq
    %v1663 = vshrl.u32 %v1662, 7
    %v1664 = vsub.s32 0, %v1663
    %v1665 = vrot.slane %v1655, %v1664
    %v1668 = vsel %vm1565, %v1649, 0
    %v1671 = vsel %vm1565, %v1650, 0
    %1673 = vmatprep.subr.mxu0 0.0
    %1674 = vmatpush1.msra.mxu0 %v1651
    %1675 = vmatprep.subr.mxu0 0.0
    %1676 = vmatpush1.msra.mxu0 %v1652
    %1677 = vmatprep.subr.mxu0 0.0
    %1678 = vmatpush1.msra.mxu0 %v1653
    %1679 = vmatprep.subr.mxu0 0.0
    %1680 = vmatpush1.msra.mxu0 %v1654
    %1681 = vmatprep.subr.mxu0 0.0
    %1682 = vmatpush1.msra.mxu0 0.0
    %1683 = vmatprep.subr.mxu0 0.0
    %1684 = vmatpush1.msra.mxu0 0.0
    %1685 = vmatprep.subr.mxu0 0.0
    %1686 = vmatpush1.msra.mxu0 0.0
    %1687 = vmatprep.subr.mxu0 0.0
    %1688 = vmatpush1.msra.mxu0 0.0
    %1689 = vmatprep.subr.mxu0 0.0
    %1690 = vmatpush1.msra.mxu0 0.0
    %1691 = vmatprep.subr.mxu0 0.0
    %1692 = vmatpush1.msra.mxu0 0.0
    %1693 = vmatprep.subr.mxu0 0.0
    %1694 = vmatpush1.msra.mxu0 0.0
    %1695 = vmatprep.subr.mxu0 0.0
    %1696 = vmatpush1.msra.mxu0 0.0
    %1697 = vmatprep.subr.mxu0 0.0
    %1698 = vmatpush1.msra.mxu0 0.0
    %1699 = vmatprep.subr.mxu0 0.0
    %1700 = vmatpush1.msra.mxu0 0.0
    %1701 = vmatprep.subr.mxu0 0.0
    %1702 = vmatpush1.msra.mxu0 0.0
    %1703 = vmatprep.subr.mxu0 0.0
    %1704 = vmatpush1.msra.mxu0 0.0
    %1705 = vmatprep.subr.mxu0 0.0
    %1706 = vmatpush1.msra.mxu0 0.0
    %1707 = vmatprep.subr.mxu0 0.0
    %1708 = vmatpush1.msra.mxu0 0.0
    %1709 = vmatprep.subr.mxu0 0.0
    %1710 = vmatpush1.msra.mxu0 0.0
    %1711 = vmatprep.subr.mxu0 0.0
    %1712 = vmatpush1.msra.mxu0 0.0
    %1713 = vmatprep.subr.mxu0 0.0
    %1714 = vmatpush1.msra.mxu0 0.0
    %1715 = vmatprep.subr.mxu0 0.0
    %1716 = vmatpush1.msra.mxu0 0.0
    %1717 = vmatprep.subr.mxu0 0.0
    %1718 = vmatpush1.msra.mxu0 0.0
    %1719 = vmatprep.subr.mxu0 0.0
    %1720 = vmatpush1.msra.mxu0 0.0
    %1721 = vmatprep.subr.mxu0 0.0
    %1722 = vmatpush1.msra.mxu0 0.0
    %1723 = vmatprep.subr.mxu0 0.0
    %1724 = vmatpush1.msra.mxu0 0.0
    %1725 = vmatprep.subr.mxu0 0.0
    %1726 = vmatpush1.msra.mxu0 0.0
    %1727 = vmatprep.subr.mxu0 0.0
    %1728 = vmatpush1.msra.mxu0 0.0
    %1729 = vmatprep.subr.mxu0 0.0
    %1730 = vmatpush1.msra.mxu0 0.0
    %1731 = vmatprep.subr.mxu0 0.0
    %1732 = vmatpush1.msra.mxu0 0.0
    %1733 = vmatprep.subr.mxu0 0.0
    %1734 = vmatpush1.msra.mxu0 0.0
    %1735 = vmatprep.subr.mxu0 0.0
    %1736 = vmatpush1.msra.mxu0 0.0
    %1737 = vmatprep.mubr.f32.mxu0 0.0
    %1738 = vmatmul.mubr.f32.gmra.mrb[0].mxu0 %v1668
    %v1739 = vpop.f32.mrb[0].mxu0
    %v1740 = vadd.f32 %v1665, %v1739
    %v1741 = vpop.f32.mrb[0].mxu0
    %1742 = vmatprep.mubr.f32.mxu0 0.0
    %1743 = vmatmul.mubr.f32.gmra.mrb[0].mxu0 %v1671
    %v1744 = vpop.f32.mrb[0].mxu0
    %v1745 = vadd.f32 %v1665, %v1744
    %v1746 = vpop.f32.mrb[0].mxu0
    %1747 = vdwg.mxu0
    %1750 = vrot.lane.b32.xlu0 %v1740, 120
    %v1751 = vpop.permute.xlu0 %1750
    %1752 = vrot.lane.b32.xlu0 %v1745, 120
    %v1753 = vpop.permute.xlu0 %1752
    %1754 = vrot.lane.b32.xlu0 %v1740, 112
    %v1755 = vpop.permute.xlu0 %1754
    %1756 = vrot.lane.b32.xlu0 %v1745, 112
    %v1757 = vpop.permute.xlu0 %1756
    %1758 = vrot.lane.b32.xlu0 %v1740, 104
    %v1759 = vpop.permute.xlu0 %1758
    %1760 = vrot.lane.b32.xlu0 %v1745, 104
    %v1761 = vpop.permute.xlu0 %1760
    %1762 = vrot.lane.b32.xlu0 %v1740, 96
    %v1763 = vpop.permute.xlu0 %1762
    %v1764 = vsel %vm215, %v1740, 0
    %v1766 = vsel %vm215, %v1763, 0
    %1768 = vmatprep.subr.mxu0 0.0
    %1769 = vmatpush1.xpose.msra.mxu0 %v1766
    %1770 = vmatprep.subr.mxu0 0.0
    %1771 = vmatpush1.xpose.msra.mxu0 0.0
    %1772 = vmatprep.subr.mxu0 0.0
    %1773 = vmatpush1.xpose.msra.mxu0 0.0
    %1774 = vmatprep.subr.mxu0 0.0
    %1775 = vmatpush1.xpose.msra.mxu0 0.0
    %1776 = vmatprep.subr.mxu0 0.0
    %1777 = vmatpush1.xpose.msra.mxu0 0.0
    %1778 = vmatprep.subr.mxu0 0.0
    %1779 = vmatpush1.xpose.msra.mxu0 0.0
    %1780 = vmatprep.subr.mxu0 0.0
    %1781 = vmatpush1.xpose.msra.mxu0 0.0
    %1782 = vmatprep.subr.mxu0 0.0
    %1783 = vmatpush1.xpose.msra.mxu0 0.0
    %1784 = vmatprep.subr.mxu0 0.0
    %1785 = vmatpush1.xpose.msra.mxu0 0.0
    %1786 = vmatprep.subr.mxu0 0.0
    %1787 = vmatpush1.xpose.msra.mxu0 0.0
    %1788 = vmatprep.subr.mxu0 0.0
    %1789 = vmatpush1.xpose.msra.mxu0 0.0
    %1790 = vmatprep.subr.mxu0 0.0
    %1791 = vmatpush1.xpose.msra.mxu0 0.0
    %1792 = vmatprep.subr.mxu0 0.0
    %1793 = vmatpush1.xpose.msra.mxu0 0.0
    %1794 = vmatprep.subr.mxu0 0.0
    %1795 = vmatpush1.xpose.msra.mxu0 0.0
    %1796 = vmatprep.subr.mxu0 0.0
    %1797 = vmatpush1.xpose.msra.mxu0 0.0
    %1798 = vmatprep.subr.mxu0 0.0
    %1799 = vmatpush1.xpose.msra.mxu0 0.0
    %1800 = vmatprep.subr.mxu0 0.0
    %1801 = vmatpush1.xpose.msra.mxu0 0.0
    %1802 = vmatprep.subr.mxu0 0.0
    %1803 = vmatpush1.xpose.msra.mxu0 0.0
    %1804 = vmatprep.subr.mxu0 0.0
    %1805 = vmatpush1.xpose.msra.mxu0 0.0
    %1806 = vmatprep.subr.mxu0 0.0
    %1807 = vmatpush1.xpose.msra.mxu0 0.0
    %1808 = vmatprep.subr.mxu0 0.0
    %1809 = vmatpush1.xpose.msra.mxu0 0.0
    %1810 = vmatprep.subr.mxu0 0.0
    %1811 = vmatpush1.xpose.msra.mxu0 0.0
    %1812 = vmatprep.subr.mxu0 0.0
    %1813 = vmatpush1.xpose.msra.mxu0 0.0
    %1814 = vmatprep.subr.mxu0 0.0
    %1815 = vmatpush1.xpose.msra.mxu0 0.0
    %1816 = vmatprep.subr.mxu0 0.0
    %1817 = vmatpush1.xpose.msra.mxu0 0.0
    %1818 = vmatprep.subr.mxu0 0.0
    %1819 = vmatpush1.xpose.msra.mxu0 0.0
    %1820 = vmatprep.subr.mxu0 0.0
    %1821 = vmatpush1.xpose.msra.mxu0 0.0
    %1822 = vmatprep.subr.mxu0 0.0
    %1823 = vmatpush1.xpose.msra.mxu0 0.0
    %1824 = vmatprep.subr.mxu0 0.0
    %1825 = vmatpush1.xpose.msra.mxu0 0.0
    %1826 = vmatprep.subr.mxu0 0.0
    %1827 = vmatpush1.xpose.msra.mxu0 0.0
    %1828 = vmatprep.subr.mxu0 0.0
    %1829 = vmatpush1.xpose.msra.mxu0 0.0
    %1830 = vmatprep.subr.mxu0 0.0
    %1831 = vmatpush1.xpose.msra.mxu0 0.0
    %1832 = vmatprep.mubr.f32.mxu0 0.0
    %1833 = vmatmul.mubr.f32.gmra.mrb[0].mxu0 %v1764
    %v1834 = vpop.f32.mrb[0].mxu0
    %v1835 = vadd.f32 0.0, %v1834
    %v1836 = vpop.f32.mrb[0].mxu0
    %1837 = vdwg.mxu0
    %1838 = vrot.lane.b32.xlu0 %v1745, 96
    %v1839 = vpop.permute.xlu0 %1838
    %v1840 = vsel %vm215, %v1745, 0
    %v1842 = vsel %vm215, %v1839, 0
    %1844 = vmatprep.subr.mxu0 0.0
    %1845 = vmatpush1.xpose.msra.mxu0 %v1842
    %1846 = vmatprep.subr.mxu0 0.0
    %1847 = vmatpush1.xpose.msra.mxu0 0.0
    %1848 = vmatprep.subr.mxu0 0.0
    %1849 = vmatpush1.xpose.msra.mxu0 0.0
    %1850 = vmatprep.subr.mxu0 0.0
    %1851 = vmatpush1.xpose.msra.mxu0 0.0
    %1852 = vmatprep.subr.mxu0 0.0
    %1853 = vmatpush1.xpose.msra.mxu0 0.0
    %1854 = vmatprep.subr.mxu0 0.0
    %1855 = vmatpush1.xpose.msra.mxu0 0.0
    %1856 = vmatprep.subr.mxu0 0.0
    %1857 = vmatpush1.xpose.msra.mxu0 0.0
    %1858 = vmatprep.subr.mxu0 0.0
    %1859 = vmatpush1.xpose.msra.mxu0 0.0
    %1860 = vmatprep.subr.mxu0 0.0
    %1861 = vmatpush1.xpose.msra.mxu0 0.0
    %1862 = vmatprep.subr.mxu0 0.0
    %1863 = vmatpush1.xpose.msra.mxu0 0.0
    %1864 = vmatprep.subr.mxu0 0.0
    %1865 = vmatpush1.xpose.msra.mxu0 0.0
    %1866 = vmatprep.subr.mxu0 0.0
    %1867 = vmatpush1.xpose.msra.mxu0 0.0
    %1868 = vmatprep.subr.mxu0 0.0
    %1869 = vmatpush1.xpose.msra.mxu0 0.0
    %1870 = vmatprep.subr.mxu0 0.0
    %1871 = vmatpush1.xpose.msra.mxu0 0.0
    %1872 = vmatprep.subr.mxu0 0.0
    %1873 = vmatpush1.xpose.msra.mxu0 0.0
    %1874 = vmatprep.subr.mxu0 0.0
    %1875 = vmatpush1.xpose.msra.mxu0 0.0
    %1876 = vmatprep.subr.mxu0 0.0
    %1877 = vmatpush1.xpose.msra.mxu0 0.0
    %1878 = vmatprep.subr.mxu0 0.0
    %1879 = vmatpush1.xpose.msra.mxu0 0.0
    %1880 = vmatprep.subr.mxu0 0.0
    %1881 = vmatpush1.xpose.msra.mxu0 0.0
    %1882 = vmatprep.subr.mxu0 0.0
    %1883 = vmatpush1.xpose.msra.mxu0 0.0
    %1884 = vmatprep.subr.mxu0 0.0
    %1885 = vmatpush1.xpose.msra.mxu0 0.0
    %1886 = vmatprep.subr.mxu0 0.0
    %1887 = vmatpush1.xpose.msra.mxu0 0.0
    %1888 = vmatprep.subr.mxu0 0.0
    %1889 = vmatpush1.xpose.msra.mxu0 0.0
    %1890 = vmatprep.subr.mxu0 0.0
    %1891 = vmatpush1.xpose.msra.mxu0 0.0
    %1892 = vmatprep.subr.mxu0 0.0
    %1893 = vmatpush1.xpose.msra.mxu0 0.0
    %1894 = vmatprep.subr.mxu0 0.0
    %1895 = vmatpush1.xpose.msra.mxu0 0.0
    %1896 = vmatprep.subr.mxu0 0.0
    %1897 = vmatpush1.xpose.msra.mxu0 0.0
    %1898 = vmatprep.subr.mxu0 0.0
    %1899 = vmatpush1.xpose.msra.mxu0 0.0
    %1900 = vmatprep.subr.mxu0 0.0
    %1901 = vmatpush1.xpose.msra.mxu0 0.0
    %1902 = vmatprep.subr.mxu0 0.0
    %1903 = vmatpush1.xpose.msra.mxu0 0.0
    %1904 = vmatprep.subr.mxu0 0.0
    %1905 = vmatpush1.xpose.msra.mxu0 0.0
    %1906 = vmatprep.subr.mxu0 0.0
    %1907 = vmatpush1.xpose.msra.mxu0 0.0
    %1908 = vmatprep.mubr.f32.mxu0 0.0
    %1909 = vmatmul.mubr.f32.gmra.mrb[0].mxu0 %v1840
    %v1910 = vpop.f32.mrb[0].mxu0
    %v1911 = vadd.f32 0.0, %v1910
    %v1912 = vpop.f32.mrb[0].mxu0
    %1913 = vdwg.mxu0
    %1914 = vrot.lane.b32.xlu0 %v1751, 96
    %v1915 = vpop.permute.xlu0 %1914
    %v1916 = vsel %vm215, %v1751, 0
    %v1918 = vsel %vm215, %v1915, 0
    %1920 = vmatprep.subr.mxu0 0.0
    %1921 = vmatpush1.xpose.msra.mxu0 %v1918
    %1922 = vmatprep.subr.mxu0 0.0
    %1923 = vmatpush1.xpose.msra.mxu0 0.0
    %1924 = vmatprep.subr.mxu0 0.0
    %1925 = vmatpush1.xpose.msra.mxu0 0.0
    %1926 = vmatprep.subr.mxu0 0.0
    %1927 = vmatpush1.xpose.msra.mxu0 0.0
    %1928 = vmatprep.subr.mxu0 0.0
    %1929 = vmatpush1.xpose.msra.mxu0 0.0
    %1930 = vmatprep.subr.mxu0 0.0
    %1931 = vmatpush1.xpose.msra.mxu0 0.0
    %1932 = vmatprep.subr.mxu0 0.0
    %1933 = vmatpush1.xpose.msra.mxu0 0.0
    %1934 = vmatprep.subr.mxu0 0.0
    %1935 = vmatpush1.xpose.msra.mxu0 0.0
    %1936 = vmatprep.subr.mxu0 0.0
    %1937 = vmatpush1.xpose.msra.mxu0 0.0
    %1938 = vmatprep.subr.mxu0 0.0
    %1939 = vmatpush1.xpose.msra.mxu0 0.0
    %1940 = vmatprep.subr.mxu0 0.0
    %1941 = vmatpush1.xpose.msra.mxu0 0.0
    %1942 = vmatprep.subr.mxu0 0.0
    %1943 = vmatpush1.xpose.msra.mxu0 0.0
    %1944 = vmatprep.subr.mxu0 0.0
    %1945 = vmatpush1.xpose.msra.mxu0 0.0
    %1946 = vmatprep.subr.mxu0 0.0
    %1947 = vmatpush1.xpose.msra.mxu0 0.0
    %1948 = vmatprep.subr.mxu0 0.0
    %1949 = vmatpush1.xpose.msra.mxu0 0.0
    %1950 = vmatprep.subr.mxu0 0.0
    %1951 = vmatpush1.xpose.msra.mxu0 0.0
    %1952 = vmatprep.subr.mxu0 0.0
    %1953 = vmatpush1.xpose.msra.mxu0 0.0
    %1954 = vmatprep.subr.mxu0 0.0
    %1955 = vmatpush1.xpose.msra.mxu0 0.0
    %1956 = vmatprep.subr.mxu0 0.0
    %1957 = vmatpush1.xpose.msra.mxu0 0.0
    %1958 = vmatprep.subr.mxu0 0.0
    %1959 = vmatpush1.xpose.msra.mxu0 0.0
    %1960 = vmatprep.subr.mxu0 0.0
    %1961 = vmatpush1.xpose.msra.mxu0 0.0
    %1962 = vmatprep.subr.mxu0 0.0
    %1963 = vmatpush1.xpose.msra.mxu0 0.0
    %1964 = vmatprep.subr.mxu0 0.0
    %1965 = vmatpush1.xpose.msra.mxu0 0.0
    %1966 = vmatprep.subr.mxu0 0.0
    %1967 = vmatpush1.xpose.msra.mxu0 0.0
    %1968 = vmatprep.subr.mxu0 0.0
    %1969 = vmatpush1.xpose.msra.mxu0 0.0
    %1970 = vmatprep.subr.mxu0 0.0
    %1971 = vmatpush1.xpose.msra.mxu0 0.0
    %1972 = vmatprep.subr.mxu0 0.0
    %1973 = vmatpush1.xpose.msra.mxu0 0.0
    %1974 = vmatprep.subr.mxu0 0.0
    %1975 = vmatpush1.xpose.msra.mxu0 0.0
    %1976 = vmatprep.subr.mxu0 0.0
    %1977 = vmatpush1.xpose.msra.mxu0 0.0
    %1978 = vmatprep.subr.mxu0 0.0
    %1979 = vmatpush1.xpose.msra.mxu0 0.0
    %1980 = vmatprep.subr.mxu0 0.0
    %1981 = vmatpush1.xpose.msra.mxu0 0.0
    %1982 = vmatprep.subr.mxu0 0.0
    %1983 = vmatpush1.xpose.msra.mxu0 0.0
    %1984 = vmatprep.mubr.f32.mxu0 0.0
    %1985 = vmatmul.mubr.f32.gmra.mrb[0].mxu0 %v1916
    %v1986 = vpop.f32.mrb[0].mxu0
    %v1987 = vadd.f32 0.0, %v1986
    %v1988 = vpop.f32.mrb[0].mxu0
    %1989 = vdwg.mxu0
    %1990 = vrot.lane.b32.xlu0 %v1753, 96
    %v1991 = vpop.permute.xlu0 %1990
    %v1992 = vsel %vm215, %v1753, 0
    %v1994 = vsel %vm215, %v1991, 0
    %1996 = vmatprep.subr.mxu0 0.0
    %1997 = vmatpush1.xpose.msra.mxu0 %v1994
    %1998 = vmatprep.subr.mxu0 0.0
    %1999 = vmatpush1.xpose.msra.mxu0 0.0
    %2000 = vmatprep.subr.mxu0 0.0
    %2001 = vmatpush1.xpose.msra.mxu0 0.0
    %2002 = vmatprep.subr.mxu0 0.0
    %2003 = vmatpush1.xpose.msra.mxu0 0.0
    %2004 = vmatprep.subr.mxu0 0.0
    %2005 = vmatpush1.xpose.msra.mxu0 0.0
    %2006 = vmatprep.subr.mxu0 0.0
    %2007 = vmatpush1.xpose.msra.mxu0 0.0
    %2008 = vmatprep.subr.mxu0 0.0
    %2009 = vmatpush1.xpose.msra.mxu0 0.0
    %2010 = vmatprep.subr.mxu0 0.0
    %2011 = vmatpush1.xpose.msra.mxu0 0.0
    %2012 = vmatprep.subr.mxu0 0.0
    %2013 = vmatpush1.xpose.msra.mxu0 0.0
    %2014 = vmatprep.subr.mxu0 0.0
    %2015 = vmatpush1.xpose.msra.mxu0 0.0
    %2016 = vmatprep.subr.mxu0 0.0
    %2017 = vmatpush1.xpose.msra.mxu0 0.0
    %2018 = vmatprep.subr.mxu0 0.0
    %2019 = vmatpush1.xpose.msra.mxu0 0.0
    %2020 = vmatprep.subr.mxu0 0.0
    %2021 = vmatpush1.xpose.msra.mxu0 0.0
    %2022 = vmatprep.subr.mxu0 0.0
    %2023 = vmatpush1.xpose.msra.mxu0 0.0
    %2024 = vmatprep.subr.mxu0 0.0
    %2025 = vmatpush1.xpose.msra.mxu0 0.0
    %2026 = vmatprep.subr.mxu0 0.0
    %2027 = vmatpush1.xpose.msra.mxu0 0.0
    %2028 = vmatprep.subr.mxu0 0.0
    %2029 = vmatpush1.xpose.msra.mxu0 0.0
    %2030 = vmatprep.subr.mxu0 0.0
    %2031 = vmatpush1.xpose.msra.mxu0 0.0
    %2032 = vmatprep.subr.mxu0 0.0
    %2033 = vmatpush1.xpose.msra.mxu0 0.0
    %2034 = vmatprep.subr.mxu0 0.0
    %2035 = vmatpush1.xpose.msra.mxu0 0.0
    %2036 = vmatprep.subr.mxu0 0.0
    %2037 = vmatpush1.xpose.msra.mxu0 0.0
    %2038 = vmatprep.subr.mxu0 0.0
    %2039 = vmatpush1.xpose.msra.mxu0 0.0
    %2040 = vmatprep.subr.mxu0 0.0
    %2041 = vmatpush1.xpose.msra.mxu0 0.0
    %2042 = vmatprep.subr.mxu0 0.0
    %2043 = vmatpush1.xpose.msra.mxu0 0.0
    %2044 = vmatprep.subr.mxu0 0.0
    %2045 = vmatpush1.xpose.msra.mxu0 0.0
    %2046 = vmatprep.subr.mxu0 0.0
    %2047 = vmatpush1.xpose.msra.mxu0 0.0
    %2048 = vmatprep.subr.mxu0 0.0
    %2049 = vmatpush1.xpose.msra.mxu0 0.0
    %2050 = vmatprep.subr.mxu0 0.0
    %2051 = vmatpush1.xpose.msra.mxu0 0.0
    %2052 = vmatprep.subr.mxu0 0.0
    %2053 = vmatpush1.xpose.msra.mxu0 0.0
    %2054 = vmatprep.subr.mxu0 0.0
    %2055 = vmatpush1.xpose.msra.mxu0 0.0
    %2056 = vmatprep.subr.mxu0 0.0
    %2057 = vmatpush1.xpose.msra.mxu0 0.0
    %2058 = vmatprep.subr.mxu0 0.0
    %2059 = vmatpush1.xpose.msra.mxu0 0.0
    %2060 = vmatprep.mubr.f32.mxu0 0.0
    %2061 = vmatmul.mubr.f32.gmra.mrb[0].mxu0 %v1992
    %v2062 = vpop.f32.mrb[0].mxu0
    %v2063 = vadd.f32 0.0, %v2062
    %v2064 = vpop.f32.mrb[0].mxu0
    %2065 = vdwg.mxu0
    %2066 = vrot.lane.b32.xlu0 %v1755, 96
    %v2067 = vpop.permute.xlu0 %2066
    %v2068 = vsel %vm215, %v1755, 0
    %v2070 = vsel %vm215, %v2067, 0
    %2072 = vmatprep.subr.mxu0 0.0
    %2073 = vmatpush1.xpose.msra.mxu0 %v2070
    %2074 = vmatprep.subr.mxu0 0.0
    %2075 = vmatpush1.xpose.msra.mxu0 0.0
    %2076 = vmatprep.subr.mxu0 0.0
    %2077 = vmatpush1.xpose.msra.mxu0 0.0
    %2078 = vmatprep.subr.mxu0 0.0
    %2079 = vmatpush1.xpose.msra.mxu0 0.0
    %2080 = vmatprep.subr.mxu0 0.0
    %2081 = vmatpush1.xpose.msra.mxu0 0.0
    %2082 = vmatprep.subr.mxu0 0.0
    %2083 = vmatpush1.xpose.msra.mxu0 0.0
    %2084 = vmatprep.subr.mxu0 0.0
    %2085 = vmatpush1.xpose.msra.mxu0 0.0
    %2086 = vmatprep.subr.mxu0 0.0
    %2087 = vmatpush1.xpose.msra.mxu0 0.0
    %2088 = vmatprep.subr.mxu0 0.0
    %2089 = vmatpush1.xpose.msra.mxu0 0.0
    %2090 = vmatprep.subr.mxu0 0.0
    %2091 = vmatpush1.xpose.msra.mxu0 0.0
    %2092 = vmatprep.subr.mxu0 0.0
    %2093 = vmatpush1.xpose.msra.mxu0 0.0
    %2094 = vmatprep.subr.mxu0 0.0
    %2095 = vmatpush1.xpose.msra.mxu0 0.0
    %2096 = vmatprep.subr.mxu0 0.0
    %2097 = vmatpush1.xpose.msra.mxu0 0.0
    %2098 = vmatprep.subr.mxu0 0.0
    %2099 = vmatpush1.xpose.msra.mxu0 0.0
    %2100 = vmatprep.subr.mxu0 0.0
    %2101 = vmatpush1.xpose.msra.mxu0 0.0
    %2102 = vmatprep.subr.mxu0 0.0
    %2103 = vmatpush1.xpose.msra.mxu0 0.0
    %2104 = vmatprep.subr.mxu0 0.0
    %2105 = vmatpush1.xpose.msra.mxu0 0.0
    %2106 = vmatprep.subr.mxu0 0.0
    %2107 = vmatpush1.xpose.msra.mxu0 0.0
    %2108 = vmatprep.subr.mxu0 0.0
    %2109 = vmatpush1.xpose.msra.mxu0 0.0
    %2110 = vmatprep.subr.mxu0 0.0
    %2111 = vmatpush1.xpose.msra.mxu0 0.0
    %2112 = vmatprep.subr.mxu0 0.0
    %2113 = vmatpush1.xpose.msra.mxu0 0.0
    %2114 = vmatprep.subr.mxu0 0.0
    %2115 = vmatpush1.xpose.msra.mxu0 0.0
    %2116 = vmatprep.subr.mxu0 0.0
    %2117 = vmatpush1.xpose.msra.mxu0 0.0
    %2118 = vmatprep.subr.mxu0 0.0
    %2119 = vmatpush1.xpose.msra.mxu0 0.0
    %2120 = vmatprep.subr.mxu0 0.0
    %2121 = vmatpush1.xpose.msra.mxu0 0.0
    %2122 = vmatprep.subr.mxu0 0.0
    %2123 = vmatpush1.xpose.msra.mxu0 0.0
    %2124 = vmatprep.subr.mxu0 0.0
    %2125 = vmatpush1.xpose.msra.mxu0 0.0
    %2126 = vmatprep.subr.mxu0 0.0
    %2127 = vmatpush1.xpose.msra.mxu0 0.0
    %2128 = vmatprep.subr.mxu0 0.0
    %2129 = vmatpush1.xpose.msra.mxu0 0.0
    %2130 = vmatprep.subr.mxu0 0.0
    %2131 = vmatpush1.xpose.msra.mxu0 0.0
    %2132 = vmatprep.subr.mxu0 0.0
    %2133 = vmatpush1.xpose.msra.mxu0 0.0
    %2134 = vmatprep.subr.mxu0 0.0
    %2135 = vmatpush1.xpose.msra.mxu0 0.0
    %2136 = vmatprep.mubr.f32.mxu0 0.0
    %2137 = vmatmul.mubr.f32.gmra.mrb[0].mxu0 %v2068
    %v2138 = vpop.f32.mrb[0].mxu0
    %v2139 = vadd.f32 0.0, %v2138
    %v2140 = vpop.f32.mrb[0].mxu0
    %2141 = vdwg.mxu0
    %2142 = vrot.lane.b32.xlu0 %v1757, 96
    %v2143 = vpop.permute.xlu0 %2142
    %v2144 = vsel %vm215, %v1757, 0
    %v2146 = vsel %vm215, %v2143, 0
    %2148 = vmatprep.subr.mxu0 0.0
    %2149 = vmatpush1.xpose.msra.mxu0 %v2146
    %2150 = vmatprep.subr.mxu0 0.0
    %2151 = vmatpush1.xpose.msra.mxu0 0.0
    %2152 = vmatprep.subr.mxu0 0.0
    %2153 = vmatpush1.xpose.msra.mxu0 0.0
    %2154 = vmatprep.subr.mxu0 0.0
    %2155 = vmatpush1.xpose.msra.mxu0 0.0
    %2156 = vmatprep.subr.mxu0 0.0
    %2157 = vmatpush1.xpose.msra.mxu0 0.0
    %2158 = vmatprep.subr.mxu0 0.0
    %2159 = vmatpush1.xpose.msra.mxu0 0.0
    %2160 = vmatprep.subr.mxu0 0.0
    %2161 = vmatpush1.xpose.msra.mxu0 0.0
    %2162 = vmatprep.subr.mxu0 0.0
    %2163 = vmatpush1.xpose.msra.mxu0 0.0
    %2164 = vmatprep.subr.mxu0 0.0
    %2165 = vmatpush1.xpose.msra.mxu0 0.0
    %2166 = vmatprep.subr.mxu0 0.0
    %2167 = vmatpush1.xpose.msra.mxu0 0.0
    %2168 = vmatprep.subr.mxu0 0.0
    %2169 = vmatpush1.xpose.msra.mxu0 0.0
    %2170 = vmatprep.subr.mxu0 0.0
    %2171 = vmatpush1.xpose.msra.mxu0 0.0
    %2172 = vmatprep.subr.mxu0 0.0
    %2173 = vmatpush1.xpose.msra.mxu0 0.0
    %2174 = vmatprep.subr.mxu0 0.0
    %2175 = vmatpush1.xpose.msra.mxu0 0.0
    %2176 = vmatprep.subr.mxu0 0.0
    %2177 = vmatpush1.xpose.msra.mxu0 0.0
    %2178 = vmatprep.subr.mxu0 0.0
    %2179 = vmatpush1.xpose.msra.mxu0 0.0
    %2180 = vmatprep.subr.mxu0 0.0
    %2181 = vmatpush1.xpose.msra.mxu0 0.0
    %2182 = vmatprep.subr.mxu0 0.0
    %2183 = vmatpush1.xpose.msra.mxu0 0.0
    %2184 = vmatprep.subr.mxu0 0.0
    %2185 = vmatpush1.xpose.msra.mxu0 0.0
    %2186 = vmatprep.subr.mxu0 0.0
    %2187 = vmatpush1.xpose.msra.mxu0 0.0
    %2188 = vmatprep.subr.mxu0 0.0
    %2189 = vmatpush1.xpose.msra.mxu0 0.0
    %2190 = vmatprep.subr.mxu0 0.0
    %2191 = vmatpush1.xpose.msra.mxu0 0.0
    %2192 = vmatprep.subr.mxu0 0.0
    %2193 = vmatpush1.xpose.msra.mxu0 0.0
    %2194 = vmatprep.subr.mxu0 0.0
    %2195 = vmatpush1.xpose.msra.mxu0 0.0
    %2196 = vmatprep.subr.mxu0 0.0
    %2197 = vmatpush1.xpose.msra.mxu0 0.0
    %2198 = vmatprep.subr.mxu0 0.0
    %2199 = vmatpush1.xpose.msra.mxu0 0.0
    %2200 = vmatprep.subr.mxu0 0.0
    %2201 = vmatpush1.xpose.msra.mxu0 0.0
    %2202 = vmatprep.subr.mxu0 0.0
    %2203 = vmatpush1.xpose.msra.mxu0 0.0
    %2204 = vmatprep.subr.mxu0 0.0
    %2205 = vmatpush1.xpose.msra.mxu0 0.0
    %2206 = vmatprep.subr.mxu0 0.0
    %2207 = vmatpush1.xpose.msra.mxu0 0.0
    %2208 = vmatprep.subr.mxu0 0.0
    %2209 = vmatpush1.xpose.msra.mxu0 0.0
    %2210 = vmatprep.subr.mxu0 0.0
    %2211 = vmatpush1.xpose.msra.mxu0 0.0
    %2212 = vmatprep.mubr.f32.mxu0 0.0
    %2213 = vmatmul.mubr.f32.gmra.mrb[0].mxu0 %v2144
    %v2214 = vpop.f32.mrb[0].mxu0
    %v2215 = vadd.f32 0.0, %v2214
    %v2216 = vpop.f32.mrb[0].mxu0
    %2217 = vdwg.mxu0
    %2218 = vrot.lane.b32.xlu0 %v1759, 96
    %v2219 = vpop.permute.xlu0 %2218
    %v2220 = vsel %vm215, %v1759, 0
    %v2222 = vsel %vm215, %v2219, 0
    %2224 = vmatprep.subr.mxu0 0.0
    %2225 = vmatpush1.xpose.msra.mxu0 %v2222
    %2226 = vmatprep.subr.mxu0 0.0
    %2227 = vmatpush1.xpose.msra.mxu0 0.0
    %2228 = vmatprep.subr.mxu0 0.0
    %2229 = vmatpush1.xpose.msra.mxu0 0.0
    %2230 = vmatprep.subr.mxu0 0.0
    %2231 = vmatpush1.xpose.msra.mxu0 0.0
    %2232 = vmatprep.subr.mxu0 0.0
    %2233 = vmatpush1.xpose.msra.mxu0 0.0
    %2234 = vmatprep.subr.mxu0 0.0
    %2235 = vmatpush1.xpose.msra.mxu0 0.0
    %2236 = vmatprep.subr.mxu0 0.0
    %2237 = vmatpush1.xpose.msra.mxu0 0.0
    %2238 = vmatprep.subr.mxu0 0.0
    %2239 = vmatpush1.xpose.msra.mxu0 0.0
    %2240 = vmatprep.subr.mxu0 0.0
    %2241 = vmatpush1.xpose.msra.mxu0 0.0
    %2242 = vmatprep.subr.mxu0 0.0
    %2243 = vmatpush1.xpose.msra.mxu0 0.0
    %2244 = vmatprep.subr.mxu0 0.0
    %2245 = vmatpush1.xpose.msra.mxu0 0.0
    %2246 = vmatprep.subr.mxu0 0.0
    %2247 = vmatpush1.xpose.msra.mxu0 0.0
    %2248 = vmatprep.subr.mxu0 0.0
    %2249 = vmatpush1.xpose.msra.mxu0 0.0
    %2250 = vmatprep.subr.mxu0 0.0
    %2251 = vmatpush1.xpose.msra.mxu0 0.0
    %2252 = vmatprep.subr.mxu0 0.0
    %2253 = vmatpush1.xpose.msra.mxu0 0.0
    %2254 = vmatprep.subr.mxu0 0.0
    %2255 = vmatpush1.xpose.msra.mxu0 0.0
    %2256 = vmatprep.subr.mxu0 0.0
    %2257 = vmatpush1.xpose.msra.mxu0 0.0
    %2258 = vmatprep.subr.mxu0 0.0
    %2259 = vmatpush1.xpose.msra.mxu0 0.0
    %2260 = vmatprep.subr.mxu0 0.0
    %2261 = vmatpush1.xpose.msra.mxu0 0.0
    %2262 = vmatprep.subr.mxu0 0.0
    %2263 = vmatpush1.xpose.msra.mxu0 0.0
    %2264 = vmatprep.subr.mxu0 0.0
    %2265 = vmatpush1.xpose.msra.mxu0 0.0
    %2266 = vmatprep.subr.mxu0 0.0
    %2267 = vmatpush1.xpose.msra.mxu0 0.0
    %2268 = vmatprep.subr.mxu0 0.0
    %2269 = vmatpush1.xpose.msra.mxu0 0.0
    %2270 = vmatprep.subr.mxu0 0.0
    %2271 = vmatpush1.xpose.msra.mxu0 0.0
    %2272 = vmatprep.subr.mxu0 0.0
    %2273 = vmatpush1.xpose.msra.mxu0 0.0
    %2274 = vmatprep.subr.mxu0 0.0
    %2275 = vmatpush1.xpose.msra.mxu0 0.0
    %2276 = vmatprep.subr.mxu0 0.0
    %2277 = vmatpush1.xpose.msra.mxu0 0.0
    %2278 = vmatprep.subr.mxu0 0.0
    %2279 = vmatpush1.xpose.msra.mxu0 0.0
    %2280 = vmatprep.subr.mxu0 0.0
    %2281 = vmatpush1.xpose.msra.mxu0 0.0
    %2282 = vmatprep.subr.mxu0 0.0
    %2283 = vmatpush1.xpose.msra.mxu0 0.0
    %2284 = vmatprep.subr.mxu0 0.0
    %2285 = vmatpush1.xpose.msra.mxu0 0.0
    %2286 = vmatprep.subr.mxu0 0.0
    %2287 = vmatpush1.xpose.msra.mxu0 0.0
    %2288 = vmatprep.mubr.f32.mxu0 0.0
    %2289 = vmatmul.mubr.f32.gmra.mrb[0].mxu0 %v2220
    %v2290 = vpop.f32.mrb[0].mxu0
    %v2291 = vadd.f32 0.0, %v2290
    %v2292 = vpop.f32.mrb[0].mxu0
    %2293 = vdwg.mxu0
    %2294 = vrot.lane.b32.xlu0 %v1761, 96
    %v2295 = vpop.permute.xlu0 %2294
    %v2296 = vsel %vm215, %v1761, 0
    %v2298 = vsel %vm215, %v2295, 0
    %2300 = vmatprep.subr.mxu0 0.0
    %2301 = vmatpush1.xpose.msra.mxu0 %v2298
    %2302 = vmatprep.subr.mxu0 0.0
    %2303 = vmatpush1.xpose.msra.mxu0 0.0
    %2304 = vmatprep.subr.mxu0 0.0
    %2305 = vmatpush1.xpose.msra.mxu0 0.0
    %2306 = vmatprep.subr.mxu0 0.0
    %2307 = vmatpush1.xpose.msra.mxu0 0.0
    %2308 = vmatprep.subr.mxu0 0.0
    %2309 = vmatpush1.xpose.msra.mxu0 0.0
    %2310 = vmatprep.subr.mxu0 0.0
    %2311 = vmatpush1.xpose.msra.mxu0 0.0
    %2312 = vmatprep.subr.mxu0 0.0
    %2313 = vmatpush1.xpose.msra.mxu0 0.0
    %2314 = vmatprep.subr.mxu0 0.0
    %2315 = vmatpush1.xpose.msra.mxu0 0.0
    %2316 = vmatprep.subr.mxu0 0.0
    %2317 = vmatpush1.xpose.msra.mxu0 0.0
    %2318 = vmatprep.subr.mxu0 0.0
    %2319 = vmatpush1.xpose.msra.mxu0 0.0
    %2320 = vmatprep.subr.mxu0 0.0
    %2321 = vmatpush1.xpose.msra.mxu0 0.0
    %2322 = vmatprep.subr.mxu0 0.0
    %2323 = vmatpush1.xpose.msra.mxu0 0.0
    %2324 = vmatprep.subr.mxu0 0.0
    %2325 = vmatpush1.xpose.msra.mxu0 0.0
    %2326 = vmatprep.subr.mxu0 0.0
    %2327 = vmatpush1.xpose.msra.mxu0 0.0
    %2328 = vmatprep.subr.mxu0 0.0
    %2329 = vmatpush1.xpose.msra.mxu0 0.0
    %2330 = vmatprep.subr.mxu0 0.0
    %2331 = vmatpush1.xpose.msra.mxu0 0.0
    %2332 = vmatprep.subr.mxu0 0.0
    %2333 = vmatpush1.xpose.msra.mxu0 0.0
    %2334 = vmatprep.subr.mxu0 0.0
    %2335 = vmatpush1.xpose.msra.mxu0 0.0
    %2336 = vmatprep.subr.mxu0 0.0
    %2337 = vmatpush1.xpose.msra.mxu0 0.0
    %2338 = vmatprep.subr.mxu0 0.0
    %2339 = vmatpush1.xpose.msra.mxu0 0.0
    %2340 = vmatprep.subr.mxu0 0.0
    %2341 = vmatpush1.xpose.msra.mxu0 0.0
    %2342 = vmatprep.subr.mxu0 0.0
    %2343 = vmatpush1.xpose.msra.mxu0 0.0
    %2344 = vmatprep.subr.mxu0 0.0
    %2345 = vmatpush1.xpose.msra.mxu0 0.0
    %2346 = vmatprep.subr.mxu0 0.0
    %2347 = vmatpush1.xpose.msra.mxu0 0.0
    %2348 = vmatprep.subr.mxu0 0.0
    %2349 = vmatpush1.xpose.msra.mxu0 0.0
    %2350 = vmatprep.subr.mxu0 0.0
    %2351 = vmatpush1.xpose.msra.mxu0 0.0
    %2352 = vmatprep.subr.mxu0 0.0
    %2353 = vmatpush1.xpose.msra.mxu0 0.0
    %2354 = vmatprep.subr.mxu0 0.0
    %2355 = vmatpush1.xpose.msra.mxu0 0.0
    %2356 = vmatprep.subr.mxu0 0.0
    %2357 = vmatpush1.xpose.msra.mxu0 0.0
    %2358 = vmatprep.subr.mxu0 0.0
    %2359 = vmatpush1.xpose.msra.mxu0 0.0
    %2360 = vmatprep.subr.mxu0 0.0
    %2361 = vmatpush1.xpose.msra.mxu0 0.0
    %2362 = vmatprep.subr.mxu0 0.0
    %2363 = vmatpush1.xpose.msra.mxu0 0.0
    %2364 = vmatprep.mubr.f32.mxu0 0.0
    %2365 = vmatmul.mubr.f32.gmra.mrb[0].mxu0 %v2296
    %v2366 = vpop.f32.mrb[0].mxu0
    %v2367 = vadd.f32 0.0, %v2366
    %v2368 = vpop.f32.mrb[0].mxu0
    %2369 = vdwg.mxu0
    %v2370 = vmul.f32 %v1835, 0.17677669
    %v2371 = vmul.f32 %v1911, 0.17677669
    %v2372 = vmul.f32 %v1987, 0.17677669
    %v2373 = vmul.f32 %v2063, 0.17677669
    %v2374 = vmul.f32 %v2139, 0.17677669
    %v2375 = vmul.f32 %v2215, 0.17677669
    %v2376 = vmul.f32 %v2291, 0.17677669
    %v2377 = vmul.f32 %v2367, 0.17677669
    %v2378 = vsel %vm215, %v2370, -inf
    %2379 = vmax.xlane.f32.xlu0 %v2378
    %v2380 = vpop.xlane.xlu0 %2379
    %v2381 = vsel %vm215, %v2371, -inf
    %2382 = vmax.xlane.f32.xlu0 %v2381
    %v2383 = vpop.xlane.xlu0 %2382
    %v2384 = vsel %vm215, %v2372, -inf
    %2385 = vmax.xlane.f32.xlu0 %v2384
    %v2386 = vpop.xlane.xlu0 %2385
    %v2387 = vsel %vm215, %v2373, -inf
    %2388 = vmax.xlane.f32.xlu0 %v2387
    %v2389 = vpop.xlane.xlu0 %2388
    %v2390 = vsel %vm215, %v2374, -inf
    %2391 = vmax.xlane.f32.xlu0 %v2390
    %v2392 = vpop.xlane.xlu0 %2391
    %v2393 = vsel %vm215, %v2375, -inf
    %2394 = vmax.xlane.f32.xlu0 %v2393
    %v2395 = vpop.xlane.xlu0 %2394
    %v2396 = vsel %vm215, %v2376, -inf
    %2397 = vmax.xlane.f32.xlu0 %v2396
    %v2398 = vpop.xlane.xlu0 %2397
    %v2399 = vsel %vm215, %v2377, -inf
    %2400 = vmax.xlane.f32.xlu0 %v2399
    %v2401 = vpop.xlane.xlu0 %2400
    %v2402 = vsub.f32 %v2370, %v2380
    %v2403 = vsub.f32 %v2371, %v2383
    %v2404 = vsub.f32 %v2372, %v2386
    %v2405 = vsub.f32 %v2373, %v2389
    %v2406 = vsub.f32 %v2374, %v2392
    %v2407 = vsub.f32 %v2375, %v2395
    %v2408 = vsub.f32 %v2376, %v2398
    %v2409 = vsub.f32 %v2377, %v2401
    %v2410 = vmul.f32 %v2402, 1.442695
    %v2411 = vpow.pop %v2410
    %v2412 = vmul.f32 %v2403, 1.442695
    %v2413 = vpow.pop %v2412
    %v2414 = vmul.f32 %v2404, 1.442695
    %v2415 = vpow.pop %v2414
    %v2416 = vmul.f32 %v2405, 1.442695
    %v2417 = vpow.pop %v2416
    %v2418 = vmul.f32 %v2406, 1.442695
    %v2419 = vpow.pop %v2418
    %v2420 = vmul.f32 %v2407, 1.442695
    %v2421 = vpow.pop %v2420
    %v2422 = vmul.f32 %v2408, 1.442695
    %v2423 = vpow.pop %v2422
    %v2424 = vmul.f32 %v2409, 1.442695
    %v2425 = vpow.pop %v2424
    %v2426 = vsel %vm215, %v2411, 0.0
    %2427 = vadd.xlane.f32.xlu0 %v2426
    %v2428 = vpop.xlane.xlu0 %2427
    %v2429 = vsel %vm215, %v2413, 0.0
    %2430 = vadd.xlane.f32.xlu0 %v2429
    %v2431 = vpop.xlane.xlu0 %2430
    %v2432 = vsel %vm215, %v2415, 0.0
    %2433 = vadd.xlane.f32.xlu0 %v2432
    %v2434 = vpop.xlane.xlu0 %2433
    %v2435 = vsel %vm215, %v2417, 0.0
    %2436 = vadd.xlane.f32.xlu0 %v2435
    %v2437 = vpop.xlane.xlu0 %2436
    %v2438 = vsel %vm215, %v2419, 0.0
    %2439 = vadd.xlane.f32.xlu0 %v2438
    %v2440 = vpop.xlane.xlu0 %2439
    %v2441 = vsel %vm215, %v2421, 0.0
    %2442 = vadd.xlane.f32.xlu0 %v2441
    %v2443 = vpop.xlane.xlu0 %2442
    %v2444 = vsel %vm215, %v2423, 0.0
    %2445 = vadd.xlane.f32.xlu0 %v2444
    %v2446 = vpop.xlane.xlu0 %2445
    %v2447 = vsel %vm215, %v2425, 0.0
    %2448 = vadd.xlane.f32.xlu0 %v2447
    %v2449 = vpop.xlane.xlu0 %2448
    %v2450 = vrcp.pop %v2428
    %v2451 = vmul.f32 %v2411, %v2450
    %v2452 = vrcp.pop %v2431
    %v2453 = vmul.f32 %v2413, %v2452
    %v2454 = vrcp.pop %v2434
    %v2455 = vmul.f32 %v2415, %v2454
    %v2456 = vrcp.pop %v2437
    %v2457 = vmul.f32 %v2417, %v2456
    %v2458 = vrcp.pop %v2440
    %v2459 = vmul.f32 %v2419, %v2458
    %v2460 = vrcp.pop %v2443
    %v2461 = vmul.f32 %v2421, %v2460
    %v2462 = vrcp.pop %v2446
    %v2463 = vmul.f32 %v2423, %v2462
    %v2464 = vrcp.pop %v2449
    %v2465 = vmul.f32 %v2425, %v2464
    %2466 = vrot.lane.b32.xlu0 %v1740, 64
    %v2467 = vpop.permute.xlu0 %2466
    %v2470 = vsel %vm215, %v2451, 0
    %2472 = vmatprep.subr.mxu0 0.0
    %2473 = vmatpush1.msra.mxu0 %v2467
    %2474 = vmatprep.subr.mxu0 0.0
    %2475 = vmatpush1.msra.mxu0 0.0
    %2476 = vmatprep.subr.mxu0 0.0
    %2477 = vmatpush1.msra.mxu0 0.0
    %2478 = vmatprep.subr.mxu0 0.0
    %2479 = vmatpush1.msra.mxu0 0.0
    %2480 = vmatprep.subr.mxu0 0.0
    %2481 = vmatpush1.msra.mxu0 0.0
    %2482 = vmatprep.subr.mxu0 0.0
    %2483 = vmatpush1.msra.mxu0 0.0
    %2484 = vmatprep.subr.mxu0 0.0
    %2485 = vmatpush1.msra.mxu0 0.0
    %2486 = vmatprep.subr.mxu0 0.0
    %2487 = vmatpush1.msra.mxu0 0.0
    %2488 = vmatprep.subr.mxu0 0.0
    %2489 = vmatpush1.msra.mxu0 0.0
    %2490 = vmatprep.subr.mxu0 0.0
    %2491 = vmatpush1.msra.mxu0 0.0
    %2492 = vmatprep.subr.mxu0 0.0
    %2493 = vmatpush1.msra.mxu0 0.0
    %2494 = vmatprep.subr.mxu0 0.0
    %2495 = vmatpush1.msra.mxu0 0.0
    %2496 = vmatprep.subr.mxu0 0.0
    %2497 = vmatpush1.msra.mxu0 0.0
    %2498 = vmatprep.subr.mxu0 0.0
    %2499 = vmatpush1.msra.mxu0 0.0
    %2500 = vmatprep.subr.mxu0 0.0
    %2501 = vmatpush1.msra.mxu0 0.0
    %2502 = vmatprep.subr.mxu0 0.0
    %2503 = vmatpush1.msra.mxu0 0.0
    %2504 = vmatprep.subr.mxu0 0.0
    %2505 = vmatpush1.msra.mxu0 0.0
    %2506 = vmatprep.subr.mxu0 0.0
    %2507 = vmatpush1.msra.mxu0 0.0
    %2508 = vmatprep.subr.mxu0 0.0
    %2509 = vmatpush1.msra.mxu0 0.0
    %2510 = vmatprep.subr.mxu0 0.0
    %2511 = vmatpush1.msra.mxu0 0.0
    %2512 = vmatprep.subr.mxu0 0.0
    %2513 = vmatpush1.msra.mxu0 0.0
    %2514 = vmatprep.subr.mxu0 0.0
    %2515 = vmatpush1.msra.mxu0 0.0
    %2516 = vmatprep.subr.mxu0 0.0
    %2517 = vmatpush1.msra.mxu0 0.0
    %2518 = vmatprep.subr.mxu0 0.0
    %2519 = vmatpush1.msra.mxu0 0.0
    %2520 = vmatprep.subr.mxu0 0.0
    %2521 = vmatpush1.msra.mxu0 0.0
    %2522 = vmatprep.subr.mxu0 0.0
    %2523 = vmatpush1.msra.mxu0 0.0
    %2524 = vmatprep.subr.mxu0 0.0
    %2525 = vmatpush1.msra.mxu0 0.0
    %2526 = vmatprep.subr.mxu0 0.0
    %2527 = vmatpush1.msra.mxu0 0.0
    %2528 = vmatprep.subr.mxu0 0.0
    %2529 = vmatpush1.msra.mxu0 0.0
    %2530 = vmatprep.subr.mxu0 0.0
    %2531 = vmatpush1.msra.mxu0 0.0
    %2532 = vmatprep.subr.mxu0 0.0
    %2533 = vmatpush1.msra.mxu0 0.0
    %2534 = vmatprep.subr.mxu0 0.0
    %2535 = vmatpush1.msra.mxu0 0.0
    %2536 = vmatprep.mubr.f32.mxu0 0.0
    %2537 = vmatmul.mubr.f32.gmra.mrb[0].mxu0 %v2470
    %v2538 = vpop.f32.mrb[0].mxu0
    %v2539 = vadd.f32 0.0, %v2538
    %v2540 = vpop.f32.mrb[0].mxu0
    %2541 = vdwg.mxu0
    %2542 = vrot.lane.b32.xlu0 %v1745, 64
    %v2543 = vpop.permute.xlu0 %2542
    %v2546 = vsel %vm215, %v2453, 0
    %2548 = vmatprep.subr.mxu0 0.0
    %2549 = vmatpush1.msra.mxu0 %v2543
    %2550 = vmatprep.subr.mxu0 0.0
    %2551 = vmatpush1.msra.mxu0 0.0
    %2552 = vmatprep.subr.mxu0 0.0
    %2553 = vmatpush1.msra.mxu0 0.0
    %2554 = vmatprep.subr.mxu0 0.0
    %2555 = vmatpush1.msra.mxu0 0.0
    %2556 = vmatprep.subr.mxu0 0.0
    %2557 = vmatpush1.msra.mxu0 0.0
    %2558 = vmatprep.subr.mxu0 0.0
    %2559 = vmatpush1.msra.mxu0 0.0
    %2560 = vmatprep.subr.mxu0 0.0
    %2561 = vmatpush1.msra.mxu0 0.0
    %2562 = vmatprep.subr.mxu0 0.0
    %2563 = vmatpush1.msra.mxu0 0.0
    %2564 = vmatprep.subr.mxu0 0.0
    %2565 = vmatpush1.msra.mxu0 0.0
    %2566 = vmatprep.subr.mxu0 0.0
    %2567 = vmatpush1.msra.mxu0 0.0
    %2568 = vmatprep.subr.mxu0 0.0
    %2569 = vmatpush1.msra.mxu0 0.0
    %2570 = vmatprep.subr.mxu0 0.0
    %2571 = vmatpush1.msra.mxu0 0.0
    %2572 = vmatprep.subr.mxu0 0.0
    %2573 = vmatpush1.msra.mxu0 0.0
    %2574 = vmatprep.subr.mxu0 0.0
    %2575 = vmatpush1.msra.mxu0 0.0
    %2576 = vmatprep.subr.mxu0 0.0
    %2577 = vmatpush1.msra.mxu0 0.0
    %2578 = vmatprep.subr.mxu0 0.0
    %2579 = vmatpush1.msra.mxu0 0.0
    %2580 = vmatprep.subr.mxu0 0.0
    %2581 = vmatpush1.msra.mxu0 0.0
    %2582 = vmatprep.subr.mxu0 0.0
    %2583 = vmatpush1.msra.mxu0 0.0
    %2584 = vmatprep.subr.mxu0 0.0
    %2585 = vmatpush1.msra.mxu0 0.0
    %2586 = vmatprep.subr.mxu0 0.0
    %2587 = vmatpush1.msra.mxu0 0.0
    %2588 = vmatprep.subr.mxu0 0.0
    %2589 = vmatpush1.msra.mxu0 0.0
    %2590 = vmatprep.subr.mxu0 0.0
    %2591 = vmatpush1.msra.mxu0 0.0
    %2592 = vmatprep.subr.mxu0 0.0
    %2593 = vmatpush1.msra.mxu0 0.0
    %2594 = vmatprep.subr.mxu0 0.0
    %2595 = vmatpush1.msra.mxu0 0.0
    %2596 = vmatprep.subr.mxu0 0.0
    %2597 = vmatpush1.msra.mxu0 0.0
    %2598 = vmatprep.subr.mxu0 0.0
    %2599 = vmatpush1.msra.mxu0 0.0
    %2600 = vmatprep.subr.mxu0 0.0
    %2601 = vmatpush1.msra.mxu0 0.0
    %2602 = vmatprep.subr.mxu0 0.0
    %2603 = vmatpush1.msra.mxu0 0.0
    %2604 = vmatprep.subr.mxu0 0.0
    %2605 = vmatpush1.msra.mxu0 0.0
    %2606 = vmatprep.subr.mxu0 0.0
    %2607 = vmatpush1.msra.mxu0 0.0
    %2608 = vmatprep.subr.mxu0 0.0
    %2609 = vmatpush1.msra.mxu0 0.0
    %2610 = vmatprep.subr.mxu0 0.0
    %2611 = vmatpush1.msra.mxu0 0.0
    %2612 = vmatprep.mubr.f32.mxu0 0.0
    %2613 = vmatmul.mubr.f32.gmra.mrb[0].mxu0 %v2546
    %v2614 = vpop.f32.mrb[0].mxu0
    %v2615 = vadd.f32 0.0, %v2614
    %v2616 = vpop.f32.mrb[0].mxu0
    %2617 = vdwg.mxu0
    %2618 = vrot.lane.b32.xlu0 %v1751, 64
    %v2619 = vpop.permute.xlu0 %2618
    %v2622 = vsel %vm215, %v2455, 0
    %2624 = vmatprep.subr.mxu0 0.0
    %2625 = vmatpush1.msra.mxu0 %v2619
    %2626 = vmatprep.subr.mxu0 0.0
    %2627 = vmatpush1.msra.mxu0 0.0
    %2628 = vmatprep.subr.mxu0 0.0
    %2629 = vmatpush1.msra.mxu0 0.0
    %2630 = vmatprep.subr.mxu0 0.0
    %2631 = vmatpush1.msra.mxu0 0.0
    %2632 = vmatprep.subr.mxu0 0.0
    %2633 = vmatpush1.msra.mxu0 0.0
    %2634 = vmatprep.subr.mxu0 0.0
    %2635 = vmatpush1.msra.mxu0 0.0
    %2636 = vmatprep.subr.mxu0 0.0
    %2637 = vmatpush1.msra.mxu0 0.0
    %2638 = vmatprep.subr.mxu0 0.0
    %2639 = vmatpush1.msra.mxu0 0.0
    %2640 = vmatprep.subr.mxu0 0.0
    %2641 = vmatpush1.msra.mxu0 0.0
    %2642 = vmatprep.subr.mxu0 0.0
    %2643 = vmatpush1.msra.mxu0 0.0
    %2644 = vmatprep.subr.mxu0 0.0
    %2645 = vmatpush1.msra.mxu0 0.0
    %2646 = vmatprep.subr.mxu0 0.0
    %2647 = vmatpush1.msra.mxu0 0.0
    %2648 = vmatprep.subr.mxu0 0.0
    %2649 = vmatpush1.msra.mxu0 0.0
    %2650 = vmatprep.subr.mxu0 0.0
    %2651 = vmatpush1.msra.mxu0 0.0
    %2652 = vmatprep.subr.mxu0 0.0
    %2653 = vmatpush1.msra.mxu0 0.0
    %2654 = vmatprep.subr.mxu0 0.0
    %2655 = vmatpush1.msra.mxu0 0.0
    %2656 = vmatprep.subr.mxu0 0.0
    %2657 = vmatpush1.msra.mxu0 0.0
    %2658 = vmatprep.subr.mxu0 0.0
    %2659 = vmatpush1.msra.mxu0 0.0
    %2660 = vmatprep.subr.mxu0 0.0
    %2661 = vmatpush1.msra.mxu0 0.0
    %2662 = vmatprep.subr.mxu0 0.0
    %2663 = vmatpush1.msra.mxu0 0.0
    %2664 = vmatprep.subr.mxu0 0.0
    %2665 = vmatpush1.msra.mxu0 0.0
    %2666 = vmatprep.subr.mxu0 0.0
    %2667 = vmatpush1.msra.mxu0 0.0
    %2668 = vmatprep.subr.mxu0 0.0
    %2669 = vmatpush1.msra.mxu0 0.0
    %2670 = vmatprep.subr.mxu0 0.0
    %2671 = vmatpush1.msra.mxu0 0.0
    %2672 = vmatprep.subr.mxu0 0.0
    %2673 = vmatpush1.msra.mxu0 0.0
    %2674 = vmatprep.subr.mxu0 0.0
    %2675 = vmatpush1.msra.mxu0 0.0
    %2676 = vmatprep.subr.mxu0 0.0
    %2677 = vmatpush1.msra.mxu0 0.0
    %2678 = vmatprep.subr.mxu0 0.0
    %2679 = vmatpush1.msra.mxu0 0.0
    %2680 = vmatprep.subr.mxu0 0.0
    %2681 = vmatpush1.msra.mxu0 0.0
    %2682 = vmatprep.subr.mxu0 0.0
    %2683 = vmatpush1.msra.mxu0 0.0
    %2684 = vmatprep.subr.mxu0 0.0
    %2685 = vmatpush1.msra.mxu0 0.0
    %2686 = vmatprep.subr.mxu0 0.0
    %2687 = vmatpush1.msra.mxu0 0.0
    %2688 = vmatprep.mubr.f32.mxu0 0.0
    %2689 = vmatmul.mubr.f32.gmra.mrb[0].mxu0 %v2622
    %v2690 = vpop.f32.mrb[0].mxu0
    %v2691 = vadd.f32 0.0, %v2690
    %v2692 = vpop.f32.mrb[0].mxu0
    %2693 = vdwg.mxu0
    %2694 = vrot.lane.b32.xlu0 %v1753, 64
    %v2695 = vpop.permute.xlu0 %2694
    %v2698 = vsel %vm215, %v2457, 0
    %2700 = vmatprep.subr.mxu0 0.0
    %2701 = vmatpush1.msra.mxu0 %v2695
    %2702 = vmatprep.subr.mxu0 0.0
    %2703 = vmatpush1.msra.mxu0 0.0
    %2704 = vmatprep.subr.mxu0 0.0
    %2705 = vmatpush1.msra.mxu0 0.0
    %2706 = vmatprep.subr.mxu0 0.0
    %2707 = vmatpush1.msra.mxu0 0.0
    %2708 = vmatprep.subr.mxu0 0.0
    %2709 = vmatpush1.msra.mxu0 0.0
    %2710 = vmatprep.subr.mxu0 0.0
    %2711 = vmatpush1.msra.mxu0 0.0
    %2712 = vmatprep.subr.mxu0 0.0
    %2713 = vmatpush1.msra.mxu0 0.0
    %2714 = vmatprep.subr.mxu0 0.0
    %2715 = vmatpush1.msra.mxu0 0.0
    %2716 = vmatprep.subr.mxu0 0.0
    %2717 = vmatpush1.msra.mxu0 0.0
    %2718 = vmatprep.subr.mxu0 0.0
    %2719 = vmatpush1.msra.mxu0 0.0
    %2720 = vmatprep.subr.mxu0 0.0
    %2721 = vmatpush1.msra.mxu0 0.0
    %2722 = vmatprep.subr.mxu0 0.0
    %2723 = vmatpush1.msra.mxu0 0.0
    %2724 = vmatprep.subr.mxu0 0.0
    %2725 = vmatpush1.msra.mxu0 0.0
    %2726 = vmatprep.subr.mxu0 0.0
    %2727 = vmatpush1.msra.mxu0 0.0
    %2728 = vmatprep.subr.mxu0 0.0
    %2729 = vmatpush1.msra.mxu0 0.0
    %2730 = vmatprep.subr.mxu0 0.0
    %2731 = vmatpush1.msra.mxu0 0.0
    %2732 = vmatprep.subr.mxu0 0.0
    %2733 = vmatpush1.msra.mxu0 0.0
    %2734 = vmatprep.subr.mxu0 0.0
    %2735 = vmatpush1.msra.mxu0 0.0
    %2736 = vmatprep.subr.mxu0 0.0
    %2737 = vmatpush1.msra.mxu0 0.0
    %2738 = vmatprep.subr.mxu0 0.0
    %2739 = vmatpush1.msra.mxu0 0.0
    %2740 = vmatprep.subr.mxu0 0.0
    %2741 = vmatpush1.msra.mxu0 0.0
    %2742 = vmatprep.subr.mxu0 0.0
    %2743 = vmatpush1.msra.mxu0 0.0
    %2744 = vmatprep.subr.mxu0 0.0
    %2745 = vmatpush1.msra.mxu0 0.0
    %2746 = vmatprep.subr.mxu0 0.0
    %2747 = vmatpush1.msra.mxu0 0.0
    %2748 = vmatprep.subr.mxu0 0.0
    %2749 = vmatpush1.msra.mxu0 0.0
    %2750 = vmatprep.subr.mxu0 0.0
    %2751 = vmatpush1.msra.mxu0 0.0
    %2752 = vmatprep.subr.mxu0 0.0
    %2753 = vmatpush1.msra.mxu0 0.0
    %2754 = vmatprep.subr.mxu0 0.0
    %2755 = vmatpush1.msra.mxu0 0.0
    %2756 = vmatprep.subr.mxu0 0.0
    %2757 = vmatpush1.msra.mxu0 0.0
    %2758 = vmatprep.subr.mxu0 0.0
    %2759 = vmatpush1.msra.mxu0 0.0
    %2760 = vmatprep.subr.mxu0 0.0
    %2761 = vmatpush1.msra.mxu0 0.0
    %2762 = vmatprep.subr.mxu0 0.0
    %2763 = vmatpush1.msra.mxu0 0.0
    %2764 = vmatprep.mubr.f32.mxu0 0.0
    %2765 = vmatmul.mubr.f32.gmra.mrb[0].mxu0 %v2698
    %v2766 = vpop.f32.mrb[0].mxu0
    %v2767 = vadd.f32 0.0, %v2766
    %v2768 = vpop.f32.mrb[0].mxu0
    %2769 = vdwg.mxu0
    %2770 = vrot.lane.b32.xlu0 %v1755, 64
    %v2771 = vpop.permute.xlu0 %2770
    %v2774 = vsel %vm215, %v2459, 0
    %2776 = vmatprep.subr.mxu0 0.0
    %2777 = vmatpush1.msra.mxu0 %v2771
    %2778 = vmatprep.subr.mxu0 0.0
    %2779 = vmatpush1.msra.mxu0 0.0
    %2780 = vmatprep.subr.mxu0 0.0
    %2781 = vmatpush1.msra.mxu0 0.0
    %2782 = vmatprep.subr.mxu0 0.0
    %2783 = vmatpush1.msra.mxu0 0.0
    %2784 = vmatprep.subr.mxu0 0.0
    %2785 = vmatpush1.msra.mxu0 0.0
    %2786 = vmatprep.subr.mxu0 0.0
    %2787 = vmatpush1.msra.mxu0 0.0
    %2788 = vmatprep.subr.mxu0 0.0
    %2789 = vmatpush1.msra.mxu0 0.0
    %2790 = vmatprep.subr.mxu0 0.0
    %2791 = vmatpush1.msra.mxu0 0.0
    %2792 = vmatprep.subr.mxu0 0.0
    %2793 = vmatpush1.msra.mxu0 0.0
    %2794 = vmatprep.subr.mxu0 0.0
    %2795 = vmatpush1.msra.mxu0 0.0
    %2796 = vmatprep.subr.mxu0 0.0
    %2797 = vmatpush1.msra.mxu0 0.0
    %2798 = vmatprep.subr.mxu0 0.0
    %2799 = vmatpush1.msra.mxu0 0.0
    %2800 = vmatprep.subr.mxu0 0.0
    %2801 = vmatpush1.msra.mxu0 0.0
    %2802 = vmatprep.subr.mxu0 0.0
    %2803 = vmatpush1.msra.mxu0 0.0
    %2804 = vmatprep.subr.mxu0 0.0
    %2805 = vmatpush1.msra.mxu0 0.0
    %2806 = vmatprep.subr.mxu0 0.0
    %2807 = vmatpush1.msra.mxu0 0.0
    %2808 = vmatprep.subr.mxu0 0.0
    %2809 = vmatpush1.msra.mxu0 0.0
    %2810 = vmatprep.subr.mxu0 0.0
    %2811 = vmatpush1.msra.mxu0 0.0
    %2812 = vmatprep.subr.mxu0 0.0
    %2813 = vmatpush1.msra.mxu0 0.0
    %2814 = vmatprep.subr.mxu0 0.0
    %2815 = vmatpush1.msra.mxu0 0.0
    %2816 = vmatprep.subr.mxu0 0.0
    %2817 = vmatpush1.msra.mxu0 0.0
    %2818 = vmatprep.subr.mxu0 0.0
    %2819 = vmatpush1.msra.mxu0 0.0
    %2820 = vmatprep.subr.mxu0 0.0
    %2821 = vmatpush1.msra.mxu0 0.0
    %2822 = vmatprep.subr.mxu0 0.0
    %2823 = vmatpush1.msra.mxu0 0.0
    %2824 = vmatprep.subr.mxu0 0.0
    %2825 = vmatpush1.msra.mxu0 0.0
    %2826 = vmatprep.subr.mxu0 0.0
    %2827 = vmatpush1.msra.mxu0 0.0
    %2828 = vmatprep.subr.mxu0 0.0
    %2829 = vmatpush1.msra.mxu0 0.0
    %2830 = vmatprep.subr.mxu0 0.0
    %2831 = vmatpush1.msra.mxu0 0.0
    %2832 = vmatprep.subr.mxu0 0.0
    %2833 = vmatpush1.msra.mxu0 0.0
    %2834 = vmatprep.subr.mxu0 0.0
    %2835 = vmatpush1.msra.mxu0 0.0
    %2836 = vmatprep.subr.mxu0 0.0
    %2837 = vmatpush1.msra.mxu0 0.0
    %2838 = vmatprep.subr.mxu0 0.0
    %2839 = vmatpush1.msra.mxu0 0.0
    %2840 = vmatprep.mubr.f32.mxu0 0.0
    %2841 = vmatmul.mubr.f32.gmra.mrb[0].mxu0 %v2774
    %v2842 = vpop.f32.mrb[0].mxu0
    %v2843 = vadd.f32 0.0, %v2842
    %v2844 = vpop.f32.mrb[0].mxu0
    %2845 = vdwg.mxu0
    %2846 = vrot.lane.b32.xlu0 %v1757, 64
    %v2847 = vpop.permute.xlu0 %2846
    %v2850 = vsel %vm215, %v2461, 0
    %2852 = vmatprep.subr.mxu0 0.0
    %2853 = vmatpush1.msra.mxu0 %v2847
    %2854 = vmatprep.subr.mxu0 0.0
    %2855 = vmatpush1.msra.mxu0 0.0
    %2856 = vmatprep.subr.mxu0 0.0
    %2857 = vmatpush1.msra.mxu0 0.0
    %2858 = vmatprep.subr.mxu0 0.0
    %2859 = vmatpush1.msra.mxu0 0.0
    %2860 = vmatprep.subr.mxu0 0.0
    %2861 = vmatpush1.msra.mxu0 0.0
    %2862 = vmatprep.subr.mxu0 0.0
    %2863 = vmatpush1.msra.mxu0 0.0
    %2864 = vmatprep.subr.mxu0 0.0
    %2865 = vmatpush1.msra.mxu0 0.0
    %2866 = vmatprep.subr.mxu0 0.0
    %2867 = vmatpush1.msra.mxu0 0.0
    %2868 = vmatprep.subr.mxu0 0.0
    %2869 = vmatpush1.msra.mxu0 0.0
    %2870 = vmatprep.subr.mxu0 0.0
    %2871 = vmatpush1.msra.mxu0 0.0
    %2872 = vmatprep.subr.mxu0 0.0
    %2873 = vmatpush1.msra.mxu0 0.0
    %2874 = vmatprep.subr.mxu0 0.0
    %2875 = vmatpush1.msra.mxu0 0.0
    %2876 = vmatprep.subr.mxu0 0.0
    %2877 = vmatpush1.msra.mxu0 0.0
    %2878 = vmatprep.subr.mxu0 0.0
    %2879 = vmatpush1.msra.mxu0 0.0
    %2880 = vmatprep.subr.mxu0 0.0
    %2881 = vmatpush1.msra.mxu0 0.0
    %2882 = vmatprep.subr.mxu0 0.0
    %2883 = vmatpush1.msra.mxu0 0.0
    %2884 = vmatprep.subr.mxu0 0.0
    %2885 = vmatpush1.msra.mxu0 0.0
    %2886 = vmatprep.subr.mxu0 0.0
    %2887 = vmatpush1.msra.mxu0 0.0
    %2888 = vmatprep.subr.mxu0 0.0
    %2889 = vmatpush1.msra.mxu0 0.0
    %2890 = vmatprep.subr.mxu0 0.0
    %2891 = vmatpush1.msra.mxu0 0.0
    %2892 = vmatprep.subr.mxu0 0.0
    %2893 = vmatpush1.msra.mxu0 0.0
    %2894 = vmatprep.subr.mxu0 0.0
    %2895 = vmatpush1.msra.mxu0 0.0
    %2896 = vmatprep.subr.mxu0 0.0
    %2897 = vmatpush1.msra.mxu0 0.0
    %2898 = vmatprep.subr.mxu0 0.0
    %2899 = vmatpush1.msra.mxu0 0.0
    %2900 = vmatprep.subr.mxu0 0.0
    %2901 = vmatpush1.msra.mxu0 0.0
    %2902 = vmatprep.subr.mxu0 0.0
    %2903 = vmatpush1.msra.mxu0 0.0
    %2904 = vmatprep.subr.mxu0 0.0
    %2905 = vmatpush1.msra.mxu0 0.0
    %2906 = vmatprep.subr.mxu0 0.0
    %2907 = vmatpush1.msra.mxu0 0.0
    %2908 = vmatprep.subr.mxu0 0.0
    %2909 = vmatpush1.msra.mxu0 0.0
    %2910 = vmatprep.subr.mxu0 0.0
    %2911 = vmatpush1.msra.mxu0 0.0
    %2912 = vmatprep.subr.mxu0 0.0
    %2913 = vmatpush1.msra.mxu0 0.0
    %2914 = vmatprep.subr.mxu0 0.0
    %2915 = vmatpush1.msra.mxu0 0.0
    %2916 = vmatprep.mubr.f32.mxu0 0.0
    %2917 = vmatmul.mubr.f32.gmra.mrb[0].mxu0 %v2850
    %v2918 = vpop.f32.mrb[0].mxu0
    %v2919 = vadd.f32 0.0, %v2918
    %v2920 = vpop.f32.mrb[0].mxu0
    %2921 = vdwg.mxu0
    %2922 = vrot.lane.b32.xlu0 %v1759, 64
    %v2923 = vpop.permute.xlu0 %2922
    %v2926 = vsel %vm215, %v2463, 0
    %2928 = vmatprep.subr.mxu0 0.0
    %2929 = vmatpush1.msra.mxu0 %v2923
    %2930 = vmatprep.subr.mxu0 0.0
    %2931 = vmatpush1.msra.mxu0 0.0
    %2932 = vmatprep.subr.mxu0 0.0
    %2933 = vmatpush1.msra.mxu0 0.0
    %2934 = vmatprep.subr.mxu0 0.0
    %2935 = vmatpush1.msra.mxu0 0.0
    %2936 = vmatprep.subr.mxu0 0.0
    %2937 = vmatpush1.msra.mxu0 0.0
    %2938 = vmatprep.subr.mxu0 0.0
    %2939 = vmatpush1.msra.mxu0 0.0
    %2940 = vmatprep.subr.mxu0 0.0
    %2941 = vmatpush1.msra.mxu0 0.0
    %2942 = vmatprep.subr.mxu0 0.0
    %2943 = vmatpush1.msra.mxu0 0.0
    %2944 = vmatprep.subr.mxu0 0.0
    %2945 = vmatpush1.msra.mxu0 0.0
    %2946 = vmatprep.subr.mxu0 0.0
    %2947 = vmatpush1.msra.mxu0 0.0
    %2948 = vmatprep.subr.mxu0 0.0
    %2949 = vmatpush1.msra.mxu0 0.0
    %2950 = vmatprep.subr.mxu0 0.0
    %2951 = vmatpush1.msra.mxu0 0.0
    %2952 = vmatprep.subr.mxu0 0.0
    %2953 = vmatpush1.msra.mxu0 0.0
    %2954 = vmatprep.subr.mxu0 0.0
    %2955 = vmatpush1.msra.mxu0 0.0
    %2956 = vmatprep.subr.mxu0 0.0
    %2957 = vmatpush1.msra.mxu0 0.0
    %2958 = vmatprep.subr.mxu0 0.0
    %2959 = vmatpush1.msra.mxu0 0.0
    %2960 = vmatprep.subr.mxu0 0.0
    %2961 = vmatpush1.msra.mxu0 0.0
    %2962 = vmatprep.subr.mxu0 0.0
    %2963 = vmatpush1.msra.mxu0 0.0
    %2964 = vmatprep.subr.mxu0 0.0
    %2965 = vmatpush1.msra.mxu0 0.0
    %2966 = vmatprep.subr.mxu0 0.0
    %2967 = vmatpush1.msra.mxu0 0.0
    %2968 = vmatprep.subr.mxu0 0.0
    %2969 = vmatpush1.msra.mxu0 0.0
    %2970 = vmatprep.subr.mxu0 0.0
    %2971 = vmatpush1.msra.mxu0 0.0
    %2972 = vmatprep.subr.mxu0 0.0
    %2973 = vmatpush1.msra.mxu0 0.0
    %2974 = vmatprep.subr.mxu0 0.0
    %2975 = vmatpush1.msra.mxu0 0.0
    %2976 = vmatprep.subr.mxu0 0.0
    %2977 = vmatpush1.msra.mxu0 0.0
    %2978 = vmatprep.subr.mxu0 0.0
    %2979 = vmatpush1.msra.mxu0 0.0
    %2980 = vmatprep.subr.mxu0 0.0
    %2981 = vmatpush1.msra.mxu0 0.0
    %2982 = vmatprep.subr.mxu0 0.0
    %2983 = vmatpush1.msra.mxu0 0.0
    %2984 = vmatprep.subr.mxu0 0.0
    %2985 = vmatpush1.msra.mxu0 0.0
    %2986 = vmatprep.subr.mxu0 0.0
    %2987 = vmatpush1.msra.mxu0 0.0
    %2988 = vmatprep.subr.mxu0 0.0
    %2989 = vmatpush1.msra.mxu0 0.0
    %2990 = vmatprep.subr.mxu0 0.0
    %2991 = vmatpush1.msra.mxu0 0.0
    %2992 = vmatprep.mubr.f32.mxu0 0.0
    %2993 = vmatmul.mubr.f32.gmra.mrb[0].mxu0 %v2926
    %v2994 = vpop.f32.mrb[0].mxu0
    %v2995 = vadd.f32 0.0, %v2994
    %v2996 = vpop.f32.mrb[0].mxu0
    %2997 = vdwg.mxu0
    %2998 = vrot.lane.b32.xlu0 %v1761, 64
    %v2999 = vpop.permute.xlu0 %2998
    %v3002 = vsel %vm215, %v2465, 0
    %3004 = vmatprep.subr.mxu0 0.0
    %3005 = vmatpush1.msra.mxu0 %v2999
    %3006 = vmatprep.subr.mxu0 0.0
    %3007 = vmatpush1.msra.mxu0 0.0
    %3008 = vmatprep.subr.mxu0 0.0
    %3009 = vmatpush1.msra.mxu0 0.0
    %3010 = vmatprep.subr.mxu0 0.0
    %3011 = vmatpush1.msra.mxu0 0.0
    %3012 = vmatprep.subr.mxu0 0.0
    %3013 = vmatpush1.msra.mxu0 0.0
    %3014 = vmatprep.subr.mxu0 0.0
    %3015 = vmatpush1.msra.mxu0 0.0
    %3016 = vmatprep.subr.mxu0 0.0
    %3017 = vmatpush1.msra.mxu0 0.0
    %3018 = vmatprep.subr.mxu0 0.0
    %3019 = vmatpush1.msra.mxu0 0.0
    %3020 = vmatprep.subr.mxu0 0.0
    %3021 = vmatpush1.msra.mxu0 0.0
    %3022 = vmatprep.subr.mxu0 0.0
    %3023 = vmatpush1.msra.mxu0 0.0
    %3024 = vmatprep.subr.mxu0 0.0
    %3025 = vmatpush1.msra.mxu0 0.0
    %3026 = vmatprep.subr.mxu0 0.0
    %3027 = vmatpush1.msra.mxu0 0.0
    %3028 = vmatprep.subr.mxu0 0.0
    %3029 = vmatpush1.msra.mxu0 0.0
    %3030 = vmatprep.subr.mxu0 0.0
    %3031 = vmatpush1.msra.mxu0 0.0
    %3032 = vmatprep.subr.mxu0 0.0
    %3033 = vmatpush1.msra.mxu0 0.0
    %3034 = vmatprep.subr.mxu0 0.0
    %3035 = vmatpush1.msra.mxu0 0.0
    %3036 = vmatprep.subr.mxu0 0.0
    %3037 = vmatpush1.msra.mxu0 0.0
    %3038 = vmatprep.subr.mxu0 0.0
    %3039 = vmatpush1.msra.mxu0 0.0
    %3040 = vmatprep.subr.mxu0 0.0
    %3041 = vmatpush1.msra.mxu0 0.0
    %3042 = vmatprep.subr.mxu0 0.0
    %3043 = vmatpush1.msra.mxu0 0.0
    %3044 = vmatprep.subr.mxu0 0.0
    %3045 = vmatpush1.msra.mxu0 0.0
    %3046 = vmatprep.subr.mxu0 0.0
    %3047 = vmatpush1.msra.mxu0 0.0
    %3048 = vmatprep.subr.mxu0 0.0
    %3049 = vmatpush1.msra.mxu0 0.0
    %3050 = vmatprep.subr.mxu0 0.0
    %3051 = vmatpush1.msra.mxu0 0.0
    %3052 = vmatprep.subr.mxu0 0.0
    %3053 = vmatpush1.msra.mxu0 0.0
    %3054 = vmatprep.subr.mxu0 0.0
    %3055 = vmatpush1.msra.mxu0 0.0
    %3056 = vmatprep.subr.mxu0 0.0
    %3057 = vmatpush1.msra.mxu0 0.0
    %3058 = vmatprep.subr.mxu0 0.0
    %3059 = vmatpush1.msra.mxu0 0.0
    %3060 = vmatprep.subr.mxu0 0.0
    %3061 = vmatpush1.msra.mxu0 0.0
    %3062 = vmatprep.subr.mxu0 0.0
    %3063 = vmatpush1.msra.mxu0 0.0
    %3064 = vmatprep.subr.mxu0 0.0
    %3065 = vmatpush1.msra.mxu0 0.0
    %3066 = vmatprep.subr.mxu0 0.0
    %3067 = vmatpush1.msra.mxu0 0.0
    %3068 = vmatprep.mubr.f32.mxu0 0.0
    %3069 = vmatmul.mubr.f32.gmra.mrb[0].mxu0 %v3002
    %v3070 = vpop.f32.mrb[0].mxu0
    %v3071 = vadd.f32 0.0, %v3070
    %v3072 = vpop.f32.mrb[0].mxu0
    %3073 = vdwg.mxu0
    %3076 = vrot.lane.b32.xlu0 %v2691, 8
    %v3077 = vpop.permute.xlu0 %3076
    %3078 = vrot.lane.b32.xlu0 %v2767, 8
    %v3079 = vpop.permute.xlu0 %3078
    %3084 = vrot.lane.b32.xlu0 %v2843, 16
    %v3085 = vpop.permute.xlu0 %3084
    %3086 = vrot.lane.b32.xlu0 %v2919, 16
    %v3087 = vpop.permute.xlu0 %3086
    %3092 = vrot.lane.b32.xlu0 %v2995, 24
    %v3093 = vpop.permute.xlu0 %3092
    %3094 = vrot.lane.b32.xlu0 %v3071, 24
    %v3095 = vpop.permute.xlu0 %3094
    %v3098 = vsel %vm215, %v2539, %v3077
    %v3099 = vsel %vm215, %v2615, %v3079
    %v3100 = vsel %vm117, %v3098, %v3085
    %v3101 = vsel %vm117, %v3099, %v3087
    %v3102 = vsel %vm1554, %v3100, %v3093
    %v3103 = vsel %vm1554, %v3101, %v3095
    %v3104 = vadd.f32 %v1740, %v3102
    %v3105 = vadd.f32 %v1745, %v3103
    %v3107 = vlaneseq
    %v3108 = vshrl.u32 %v3107, 7
    %v3109 = vsub.s32 0, %v3108
    %v3110 = vrot.slane %v1660, %v3109
    %v3113 = vsel %vm1565, %v3104, 0
    %v3116 = vsel %vm1565, %v3105, 0
    %3118 = vmatprep.subr.mxu0 0.0
    %3119 = vmatpush1.msra.mxu0 %v1656
    %3120 = vmatprep.subr.mxu0 0.0
    %3121 = vmatpush1.msra.mxu0 %v1657
    %3122 = vmatprep.subr.mxu0 0.0
    %3123 = vmatpush1.msra.mxu0 %v1658
    %3124 = vmatprep.subr.mxu0 0.0
    %3125 = vmatpush1.msra.mxu0 %v1659
    %3126 = vmatprep.subr.mxu0 0.0
    %3127 = vmatpush1.msra.mxu0 0.0
    %3128 = vmatprep.subr.mxu0 0.0
    %3129 = vmatpush1.msra.mxu0 0.0
    %3130 = vmatprep.subr.mxu0 0.0
    %3131 = vmatpush1.msra.mxu0 0.0
    %3132 = vmatprep.subr.mxu0 0.0
    %3133 = vmatpush1.msra.mxu0 0.0
    %3134 = vmatprep.subr.mxu0 0.0
    %3135 = vmatpush1.msra.mxu0 0.0
    %3136 = vmatprep.subr.mxu0 0.0
    %3137 = vmatpush1.msra.mxu0 0.0
    %3138 = vmatprep.subr.mxu0 0.0
    %3139 = vmatpush1.msra.mxu0 0.0
    %3140 = vmatprep.subr.mxu0 0.0
    %3141 = vmatpush1.msra.mxu0 0.0
    %3142 = vmatprep.subr.mxu0 0.0
    %3143 = vmatpush1.msra.mxu0 0.0
    %3144 = vmatprep.subr.mxu0 0.0
    %3145 = vmatpush1.msra.mxu0 0.0
    %3146 = vmatprep.subr.mxu0 0.0
    %3147 = vmatpush1.msra.mxu0 0.0
    %3148 = vmatprep.subr.mxu0 0.0
    %3149 = vmatpush1.msra.mxu0 0.0
    %3150 = vmatprep.subr.mxu0 0.0
    %3151 = vmatpush1.msra.mxu0 0.0
    %3152 = vmatprep.subr.mxu0 0.0
    %3153 = vmatpush1.msra.mxu0 0.0
    %3154 = vmatprep.subr.mxu0 0.0
    %3155 = vmatpush1.msra.mxu0 0.0
    %3156 = vmatprep.subr.mxu0 0.0
    %3157 = vmatpush1.msra.mxu0 0.0
    %3158 = vmatprep.subr.mxu0 0.0
    %3159 = vmatpush1.msra.mxu0 0.0
    %3160 = vmatprep.subr.mxu0 0.0
    %3161 = vmatpush1.msra.mxu0 0.0
    %3162 = vmatprep.subr.mxu0 0.0
    %3163 = vmatpush1.msra.mxu0 0.0
    %3164 = vmatprep.subr.mxu0 0.0
    %3165 = vmatpush1.msra.mxu0 0.0
    %3166 = vmatprep.subr.mxu0 0.0
    %3167 = vmatpush1.msra.mxu0 0.0
    %3168 = vmatprep.subr.mxu0 0.0
    %3169 = vmatpush1.msra.mxu0 0.0
    %3170 = vmatprep.subr.mxu0 0.0
    %3171 = vmatpush1.msra.mxu0 0.0
    %3172 = vmatprep.subr.mxu0 0.0
    %3173 = vmatpush1.msra.mxu0 0.0
    %3174 = vmatprep.subr.mxu0 0.0
    %3175 = vmatpush1.msra.mxu0 0.0
    %3176 = vmatprep.subr.mxu0 0.0
    %3177 = vmatpush1.msra.mxu0 0.0
    %3178 = vmatprep.subr.mxu0 0.0
    %3179 = vmatpush1.msra.mxu0 0.0
    %3180 = vmatprep.subr.mxu0 0.0
    %3181 = vmatpush1.msra.mxu0 0.0
    %3182 = vmatprep.mubr.f32.mxu0 0.0
    %3183 = vmatmul.mubr.f32.gmra.mrb[0].mxu0 %v3113
    %v3184 = vpop.f32.mrb[0].mxu0
    %v3185 = vadd.f32 %v3110, %v3184
    %v3186 = vpop.f32.mrb[0].mxu0
    %3187 = vmatprep.mubr.f32.mxu0 0.0
    %3188 = vmatmul.mubr.f32.gmra.mrb[0].mxu0 %v3116
    %v3189 = vpop.f32.mrb[0].mxu0
    %v3190 = vadd.f32 %v3110, %v3189
    %v3191 = vpop.f32.mrb[0].mxu0
    %3192 = vdwg.mxu0
    %v3193 = vmax.f32 %v3185, 0.0
    %v3194 = vmax.f32 %v3190, 0.0
    %v3195 = vadd.f32 %v3104, %v3193
    %v3196 = vadd.f32 %v3105, %v3194
    %3197 = vst.msk [vmem:[#allocation11] sm:$0xff] %vm1565, %v3195
    %3198 = vst.msk [vmem:[#allocation11 + $0x8] sm:$0xff] %vm1565, %v3196
    // Predicated region
    $region58: #{tpu_custom_call.1} parent=1 // pred_check
      _
    $region59: #{tpu_custom_call.1} parent=1 // pred_check_branch
      %3200 = sbr.rel (0) target = $region61
    $region60: #{tpu_custom_call.1} parent=1 // pred_region
      %s3202 = ssub.s32 256, 256
      %3203 = vsyncadd [#allocation4], %s3202
      %s3204 = sshll.u32 [#allocation11], 4
      %s3205 = int_to_ptr.vmem [resolvable:$true] %s3204
      %3210 = dma.vmem_to_hbm [thread:$0]  %s3205, 256, %s9, [#allocation4], 128, 128, 8
    $region61: #{tpu_custom_call.1} parent=1 // pred_fallthru
      _
    // Predicated region
    $region62: #{tpu_custom_call.1} parent=1 // pred_check
      _
    $region63: #{tpu_custom_call.1} parent=1 // pred_check_branch
      %3212 = sbr.rel (0) target = $region65
    $region64: #{tpu_custom_call.1} parent=1 // pred_region
      %3213 = dma.done [#allocation4], 256
    $region65: #{tpu_custom_call.1} parent=1 // pred_fallthru
      _
    %3214 = vsyncpa [#allocation3], 1
    %3215 = vsyncpa [#allocation6], 1
    %3216 = vsyncpa [#allocation9], 1
    %3217 = vsyncpa [#allocation4], 1

</llo_original>
